<compile_context>
chip_gen: v7x
topology: tpu7x:2x2x1
jax: 0.10.0
libtpu: 0.0.40
codegen_flags: <defaults>
</compile_context>

<pallas_src>
import functools

import jax
import jax.numpy as jnp
from jax.experimental import pallas as pl
from jax.experimental.pallas import tpu as pltpu

HP = 128          # padded per-gate hidden width (one lane tile)
GP = 4 * HP       # padded gate width (i|f|o|g), lane-aligned blocks

_VMEM_SPEC = pl.BlockSpec(memory_space=pltpu.MemorySpace.VMEM)


# ---------------------------------------------------------------------------
# Fused forward kernel
# ---------------------------------------------------------------------------

def _build_fused_kernel(T, Bp, B, L):
    """Build the fused kernel for static (seq_len, padded_batch, valid_batch, layers)."""
    C = HP
    G = GP

    def kernel(x_ref,
               wih1_ref, whh1_ref, b1_ref,
               wih2_ref, whh2_ref, b2_ref,
               gamma_ref, beta_ref,
               fc1w_ref, fc1b_ref, fc2w_ref, fc2b_ref,
               out_ref, h1_ref, c1_ref, h2_ref, c2_ref,
               seq_ref, xproj_ref):

        def run_stack(first_in_ref, wih_s, whh_s, b_s, hT_ref, cT_ref):
            for l in range(L):                              # static unroll over layers
                wih = wih_s[l]                              # (C, G) bf16
                whh = whh_s[l]                              # (C, G) bf16
                b = b_s[l]                                  # (1, G) f32

                # Hoisted input projection: one bf16 MXU matmul over the whole
                # sequence (bias folded in, f32 accumulation) instead of T tiny
                # matmuls on the serial critical path.  Layer 0 of the first
                # stack reads x_ref directly (no seq_ref pre-copy).
                src = first_in_ref if l == 0 else seq_ref
                xin = src[...].reshape(T * Bp, C).astype(jnp.bfloat16)
                xproj_ref[...] = (
                    jnp.dot(xin, wih, preferred_element_type=jnp.float32) + b
                ).reshape(T, Bp, G)

                def step(t, carry):
                    h, c = carry                            # f32 carry
                    gates = xproj_ref[t] + jnp.dot(
                        h.astype(jnp.bfloat16), whh,
                        preferred_element_type=jnp.float32)  # (Bp, G) f32
                    # Gate layout is (i, f, o, g): one sigmoid over a contiguous
                    # 3*C slab, tanh over the last 128-lane block.
                    sig = jax.nn.sigmoid(gates[:, :3 * C])
                    i = sig[:, 0 * C:1 * C]
                    f = sig[:, 1 * C:2 * C]
                    o = sig[:, 2 * C:3 * C]
                    g = jnp.tanh(gates[:, 3 * C:4 * C])
                    c_new = f * c + i * g
                    h_new = o * jnp.tanh(c_new)
                    seq_ref[t] = h_new                      # full (8,128)-aligned tile store
                    return h_new, c_new

                zeros = jnp.zeros((Bp, C), jnp.float32)
                h_fin, c_fin = jax.lax.fori_loop(0, T, step, (zeros, zeros),
                                                 unroll=True)
                hT_ref[l] = h_fin
                cT_ref[l] = c_fin

        # ---- lstm1 stack (hidden 108, padded to 128) ----
        run_stack(x_ref, wih1_ref, whh1_ref, b1_ref, h1_ref, c1_ref)

        # ---- BatchNorm1d(108): batch statistics over the T*B valid rows ----
        seq = seq_ref[...]                                          # (T, Bp, C)
        bidx = jax.lax.broadcasted_iota(jnp.int32, (T, Bp, C), 1)
        mask = (bidx < B).astype(jnp.float32)                       # exclude padded batch rows
        cnt = float(T * B)
        sm = seq * mask
        s1 = jnp.sum(jnp.sum(sm, axis=0), axis=0, keepdims=True)            # (1, C)
        s2 = jnp.sum(jnp.sum(sm * seq, axis=0), axis=0, keepdims=True)      # (1, C)
        mean = s1 / cnt
        var = jnp.maximum(s2 / cnt - mean * mean, 0.0)              # biased var, clamped >= 0
        inv = jax.lax.rsqrt(var + 1e-5)
        scale = inv * gamma_ref[...]                                # (1, C)
        shift = beta_ref[...] - mean * scale                        # (1, C)
        seq_ref[...] = seq * scale + shift

        # Dropout: identity (inference).

        # ---- lstm2 stack (hidden 56, padded to 128) ----
        run_stack(seq_ref, wih2_ref, whh2_ref, b2_ref, h2_ref, c2_ref)

        # ---- head on last timestep: Linear(56,32) -> ReLU -> Linear(32,out) ----
        last = seq_ref[T - 1]                                       # (Bp, C)
        hid = jnp.dot(last, fc1w_ref[...],
                      preferred_element_type=jnp.float32) + fc1b_ref[...]
        hid = jnp.maximum(hid, 0.0)
        out_ref[...] = jnp.dot(hid, fc2w_ref[...],
                               preferred_element_type=jnp.float32) + fc2b_ref[...]

    return kernel


# ---------------------------------------------------------------------------
# Parameter initialization (deterministic, PyTorch-like uniform ranges),
# stored pre-transposed, zero-padded to lane-aligned (128 / 512) tiles, and
# with LSTM matmul weights cast to bf16.
# ---------------------------------------------------------------------------

def _uniform(key, shape, bound):
    return jax.random.uniform(key, shape, jnp.float32, minval=-bound, maxval=bound)


def _pad_gate_dim(w, hidden):
    """Pad each gate block to HP lanes and reorder (i,f,g,o) -> (i,f,o,g)."""
    gi, gf, gg, go = jnp.split(w, 4, axis=-1)
    pad = [(0, 0)] * (w.ndim - 1) + [(0, HP - hidden)]
    return jnp.concatenate([jnp.pad(blk, pad) for blk in (gi, gf, go, gg)], axis=-1)


def init_params(key, inputdim, outputdim, layerdim):
    assert inputdim <= HP and outputdim <= HP
    keys = iter(jax.random.split(key, 8 * layerdim + 8))

    def lstm_stack(in_dim, hidden):
        k = hidden ** -0.5
        wihs, whhs, bs = [], [], []
        for l in range(layerdim):
            d_in = in_dim if l == 0 else hidden
            w_ih = _uniform(next(keys), (4 * hidden, d_in), k)     # PyTorch layout
            w_hh = _uniform(next(keys), (4 * hidden, hidden), k)
            b_ih = _uniform(next(keys), (4 * hidden,), k)
            b_hh = _uniform(next(keys), (4 * hidden,), k)
            wih_t = _pad_gate_dim(w_ih.T, hidden)                  # (d_in, 4*HP)
            wih_t = jnp.pad(wih_t, ((0, HP - d_in), (0, 0)))       # (HP, 4*HP)
            whh_t = _pad_gate_dim(w_hh.T, hidden)
            whh_t = jnp.pad(whh_t, ((0, HP - hidden), (0, 0)))
            b = _pad_gate_dim((b_ih + b_hh).reshape(1, 4 * hidden), hidden)  # (1, 4*HP)
            wihs.append(wih_t)
            whhs.append(whh_t)
            bs.append(b)
        # bf16 weights for the MXU (f32 accumulation in-kernel); bias stays f32.
        return (jnp.stack(wihs).astype(jnp.bfloat16),
                jnp.stack(whhs).astype(jnp.bfloat16),
                jnp.stack(bs))

    wih1, whh1, b1 = lstm_stack(inputdim, 108)
    wih2, whh2, b2 = lstm_stack(108, 56)

    params = dict(wih1=wih1, whh1=whh1, b1=b1,
                  wih2=wih2, whh2=whh2, b2=b2)

    params["bn_gamma"] = jnp.pad(jnp.ones((1, 108), jnp.float32),
                                 ((0, 0), (0, HP - 108)))
    params["bn_beta"] = jnp.zeros((1, HP), jnp.float32)

    k1 = 56.0 ** -0.5
    fc1_w = _uniform(next(keys), (32, 56), k1).T                   # (56, 32)
    fc1_b = _uniform(next(keys), (32,), k1)
    k2 = 32.0 ** -0.5
    fc2_w = _uniform(next(keys), (outputdim, 32), k2).T            # (32, outputdim)
    fc2_b = _uniform(next(keys), (outputdim,), k2)

    params["fc1_w"] = jnp.pad(fc1_w, ((0, HP - 56), (0, HP - 32)))
    params["fc1_b"] = jnp.pad(fc1_b.reshape(1, 32), ((0, 0), (0, HP - 32)))
    params["fc2_w"] = jnp.pad(fc2_w, ((0, HP - 32), (0, HP - outputdim)))
    params["fc2_b"] = jnp.pad(fc2_b.reshape(1, outputdim),
                              ((0, 0), (0, HP - outputdim)))
    return params


# ---------------------------------------------------------------------------
# Full forward pass (matches LSTM.forward with default zero initial states)
# ---------------------------------------------------------------------------

def _round_up(n, m):
    return ((n + m - 1) // m) * m


@functools.partial(jax.jit, static_argnames=("outputdim",))
def lstm_model_forward(params, x, outputdim):
    B, T, Din = x.shape
    L = params["wih1"].shape[0]
    Bp = _round_up(max(B, 8), 8)

    # batch_first -> time-major, pad batch to 8 sublanes and channels to 128 lanes.
    x_tm = jnp.transpose(x, (1, 0, 2)).astype(jnp.float32)         # (T, B, Din)
    x_pad = jnp.pad(x_tm, ((0, 0), (0, Bp - B), (0, HP - Din)))    # (T, Bp, 128)

    kernel = _build_fused_kernel(T, Bp, B, L)

    # Explicit scoped-VMEM budget: scratch (seq + xproj, f32) with generous headroom,
    # clamped to stay within every generation's physical VMEM.
    scratch_bytes = 4 * T * Bp * (HP + GP)
    vmem_limit = int(min(64 << 20, max(16 << 20, 4 * scratch_bytes)))

    out_pad, h1p, c1p, h2p, c2p = pl.pallas_call(
        kernel,
        out_shape=(jax.ShapeDtypeStruct((Bp, HP), jnp.float32),
                   jax.ShapeDtypeStruct((L, Bp, HP), jnp.float32),
                   jax.ShapeDtypeStruct((L, Bp, HP), jnp.float32),
                   jax.ShapeDtypeStruct((L, Bp, HP), jnp.float32),
                   jax.ShapeDtypeStruct((L, Bp, HP), jnp.float32)),
        in_specs=[_VMEM_SPEC] * 13,
        out_specs=(_VMEM_SPEC,) * 5,
        scratch_shapes=[pltpu.VMEM((T, Bp, HP), jnp.float32),      # resident sequence
                        pltpu.VMEM((T, Bp, GP), jnp.float32)],     # hoisted input proj
        compiler_params=pltpu.CompilerParams(vmem_limit_bytes=vmem_limit),
    )(x_pad,
      params["wih1"], params["whh1"], params["b1"],
      params["wih2"], params["whh2"], params["b2"],
      params["bn_gamma"], params["bn_beta"],
      params["fc1_w"], params["fc1_b"], params["fc2_w"], params["fc2_b"])

    out = out_pad[:B, :outputdim]
    h1 = h1p[:, :B, :108]
    c1 = c1p[:, :B, :108]
    h2 = h2p[:, :B, :56]
    c2 = c2p[:, :B, :56]
    return out, h1, c1, h2, c2


# ---------------------------------------------------------------------------

if __name__ == "__main__":
    inputdim, outputdim, layerdim, dropout = 16, 10, 2, 0.5
    batch, seq = 2, 8

    key = jax.random.PRNGKey(0)
    pkey, xkey = jax.random.split(key)
    params = init_params(pkey, inputdim, outputdim, layerdim)
    x = jax.random.normal(xkey, (batch, seq, inputdim), jnp.float32)

    out, h1, c1, h2, c2 = lstm_model_forward(params, x, outputdim)
    jax.block_until_ready((out, h1, c1, h2, c2))

    assert out.shape == (batch, outputdim)
    assert h1.shape == (layerdim, batch, 108) and c1.shape == (layerdim, batch, 108)
    assert h2.shape == (layerdim, batch, 56) and c2.shape == (layerdim, batch, 56)
    assert not bool(jnp.any(jnp.isnan(out)))
    print("KERNEL_OK")
</pallas_src>

<mosaic_0001>
module attributes {stable_mosaic.version = 11 : i64} {
  func.func @kernel(%arg0: memref<8x8x128xf32, #tpu.memory_space<vmem>>, %arg1: memref<2x128x512xbf16, #tpu.memory_space<vmem>>, %arg2: memref<2x128x512xbf16, #tpu.memory_space<vmem>>, %arg3: memref<2x1x512xf32, #tpu.memory_space<vmem>>, %arg4: memref<2x128x512xbf16, #tpu.memory_space<vmem>>, %arg5: memref<2x128x512xbf16, #tpu.memory_space<vmem>>, %arg6: memref<2x1x512xf32, #tpu.memory_space<vmem>>, %arg7: memref<1x128xf32, #tpu.memory_space<vmem>>, %arg8: memref<1x128xf32, #tpu.memory_space<vmem>>, %arg9: memref<128x128xf32, #tpu.memory_space<vmem>>, %arg10: memref<1x128xf32, #tpu.memory_space<vmem>>, %arg11: memref<128x128xf32, #tpu.memory_space<vmem>>, %arg12: memref<1x128xf32, #tpu.memory_space<vmem>>, %arg13: memref<8x128xf32, #tpu.memory_space<vmem>>, %arg14: memref<2x8x128xf32, #tpu.memory_space<vmem>>, %arg15: memref<2x8x128xf32, #tpu.memory_space<vmem>>, %arg16: memref<2x8x128xf32, #tpu.memory_space<vmem>>, %arg17: memref<2x8x128xf32, #tpu.memory_space<vmem>>, %arg18: memref<8x8x128xf32, #tpu.memory_space<vmem>>, %arg19: memref<8x8x512xf32, #tpu.memory_space<vmem>>) attributes {dimension_semantics = [], scalar_prefetch = 0 : i64, scratch_operands = 2 : i64, tpu.core_type = #tpu.core_type<tc>} {
    %c0 = arith.constant 0 : index
    %c0_0 = arith.constant 0 : index
    %c0_1 = arith.constant 0 : index
    %0 = vector.load %arg1[%c0, %c0_0, %c0_1] : memref<2x128x512xbf16, #tpu.memory_space<vmem>>, vector<1x128x512xbf16>
    %1 = vector.shape_cast %0 : vector<1x128x512xbf16> to vector<128x512xbf16>
    %c0_2 = arith.constant 0 : index
    %c0_3 = arith.constant 0 : index
    %c0_4 = arith.constant 0 : index
    %2 = vector.load %arg2[%c0_2, %c0_3, %c0_4] : memref<2x128x512xbf16, #tpu.memory_space<vmem>>, vector<1x128x512xbf16>
    %3 = vector.shape_cast %2 : vector<1x128x512xbf16> to vector<128x512xbf16>
    %c0_5 = arith.constant 0 : index
    %c0_6 = arith.constant 0 : index
    %c0_7 = arith.constant 0 : index
    %4 = vector.load %arg3[%c0_5, %c0_6, %c0_7] : memref<2x1x512xf32, #tpu.memory_space<vmem>>, vector<1x1x512xf32>
    %5 = vector.shape_cast %4 : vector<1x1x512xf32> to vector<1x512xf32>
    %c0_8 = arith.constant 0 : index
    %c0_9 = arith.constant 0 : index
    %c0_10 = arith.constant 0 : index
    %6 = vector.load %arg0[%c0_8, %c0_9, %c0_10] : memref<8x8x128xf32, #tpu.memory_space<vmem>>, vector<8x8x128xf32>
    %7 = vector.shape_cast %6 : vector<8x8x128xf32> to vector<64x128xf32>
    %8 = arith.truncf %7 : vector<64x128xf32> to vector<64x128xbf16>
    %cst = arith.constant dense<0.000000e+00> : vector<64x512xf32>
    %9 = tpu.matmul %8, %1, %cst {dimension_numbers = #tpu.dot_dimension_numbers<[1], [0], [0], [1], [0, 0, 1, 1], [], []>} : vector<64x128xbf16>, vector<128x512xbf16>, vector<64x512xf32> -> vector<64x512xf32>
    %10 = vector.broadcast %5 : vector<1x512xf32> to vector<64x512xf32>
    %11 = arith.addf %9, %10 : vector<64x512xf32>
    %12 = vector.shape_cast %11 : vector<64x512xf32> to vector<8x8x512xf32>
    %c0_11 = arith.constant 0 : index
    %c0_12 = arith.constant 0 : index
    %c0_13 = arith.constant 0 : index
    %13 = vector.load %arg19[%c0_11, %c0_12, %c0_13] : memref<8x8x512xf32, #tpu.memory_space<vmem>>, vector<8x8x512xf32>
    tpu.vector_store %arg19[%c0_11, %c0_12, %c0_13], %12 {strides = array<i32>} : memref<8x8x512xf32, #tpu.memory_space<vmem>>, vector<8x8x512xf32>,
    %cst_14 = arith.constant 0.000000e+00 : f32
    %14 = vector.broadcast %cst_14 : f32 to vector<8x128xf32>
    %c0_i32 = arith.constant 0 : i32
    %15 = arith.index_cast %c0_i32 : i32 to index
    %c0_15 = arith.constant 0 : index
    %c0_16 = arith.constant 0 : index
    %16 = vector.load %arg19[%15, %c0_15, %c0_16] : memref<8x8x512xf32, #tpu.memory_space<vmem>>, vector<1x8x512xf32>
    %17 = vector.shape_cast %16 : vector<1x8x512xf32> to vector<8x512xf32>
    %18 = arith.truncf %14 : vector<8x128xf32> to vector<8x128xbf16>
    %cst_17 = arith.constant dense<0.000000e+00> : vector<8x512xf32>
    %19 = tpu.matmul %18, %3, %cst_17 {dimension_numbers = #tpu.dot_dimension_numbers<[1], [0], [0], [1], [0, 0, 1, 1], [], []>} : vector<8x128xbf16>, vector<128x512xbf16>, vector<8x512xf32> -> vector<8x512xf32>
    %20 = arith.addf %17, %19 : vector<8x512xf32>
    %21 = vector.extract_strided_slice %20 {offsets = [0, 0], sizes = [8, 384], strides = [1, 1]} : vector<8x512xf32> to vector<8x384xf32>
    %22 = arith.negf %21 : vector<8x384xf32>
    %23 = math.exp %22 : vector<8x384xf32>
    %cst_18 = arith.constant 1.000000e+00 : f32
    %24 = vector.broadcast %cst_18 : f32 to vector<8x384xf32>
    %25 = arith.addf %24, %23 : vector<8x384xf32>
    %26 = arith.divf %24, %25 : vector<8x384xf32>
    %27 = vector.extract_strided_slice %26 {offsets = [0, 0], sizes = [8, 128], strides = [1, 1]} : vector<8x384xf32> to vector<8x128xf32>
    %28 = vector.extract_strided_slice %26 {offsets = [0, 128], sizes = [8, 128], strides = [1, 1]} : vector<8x384xf32> to vector<8x128xf32>
    %29 = vector.extract_strided_slice %26 {offsets = [0, 256], sizes = [8, 128], strides = [1, 1]} : vector<8x384xf32> to vector<8x128xf32>
    %30 = vector.extract_strided_slice %20 {offsets = [0, 384], sizes = [8, 128], strides = [1, 1]} : vector<8x512xf32> to vector<8x128xf32>
    %31 = math.tanh %30 : vector<8x128xf32>
    %32 = arith.mulf %28, %14 : vector<8x128xf32>
    %33 = arith.mulf %27, %31 : vector<8x128xf32>
    %34 = arith.addf %32, %33 : vector<8x128xf32>
    %35 = math.tanh %34 : vector<8x128xf32>
    %36 = arith.mulf %29, %35 : vector<8x128xf32>
    %37 = arith.index_cast %c0_i32 : i32 to index
    %c0_19 = arith.constant 0 : index
    %c0_20 = arith.constant 0 : index
    %38 = vector.load %arg18[%37, %c0_19, %c0_20] : memref<8x8x128xf32, #tpu.memory_space<vmem>>, vector<1x8x128xf32>
    %39 = vector.shape_cast %38 : vector<1x8x128xf32> to vector<8x128xf32>
    %40 = vector.shape_cast %36 : vector<8x128xf32> to vector<1x8x128xf32>
    tpu.vector_store %arg18[%37, %c0_19, %c0_20], %40 {strides = array<i32>} : memref<8x8x128xf32, #tpu.memory_space<vmem>>, vector<1x8x128xf32>,
    %c1_i32 = arith.constant 1 : i32
    %41 = arith.index_cast %c1_i32 : i32 to index
    %c0_21 = arith.constant 0 : index
    %c0_22 = arith.constant 0 : index
    %42 = vector.load %arg19[%41, %c0_21, %c0_22] : memref<8x8x512xf32, #tpu.memory_space<vmem>>, vector<1x8x512xf32>
    %43 = vector.shape_cast %42 : vector<1x8x512xf32> to vector<8x512xf32>
    %44 = arith.truncf %36 : vector<8x128xf32> to vector<8x128xbf16>
    %cst_23 = arith.constant dense<0.000000e+00> : vector<8x512xf32>
    %45 = tpu.matmul %44, %3, %cst_23 {dimension_numbers = #tpu.dot_dimension_numbers<[1], [0], [0], [1], [0, 0, 1, 1], [], []>} : vector<8x128xbf16>, vector<128x512xbf16>, vector<8x512xf32> -> vector<8x512xf32>
    %46 = arith.addf %43, %45 : vector<8x512xf32>
    %47 = vector.extract_strided_slice %46 {offsets = [0, 0], sizes = [8, 384], strides = [1, 1]} : vector<8x512xf32> to vector<8x384xf32>
    %48 = arith.negf %47 : vector<8x384xf32>
    %49 = math.exp %48 : vector<8x384xf32>
    %cst_24 = arith.constant 1.000000e+00 : f32
    %50 = vector.broadcast %cst_24 : f32 to vector<8x384xf32>
    %51 = arith.addf %50, %49 : vector<8x384xf32>
    %52 = arith.divf %50, %51 : vector<8x384xf32>
    %53 = vector.extract_strided_slice %52 {offsets = [0, 0], sizes = [8, 128], strides = [1, 1]} : vector<8x384xf32> to vector<8x128xf32>
    %54 = vector.extract_strided_slice %52 {offsets = [0, 128], sizes = [8, 128], strides = [1, 1]} : vector<8x384xf32> to vector<8x128xf32>
    %55 = vector.extract_strided_slice %52 {offsets = [0, 256], sizes = [8, 128], strides = [1, 1]} : vector<8x384xf32> to vector<8x128xf32>
    %56 = vector.extract_strided_slice %46 {offsets = [0, 384], sizes = [8, 128], strides = [1, 1]} : vector<8x512xf32> to vector<8x128xf32>
    %57 = math.tanh %56 : vector<8x128xf32>
    %58 = arith.mulf %54, %34 : vector<8x128xf32>
    %59 = arith.mulf %53, %57 : vector<8x128xf32>
    %60 = arith.addf %58, %59 : vector<8x128xf32>
    %61 = math.tanh %60 : vector<8x128xf32>
    %62 = arith.mulf %55, %61 : vector<8x128xf32>
    %63 = arith.index_cast %c1_i32 : i32 to index
    %c0_25 = arith.constant 0 : index
    %c0_26 = arith.constant 0 : index
    %64 = vector.load %arg18[%63, %c0_25, %c0_26] : memref<8x8x128xf32, #tpu.memory_space<vmem>>, vector<1x8x128xf32>
    %65 = vector.shape_cast %64 : vector<1x8x128xf32> to vector<8x128xf32>
    %66 = vector.shape_cast %62 : vector<8x128xf32> to vector<1x8x128xf32>
    tpu.vector_store %arg18[%63, %c0_25, %c0_26], %66 {strides = array<i32>} : memref<8x8x128xf32, #tpu.memory_space<vmem>>, vector<1x8x128xf32>,
    %c2_i32 = arith.constant 2 : i32
    %67 = arith.index_cast %c2_i32 : i32 to index
    %c0_27 = arith.constant 0 : index
    %c0_28 = arith.constant 0 : index
    %68 = vector.load %arg19[%67, %c0_27, %c0_28] : memref<8x8x512xf32, #tpu.memory_space<vmem>>, vector<1x8x512xf32>
    %69 = vector.shape_cast %68 : vector<1x8x512xf32> to vector<8x512xf32>
    %70 = arith.truncf %62 : vector<8x128xf32> to vector<8x128xbf16>
    %cst_29 = arith.constant dense<0.000000e+00> : vector<8x512xf32>
    %71 = tpu.matmul %70, %3, %cst_29 {dimension_numbers = #tpu.dot_dimension_numbers<[1], [0], [0], [1], [0, 0, 1, 1], [], []>} : vector<8x128xbf16>, vector<128x512xbf16>, vector<8x512xf32> -> vector<8x512xf32>
    %72 = arith.addf %69, %71 : vector<8x512xf32>
    %73 = vector.extract_strided_slice %72 {offsets = [0, 0], sizes = [8, 384], strides = [1, 1]} : vector<8x512xf32> to vector<8x384xf32>
    %74 = arith.negf %73 : vector<8x384xf32>
    %75 = math.exp %74 : vector<8x384xf32>
    %cst_30 = arith.constant 1.000000e+00 : f32
    %76 = vector.broadcast %cst_30 : f32 to vector<8x384xf32>
    %77 = arith.addf %76, %75 : vector<8x384xf32>
    %78 = arith.divf %76, %77 : vector<8x384xf32>
    %79 = vector.extract_strided_slice %78 {offsets = [0, 0], sizes = [8, 128], strides = [1, 1]} : vector<8x384xf32> to vector<8x128xf32>
    %80 = vector.extract_strided_slice %78 {offsets = [0, 128], sizes = [8, 128], strides = [1, 1]} : vector<8x384xf32> to vector<8x128xf32>
    %81 = vector.extract_strided_slice %78 {offsets = [0, 256], sizes = [8, 128], strides = [1, 1]} : vector<8x384xf32> to vector<8x128xf32>
    %82 = vector.extract_strided_slice %72 {offsets = [0, 384], sizes = [8, 128], strides = [1, 1]} : vector<8x512xf32> to vector<8x128xf32>
    %83 = math.tanh %82 : vector<8x128xf32>
    %84 = arith.mulf %80, %60 : vector<8x128xf32>
    %85 = arith.mulf %79, %83 : vector<8x128xf32>
    %86 = arith.addf %84, %85 : vector<8x128xf32>
    %87 = math.tanh %86 : vector<8x128xf32>
    %88 = arith.mulf %81, %87 : vector<8x128xf32>
    %89 = arith.index_cast %c2_i32 : i32 to index
    %c0_31 = arith.constant 0 : index
    %c0_32 = arith.constant 0 : index
    %90 = vector.load %arg18[%89, %c0_31, %c0_32] : memref<8x8x128xf32, #tpu.memory_space<vmem>>, vector<1x8x128xf32>
    %91 = vector.shape_cast %90 : vector<1x8x128xf32> to vector<8x128xf32>
    %92 = vector.shape_cast %88 : vector<8x128xf32> to vector<1x8x128xf32>
    tpu.vector_store %arg18[%89, %c0_31, %c0_32], %92 {strides = array<i32>} : memref<8x8x128xf32, #tpu.memory_space<vmem>>, vector<1x8x128xf32>,
    %c3_i32 = arith.constant 3 : i32
    %93 = arith.index_cast %c3_i32 : i32 to index
    %c0_33 = arith.constant 0 : index
    %c0_34 = arith.constant 0 : index
    %94 = vector.load %arg19[%93, %c0_33, %c0_34] : memref<8x8x512xf32, #tpu.memory_space<vmem>>, vector<1x8x512xf32>
    %95 = vector.shape_cast %94 : vector<1x8x512xf32> to vector<8x512xf32>
    %96 = arith.truncf %88 : vector<8x128xf32> to vector<8x128xbf16>
    %cst_35 = arith.constant dense<0.000000e+00> : vector<8x512xf32>
    %97 = tpu.matmul %96, %3, %cst_35 {dimension_numbers = #tpu.dot_dimension_numbers<[1], [0], [0], [1], [0, 0, 1, 1], [], []>} : vector<8x128xbf16>, vector<128x512xbf16>, vector<8x512xf32> -> vector<8x512xf32>
    %98 = arith.addf %95, %97 : vector<8x512xf32>
    %99 = vector.extract_strided_slice %98 {offsets = [0, 0], sizes = [8, 384], strides = [1, 1]} : vector<8x512xf32> to vector<8x384xf32>
    %100 = arith.negf %99 : vector<8x384xf32>
    %101 = math.exp %100 : vector<8x384xf32>
    %cst_36 = arith.constant 1.000000e+00 : f32
    %102 = vector.broadcast %cst_36 : f32 to vector<8x384xf32>
    %103 = arith.addf %102, %101 : vector<8x384xf32>
    %104 = arith.divf %102, %103 : vector<8x384xf32>
    %105 = vector.extract_strided_slice %104 {offsets = [0, 0], sizes = [8, 128], strides = [1, 1]} : vector<8x384xf32> to vector<8x128xf32>
    %106 = vector.extract_strided_slice %104 {offsets = [0, 128], sizes = [8, 128], strides = [1, 1]} : vector<8x384xf32> to vector<8x128xf32>
    %107 = vector.extract_strided_slice %104 {offsets = [0, 256], sizes = [8, 128], strides = [1, 1]} : vector<8x384xf32> to vector<8x128xf32>
    %108 = vector.extract_strided_slice %98 {offsets = [0, 384], sizes = [8, 128], strides = [1, 1]} : vector<8x512xf32> to vector<8x128xf32>
    %109 = math.tanh %108 : vector<8x128xf32>
    %110 = arith.mulf %106, %86 : vector<8x128xf32>
    %111 = arith.mulf %105, %109 : vector<8x128xf32>
    %112 = arith.addf %110, %111 : vector<8x128xf32>
    %113 = math.tanh %112 : vector<8x128xf32>
    %114 = arith.mulf %107, %113 : vector<8x128xf32>
    %115 = arith.index_cast %c3_i32 : i32 to index
    %c0_37 = arith.constant 0 : index
    %c0_38 = arith.constant 0 : index
    %116 = vector.load %arg18[%115, %c0_37, %c0_38] : memref<8x8x128xf32, #tpu.memory_space<vmem>>, vector<1x8x128xf32>
    %117 = vector.shape_cast %116 : vector<1x8x128xf32> to vector<8x128xf32>
    %118 = vector.shape_cast %114 : vector<8x128xf32> to vector<1x8x128xf32>
    tpu.vector_store %arg18[%115, %c0_37, %c0_38], %118 {strides = array<i32>} : memref<8x8x128xf32, #tpu.memory_space<vmem>>, vector<1x8x128xf32>,
    %c4_i32 = arith.constant 4 : i32
    %119 = arith.index_cast %c4_i32 : i32 to index
    %c0_39 = arith.constant 0 : index
    %c0_40 = arith.constant 0 : index
    %120 = vector.load %arg19[%119, %c0_39, %c0_40] : memref<8x8x512xf32, #tpu.memory_space<vmem>>, vector<1x8x512xf32>
    %121 = vector.shape_cast %120 : vector<1x8x512xf32> to vector<8x512xf32>
    %122 = arith.truncf %114 : vector<8x128xf32> to vector<8x128xbf16>
    %cst_41 = arith.constant dense<0.000000e+00> : vector<8x512xf32>
    %123 = tpu.matmul %122, %3, %cst_41 {dimension_numbers = #tpu.dot_dimension_numbers<[1], [0], [0], [1], [0, 0, 1, 1], [], []>} : vector<8x128xbf16>, vector<128x512xbf16>, vector<8x512xf32> -> vector<8x512xf32>
    %124 = arith.addf %121, %123 : vector<8x512xf32>
    %125 = vector.extract_strided_slice %124 {offsets = [0, 0], sizes = [8, 384], strides = [1, 1]} : vector<8x512xf32> to vector<8x384xf32>
    %126 = arith.negf %125 : vector<8x384xf32>
    %127 = math.exp %126 : vector<8x384xf32>
    %cst_42 = arith.constant 1.000000e+00 : f32
    %128 = vector.broadcast %cst_42 : f32 to vector<8x384xf32>
    %129 = arith.addf %128, %127 : vector<8x384xf32>
    %130 = arith.divf %128, %129 : vector<8x384xf32>
    %131 = vector.extract_strided_slice %130 {offsets = [0, 0], sizes = [8, 128], strides = [1, 1]} : vector<8x384xf32> to vector<8x128xf32>
    %132 = vector.extract_strided_slice %130 {offsets = [0, 128], sizes = [8, 128], strides = [1, 1]} : vector<8x384xf32> to vector<8x128xf32>
    %133 = vector.extract_strided_slice %130 {offsets = [0, 256], sizes = [8, 128], strides = [1, 1]} : vector<8x384xf32> to vector<8x128xf32>
    %134 = vector.extract_strided_slice %124 {offsets = [0, 384], sizes = [8, 128], strides = [1, 1]} : vector<8x512xf32> to vector<8x128xf32>
    %135 = math.tanh %134 : vector<8x128xf32>
    %136 = arith.mulf %132, %112 : vector<8x128xf32>
    %137 = arith.mulf %131, %135 : vector<8x128xf32>
    %138 = arith.addf %136, %137 : vector<8x128xf32>
    %139 = math.tanh %138 : vector<8x128xf32>
    %140 = arith.mulf %133, %139 : vector<8x128xf32>
    %141 = arith.index_cast %c4_i32 : i32 to index
    %c0_43 = arith.constant 0 : index
    %c0_44 = arith.constant 0 : index
    %142 = vector.load %arg18[%141, %c0_43, %c0_44] : memref<8x8x128xf32, #tpu.memory_space<vmem>>, vector<1x8x128xf32>
    %143 = vector.shape_cast %142 : vector<1x8x128xf32> to vector<8x128xf32>
    %144 = vector.shape_cast %140 : vector<8x128xf32> to vector<1x8x128xf32>
    tpu.vector_store %arg18[%141, %c0_43, %c0_44], %144 {strides = array<i32>} : memref<8x8x128xf32, #tpu.memory_space<vmem>>, vector<1x8x128xf32>,
    %c5_i32 = arith.constant 5 : i32
    %145 = arith.index_cast %c5_i32 : i32 to index
    %c0_45 = arith.constant 0 : index
    %c0_46 = arith.constant 0 : index
    %146 = vector.load %arg19[%145, %c0_45, %c0_46] : memref<8x8x512xf32, #tpu.memory_space<vmem>>, vector<1x8x512xf32>
    %147 = vector.shape_cast %146 : vector<1x8x512xf32> to vector<8x512xf32>
    %148 = arith.truncf %140 : vector<8x128xf32> to vector<8x128xbf16>
    %cst_47 = arith.constant dense<0.000000e+00> : vector<8x512xf32>
    %149 = tpu.matmul %148, %3, %cst_47 {dimension_numbers = #tpu.dot_dimension_numbers<[1], [0], [0], [1], [0, 0, 1, 1], [], []>} : vector<8x128xbf16>, vector<128x512xbf16>, vector<8x512xf32> -> vector<8x512xf32>
    %150 = arith.addf %147, %149 : vector<8x512xf32>
    %151 = vector.extract_strided_slice %150 {offsets = [0, 0], sizes = [8, 384], strides = [1, 1]} : vector<8x512xf32> to vector<8x384xf32>
    %152 = arith.negf %151 : vector<8x384xf32>
    %153 = math.exp %152 : vector<8x384xf32>
    %cst_48 = arith.constant 1.000000e+00 : f32
    %154 = vector.broadcast %cst_48 : f32 to vector<8x384xf32>
    %155 = arith.addf %154, %153 : vector<8x384xf32>
    %156 = arith.divf %154, %155 : vector<8x384xf32>
    %157 = vector.extract_strided_slice %156 {offsets = [0, 0], sizes = [8, 128], strides = [1, 1]} : vector<8x384xf32> to vector<8x128xf32>
    %158 = vector.extract_strided_slice %156 {offsets = [0, 128], sizes = [8, 128], strides = [1, 1]} : vector<8x384xf32> to vector<8x128xf32>
    %159 = vector.extract_strided_slice %156 {offsets = [0, 256], sizes = [8, 128], strides = [1, 1]} : vector<8x384xf32> to vector<8x128xf32>
    %160 = vector.extract_strided_slice %150 {offsets = [0, 384], sizes = [8, 128], strides = [1, 1]} : vector<8x512xf32> to vector<8x128xf32>
    %161 = math.tanh %160 : vector<8x128xf32>
    %162 = arith.mulf %158, %138 : vector<8x128xf32>
    %163 = arith.mulf %157, %161 : vector<8x128xf32>
    %164 = arith.addf %162, %163 : vector<8x128xf32>
    %165 = math.tanh %164 : vector<8x128xf32>
    %166 = arith.mulf %159, %165 : vector<8x128xf32>
    %167 = arith.index_cast %c5_i32 : i32 to index
    %c0_49 = arith.constant 0 : index
    %c0_50 = arith.constant 0 : index
    %168 = vector.load %arg18[%167, %c0_49, %c0_50] : memref<8x8x128xf32, #tpu.memory_space<vmem>>, vector<1x8x128xf32>
    %169 = vector.shape_cast %168 : vector<1x8x128xf32> to vector<8x128xf32>
    %170 = vector.shape_cast %166 : vector<8x128xf32> to vector<1x8x128xf32>
    tpu.vector_store %arg18[%167, %c0_49, %c0_50], %170 {strides = array<i32>} : memref<8x8x128xf32, #tpu.memory_space<vmem>>, vector<1x8x128xf32>,
    %c6_i32 = arith.constant 6 : i32
    %171 = arith.index_cast %c6_i32 : i32 to index
    %c0_51 = arith.constant 0 : index
    %c0_52 = arith.constant 0 : index
    %172 = vector.load %arg19[%171, %c0_51, %c0_52] : memref<8x8x512xf32, #tpu.memory_space<vmem>>, vector<1x8x512xf32>
    %173 = vector.shape_cast %172 : vector<1x8x512xf32> to vector<8x512xf32>
    %174 = arith.truncf %166 : vector<8x128xf32> to vector<8x128xbf16>
    %cst_53 = arith.constant dense<0.000000e+00> : vector<8x512xf32>
    %175 = tpu.matmul %174, %3, %cst_53 {dimension_numbers = #tpu.dot_dimension_numbers<[1], [0], [0], [1], [0, 0, 1, 1], [], []>} : vector<8x128xbf16>, vector<128x512xbf16>, vector<8x512xf32> -> vector<8x512xf32>
    %176 = arith.addf %173, %175 : vector<8x512xf32>
    %177 = vector.extract_strided_slice %176 {offsets = [0, 0], sizes = [8, 384], strides = [1, 1]} : vector<8x512xf32> to vector<8x384xf32>
    %178 = arith.negf %177 : vector<8x384xf32>
    %179 = math.exp %178 : vector<8x384xf32>
    %cst_54 = arith.constant 1.000000e+00 : f32
    %180 = vector.broadcast %cst_54 : f32 to vector<8x384xf32>
    %181 = arith.addf %180, %179 : vector<8x384xf32>
    %182 = arith.divf %180, %181 : vector<8x384xf32>
    %183 = vector.extract_strided_slice %182 {offsets = [0, 0], sizes = [8, 128], strides = [1, 1]} : vector<8x384xf32> to vector<8x128xf32>
    %184 = vector.extract_strided_slice %182 {offsets = [0, 128], sizes = [8, 128], strides = [1, 1]} : vector<8x384xf32> to vector<8x128xf32>
    %185 = vector.extract_strided_slice %182 {offsets = [0, 256], sizes = [8, 128], strides = [1, 1]} : vector<8x384xf32> to vector<8x128xf32>
    %186 = vector.extract_strided_slice %176 {offsets = [0, 384], sizes = [8, 128], strides = [1, 1]} : vector<8x512xf32> to vector<8x128xf32>
    %187 = math.tanh %186 : vector<8x128xf32>
    %188 = arith.mulf %184, %164 : vector<8x128xf32>
    %189 = arith.mulf %183, %187 : vector<8x128xf32>
    %190 = arith.addf %188, %189 : vector<8x128xf32>
    %191 = math.tanh %190 : vector<8x128xf32>
    %192 = arith.mulf %185, %191 : vector<8x128xf32>
    %193 = arith.index_cast %c6_i32 : i32 to index
    %c0_55 = arith.constant 0 : index
    %c0_56 = arith.constant 0 : index
    %194 = vector.load %arg18[%193, %c0_55, %c0_56] : memref<8x8x128xf32, #tpu.memory_space<vmem>>, vector<1x8x128xf32>
    %195 = vector.shape_cast %194 : vector<1x8x128xf32> to vector<8x128xf32>
    %196 = vector.shape_cast %192 : vector<8x128xf32> to vector<1x8x128xf32>
    tpu.vector_store %arg18[%193, %c0_55, %c0_56], %196 {strides = array<i32>} : memref<8x8x128xf32, #tpu.memory_space<vmem>>, vector<1x8x128xf32>,
    %c7_i32 = arith.constant 7 : i32
    %197 = arith.index_cast %c7_i32 : i32 to index
    %c0_57 = arith.constant 0 : index
    %c0_58 = arith.constant 0 : index
    %198 = vector.load %arg19[%197, %c0_57, %c0_58] : memref<8x8x512xf32, #tpu.memory_space<vmem>>, vector<1x8x512xf32>
    %199 = vector.shape_cast %198 : vector<1x8x512xf32> to vector<8x512xf32>
    %200 = arith.truncf %192 : vector<8x128xf32> to vector<8x128xbf16>
    %cst_59 = arith.constant dense<0.000000e+00> : vector<8x512xf32>
    %201 = tpu.matmul %200, %3, %cst_59 {dimension_numbers = #tpu.dot_dimension_numbers<[1], [0], [0], [1], [0, 0, 1, 1], [], []>} : vector<8x128xbf16>, vector<128x512xbf16>, vector<8x512xf32> -> vector<8x512xf32>
    %202 = arith.addf %199, %201 : vector<8x512xf32>
    %203 = vector.extract_strided_slice %202 {offsets = [0, 0], sizes = [8, 384], strides = [1, 1]} : vector<8x512xf32> to vector<8x384xf32>
    %204 = arith.negf %203 : vector<8x384xf32>
    %205 = math.exp %204 : vector<8x384xf32>
    %cst_60 = arith.constant 1.000000e+00 : f32
    %206 = vector.broadcast %cst_60 : f32 to vector<8x384xf32>
    %207 = arith.addf %206, %205 : vector<8x384xf32>
    %208 = arith.divf %206, %207 : vector<8x384xf32>
    %209 = vector.extract_strided_slice %208 {offsets = [0, 0], sizes = [8, 128], strides = [1, 1]} : vector<8x384xf32> to vector<8x128xf32>
    %210 = vector.extract_strided_slice %208 {offsets = [0, 128], sizes = [8, 128], strides = [1, 1]} : vector<8x384xf32> to vector<8x128xf32>
    %211 = vector.extract_strided_slice %208 {offsets = [0, 256], sizes = [8, 128], strides = [1, 1]} : vector<8x384xf32> to vector<8x128xf32>
    %212 = vector.extract_strided_slice %202 {offsets = [0, 384], sizes = [8, 128], strides = [1, 1]} : vector<8x512xf32> to vector<8x128xf32>
    %213 = math.tanh %212 : vector<8x128xf32>
    %214 = arith.mulf %210, %190 : vector<8x128xf32>
    %215 = arith.mulf %209, %213 : vector<8x128xf32>
    %216 = arith.addf %214, %215 : vector<8x128xf32>
    %217 = math.tanh %216 : vector<8x128xf32>
    %218 = arith.mulf %211, %217 : vector<8x128xf32>
    %219 = arith.index_cast %c7_i32 : i32 to index
    %c0_61 = arith.constant 0 : index
    %c0_62 = arith.constant 0 : index
    %220 = vector.load %arg18[%219, %c0_61, %c0_62] : memref<8x8x128xf32, #tpu.memory_space<vmem>>, vector<1x8x128xf32>
    %221 = vector.shape_cast %220 : vector<1x8x128xf32> to vector<8x128xf32>
    %222 = vector.shape_cast %218 : vector<8x128xf32> to vector<1x8x128xf32>
    tpu.vector_store %arg18[%219, %c0_61, %c0_62], %222 {strides = array<i32>} : memref<8x8x128xf32, #tpu.memory_space<vmem>>, vector<1x8x128xf32>,
    %c8_i32 = arith.constant 8 : i32
    %c0_63 = arith.constant 0 : index
    %c0_64 = arith.constant 0 : index
    %c0_65 = arith.constant 0 : index
    %223 = vector.load %arg14[%c0_63, %c0_64, %c0_65] : memref<2x8x128xf32, #tpu.memory_space<vmem>>, vector<1x8x128xf32>
    %224 = vector.shape_cast %223 : vector<1x8x128xf32> to vector<8x128xf32>
    %225 = vector.shape_cast %218 : vector<8x128xf32> to vector<1x8x128xf32>
    tpu.vector_store %arg14[%c0_63, %c0_64, %c0_65], %225 {strides = array<i32>} : memref<2x8x128xf32, #tpu.memory_space<vmem>>, vector<1x8x128xf32>,
    %c0_66 = arith.constant 0 : index
    %c0_67 = arith.constant 0 : index
    %c0_68 = arith.constant 0 : index
    %226 = vector.load %arg15[%c0_66, %c0_67, %c0_68] : memref<2x8x128xf32, #tpu.memory_space<vmem>>, vector<1x8x128xf32>
    %227 = vector.shape_cast %226 : vector<1x8x128xf32> to vector<8x128xf32>
    %228 = vector.shape_cast %216 : vector<8x128xf32> to vector<1x8x128xf32>
    tpu.vector_store %arg15[%c0_66, %c0_67, %c0_68], %228 {strides = array<i32>} : memref<2x8x128xf32, #tpu.memory_space<vmem>>, vector<1x8x128xf32>,
    %c1 = arith.constant 1 : index
    %c0_69 = arith.constant 0 : index
    %c0_70 = arith.constant 0 : index
    %229 = vector.load %arg1[%c1, %c0_69, %c0_70] : memref<2x128x512xbf16, #tpu.memory_space<vmem>>, vector<1x128x512xbf16>
    %230 = vector.shape_cast %229 : vector<1x128x512xbf16> to vector<128x512xbf16>
    %c1_71 = arith.constant 1 : index
    %c0_72 = arith.constant 0 : index
    %c0_73 = arith.constant 0 : index
    %231 = vector.load %arg2[%c1_71, %c0_72, %c0_73] : memref<2x128x512xbf16, #tpu.memory_space<vmem>>, vector<1x128x512xbf16>
    %232 = vector.shape_cast %231 : vector<1x128x512xbf16> to vector<128x512xbf16>
    %c1_74 = arith.constant 1 : index
    %c0_75 = arith.constant 0 : index
    %c0_76 = arith.constant 0 : index
    %233 = vector.load %arg3[%c1_74, %c0_75, %c0_76] : memref<2x1x512xf32, #tpu.memory_space<vmem>>, vector<1x1x512xf32>
    %234 = vector.shape_cast %233 : vector<1x1x512xf32> to vector<1x512xf32>
    %c0_77 = arith.constant 0 : index
    %c0_78 = arith.constant 0 : index
    %c0_79 = arith.constant 0 : index
    %235 = vector.load %arg18[%c0_77, %c0_78, %c0_79] : memref<8x8x128xf32, #tpu.memory_space<vmem>>, vector<8x8x128xf32>
    %236 = vector.shape_cast %235 : vector<8x8x128xf32> to vector<64x128xf32>
    %237 = arith.truncf %236 : vector<64x128xf32> to vector<64x128xbf16>
    %cst_80 = arith.constant dense<0.000000e+00> : vector<64x512xf32>
    %238 = tpu.matmul %237, %230, %cst_80 {dimension_numbers = #tpu.dot_dimension_numbers<[1], [0], [0], [1], [0, 0, 1, 1], [], []>} : vector<64x128xbf16>, vector<128x512xbf16>, vector<64x512xf32> -> vector<64x512xf32>
    %239 = vector.broadcast %234 : vector<1x512xf32> to vector<64x512xf32>
    %240 = arith.addf %238, %239 : vector<64x512xf32>
    %241 = vector.shape_cast %240 : vector<64x512xf32> to vector<8x8x512xf32>
    %c0_81 = arith.constant 0 : index
    %c0_82 = arith.constant 0 : index
    %c0_83 = arith.constant 0 : index
    %242 = vector.load %arg19[%c0_81, %c0_82, %c0_83] : memref<8x8x512xf32, #tpu.memory_space<vmem>>, vector<8x8x512xf32>
    tpu.vector_store %arg19[%c0_81, %c0_82, %c0_83], %241 {strides = array<i32>} : memref<8x8x512xf32, #tpu.memory_space<vmem>>, vector<8x8x512xf32>,
    %cst_84 = arith.constant 0.000000e+00 : f32
    %243 = vector.broadcast %cst_84 : f32 to vector<8x128xf32>
    %c0_i32_85 = arith.constant 0 : i32
    %244 = arith.index_cast %c0_i32_85 : i32 to index
    %c0_86 = arith.constant 0 : index
    %c0_87 = arith.constant 0 : index
    %245 = vector.load %arg19[%244, %c0_86, %c0_87] : memref<8x8x512xf32, #tpu.memory_space<vmem>>, vector<1x8x512xf32>
    %246 = vector.shape_cast %245 : vector<1x8x512xf32> to vector<8x512xf32>
    %247 = arith.truncf %243 : vector<8x128xf32> to vector<8x128xbf16>
    %cst_88 = arith.constant dense<0.000000e+00> : vector<8x512xf32>
    %248 = tpu.matmul %247, %232, %cst_88 {dimension_numbers = #tpu.dot_dimension_numbers<[1], [0], [0], [1], [0, 0, 1, 1], [], []>} : vector<8x128xbf16>, vector<128x512xbf16>, vector<8x512xf32> -> vector<8x512xf32>
    %249 = arith.addf %246, %248 : vector<8x512xf32>
    %250 = vector.extract_strided_slice %249 {offsets = [0, 0], sizes = [8, 384], strides = [1, 1]} : vector<8x512xf32> to vector<8x384xf32>
    %251 = arith.negf %250 : vector<8x384xf32>
    %252 = math.exp %251 : vector<8x384xf32>
    %cst_89 = arith.constant 1.000000e+00 : f32
    %253 = vector.broadcast %cst_89 : f32 to vector<8x384xf32>
    %254 = arith.addf %253, %252 : vector<8x384xf32>
    %255 = arith.divf %253, %254 : vector<8x384xf32>
    %256 = vector.extract_strided_slice %255 {offsets = [0, 0], sizes = [8, 128], strides = [1, 1]} : vector<8x384xf32> to vector<8x128xf32>
    %257 = vector.extract_strided_slice %255 {offsets = [0, 128], sizes = [8, 128], strides = [1, 1]} : vector<8x384xf32> to vector<8x128xf32>
    %258 = vector.extract_strided_slice %255 {offsets = [0, 256], sizes = [8, 128], strides = [1, 1]} : vector<8x384xf32> to vector<8x128xf32>
    %259 = vector.extract_strided_slice %249 {offsets = [0, 384], sizes = [8, 128], strides = [1, 1]} : vector<8x512xf32> to vector<8x128xf32>
    %260 = math.tanh %259 : vector<8x128xf32>
    %261 = arith.mulf %257, %243 : vector<8x128xf32>
    %262 = arith.mulf %256, %260 : vector<8x128xf32>
    %263 = arith.addf %261, %262 : vector<8x128xf32>
    %264 = math.tanh %263 : vector<8x128xf32>
    %265 = arith.mulf %258, %264 : vector<8x128xf32>
    %266 = arith.index_cast %c0_i32_85 : i32 to index
    %c0_90 = arith.constant 0 : index
    %c0_91 = arith.constant 0 : index
    %267 = vector.load %arg18[%266, %c0_90, %c0_91] : memref<8x8x128xf32, #tpu.memory_space<vmem>>, vector<1x8x128xf32>
    %268 = vector.shape_cast %267 : vector<1x8x128xf32> to vector<8x128xf32>
    %269 = vector.shape_cast %265 : vector<8x128xf32> to vector<1x8x128xf32>
    tpu.vector_store %arg18[%266, %c0_90, %c0_91], %269 {strides = array<i32>} : memref<8x8x128xf32, #tpu.memory_space<vmem>>, vector<1x8x128xf32>,
    %c1_i32_92 = arith.constant 1 : i32
    %270 = arith.index_cast %c1_i32_92 : i32 to index
    %c0_93 = arith.constant 0 : index
    %c0_94 = arith.constant 0 : index
    %271 = vector.load %arg19[%270, %c0_93, %c0_94] : memref<8x8x512xf32, #tpu.memory_space<vmem>>, vector<1x8x512xf32>
    %272 = vector.shape_cast %271 : vector<1x8x512xf32> to vector<8x512xf32>
    %273 = arith.truncf %265 : vector<8x128xf32> to vector<8x128xbf16>
    %cst_95 = arith.constant dense<0.000000e+00> : vector<8x512xf32>
    %274 = tpu.matmul %273, %232, %cst_95 {dimension_numbers = #tpu.dot_dimension_numbers<[1], [0], [0], [1], [0, 0, 1, 1], [], []>} : vector<8x128xbf16>, vector<128x512xbf16>, vector<8x512xf32> -> vector<8x512xf32>
    %275 = arith.addf %272, %274 : vector<8x512xf32>
    %276 = vector.extract_strided_slice %275 {offsets = [0, 0], sizes = [8, 384], strides = [1, 1]} : vector<8x512xf32> to vector<8x384xf32>
    %277 = arith.negf %276 : vector<8x384xf32>
    %278 = math.exp %277 : vector<8x384xf32>
    %cst_96 = arith.constant 1.000000e+00 : f32
    %279 = vector.broadcast %cst_96 : f32 to vector<8x384xf32>
    %280 = arith.addf %279, %278 : vector<8x384xf32>
    %281 = arith.divf %279, %280 : vector<8x384xf32>
    %282 = vector.extract_strided_slice %281 {offsets = [0, 0], sizes = [8, 128], strides = [1, 1]} : vector<8x384xf32> to vector<8x128xf32>
    %283 = vector.extract_strided_slice %281 {offsets = [0, 128], sizes = [8, 128], strides = [1, 1]} : vector<8x384xf32> to vector<8x128xf32>
    %284 = vector.extract_strided_slice %281 {offsets = [0, 256], sizes = [8, 128], strides = [1, 1]} : vector<8x384xf32> to vector<8x128xf32>
    %285 = vector.extract_strided_slice %275 {offsets = [0, 384], sizes = [8, 128], strides = [1, 1]} : vector<8x512xf32> to vector<8x128xf32>
    %286 = math.tanh %285 : vector<8x128xf32>
    %287 = arith.mulf %283, %263 : vector<8x128xf32>
    %288 = arith.mulf %282, %286 : vector<8x128xf32>
    %289 = arith.addf %287, %288 : vector<8x128xf32>
    %290 = math.tanh %289 : vector<8x128xf32>
    %291 = arith.mulf %284, %290 : vector<8x128xf32>
    %292 = arith.index_cast %c1_i32_92 : i32 to index
    %c0_97 = arith.constant 0 : index
    %c0_98 = arith.constant 0 : index
    %293 = vector.load %arg18[%292, %c0_97, %c0_98] : memref<8x8x128xf32, #tpu.memory_space<vmem>>, vector<1x8x128xf32>
    %294 = vector.shape_cast %293 : vector<1x8x128xf32> to vector<8x128xf32>
    %295 = vector.shape_cast %291 : vector<8x128xf32> to vector<1x8x128xf32>
    tpu.vector_store %arg18[%292, %c0_97, %c0_98], %295 {strides = array<i32>} : memref<8x8x128xf32, #tpu.memory_space<vmem>>, vector<1x8x128xf32>,
    %c2_i32_99 = arith.constant 2 : i32
    %296 = arith.index_cast %c2_i32_99 : i32 to index
    %c0_100 = arith.constant 0 : index
    %c0_101 = arith.constant 0 : index
    %297 = vector.load %arg19[%296, %c0_100, %c0_101] : memref<8x8x512xf32, #tpu.memory_space<vmem>>, vector<1x8x512xf32>
    %298 = vector.shape_cast %297 : vector<1x8x512xf32> to vector<8x512xf32>
    %299 = arith.truncf %291 : vector<8x128xf32> to vector<8x128xbf16>
    %cst_102 = arith.constant dense<0.000000e+00> : vector<8x512xf32>
    %300 = tpu.matmul %299, %232, %cst_102 {dimension_numbers = #tpu.dot_dimension_numbers<[1], [0], [0], [1], [0, 0, 1, 1], [], []>} : vector<8x128xbf16>, vector<128x512xbf16>, vector<8x512xf32> -> vector<8x512xf32>
    %301 = arith.addf %298, %300 : vector<8x512xf32>
    %302 = vector.extract_strided_slice %301 {offsets = [0, 0], sizes = [8, 384], strides = [1, 1]} : vector<8x512xf32> to vector<8x384xf32>
    %303 = arith.negf %302 : vector<8x384xf32>
    %304 = math.exp %303 : vector<8x384xf32>
    %cst_103 = arith.constant 1.000000e+00 : f32
    %305 = vector.broadcast %cst_103 : f32 to vector<8x384xf32>
    %306 = arith.addf %305, %304 : vector<8x384xf32>
    %307 = arith.divf %305, %306 : vector<8x384xf32>
    %308 = vector.extract_strided_slice %307 {offsets = [0, 0], sizes = [8, 128], strides = [1, 1]} : vector<8x384xf32> to vector<8x128xf32>
    %309 = vector.extract_strided_slice %307 {offsets = [0, 128], sizes = [8, 128], strides = [1, 1]} : vector<8x384xf32> to vector<8x128xf32>
    %310 = vector.extract_strided_slice %307 {offsets = [0, 256], sizes = [8, 128], strides = [1, 1]} : vector<8x384xf32> to vector<8x128xf32>
    %311 = vector.extract_strided_slice %301 {offsets = [0, 384], sizes = [8, 128], strides = [1, 1]} : vector<8x512xf32> to vector<8x128xf32>
    %312 = math.tanh %311 : vector<8x128xf32>
    %313 = arith.mulf %309, %289 : vector<8x128xf32>
    %314 = arith.mulf %308, %312 : vector<8x128xf32>
    %315 = arith.addf %313, %314 : vector<8x128xf32>
    %316 = math.tanh %315 : vector<8x128xf32>
    %317 = arith.mulf %310, %316 : vector<8x128xf32>
    %318 = arith.index_cast %c2_i32_99 : i32 to index
    %c0_104 = arith.constant 0 : index
    %c0_105 = arith.constant 0 : index
    %319 = vector.load %arg18[%318, %c0_104, %c0_105] : memref<8x8x128xf32, #tpu.memory_space<vmem>>, vector<1x8x128xf32>
    %320 = vector.shape_cast %319 : vector<1x8x128xf32> to vector<8x128xf32>
    %321 = vector.shape_cast %317 : vector<8x128xf32> to vector<1x8x128xf32>
    tpu.vector_store %arg18[%318, %c0_104, %c0_105], %321 {strides = array<i32>} : memref<8x8x128xf32, #tpu.memory_space<vmem>>, vector<1x8x128xf32>,
    %c3_i32_106 = arith.constant 3 : i32
    %322 = arith.index_cast %c3_i32_106 : i32 to index
    %c0_107 = arith.constant 0 : index
    %c0_108 = arith.constant 0 : index
    %323 = vector.load %arg19[%322, %c0_107, %c0_108] : memref<8x8x512xf32, #tpu.memory_space<vmem>>, vector<1x8x512xf32>
    %324 = vector.shape_cast %323 : vector<1x8x512xf32> to vector<8x512xf32>
    %325 = arith.truncf %317 : vector<8x128xf32> to vector<8x128xbf16>
    %cst_109 = arith.constant dense<0.000000e+00> : vector<8x512xf32>
    %326 = tpu.matmul %325, %232, %cst_109 {dimension_numbers = #tpu.dot_dimension_numbers<[1], [0], [0], [1], [0, 0, 1, 1], [], []>} : vector<8x128xbf16>, vector<128x512xbf16>, vector<8x512xf32> -> vector<8x512xf32>
    %327 = arith.addf %324, %326 : vector<8x512xf32>
    %328 = vector.extract_strided_slice %327 {offsets = [0, 0], sizes = [8, 384], strides = [1, 1]} : vector<8x512xf32> to vector<8x384xf32>
    %329 = arith.negf %328 : vector<8x384xf32>
    %330 = math.exp %329 : vector<8x384xf32>
    %cst_110 = arith.constant 1.000000e+00 : f32
    %331 = vector.broadcast %cst_110 : f32 to vector<8x384xf32>
    %332 = arith.addf %331, %330 : vector<8x384xf32>
    %333 = arith.divf %331, %332 : vector<8x384xf32>
    %334 = vector.extract_strided_slice %333 {offsets = [0, 0], sizes = [8, 128], strides = [1, 1]} : vector<8x384xf32> to vector<8x128xf32>
    %335 = vector.extract_strided_slice %333 {offsets = [0, 128], sizes = [8, 128], strides = [1, 1]} : vector<8x384xf32> to vector<8x128xf32>
    %336 = vector.extract_strided_slice %333 {offsets = [0, 256], sizes = [8, 128], strides = [1, 1]} : vector<8x384xf32> to vector<8x128xf32>
    %337 = vector.extract_strided_slice %327 {offsets = [0, 384], sizes = [8, 128], strides = [1, 1]} : vector<8x512xf32> to vector<8x128xf32>
    %338 = math.tanh %337 : vector<8x128xf32>
    %339 = arith.mulf %335, %315 : vector<8x128xf32>
    %340 = arith.mulf %334, %338 : vector<8x128xf32>
    %341 = arith.addf %339, %340 : vector<8x128xf32>
    %342 = math.tanh %341 : vector<8x128xf32>
    %343 = arith.mulf %336, %342 : vector<8x128xf32>
    %344 = arith.index_cast %c3_i32_106 : i32 to index
    %c0_111 = arith.constant 0 : index
    %c0_112 = arith.constant 0 : index
    %345 = vector.load %arg18[%344, %c0_111, %c0_112] : memref<8x8x128xf32, #tpu.memory_space<vmem>>, vector<1x8x128xf32>
    %346 = vector.shape_cast %345 : vector<1x8x128xf32> to vector<8x128xf32>
    %347 = vector.shape_cast %343 : vector<8x128xf32> to vector<1x8x128xf32>
    tpu.vector_store %arg18[%344, %c0_111, %c0_112], %347 {strides = array<i32>} : memref<8x8x128xf32, #tpu.memory_space<vmem>>, vector<1x8x128xf32>,
    %c4_i32_113 = arith.constant 4 : i32
    %348 = arith.index_cast %c4_i32_113 : i32 to index
    %c0_114 = arith.constant 0 : index
    %c0_115 = arith.constant 0 : index
    %349 = vector.load %arg19[%348, %c0_114, %c0_115] : memref<8x8x512xf32, #tpu.memory_space<vmem>>, vector<1x8x512xf32>
    %350 = vector.shape_cast %349 : vector<1x8x512xf32> to vector<8x512xf32>
    %351 = arith.truncf %343 : vector<8x128xf32> to vector<8x128xbf16>
    %cst_116 = arith.constant dense<0.000000e+00> : vector<8x512xf32>
    %352 = tpu.matmul %351, %232, %cst_116 {dimension_numbers = #tpu.dot_dimension_numbers<[1], [0], [0], [1], [0, 0, 1, 1], [], []>} : vector<8x128xbf16>, vector<128x512xbf16>, vector<8x512xf32> -> vector<8x512xf32>
    %353 = arith.addf %350, %352 : vector<8x512xf32>
    %354 = vector.extract_strided_slice %353 {offsets = [0, 0], sizes = [8, 384], strides = [1, 1]} : vector<8x512xf32> to vector<8x384xf32>
    %355 = arith.negf %354 : vector<8x384xf32>
    %356 = math.exp %355 : vector<8x384xf32>
    %cst_117 = arith.constant 1.000000e+00 : f32
    %357 = vector.broadcast %cst_117 : f32 to vector<8x384xf32>
    %358 = arith.addf %357, %356 : vector<8x384xf32>
    %359 = arith.divf %357, %358 : vector<8x384xf32>
    %360 = vector.extract_strided_slice %359 {offsets = [0, 0], sizes = [8, 128], strides = [1, 1]} : vector<8x384xf32> to vector<8x128xf32>
    %361 = vector.extract_strided_slice %359 {offsets = [0, 128], sizes = [8, 128], strides = [1, 1]} : vector<8x384xf32> to vector<8x128xf32>
    %362 = vector.extract_strided_slice %359 {offsets = [0, 256], sizes = [8, 128], strides = [1, 1]} : vector<8x384xf32> to vector<8x128xf32>
    %363 = vector.extract_strided_slice %353 {offsets = [0, 384], sizes = [8, 128], strides = [1, 1]} : vector<8x512xf32> to vector<8x128xf32>
    %364 = math.tanh %363 : vector<8x128xf32>
    %365 = arith.mulf %361, %341 : vector<8x128xf32>
    %366 = arith.mulf %360, %364 : vector<8x128xf32>
    %367 = arith.addf %365, %366 : vector<8x128xf32>
    %368 = math.tanh %367 : vector<8x128xf32>
    %369 = arith.mulf %362, %368 : vector<8x128xf32>
    %370 = arith.index_cast %c4_i32_113 : i32 to index
    %c0_118 = arith.constant 0 : index
    %c0_119 = arith.constant 0 : index
    %371 = vector.load %arg18[%370, %c0_118, %c0_119] : memref<8x8x128xf32, #tpu.memory_space<vmem>>, vector<1x8x128xf32>
    %372 = vector.shape_cast %371 : vector<1x8x128xf32> to vector<8x128xf32>
    %373 = vector.shape_cast %369 : vector<8x128xf32> to vector<1x8x128xf32>
    tpu.vector_store %arg18[%370, %c0_118, %c0_119], %373 {strides = array<i32>} : memref<8x8x128xf32, #tpu.memory_space<vmem>>, vector<1x8x128xf32>,
    %c5_i32_120 = arith.constant 5 : i32
    %374 = arith.index_cast %c5_i32_120 : i32 to index
    %c0_121 = arith.constant 0 : index
    %c0_122 = arith.constant 0 : index
    %375 = vector.load %arg19[%374, %c0_121, %c0_122] : memref<8x8x512xf32, #tpu.memory_space<vmem>>, vector<1x8x512xf32>
    %376 = vector.shape_cast %375 : vector<1x8x512xf32> to vector<8x512xf32>
    %377 = arith.truncf %369 : vector<8x128xf32> to vector<8x128xbf16>
    %cst_123 = arith.constant dense<0.000000e+00> : vector<8x512xf32>
    %378 = tpu.matmul %377, %232, %cst_123 {dimension_numbers = #tpu.dot_dimension_numbers<[1], [0], [0], [1], [0, 0, 1, 1], [], []>} : vector<8x128xbf16>, vector<128x512xbf16>, vector<8x512xf32> -> vector<8x512xf32>
    %379 = arith.addf %376, %378 : vector<8x512xf32>
    %380 = vector.extract_strided_slice %379 {offsets = [0, 0], sizes = [8, 384], strides = [1, 1]} : vector<8x512xf32> to vector<8x384xf32>
    %381 = arith.negf %380 : vector<8x384xf32>
    %382 = math.exp %381 : vector<8x384xf32>
    %cst_124 = arith.constant 1.000000e+00 : f32
    %383 = vector.broadcast %cst_124 : f32 to vector<8x384xf32>
    %384 = arith.addf %383, %382 : vector<8x384xf32>
    %385 = arith.divf %383, %384 : vector<8x384xf32>
    %386 = vector.extract_strided_slice %385 {offsets = [0, 0], sizes = [8, 128], strides = [1, 1]} : vector<8x384xf32> to vector<8x128xf32>
    %387 = vector.extract_strided_slice %385 {offsets = [0, 128], sizes = [8, 128], strides = [1, 1]} : vector<8x384xf32> to vector<8x128xf32>
    %388 = vector.extract_strided_slice %385 {offsets = [0, 256], sizes = [8, 128], strides = [1, 1]} : vector<8x384xf32> to vector<8x128xf32>
    %389 = vector.extract_strided_slice %379 {offsets = [0, 384], sizes = [8, 128], strides = [1, 1]} : vector<8x512xf32> to vector<8x128xf32>
    %390 = math.tanh %389 : vector<8x128xf32>
    %391 = arith.mulf %387, %367 : vector<8x128xf32>
    %392 = arith.mulf %386, %390 : vector<8x128xf32>
    %393 = arith.addf %391, %392 : vector<8x128xf32>
    %394 = math.tanh %393 : vector<8x128xf32>
    %395 = arith.mulf %388, %394 : vector<8x128xf32>
    %396 = arith.index_cast %c5_i32_120 : i32 to index
    %c0_125 = arith.constant 0 : index
    %c0_126 = arith.constant 0 : index
    %397 = vector.load %arg18[%396, %c0_125, %c0_126] : memref<8x8x128xf32, #tpu.memory_space<vmem>>, vector<1x8x128xf32>
    %398 = vector.shape_cast %397 : vector<1x8x128xf32> to vector<8x128xf32>
    %399 = vector.shape_cast %395 : vector<8x128xf32> to vector<1x8x128xf32>
    tpu.vector_store %arg18[%396, %c0_125, %c0_126], %399 {strides = array<i32>} : memref<8x8x128xf32, #tpu.memory_space<vmem>>, vector<1x8x128xf32>,
    %c6_i32_127 = arith.constant 6 : i32
    %400 = arith.index_cast %c6_i32_127 : i32 to index
    %c0_128 = arith.constant 0 : index
    %c0_129 = arith.constant 0 : index
    %401 = vector.load %arg19[%400, %c0_128, %c0_129] : memref<8x8x512xf32, #tpu.memory_space<vmem>>, vector<1x8x512xf32>
    %402 = vector.shape_cast %401 : vector<1x8x512xf32> to vector<8x512xf32>
    %403 = arith.truncf %395 : vector<8x128xf32> to vector<8x128xbf16>
    %cst_130 = arith.constant dense<0.000000e+00> : vector<8x512xf32>
    %404 = tpu.matmul %403, %232, %cst_130 {dimension_numbers = #tpu.dot_dimension_numbers<[1], [0], [0], [1], [0, 0, 1, 1], [], []>} : vector<8x128xbf16>, vector<128x512xbf16>, vector<8x512xf32> -> vector<8x512xf32>
    %405 = arith.addf %402, %404 : vector<8x512xf32>
    %406 = vector.extract_strided_slice %405 {offsets = [0, 0], sizes = [8, 384], strides = [1, 1]} : vector<8x512xf32> to vector<8x384xf32>
    %407 = arith.negf %406 : vector<8x384xf32>
    %408 = math.exp %407 : vector<8x384xf32>
    %cst_131 = arith.constant 1.000000e+00 : f32
    %409 = vector.broadcast %cst_131 : f32 to vector<8x384xf32>
    %410 = arith.addf %409, %408 : vector<8x384xf32>
    %411 = arith.divf %409, %410 : vector<8x384xf32>
    %412 = vector.extract_strided_slice %411 {offsets = [0, 0], sizes = [8, 128], strides = [1, 1]} : vector<8x384xf32> to vector<8x128xf32>
    %413 = vector.extract_strided_slice %411 {offsets = [0, 128], sizes = [8, 128], strides = [1, 1]} : vector<8x384xf32> to vector<8x128xf32>
    %414 = vector.extract_strided_slice %411 {offsets = [0, 256], sizes = [8, 128], strides = [1, 1]} : vector<8x384xf32> to vector<8x128xf32>
    %415 = vector.extract_strided_slice %405 {offsets = [0, 384], sizes = [8, 128], strides = [1, 1]} : vector<8x512xf32> to vector<8x128xf32>
    %416 = math.tanh %415 : vector<8x128xf32>
    %417 = arith.mulf %413, %393 : vector<8x128xf32>
    %418 = arith.mulf %412, %416 : vector<8x128xf32>
    %419 = arith.addf %417, %418 : vector<8x128xf32>
    %420 = math.tanh %419 : vector<8x128xf32>
    %421 = arith.mulf %414, %420 : vector<8x128xf32>
    %422 = arith.index_cast %c6_i32_127 : i32 to index
    %c0_132 = arith.constant 0 : index
    %c0_133 = arith.constant 0 : index
    %423 = vector.load %arg18[%422, %c0_132, %c0_133] : memref<8x8x128xf32, #tpu.memory_space<vmem>>, vector<1x8x128xf32>
    %424 = vector.shape_cast %423 : vector<1x8x128xf32> to vector<8x128xf32>
    %425 = vector.shape_cast %421 : vector<8x128xf32> to vector<1x8x128xf32>
    tpu.vector_store %arg18[%422, %c0_132, %c0_133], %425 {strides = array<i32>} : memref<8x8x128xf32, #tpu.memory_space<vmem>>, vector<1x8x128xf32>,
    %c7_i32_134 = arith.constant 7 : i32
    %426 = arith.index_cast %c7_i32_134 : i32 to index
    %c0_135 = arith.constant 0 : index
    %c0_136 = arith.constant 0 : index
    %427 = vector.load %arg19[%426, %c0_135, %c0_136] : memref<8x8x512xf32, #tpu.memory_space<vmem>>, vector<1x8x512xf32>
    %428 = vector.shape_cast %427 : vector<1x8x512xf32> to vector<8x512xf32>
    %429 = arith.truncf %421 : vector<8x128xf32> to vector<8x128xbf16>
    %cst_137 = arith.constant dense<0.000000e+00> : vector<8x512xf32>
    %430 = tpu.matmul %429, %232, %cst_137 {dimension_numbers = #tpu.dot_dimension_numbers<[1], [0], [0], [1], [0, 0, 1, 1], [], []>} : vector<8x128xbf16>, vector<128x512xbf16>, vector<8x512xf32> -> vector<8x512xf32>
    %431 = arith.addf %428, %430 : vector<8x512xf32>
    %432 = vector.extract_strided_slice %431 {offsets = [0, 0], sizes = [8, 384], strides = [1, 1]} : vector<8x512xf32> to vector<8x384xf32>
    %433 = arith.negf %432 : vector<8x384xf32>
    %434 = math.exp %433 : vector<8x384xf32>
    %cst_138 = arith.constant 1.000000e+00 : f32
    %435 = vector.broadcast %cst_138 : f32 to vector<8x384xf32>
    %436 = arith.addf %435, %434 : vector<8x384xf32>
    %437 = arith.divf %435, %436 : vector<8x384xf32>
    %438 = vector.extract_strided_slice %437 {offsets = [0, 0], sizes = [8, 128], strides = [1, 1]} : vector<8x384xf32> to vector<8x128xf32>
    %439 = vector.extract_strided_slice %437 {offsets = [0, 128], sizes = [8, 128], strides = [1, 1]} : vector<8x384xf32> to vector<8x128xf32>
    %440 = vector.extract_strided_slice %437 {offsets = [0, 256], sizes = [8, 128], strides = [1, 1]} : vector<8x384xf32> to vector<8x128xf32>
    %441 = vector.extract_strided_slice %431 {offsets = [0, 384], sizes = [8, 128], strides = [1, 1]} : vector<8x512xf32> to vector<8x128xf32>
    %442 = math.tanh %441 : vector<8x128xf32>
    %443 = arith.mulf %439, %419 : vector<8x128xf32>
    %444 = arith.mulf %438, %442 : vector<8x128xf32>
    %445 = arith.addf %443, %444 : vector<8x128xf32>
    %446 = math.tanh %445 : vector<8x128xf32>
    %447 = arith.mulf %440, %446 : vector<8x128xf32>
    %448 = arith.index_cast %c7_i32_134 : i32 to index
    %c0_139 = arith.constant 0 : index
    %c0_140 = arith.constant 0 : index
    %449 = vector.load %arg18[%448, %c0_139, %c0_140] : memref<8x8x128xf32, #tpu.memory_space<vmem>>, vector<1x8x128xf32>
    %450 = vector.shape_cast %449 : vector<1x8x128xf32> to vector<8x128xf32>
    %451 = vector.shape_cast %447 : vector<8x128xf32> to vector<1x8x128xf32>
    tpu.vector_store %arg18[%448, %c0_139, %c0_140], %451 {strides = array<i32>} : memref<8x8x128xf32, #tpu.memory_space<vmem>>, vector<1x8x128xf32>,
    %c8_i32_141 = arith.constant 8 : i32
    %c1_142 = arith.constant 1 : index
    %c0_143 = arith.constant 0 : index
    %c0_144 = arith.constant 0 : index
    %452 = vector.load %arg14[%c1_142, %c0_143, %c0_144] : memref<2x8x128xf32, #tpu.memory_space<vmem>>, vector<1x8x128xf32>
    %453 = vector.shape_cast %452 : vector<1x8x128xf32> to vector<8x128xf32>
    %454 = vector.shape_cast %447 : vector<8x128xf32> to vector<1x8x128xf32>
    tpu.vector_store %arg14[%c1_142, %c0_143, %c0_144], %454 {strides = array<i32>} : memref<2x8x128xf32, #tpu.memory_space<vmem>>, vector<1x8x128xf32>,
    %c1_145 = arith.constant 1 : index
    %c0_146 = arith.constant 0 : index
    %c0_147 = arith.constant 0 : index
    %455 = vector.load %arg15[%c1_145, %c0_146, %c0_147] : memref<2x8x128xf32, #tpu.memory_space<vmem>>, vector<1x8x128xf32>
    %456 = vector.shape_cast %455 : vector<1x8x128xf32> to vector<8x128xf32>
    %457 = vector.shape_cast %445 : vector<8x128xf32> to vector<1x8x128xf32>
    tpu.vector_store %arg15[%c1_145, %c0_146, %c0_147], %457 {strides = array<i32>} : memref<2x8x128xf32, #tpu.memory_space<vmem>>, vector<1x8x128xf32>,
    %c0_148 = arith.constant 0 : index
    %c0_149 = arith.constant 0 : index
    %c0_150 = arith.constant 0 : index
    %458 = vector.load %arg18[%c0_148, %c0_149, %c0_150] : memref<8x8x128xf32, #tpu.memory_space<vmem>>, vector<8x8x128xf32>
    %459 = tpu.iota {dimensions = array<i32: 1>} : vector<8x8x128xi32>
    %c2_i32_151 = arith.constant 2 : i32
    %460 = vector.broadcast %c2_i32_151 : i32 to vector<8x8x128xi32>
    %461 = arith.cmpi slt, %459, %460 : vector<8x8x128xi32>
    %462 = arith.extui %461 : vector<8x8x128xi1> to vector<8x8x128xi32>
    %463 = arith.sitofp %462 : vector<8x8x128xi32> to vector<8x8x128xf32>
    %464 = arith.mulf %458, %463 : vector<8x8x128xf32>
    %cst_152 = arith.constant dense<0.000000e+00> : vector<8x128xf32>
    %465 = vector.multi_reduction <add>, %464, %cst_152 [0] : vector<8x8x128xf32> to vector<8x128xf32>
    %cst_153 = arith.constant dense<0.000000e+00> : vector<128xf32>
    %466 = vector.multi_reduction <add>, %465, %cst_153 [0] : vector<8x128xf32> to vector<128xf32>
    %467 = vector.shape_cast %466 : vector<128xf32> to vector<1x128xf32>
    %468 = arith.mulf %464, %458 : vector<8x8x128xf32>
    %cst_154 = arith.constant dense<0.000000e+00> : vector<8x128xf32>
    %469 = vector.multi_reduction <add>, %468, %cst_154 [0] : vector<8x8x128xf32> to vector<8x128xf32>
    %cst_155 = arith.constant dense<0.000000e+00> : vector<128xf32>
    %470 = vector.multi_reduction <add>, %469, %cst_155 [0] : vector<8x128xf32> to vector<128xf32>
    %471 = vector.shape_cast %470 : vector<128xf32> to vector<1x128xf32>
    %cst_156 = arith.constant 1.600000e+01 : f32
    %472 = vector.broadcast %cst_156 : f32 to vector<1x128xf32>
    %473 = arith.divf %467, %472 : vector<1x128xf32>
    %cst_157 = arith.constant 1.600000e+01 : f32
    %474 = vector.broadcast %cst_157 : f32 to vector<1x128xf32>
    %475 = arith.divf %471, %474 : vector<1x128xf32>
    %476 = arith.mulf %473, %473 : vector<1x128xf32>
    %477 = arith.subf %475, %476 : vector<1x128xf32>
    %cst_158 = arith.constant 0.000000e+00 : f32
    %478 = vector.broadcast %cst_158 : f32 to vector<1x128xf32>
    %479 = arith.maximumf %477, %478 : vector<1x128xf32>
    %cst_159 = arith.constant 9.99999974E-6 : f32
    %480 = vector.broadcast %cst_159 : f32 to vector<1x128xf32>
    %481 = arith.addf %479, %480 : vector<1x128xf32>
    %482 = math.rsqrt %481 : vector<1x128xf32>
    %c0_160 = arith.constant 0 : index
    %c0_161 = arith.constant 0 : index
    %483 = vector.load %arg7[%c0_160, %c0_161] : memref<1x128xf32, #tpu.memory_space<vmem>>, vector<1x128xf32>
    %484 = arith.mulf %482, %483 : vector<1x128xf32>
    %c0_162 = arith.constant 0 : index
    %c0_163 = arith.constant 0 : index
    %485 = vector.load %arg8[%c0_162, %c0_163] : memref<1x128xf32, #tpu.memory_space<vmem>>, vector<1x128xf32>
    %486 = arith.mulf %473, %484 : vector<1x128xf32>
    %487 = arith.subf %485, %486 : vector<1x128xf32>
    %488 = vector.shape_cast %484 : vector<1x128xf32> to vector<1x1x128xf32>
    %489 = vector.broadcast %488 : vector<1x1x128xf32> to vector<8x8x128xf32>
    %490 = arith.mulf %458, %489 : vector<8x8x128xf32>
    %491 = vector.shape_cast %487 : vector<1x128xf32> to vector<1x1x128xf32>
    %492 = vector.broadcast %491 : vector<1x1x128xf32> to vector<8x8x128xf32>
    %493 = arith.addf %490, %492 : vector<8x8x128xf32>
    %c0_164 = arith.constant 0 : index
    %c0_165 = arith.constant 0 : index
    %c0_166 = arith.constant 0 : index
    %494 = vector.load %arg18[%c0_164, %c0_165, %c0_166] : memref<8x8x128xf32, #tpu.memory_space<vmem>>, vector<8x8x128xf32>
    tpu.vector_store %arg18[%c0_164, %c0_165, %c0_166], %493 {strides = array<i32>} : memref<8x8x128xf32, #tpu.memory_space<vmem>>, vector<8x8x128xf32>,
    %c0_167 = arith.constant 0 : index
    %c0_168 = arith.constant 0 : index
    %c0_169 = arith.constant 0 : index
    %495 = vector.load %arg4[%c0_167, %c0_168, %c0_169] : memref<2x128x512xbf16, #tpu.memory_space<vmem>>, vector<1x128x512xbf16>
    %496 = vector.shape_cast %495 : vector<1x128x512xbf16> to vector<128x512xbf16>
    %c0_170 = arith.constant 0 : index
    %c0_171 = arith.constant 0 : index
    %c0_172 = arith.constant 0 : index
    %497 = vector.load %arg5[%c0_170, %c0_171, %c0_172] : memref<2x128x512xbf16, #tpu.memory_space<vmem>>, vector<1x128x512xbf16>
    %498 = vector.shape_cast %497 : vector<1x128x512xbf16> to vector<128x512xbf16>
    %c0_173 = arith.constant 0 : index
    %c0_174 = arith.constant 0 : index
    %c0_175 = arith.constant 0 : index
    %499 = vector.load %arg6[%c0_173, %c0_174, %c0_175] : memref<2x1x512xf32, #tpu.memory_space<vmem>>, vector<1x1x512xf32>
    %500 = vector.shape_cast %499 : vector<1x1x512xf32> to vector<1x512xf32>
    %c0_176 = arith.constant 0 : index
    %c0_177 = arith.constant 0 : index
    %c0_178 = arith.constant 0 : index
    %501 = vector.load %arg18[%c0_176, %c0_177, %c0_178] : memref<8x8x128xf32, #tpu.memory_space<vmem>>, vector<8x8x128xf32>
    %502 = vector.shape_cast %501 : vector<8x8x128xf32> to vector<64x128xf32>
    %503 = arith.truncf %502 : vector<64x128xf32> to vector<64x128xbf16>
    %cst_179 = arith.constant dense<0.000000e+00> : vector<64x512xf32>
    %504 = tpu.matmul %503, %496, %cst_179 {dimension_numbers = #tpu.dot_dimension_numbers<[1], [0], [0], [1], [0, 0, 1, 1], [], []>} : vector<64x128xbf16>, vector<128x512xbf16>, vector<64x512xf32> -> vector<64x512xf32>
    %505 = vector.broadcast %500 : vector<1x512xf32> to vector<64x512xf32>
    %506 = arith.addf %504, %505 : vector<64x512xf32>
    %507 = vector.shape_cast %506 : vector<64x512xf32> to vector<8x8x512xf32>
    %c0_180 = arith.constant 0 : index
    %c0_181 = arith.constant 0 : index
    %c0_182 = arith.constant 0 : index
    %508 = vector.load %arg19[%c0_180, %c0_181, %c0_182] : memref<8x8x512xf32, #tpu.memory_space<vmem>>, vector<8x8x512xf32>
    tpu.vector_store %arg19[%c0_180, %c0_181, %c0_182], %507 {strides = array<i32>} : memref<8x8x512xf32, #tpu.memory_space<vmem>>, vector<8x8x512xf32>,
    %cst_183 = arith.constant 0.000000e+00 : f32
    %509 = vector.broadcast %cst_183 : f32 to vector<8x128xf32>
    %c0_i32_184 = arith.constant 0 : i32
    %510 = arith.index_cast %c0_i32_184 : i32 to index
    %c0_185 = arith.constant 0 : index
    %c0_186 = arith.constant 0 : index
    %511 = vector.load %arg19[%510, %c0_185, %c0_186] : memref<8x8x512xf32, #tpu.memory_space<vmem>>, vector<1x8x512xf32>
    %512 = vector.shape_cast %511 : vector<1x8x512xf32> to vector<8x512xf32>
    %513 = arith.truncf %509 : vector<8x128xf32> to vector<8x128xbf16>
    %cst_187 = arith.constant dense<0.000000e+00> : vector<8x512xf32>
    %514 = tpu.matmul %513, %498, %cst_187 {dimension_numbers = #tpu.dot_dimension_numbers<[1], [0], [0], [1], [0, 0, 1, 1], [], []>} : vector<8x128xbf16>, vector<128x512xbf16>, vector<8x512xf32> -> vector<8x512xf32>
    %515 = arith.addf %512, %514 : vector<8x512xf32>
    %516 = vector.extract_strided_slice %515 {offsets = [0, 0], sizes = [8, 384], strides = [1, 1]} : vector<8x512xf32> to vector<8x384xf32>
    %517 = arith.negf %516 : vector<8x384xf32>
    %518 = math.exp %517 : vector<8x384xf32>
    %cst_188 = arith.constant 1.000000e+00 : f32
    %519 = vector.broadcast %cst_188 : f32 to vector<8x384xf32>
    %520 = arith.addf %519, %518 : vector<8x384xf32>
    %521 = arith.divf %519, %520 : vector<8x384xf32>
    %522 = vector.extract_strided_slice %521 {offsets = [0, 0], sizes = [8, 128], strides = [1, 1]} : vector<8x384xf32> to vector<8x128xf32>
    %523 = vector.extract_strided_slice %521 {offsets = [0, 128], sizes = [8, 128], strides = [1, 1]} : vector<8x384xf32> to vector<8x128xf32>
    %524 = vector.extract_strided_slice %521 {offsets = [0, 256], sizes = [8, 128], strides = [1, 1]} : vector<8x384xf32> to vector<8x128xf32>
    %525 = vector.extract_strided_slice %515 {offsets = [0, 384], sizes = [8, 128], strides = [1, 1]} : vector<8x512xf32> to vector<8x128xf32>
    %526 = math.tanh %525 : vector<8x128xf32>
    %527 = arith.mulf %523, %509 : vector<8x128xf32>
    %528 = arith.mulf %522, %526 : vector<8x128xf32>
    %529 = arith.addf %527, %528 : vector<8x128xf32>
    %530 = math.tanh %529 : vector<8x128xf32>
    %531 = arith.mulf %524, %530 : vector<8x128xf32>
    %532 = arith.index_cast %c0_i32_184 : i32 to index
    %c0_189 = arith.constant 0 : index
    %c0_190 = arith.constant 0 : index
    %533 = vector.load %arg18[%532, %c0_189, %c0_190] : memref<8x8x128xf32, #tpu.memory_space<vmem>>, vector<1x8x128xf32>
    %534 = vector.shape_cast %533 : vector<1x8x128xf32> to vector<8x128xf32>
    %535 = vector.shape_cast %531 : vector<8x128xf32> to vector<1x8x128xf32>
    tpu.vector_store %arg18[%532, %c0_189, %c0_190], %535 {strides = array<i32>} : memref<8x8x128xf32, #tpu.memory_space<vmem>>, vector<1x8x128xf32>,
    %c1_i32_191 = arith.constant 1 : i32
    %536 = arith.index_cast %c1_i32_191 : i32 to index
    %c0_192 = arith.constant 0 : index
    %c0_193 = arith.constant 0 : index
    %537 = vector.load %arg19[%536, %c0_192, %c0_193] : memref<8x8x512xf32, #tpu.memory_space<vmem>>, vector<1x8x512xf32>
    %538 = vector.shape_cast %537 : vector<1x8x512xf32> to vector<8x512xf32>
    %539 = arith.truncf %531 : vector<8x128xf32> to vector<8x128xbf16>
    %cst_194 = arith.constant dense<0.000000e+00> : vector<8x512xf32>
    %540 = tpu.matmul %539, %498, %cst_194 {dimension_numbers = #tpu.dot_dimension_numbers<[1], [0], [0], [1], [0, 0, 1, 1], [], []>} : vector<8x128xbf16>, vector<128x512xbf16>, vector<8x512xf32> -> vector<8x512xf32>
    %541 = arith.addf %538, %540 : vector<8x512xf32>
    %542 = vector.extract_strided_slice %541 {offsets = [0, 0], sizes = [8, 384], strides = [1, 1]} : vector<8x512xf32> to vector<8x384xf32>
    %543 = arith.negf %542 : vector<8x384xf32>
    %544 = math.exp %543 : vector<8x384xf32>
    %cst_195 = arith.constant 1.000000e+00 : f32
    %545 = vector.broadcast %cst_195 : f32 to vector<8x384xf32>
    %546 = arith.addf %545, %544 : vector<8x384xf32>
    %547 = arith.divf %545, %546 : vector<8x384xf32>
    %548 = vector.extract_strided_slice %547 {offsets = [0, 0], sizes = [8, 128], strides = [1, 1]} : vector<8x384xf32> to vector<8x128xf32>
    %549 = vector.extract_strided_slice %547 {offsets = [0, 128], sizes = [8, 128], strides = [1, 1]} : vector<8x384xf32> to vector<8x128xf32>
    %550 = vector.extract_strided_slice %547 {offsets = [0, 256], sizes = [8, 128], strides = [1, 1]} : vector<8x384xf32> to vector<8x128xf32>
    %551 = vector.extract_strided_slice %541 {offsets = [0, 384], sizes = [8, 128], strides = [1, 1]} : vector<8x512xf32> to vector<8x128xf32>
    %552 = math.tanh %551 : vector<8x128xf32>
    %553 = arith.mulf %549, %529 : vector<8x128xf32>
    %554 = arith.mulf %548, %552 : vector<8x128xf32>
    %555 = arith.addf %553, %554 : vector<8x128xf32>
    %556 = math.tanh %555 : vector<8x128xf32>
    %557 = arith.mulf %550, %556 : vector<8x128xf32>
    %558 = arith.index_cast %c1_i32_191 : i32 to index
    %c0_196 = arith.constant 0 : index
    %c0_197 = arith.constant 0 : index
    %559 = vector.load %arg18[%558, %c0_196, %c0_197] : memref<8x8x128xf32, #tpu.memory_space<vmem>>, vector<1x8x128xf32>
    %560 = vector.shape_cast %559 : vector<1x8x128xf32> to vector<8x128xf32>
    %561 = vector.shape_cast %557 : vector<8x128xf32> to vector<1x8x128xf32>
    tpu.vector_store %arg18[%558, %c0_196, %c0_197], %561 {strides = array<i32>} : memref<8x8x128xf32, #tpu.memory_space<vmem>>, vector<1x8x128xf32>,
    %c2_i32_198 = arith.constant 2 : i32
    %562 = arith.index_cast %c2_i32_198 : i32 to index
    %c0_199 = arith.constant 0 : index
    %c0_200 = arith.constant 0 : index
    %563 = vector.load %arg19[%562, %c0_199, %c0_200] : memref<8x8x512xf32, #tpu.memory_space<vmem>>, vector<1x8x512xf32>
    %564 = vector.shape_cast %563 : vector<1x8x512xf32> to vector<8x512xf32>
    %565 = arith.truncf %557 : vector<8x128xf32> to vector<8x128xbf16>
    %cst_201 = arith.constant dense<0.000000e+00> : vector<8x512xf32>
    %566 = tpu.matmul %565, %498, %cst_201 {dimension_numbers = #tpu.dot_dimension_numbers<[1], [0], [0], [1], [0, 0, 1, 1], [], []>} : vector<8x128xbf16>, vector<128x512xbf16>, vector<8x512xf32> -> vector<8x512xf32>
    %567 = arith.addf %564, %566 : vector<8x512xf32>
    %568 = vector.extract_strided_slice %567 {offsets = [0, 0], sizes = [8, 384], strides = [1, 1]} : vector<8x512xf32> to vector<8x384xf32>
    %569 = arith.negf %568 : vector<8x384xf32>
    %570 = math.exp %569 : vector<8x384xf32>
    %cst_202 = arith.constant 1.000000e+00 : f32
    %571 = vector.broadcast %cst_202 : f32 to vector<8x384xf32>
    %572 = arith.addf %571, %570 : vector<8x384xf32>
    %573 = arith.divf %571, %572 : vector<8x384xf32>
    %574 = vector.extract_strided_slice %573 {offsets = [0, 0], sizes = [8, 128], strides = [1, 1]} : vector<8x384xf32> to vector<8x128xf32>
    %575 = vector.extract_strided_slice %573 {offsets = [0, 128], sizes = [8, 128], strides = [1, 1]} : vector<8x384xf32> to vector<8x128xf32>
    %576 = vector.extract_strided_slice %573 {offsets = [0, 256], sizes = [8, 128], strides = [1, 1]} : vector<8x384xf32> to vector<8x128xf32>
    %577 = vector.extract_strided_slice %567 {offsets = [0, 384], sizes = [8, 128], strides = [1, 1]} : vector<8x512xf32> to vector<8x128xf32>
    %578 = math.tanh %577 : vector<8x128xf32>
    %579 = arith.mulf %575, %555 : vector<8x128xf32>
    %580 = arith.mulf %574, %578 : vector<8x128xf32>
    %581 = arith.addf %579, %580 : vector<8x128xf32>
    %582 = math.tanh %581 : vector<8x128xf32>
    %583 = arith.mulf %576, %582 : vector<8x128xf32>
    %584 = arith.index_cast %c2_i32_198 : i32 to index
    %c0_203 = arith.constant 0 : index
    %c0_204 = arith.constant 0 : index
    %585 = vector.load %arg18[%584, %c0_203, %c0_204] : memref<8x8x128xf32, #tpu.memory_space<vmem>>, vector<1x8x128xf32>
    %586 = vector.shape_cast %585 : vector<1x8x128xf32> to vector<8x128xf32>
    %587 = vector.shape_cast %583 : vector<8x128xf32> to vector<1x8x128xf32>
    tpu.vector_store %arg18[%584, %c0_203, %c0_204], %587 {strides = array<i32>} : memref<8x8x128xf32, #tpu.memory_space<vmem>>, vector<1x8x128xf32>,
    %c3_i32_205 = arith.constant 3 : i32
    %588 = arith.index_cast %c3_i32_205 : i32 to index
    %c0_206 = arith.constant 0 : index
    %c0_207 = arith.constant 0 : index
    %589 = vector.load %arg19[%588, %c0_206, %c0_207] : memref<8x8x512xf32, #tpu.memory_space<vmem>>, vector<1x8x512xf32>
    %590 = vector.shape_cast %589 : vector<1x8x512xf32> to vector<8x512xf32>
    %591 = arith.truncf %583 : vector<8x128xf32> to vector<8x128xbf16>
    %cst_208 = arith.constant dense<0.000000e+00> : vector<8x512xf32>
    %592 = tpu.matmul %591, %498, %cst_208 {dimension_numbers = #tpu.dot_dimension_numbers<[1], [0], [0], [1], [0, 0, 1, 1], [], []>} : vector<8x128xbf16>, vector<128x512xbf16>, vector<8x512xf32> -> vector<8x512xf32>
    %593 = arith.addf %590, %592 : vector<8x512xf32>
    %594 = vector.extract_strided_slice %593 {offsets = [0, 0], sizes = [8, 384], strides = [1, 1]} : vector<8x512xf32> to vector<8x384xf32>
    %595 = arith.negf %594 : vector<8x384xf32>
    %596 = math.exp %595 : vector<8x384xf32>
    %cst_209 = arith.constant 1.000000e+00 : f32
    %597 = vector.broadcast %cst_209 : f32 to vector<8x384xf32>
    %598 = arith.addf %597, %596 : vector<8x384xf32>
    %599 = arith.divf %597, %598 : vector<8x384xf32>
    %600 = vector.extract_strided_slice %599 {offsets = [0, 0], sizes = [8, 128], strides = [1, 1]} : vector<8x384xf32> to vector<8x128xf32>
    %601 = vector.extract_strided_slice %599 {offsets = [0, 128], sizes = [8, 128], strides = [1, 1]} : vector<8x384xf32> to vector<8x128xf32>
    %602 = vector.extract_strided_slice %599 {offsets = [0, 256], sizes = [8, 128], strides = [1, 1]} : vector<8x384xf32> to vector<8x128xf32>
    %603 = vector.extract_strided_slice %593 {offsets = [0, 384], sizes = [8, 128], strides = [1, 1]} : vector<8x512xf32> to vector<8x128xf32>
    %604 = math.tanh %603 : vector<8x128xf32>
    %605 = arith.mulf %601, %581 : vector<8x128xf32>
    %606 = arith.mulf %600, %604 : vector<8x128xf32>
    %607 = arith.addf %605, %606 : vector<8x128xf32>
    %608 = math.tanh %607 : vector<8x128xf32>
    %609 = arith.mulf %602, %608 : vector<8x128xf32>
    %610 = arith.index_cast %c3_i32_205 : i32 to index
    %c0_210 = arith.constant 0 : index
    %c0_211 = arith.constant 0 : index
    %611 = vector.load %arg18[%610, %c0_210, %c0_211] : memref<8x8x128xf32, #tpu.memory_space<vmem>>, vector<1x8x128xf32>
    %612 = vector.shape_cast %611 : vector<1x8x128xf32> to vector<8x128xf32>
    %613 = vector.shape_cast %609 : vector<8x128xf32> to vector<1x8x128xf32>
    tpu.vector_store %arg18[%610, %c0_210, %c0_211], %613 {strides = array<i32>} : memref<8x8x128xf32, #tpu.memory_space<vmem>>, vector<1x8x128xf32>,
    %c4_i32_212 = arith.constant 4 : i32
    %614 = arith.index_cast %c4_i32_212 : i32 to index
    %c0_213 = arith.constant 0 : index
    %c0_214 = arith.constant 0 : index
    %615 = vector.load %arg19[%614, %c0_213, %c0_214] : memref<8x8x512xf32, #tpu.memory_space<vmem>>, vector<1x8x512xf32>
    %616 = vector.shape_cast %615 : vector<1x8x512xf32> to vector<8x512xf32>
    %617 = arith.truncf %609 : vector<8x128xf32> to vector<8x128xbf16>
    %cst_215 = arith.constant dense<0.000000e+00> : vector<8x512xf32>
    %618 = tpu.matmul %617, %498, %cst_215 {dimension_numbers = #tpu.dot_dimension_numbers<[1], [0], [0], [1], [0, 0, 1, 1], [], []>} : vector<8x128xbf16>, vector<128x512xbf16>, vector<8x512xf32> -> vector<8x512xf32>
    %619 = arith.addf %616, %618 : vector<8x512xf32>
    %620 = vector.extract_strided_slice %619 {offsets = [0, 0], sizes = [8, 384], strides = [1, 1]} : vector<8x512xf32> to vector<8x384xf32>
    %621 = arith.negf %620 : vector<8x384xf32>
    %622 = math.exp %621 : vector<8x384xf32>
    %cst_216 = arith.constant 1.000000e+00 : f32
    %623 = vector.broadcast %cst_216 : f32 to vector<8x384xf32>
    %624 = arith.addf %623, %622 : vector<8x384xf32>
    %625 = arith.divf %623, %624 : vector<8x384xf32>
    %626 = vector.extract_strided_slice %625 {offsets = [0, 0], sizes = [8, 128], strides = [1, 1]} : vector<8x384xf32> to vector<8x128xf32>
    %627 = vector.extract_strided_slice %625 {offsets = [0, 128], sizes = [8, 128], strides = [1, 1]} : vector<8x384xf32> to vector<8x128xf32>
    %628 = vector.extract_strided_slice %625 {offsets = [0, 256], sizes = [8, 128], strides = [1, 1]} : vector<8x384xf32> to vector<8x128xf32>
    %629 = vector.extract_strided_slice %619 {offsets = [0, 384], sizes = [8, 128], strides = [1, 1]} : vector<8x512xf32> to vector<8x128xf32>
    %630 = math.tanh %629 : vector<8x128xf32>
    %631 = arith.mulf %627, %607 : vector<8x128xf32>
    %632 = arith.mulf %626, %630 : vector<8x128xf32>
    %633 = arith.addf %631, %632 : vector<8x128xf32>
    %634 = math.tanh %633 : vector<8x128xf32>
    %635 = arith.mulf %628, %634 : vector<8x128xf32>
    %636 = arith.index_cast %c4_i32_212 : i32 to index
    %c0_217 = arith.constant 0 : index
    %c0_218 = arith.constant 0 : index
    %637 = vector.load %arg18[%636, %c0_217, %c0_218] : memref<8x8x128xf32, #tpu.memory_space<vmem>>, vector<1x8x128xf32>
    %638 = vector.shape_cast %637 : vector<1x8x128xf32> to vector<8x128xf32>
    %639 = vector.shape_cast %635 : vector<8x128xf32> to vector<1x8x128xf32>
    tpu.vector_store %arg18[%636, %c0_217, %c0_218], %639 {strides = array<i32>} : memref<8x8x128xf32, #tpu.memory_space<vmem>>, vector<1x8x128xf32>,
    %c5_i32_219 = arith.constant 5 : i32
    %640 = arith.index_cast %c5_i32_219 : i32 to index
    %c0_220 = arith.constant 0 : index
    %c0_221 = arith.constant 0 : index
    %641 = vector.load %arg19[%640, %c0_220, %c0_221] : memref<8x8x512xf32, #tpu.memory_space<vmem>>, vector<1x8x512xf32>
    %642 = vector.shape_cast %641 : vector<1x8x512xf32> to vector<8x512xf32>
    %643 = arith.truncf %635 : vector<8x128xf32> to vector<8x128xbf16>
    %cst_222 = arith.constant dense<0.000000e+00> : vector<8x512xf32>
    %644 = tpu.matmul %643, %498, %cst_222 {dimension_numbers = #tpu.dot_dimension_numbers<[1], [0], [0], [1], [0, 0, 1, 1], [], []>} : vector<8x128xbf16>, vector<128x512xbf16>, vector<8x512xf32> -> vector<8x512xf32>
    %645 = arith.addf %642, %644 : vector<8x512xf32>
    %646 = vector.extract_strided_slice %645 {offsets = [0, 0], sizes = [8, 384], strides = [1, 1]} : vector<8x512xf32> to vector<8x384xf32>
    %647 = arith.negf %646 : vector<8x384xf32>
    %648 = math.exp %647 : vector<8x384xf32>
    %cst_223 = arith.constant 1.000000e+00 : f32
    %649 = vector.broadcast %cst_223 : f32 to vector<8x384xf32>
    %650 = arith.addf %649, %648 : vector<8x384xf32>
    %651 = arith.divf %649, %650 : vector<8x384xf32>
    %652 = vector.extract_strided_slice %651 {offsets = [0, 0], sizes = [8, 128], strides = [1, 1]} : vector<8x384xf32> to vector<8x128xf32>
    %653 = vector.extract_strided_slice %651 {offsets = [0, 128], sizes = [8, 128], strides = [1, 1]} : vector<8x384xf32> to vector<8x128xf32>
    %654 = vector.extract_strided_slice %651 {offsets = [0, 256], sizes = [8, 128], strides = [1, 1]} : vector<8x384xf32> to vector<8x128xf32>
    %655 = vector.extract_strided_slice %645 {offsets = [0, 384], sizes = [8, 128], strides = [1, 1]} : vector<8x512xf32> to vector<8x128xf32>
    %656 = math.tanh %655 : vector<8x128xf32>
    %657 = arith.mulf %653, %633 : vector<8x128xf32>
    %658 = arith.mulf %652, %656 : vector<8x128xf32>
    %659 = arith.addf %657, %658 : vector<8x128xf32>
    %660 = math.tanh %659 : vector<8x128xf32>
    %661 = arith.mulf %654, %660 : vector<8x128xf32>
    %662 = arith.index_cast %c5_i32_219 : i32 to index
    %c0_224 = arith.constant 0 : index
    %c0_225 = arith.constant 0 : index
    %663 = vector.load %arg18[%662, %c0_224, %c0_225] : memref<8x8x128xf32, #tpu.memory_space<vmem>>, vector<1x8x128xf32>
    %664 = vector.shape_cast %663 : vector<1x8x128xf32> to vector<8x128xf32>
    %665 = vector.shape_cast %661 : vector<8x128xf32> to vector<1x8x128xf32>
    tpu.vector_store %arg18[%662, %c0_224, %c0_225], %665 {strides = array<i32>} : memref<8x8x128xf32, #tpu.memory_space<vmem>>, vector<1x8x128xf32>,
    %c6_i32_226 = arith.constant 6 : i32
    %666 = arith.index_cast %c6_i32_226 : i32 to index
    %c0_227 = arith.constant 0 : index
    %c0_228 = arith.constant 0 : index
    %667 = vector.load %arg19[%666, %c0_227, %c0_228] : memref<8x8x512xf32, #tpu.memory_space<vmem>>, vector<1x8x512xf32>
    %668 = vector.shape_cast %667 : vector<1x8x512xf32> to vector<8x512xf32>
    %669 = arith.truncf %661 : vector<8x128xf32> to vector<8x128xbf16>
    %cst_229 = arith.constant dense<0.000000e+00> : vector<8x512xf32>
    %670 = tpu.matmul %669, %498, %cst_229 {dimension_numbers = #tpu.dot_dimension_numbers<[1], [0], [0], [1], [0, 0, 1, 1], [], []>} : vector<8x128xbf16>, vector<128x512xbf16>, vector<8x512xf32> -> vector<8x512xf32>
    %671 = arith.addf %668, %670 : vector<8x512xf32>
    %672 = vector.extract_strided_slice %671 {offsets = [0, 0], sizes = [8, 384], strides = [1, 1]} : vector<8x512xf32> to vector<8x384xf32>
    %673 = arith.negf %672 : vector<8x384xf32>
    %674 = math.exp %673 : vector<8x384xf32>
    %cst_230 = arith.constant 1.000000e+00 : f32
    %675 = vector.broadcast %cst_230 : f32 to vector<8x384xf32>
    %676 = arith.addf %675, %674 : vector<8x384xf32>
    %677 = arith.divf %675, %676 : vector<8x384xf32>
    %678 = vector.extract_strided_slice %677 {offsets = [0, 0], sizes = [8, 128], strides = [1, 1]} : vector<8x384xf32> to vector<8x128xf32>
    %679 = vector.extract_strided_slice %677 {offsets = [0, 128], sizes = [8, 128], strides = [1, 1]} : vector<8x384xf32> to vector<8x128xf32>
    %680 = vector.extract_strided_slice %677 {offsets = [0, 256], sizes = [8, 128], strides = [1, 1]} : vector<8x384xf32> to vector<8x128xf32>
    %681 = vector.extract_strided_slice %671 {offsets = [0, 384], sizes = [8, 128], strides = [1, 1]} : vector<8x512xf32> to vector<8x128xf32>
    %682 = math.tanh %681 : vector<8x128xf32>
    %683 = arith.mulf %679, %659 : vector<8x128xf32>
    %684 = arith.mulf %678, %682 : vector<8x128xf32>
    %685 = arith.addf %683, %684 : vector<8x128xf32>
    %686 = math.tanh %685 : vector<8x128xf32>
    %687 = arith.mulf %680, %686 : vector<8x128xf32>
    %688 = arith.index_cast %c6_i32_226 : i32 to index
    %c0_231 = arith.constant 0 : index
    %c0_232 = arith.constant 0 : index
    %689 = vector.load %arg18[%688, %c0_231, %c0_232] : memref<8x8x128xf32, #tpu.memory_space<vmem>>, vector<1x8x128xf32>
    %690 = vector.shape_cast %689 : vector<1x8x128xf32> to vector<8x128xf32>
    %691 = vector.shape_cast %687 : vector<8x128xf32> to vector<1x8x128xf32>
    tpu.vector_store %arg18[%688, %c0_231, %c0_232], %691 {strides = array<i32>} : memref<8x8x128xf32, #tpu.memory_space<vmem>>, vector<1x8x128xf32>,
    %c7_i32_233 = arith.constant 7 : i32
    %692 = arith.index_cast %c7_i32_233 : i32 to index
    %c0_234 = arith.constant 0 : index
    %c0_235 = arith.constant 0 : index
    %693 = vector.load %arg19[%692, %c0_234, %c0_235] : memref<8x8x512xf32, #tpu.memory_space<vmem>>, vector<1x8x512xf32>
    %694 = vector.shape_cast %693 : vector<1x8x512xf32> to vector<8x512xf32>
    %695 = arith.truncf %687 : vector<8x128xf32> to vector<8x128xbf16>
    %cst_236 = arith.constant dense<0.000000e+00> : vector<8x512xf32>
    %696 = tpu.matmul %695, %498, %cst_236 {dimension_numbers = #tpu.dot_dimension_numbers<[1], [0], [0], [1], [0, 0, 1, 1], [], []>} : vector<8x128xbf16>, vector<128x512xbf16>, vector<8x512xf32> -> vector<8x512xf32>
    %697 = arith.addf %694, %696 : vector<8x512xf32>
    %698 = vector.extract_strided_slice %697 {offsets = [0, 0], sizes = [8, 384], strides = [1, 1]} : vector<8x512xf32> to vector<8x384xf32>
    %699 = arith.negf %698 : vector<8x384xf32>
    %700 = math.exp %699 : vector<8x384xf32>
    %cst_237 = arith.constant 1.000000e+00 : f32
    %701 = vector.broadcast %cst_237 : f32 to vector<8x384xf32>
    %702 = arith.addf %701, %700 : vector<8x384xf32>
    %703 = arith.divf %701, %702 : vector<8x384xf32>
    %704 = vector.extract_strided_slice %703 {offsets = [0, 0], sizes = [8, 128], strides = [1, 1]} : vector<8x384xf32> to vector<8x128xf32>
    %705 = vector.extract_strided_slice %703 {offsets = [0, 128], sizes = [8, 128], strides = [1, 1]} : vector<8x384xf32> to vector<8x128xf32>
    %706 = vector.extract_strided_slice %703 {offsets = [0, 256], sizes = [8, 128], strides = [1, 1]} : vector<8x384xf32> to vector<8x128xf32>
    %707 = vector.extract_strided_slice %697 {offsets = [0, 384], sizes = [8, 128], strides = [1, 1]} : vector<8x512xf32> to vector<8x128xf32>
    %708 = math.tanh %707 : vector<8x128xf32>
    %709 = arith.mulf %705, %685 : vector<8x128xf32>
    %710 = arith.mulf %704, %708 : vector<8x128xf32>
    %711 = arith.addf %709, %710 : vector<8x128xf32>
    %712 = math.tanh %711 : vector<8x128xf32>
    %713 = arith.mulf %706, %712 : vector<8x128xf32>
    %714 = arith.index_cast %c7_i32_233 : i32 to index
    %c0_238 = arith.constant 0 : index
    %c0_239 = arith.constant 0 : index
    %715 = vector.load %arg18[%714, %c0_238, %c0_239] : memref<8x8x128xf32, #tpu.memory_space<vmem>>, vector<1x8x128xf32>
    %716 = vector.shape_cast %715 : vector<1x8x128xf32> to vector<8x128xf32>
    %717 = vector.shape_cast %713 : vector<8x128xf32> to vector<1x8x128xf32>
    tpu.vector_store %arg18[%714, %c0_238, %c0_239], %717 {strides = array<i32>} : memref<8x8x128xf32, #tpu.memory_space<vmem>>, vector<1x8x128xf32>,
    %c8_i32_240 = arith.constant 8 : i32
    %c0_241 = arith.constant 0 : index
    %c0_242 = arith.constant 0 : index
    %c0_243 = arith.constant 0 : index
    %718 = vector.load %arg16[%c0_241, %c0_242, %c0_243] : memref<2x8x128xf32, #tpu.memory_space<vmem>>, vector<1x8x128xf32>
    %719 = vector.shape_cast %718 : vector<1x8x128xf32> to vector<8x128xf32>
    %720 = vector.shape_cast %713 : vector<8x128xf32> to vector<1x8x128xf32>
    tpu.vector_store %arg16[%c0_241, %c0_242, %c0_243], %720 {strides = array<i32>} : memref<2x8x128xf32, #tpu.memory_space<vmem>>, vector<1x8x128xf32>,
    %c0_244 = arith.constant 0 : index
    %c0_245 = arith.constant 0 : index
    %c0_246 = arith.constant 0 : index
    %721 = vector.load %arg17[%c0_244, %c0_245, %c0_246] : memref<2x8x128xf32, #tpu.memory_space<vmem>>, vector<1x8x128xf32>
    %722 = vector.shape_cast %721 : vector<1x8x128xf32> to vector<8x128xf32>
    %723 = vector.shape_cast %711 : vector<8x128xf32> to vector<1x8x128xf32>
    tpu.vector_store %arg17[%c0_244, %c0_245, %c0_246], %723 {strides = array<i32>} : memref<2x8x128xf32, #tpu.memory_space<vmem>>, vector<1x8x128xf32>,
    %c1_247 = arith.constant 1 : index
    %c0_248 = arith.constant 0 : index
    %c0_249 = arith.constant 0 : index
    %724 = vector.load %arg4[%c1_247, %c0_248, %c0_249] : memref<2x128x512xbf16, #tpu.memory_space<vmem>>, vector<1x128x512xbf16>
    %725 = vector.shape_cast %724 : vector<1x128x512xbf16> to vector<128x512xbf16>
    %c1_250 = arith.constant 1 : index
    %c0_251 = arith.constant 0 : index
    %c0_252 = arith.constant 0 : index
    %726 = vector.load %arg5[%c1_250, %c0_251, %c0_252] : memref<2x128x512xbf16, #tpu.memory_space<vmem>>, vector<1x128x512xbf16>
    %727 = vector.shape_cast %726 : vector<1x128x512xbf16> to vector<128x512xbf16>
    %c1_253 = arith.constant 1 : index
    %c0_254 = arith.constant 0 : index
    %c0_255 = arith.constant 0 : index
    %728 = vector.load %arg6[%c1_253, %c0_254, %c0_255] : memref<2x1x512xf32, #tpu.memory_space<vmem>>, vector<1x1x512xf32>
    %729 = vector.shape_cast %728 : vector<1x1x512xf32> to vector<1x512xf32>
    %c0_256 = arith.constant 0 : index
    %c0_257 = arith.constant 0 : index
    %c0_258 = arith.constant 0 : index
    %730 = vector.load %arg18[%c0_256, %c0_257, %c0_258] : memref<8x8x128xf32, #tpu.memory_space<vmem>>, vector<8x8x128xf32>
    %731 = vector.shape_cast %730 : vector<8x8x128xf32> to vector<64x128xf32>
    %732 = arith.truncf %731 : vector<64x128xf32> to vector<64x128xbf16>
    %cst_259 = arith.constant dense<0.000000e+00> : vector<64x512xf32>
    %733 = tpu.matmul %732, %725, %cst_259 {dimension_numbers = #tpu.dot_dimension_numbers<[1], [0], [0], [1], [0, 0, 1, 1], [], []>} : vector<64x128xbf16>, vector<128x512xbf16>, vector<64x512xf32> -> vector<64x512xf32>
    %734 = vector.broadcast %729 : vector<1x512xf32> to vector<64x512xf32>
    %735 = arith.addf %733, %734 : vector<64x512xf32>
    %736 = vector.shape_cast %735 : vector<64x512xf32> to vector<8x8x512xf32>
    %c0_260 = arith.constant 0 : index
    %c0_261 = arith.constant 0 : index
    %c0_262 = arith.constant 0 : index
    %737 = vector.load %arg19[%c0_260, %c0_261, %c0_262] : memref<8x8x512xf32, #tpu.memory_space<vmem>>, vector<8x8x512xf32>
    tpu.vector_store %arg19[%c0_260, %c0_261, %c0_262], %736 {strides = array<i32>} : memref<8x8x512xf32, #tpu.memory_space<vmem>>, vector<8x8x512xf32>,
    %cst_263 = arith.constant 0.000000e+00 : f32
    %738 = vector.broadcast %cst_263 : f32 to vector<8x128xf32>
    %c0_i32_264 = arith.constant 0 : i32
    %739 = arith.index_cast %c0_i32_264 : i32 to index
    %c0_265 = arith.constant 0 : index
    %c0_266 = arith.constant 0 : index
    %740 = vector.load %arg19[%739, %c0_265, %c0_266] : memref<8x8x512xf32, #tpu.memory_space<vmem>>, vector<1x8x512xf32>
    %741 = vector.shape_cast %740 : vector<1x8x512xf32> to vector<8x512xf32>
    %742 = arith.truncf %738 : vector<8x128xf32> to vector<8x128xbf16>
    %cst_267 = arith.constant dense<0.000000e+00> : vector<8x512xf32>
    %743 = tpu.matmul %742, %727, %cst_267 {dimension_numbers = #tpu.dot_dimension_numbers<[1], [0], [0], [1], [0, 0, 1, 1], [], []>} : vector<8x128xbf16>, vector<128x512xbf16>, vector<8x512xf32> -> vector<8x512xf32>
    %744 = arith.addf %741, %743 : vector<8x512xf32>
    %745 = vector.extract_strided_slice %744 {offsets = [0, 0], sizes = [8, 384], strides = [1, 1]} : vector<8x512xf32> to vector<8x384xf32>
    %746 = arith.negf %745 : vector<8x384xf32>
    %747 = math.exp %746 : vector<8x384xf32>
    %cst_268 = arith.constant 1.000000e+00 : f32
    %748 = vector.broadcast %cst_268 : f32 to vector<8x384xf32>
    %749 = arith.addf %748, %747 : vector<8x384xf32>
    %750 = arith.divf %748, %749 : vector<8x384xf32>
    %751 = vector.extract_strided_slice %750 {offsets = [0, 0], sizes = [8, 128], strides = [1, 1]} : vector<8x384xf32> to vector<8x128xf32>
    %752 = vector.extract_strided_slice %750 {offsets = [0, 128], sizes = [8, 128], strides = [1, 1]} : vector<8x384xf32> to vector<8x128xf32>
    %753 = vector.extract_strided_slice %750 {offsets = [0, 256], sizes = [8, 128], strides = [1, 1]} : vector<8x384xf32> to vector<8x128xf32>
    %754 = vector.extract_strided_slice %744 {offsets = [0, 384], sizes = [8, 128], strides = [1, 1]} : vector<8x512xf32> to vector<8x128xf32>
    %755 = math.tanh %754 : vector<8x128xf32>
    %756 = arith.mulf %752, %738 : vector<8x128xf32>
    %757 = arith.mulf %751, %755 : vector<8x128xf32>
    %758 = arith.addf %756, %757 : vector<8x128xf32>
    %759 = math.tanh %758 : vector<8x128xf32>
    %760 = arith.mulf %753, %759 : vector<8x128xf32>
    %761 = arith.index_cast %c0_i32_264 : i32 to index
    %c0_269 = arith.constant 0 : index
    %c0_270 = arith.constant 0 : index
    %762 = vector.load %arg18[%761, %c0_269, %c0_270] : memref<8x8x128xf32, #tpu.memory_space<vmem>>, vector<1x8x128xf32>
    %763 = vector.shape_cast %762 : vector<1x8x128xf32> to vector<8x128xf32>
    %764 = vector.shape_cast %760 : vector<8x128xf32> to vector<1x8x128xf32>
    tpu.vector_store %arg18[%761, %c0_269, %c0_270], %764 {strides = array<i32>} : memref<8x8x128xf32, #tpu.memory_space<vmem>>, vector<1x8x128xf32>,
    %c1_i32_271 = arith.constant 1 : i32
    %765 = arith.index_cast %c1_i32_271 : i32 to index
    %c0_272 = arith.constant 0 : index
    %c0_273 = arith.constant 0 : index
    %766 = vector.load %arg19[%765, %c0_272, %c0_273] : memref<8x8x512xf32, #tpu.memory_space<vmem>>, vector<1x8x512xf32>
    %767 = vector.shape_cast %766 : vector<1x8x512xf32> to vector<8x512xf32>
    %768 = arith.truncf %760 : vector<8x128xf32> to vector<8x128xbf16>
    %cst_274 = arith.constant dense<0.000000e+00> : vector<8x512xf32>
    %769 = tpu.matmul %768, %727, %cst_274 {dimension_numbers = #tpu.dot_dimension_numbers<[1], [0], [0], [1], [0, 0, 1, 1], [], []>} : vector<8x128xbf16>, vector<128x512xbf16>, vector<8x512xf32> -> vector<8x512xf32>
    %770 = arith.addf %767, %769 : vector<8x512xf32>
    %771 = vector.extract_strided_slice %770 {offsets = [0, 0], sizes = [8, 384], strides = [1, 1]} : vector<8x512xf32> to vector<8x384xf32>
    %772 = arith.negf %771 : vector<8x384xf32>
    %773 = math.exp %772 : vector<8x384xf32>
    %cst_275 = arith.constant 1.000000e+00 : f32
    %774 = vector.broadcast %cst_275 : f32 to vector<8x384xf32>
    %775 = arith.addf %774, %773 : vector<8x384xf32>
    %776 = arith.divf %774, %775 : vector<8x384xf32>
    %777 = vector.extract_strided_slice %776 {offsets = [0, 0], sizes = [8, 128], strides = [1, 1]} : vector<8x384xf32> to vector<8x128xf32>
    %778 = vector.extract_strided_slice %776 {offsets = [0, 128], sizes = [8, 128], strides = [1, 1]} : vector<8x384xf32> to vector<8x128xf32>
    %779 = vector.extract_strided_slice %776 {offsets = [0, 256], sizes = [8, 128], strides = [1, 1]} : vector<8x384xf32> to vector<8x128xf32>
    %780 = vector.extract_strided_slice %770 {offsets = [0, 384], sizes = [8, 128], strides = [1, 1]} : vector<8x512xf32> to vector<8x128xf32>
    %781 = math.tanh %780 : vector<8x128xf32>
    %782 = arith.mulf %778, %758 : vector<8x128xf32>
    %783 = arith.mulf %777, %781 : vector<8x128xf32>
    %784 = arith.addf %782, %783 : vector<8x128xf32>
    %785 = math.tanh %784 : vector<8x128xf32>
    %786 = arith.mulf %779, %785 : vector<8x128xf32>
    %787 = arith.index_cast %c1_i32_271 : i32 to index
    %c0_276 = arith.constant 0 : index
    %c0_277 = arith.constant 0 : index
    %788 = vector.load %arg18[%787, %c0_276, %c0_277] : memref<8x8x128xf32, #tpu.memory_space<vmem>>, vector<1x8x128xf32>
    %789 = vector.shape_cast %788 : vector<1x8x128xf32> to vector<8x128xf32>
    %790 = vector.shape_cast %786 : vector<8x128xf32> to vector<1x8x128xf32>
    tpu.vector_store %arg18[%787, %c0_276, %c0_277], %790 {strides = array<i32>} : memref<8x8x128xf32, #tpu.memory_space<vmem>>, vector<1x8x128xf32>,
    %c2_i32_278 = arith.constant 2 : i32
    %791 = arith.index_cast %c2_i32_278 : i32 to index
    %c0_279 = arith.constant 0 : index
    %c0_280 = arith.constant 0 : index
    %792 = vector.load %arg19[%791, %c0_279, %c0_280] : memref<8x8x512xf32, #tpu.memory_space<vmem>>, vector<1x8x512xf32>
    %793 = vector.shape_cast %792 : vector<1x8x512xf32> to vector<8x512xf32>
    %794 = arith.truncf %786 : vector<8x128xf32> to vector<8x128xbf16>
    %cst_281 = arith.constant dense<0.000000e+00> : vector<8x512xf32>
    %795 = tpu.matmul %794, %727, %cst_281 {dimension_numbers = #tpu.dot_dimension_numbers<[1], [0], [0], [1], [0, 0, 1, 1], [], []>} : vector<8x128xbf16>, vector<128x512xbf16>, vector<8x512xf32> -> vector<8x512xf32>
    %796 = arith.addf %793, %795 : vector<8x512xf32>
    %797 = vector.extract_strided_slice %796 {offsets = [0, 0], sizes = [8, 384], strides = [1, 1]} : vector<8x512xf32> to vector<8x384xf32>
    %798 = arith.negf %797 : vector<8x384xf32>
    %799 = math.exp %798 : vector<8x384xf32>
    %cst_282 = arith.constant 1.000000e+00 : f32
    %800 = vector.broadcast %cst_282 : f32 to vector<8x384xf32>
    %801 = arith.addf %800, %799 : vector<8x384xf32>
    %802 = arith.divf %800, %801 : vector<8x384xf32>
    %803 = vector.extract_strided_slice %802 {offsets = [0, 0], sizes = [8, 128], strides = [1, 1]} : vector<8x384xf32> to vector<8x128xf32>
    %804 = vector.extract_strided_slice %802 {offsets = [0, 128], sizes = [8, 128], strides = [1, 1]} : vector<8x384xf32> to vector<8x128xf32>
    %805 = vector.extract_strided_slice %802 {offsets = [0, 256], sizes = [8, 128], strides = [1, 1]} : vector<8x384xf32> to vector<8x128xf32>
    %806 = vector.extract_strided_slice %796 {offsets = [0, 384], sizes = [8, 128], strides = [1, 1]} : vector<8x512xf32> to vector<8x128xf32>
    %807 = math.tanh %806 : vector<8x128xf32>
    %808 = arith.mulf %804, %784 : vector<8x128xf32>
    %809 = arith.mulf %803, %807 : vector<8x128xf32>
    %810 = arith.addf %808, %809 : vector<8x128xf32>
    %811 = math.tanh %810 : vector<8x128xf32>
    %812 = arith.mulf %805, %811 : vector<8x128xf32>
    %813 = arith.index_cast %c2_i32_278 : i32 to index
    %c0_283 = arith.constant 0 : index
    %c0_284 = arith.constant 0 : index
    %814 = vector.load %arg18[%813, %c0_283, %c0_284] : memref<8x8x128xf32, #tpu.memory_space<vmem>>, vector<1x8x128xf32>
    %815 = vector.shape_cast %814 : vector<1x8x128xf32> to vector<8x128xf32>
    %816 = vector.shape_cast %812 : vector<8x128xf32> to vector<1x8x128xf32>
    tpu.vector_store %arg18[%813, %c0_283, %c0_284], %816 {strides = array<i32>} : memref<8x8x128xf32, #tpu.memory_space<vmem>>, vector<1x8x128xf32>,
    %c3_i32_285 = arith.constant 3 : i32
    %817 = arith.index_cast %c3_i32_285 : i32 to index
    %c0_286 = arith.constant 0 : index
    %c0_287 = arith.constant 0 : index
    %818 = vector.load %arg19[%817, %c0_286, %c0_287] : memref<8x8x512xf32, #tpu.memory_space<vmem>>, vector<1x8x512xf32>
    %819 = vector.shape_cast %818 : vector<1x8x512xf32> to vector<8x512xf32>
    %820 = arith.truncf %812 : vector<8x128xf32> to vector<8x128xbf16>
    %cst_288 = arith.constant dense<0.000000e+00> : vector<8x512xf32>
    %821 = tpu.matmul %820, %727, %cst_288 {dimension_numbers = #tpu.dot_dimension_numbers<[1], [0], [0], [1], [0, 0, 1, 1], [], []>} : vector<8x128xbf16>, vector<128x512xbf16>, vector<8x512xf32> -> vector<8x512xf32>
    %822 = arith.addf %819, %821 : vector<8x512xf32>
    %823 = vector.extract_strided_slice %822 {offsets = [0, 0], sizes = [8, 384], strides = [1, 1]} : vector<8x512xf32> to vector<8x384xf32>
    %824 = arith.negf %823 : vector<8x384xf32>
    %825 = math.exp %824 : vector<8x384xf32>
    %cst_289 = arith.constant 1.000000e+00 : f32
    %826 = vector.broadcast %cst_289 : f32 to vector<8x384xf32>
    %827 = arith.addf %826, %825 : vector<8x384xf32>
    %828 = arith.divf %826, %827 : vector<8x384xf32>
    %829 = vector.extract_strided_slice %828 {offsets = [0, 0], sizes = [8, 128], strides = [1, 1]} : vector<8x384xf32> to vector<8x128xf32>
    %830 = vector.extract_strided_slice %828 {offsets = [0, 128], sizes = [8, 128], strides = [1, 1]} : vector<8x384xf32> to vector<8x128xf32>
    %831 = vector.extract_strided_slice %828 {offsets = [0, 256], sizes = [8, 128], strides = [1, 1]} : vector<8x384xf32> to vector<8x128xf32>
    %832 = vector.extract_strided_slice %822 {offsets = [0, 384], sizes = [8, 128], strides = [1, 1]} : vector<8x512xf32> to vector<8x128xf32>
    %833 = math.tanh %832 : vector<8x128xf32>
    %834 = arith.mulf %830, %810 : vector<8x128xf32>
    %835 = arith.mulf %829, %833 : vector<8x128xf32>
    %836 = arith.addf %834, %835 : vector<8x128xf32>
    %837 = math.tanh %836 : vector<8x128xf32>
    %838 = arith.mulf %831, %837 : vector<8x128xf32>
    %839 = arith.index_cast %c3_i32_285 : i32 to index
    %c0_290 = arith.constant 0 : index
    %c0_291 = arith.constant 0 : index
    %840 = vector.load %arg18[%839, %c0_290, %c0_291] : memref<8x8x128xf32, #tpu.memory_space<vmem>>, vector<1x8x128xf32>
    %841 = vector.shape_cast %840 : vector<1x8x128xf32> to vector<8x128xf32>
    %842 = vector.shape_cast %838 : vector<8x128xf32> to vector<1x8x128xf32>
    tpu.vector_store %arg18[%839, %c0_290, %c0_291], %842 {strides = array<i32>} : memref<8x8x128xf32, #tpu.memory_space<vmem>>, vector<1x8x128xf32>,
    %c4_i32_292 = arith.constant 4 : i32
    %843 = arith.index_cast %c4_i32_292 : i32 to index
    %c0_293 = arith.constant 0 : index
    %c0_294 = arith.constant 0 : index
    %844 = vector.load %arg19[%843, %c0_293, %c0_294] : memref<8x8x512xf32, #tpu.memory_space<vmem>>, vector<1x8x512xf32>
    %845 = vector.shape_cast %844 : vector<1x8x512xf32> to vector<8x512xf32>
    %846 = arith.truncf %838 : vector<8x128xf32> to vector<8x128xbf16>
    %cst_295 = arith.constant dense<0.000000e+00> : vector<8x512xf32>
    %847 = tpu.matmul %846, %727, %cst_295 {dimension_numbers = #tpu.dot_dimension_numbers<[1], [0], [0], [1], [0, 0, 1, 1], [], []>} : vector<8x128xbf16>, vector<128x512xbf16>, vector<8x512xf32> -> vector<8x512xf32>
    %848 = arith.addf %845, %847 : vector<8x512xf32>
    %849 = vector.extract_strided_slice %848 {offsets = [0, 0], sizes = [8, 384], strides = [1, 1]} : vector<8x512xf32> to vector<8x384xf32>
    %850 = arith.negf %849 : vector<8x384xf32>
    %851 = math.exp %850 : vector<8x384xf32>
    %cst_296 = arith.constant 1.000000e+00 : f32
    %852 = vector.broadcast %cst_296 : f32 to vector<8x384xf32>
    %853 = arith.addf %852, %851 : vector<8x384xf32>
    %854 = arith.divf %852, %853 : vector<8x384xf32>
    %855 = vector.extract_strided_slice %854 {offsets = [0, 0], sizes = [8, 128], strides = [1, 1]} : vector<8x384xf32> to vector<8x128xf32>
    %856 = vector.extract_strided_slice %854 {offsets = [0, 128], sizes = [8, 128], strides = [1, 1]} : vector<8x384xf32> to vector<8x128xf32>
    %857 = vector.extract_strided_slice %854 {offsets = [0, 256], sizes = [8, 128], strides = [1, 1]} : vector<8x384xf32> to vector<8x128xf32>
    %858 = vector.extract_strided_slice %848 {offsets = [0, 384], sizes = [8, 128], strides = [1, 1]} : vector<8x512xf32> to vector<8x128xf32>
    %859 = math.tanh %858 : vector<8x128xf32>
    %860 = arith.mulf %856, %836 : vector<8x128xf32>
    %861 = arith.mulf %855, %859 : vector<8x128xf32>
    %862 = arith.addf %860, %861 : vector<8x128xf32>
    %863 = math.tanh %862 : vector<8x128xf32>
    %864 = arith.mulf %857, %863 : vector<8x128xf32>
    %865 = arith.index_cast %c4_i32_292 : i32 to index
    %c0_297 = arith.constant 0 : index
    %c0_298 = arith.constant 0 : index
    %866 = vector.load %arg18[%865, %c0_297, %c0_298] : memref<8x8x128xf32, #tpu.memory_space<vmem>>, vector<1x8x128xf32>
    %867 = vector.shape_cast %866 : vector<1x8x128xf32> to vector<8x128xf32>
    %868 = vector.shape_cast %864 : vector<8x128xf32> to vector<1x8x128xf32>
    tpu.vector_store %arg18[%865, %c0_297, %c0_298], %868 {strides = array<i32>} : memref<8x8x128xf32, #tpu.memory_space<vmem>>, vector<1x8x128xf32>,
    %c5_i32_299 = arith.constant 5 : i32
    %869 = arith.index_cast %c5_i32_299 : i32 to index
    %c0_300 = arith.constant 0 : index
    %c0_301 = arith.constant 0 : index
    %870 = vector.load %arg19[%869, %c0_300, %c0_301] : memref<8x8x512xf32, #tpu.memory_space<vmem>>, vector<1x8x512xf32>
    %871 = vector.shape_cast %870 : vector<1x8x512xf32> to vector<8x512xf32>
    %872 = arith.truncf %864 : vector<8x128xf32> to vector<8x128xbf16>
    %cst_302 = arith.constant dense<0.000000e+00> : vector<8x512xf32>
    %873 = tpu.matmul %872, %727, %cst_302 {dimension_numbers = #tpu.dot_dimension_numbers<[1], [0], [0], [1], [0, 0, 1, 1], [], []>} : vector<8x128xbf16>, vector<128x512xbf16>, vector<8x512xf32> -> vector<8x512xf32>
    %874 = arith.addf %871, %873 : vector<8x512xf32>
    %875 = vector.extract_strided_slice %874 {offsets = [0, 0], sizes = [8, 384], strides = [1, 1]} : vector<8x512xf32> to vector<8x384xf32>
    %876 = arith.negf %875 : vector<8x384xf32>
    %877 = math.exp %876 : vector<8x384xf32>
    %cst_303 = arith.constant 1.000000e+00 : f32
    %878 = vector.broadcast %cst_303 : f32 to vector<8x384xf32>
    %879 = arith.addf %878, %877 : vector<8x384xf32>
    %880 = arith.divf %878, %879 : vector<8x384xf32>
    %881 = vector.extract_strided_slice %880 {offsets = [0, 0], sizes = [8, 128], strides = [1, 1]} : vector<8x384xf32> to vector<8x128xf32>
    %882 = vector.extract_strided_slice %880 {offsets = [0, 128], sizes = [8, 128], strides = [1, 1]} : vector<8x384xf32> to vector<8x128xf32>
    %883 = vector.extract_strided_slice %880 {offsets = [0, 256], sizes = [8, 128], strides = [1, 1]} : vector<8x384xf32> to vector<8x128xf32>
    %884 = vector.extract_strided_slice %874 {offsets = [0, 384], sizes = [8, 128], strides = [1, 1]} : vector<8x512xf32> to vector<8x128xf32>
    %885 = math.tanh %884 : vector<8x128xf32>
    %886 = arith.mulf %882, %862 : vector<8x128xf32>
    %887 = arith.mulf %881, %885 : vector<8x128xf32>
    %888 = arith.addf %886, %887 : vector<8x128xf32>
    %889 = math.tanh %888 : vector<8x128xf32>
    %890 = arith.mulf %883, %889 : vector<8x128xf32>
    %891 = arith.index_cast %c5_i32_299 : i32 to index
    %c0_304 = arith.constant 0 : index
    %c0_305 = arith.constant 0 : index
    %892 = vector.load %arg18[%891, %c0_304, %c0_305] : memref<8x8x128xf32, #tpu.memory_space<vmem>>, vector<1x8x128xf32>
    %893 = vector.shape_cast %892 : vector<1x8x128xf32> to vector<8x128xf32>
    %894 = vector.shape_cast %890 : vector<8x128xf32> to vector<1x8x128xf32>
    tpu.vector_store %arg18[%891, %c0_304, %c0_305], %894 {strides = array<i32>} : memref<8x8x128xf32, #tpu.memory_space<vmem>>, vector<1x8x128xf32>,
    %c6_i32_306 = arith.constant 6 : i32
    %895 = arith.index_cast %c6_i32_306 : i32 to index
    %c0_307 = arith.constant 0 : index
    %c0_308 = arith.constant 0 : index
    %896 = vector.load %arg19[%895, %c0_307, %c0_308] : memref<8x8x512xf32, #tpu.memory_space<vmem>>, vector<1x8x512xf32>
    %897 = vector.shape_cast %896 : vector<1x8x512xf32> to vector<8x512xf32>
    %898 = arith.truncf %890 : vector<8x128xf32> to vector<8x128xbf16>
    %cst_309 = arith.constant dense<0.000000e+00> : vector<8x512xf32>
    %899 = tpu.matmul %898, %727, %cst_309 {dimension_numbers = #tpu.dot_dimension_numbers<[1], [0], [0], [1], [0, 0, 1, 1], [], []>} : vector<8x128xbf16>, vector<128x512xbf16>, vector<8x512xf32> -> vector<8x512xf32>
    %900 = arith.addf %897, %899 : vector<8x512xf32>
    %901 = vector.extract_strided_slice %900 {offsets = [0, 0], sizes = [8, 384], strides = [1, 1]} : vector<8x512xf32> to vector<8x384xf32>
    %902 = arith.negf %901 : vector<8x384xf32>
    %903 = math.exp %902 : vector<8x384xf32>
    %cst_310 = arith.constant 1.000000e+00 : f32
    %904 = vector.broadcast %cst_310 : f32 to vector<8x384xf32>
    %905 = arith.addf %904, %903 : vector<8x384xf32>
    %906 = arith.divf %904, %905 : vector<8x384xf32>
    %907 = vector.extract_strided_slice %906 {offsets = [0, 0], sizes = [8, 128], strides = [1, 1]} : vector<8x384xf32> to vector<8x128xf32>
    %908 = vector.extract_strided_slice %906 {offsets = [0, 128], sizes = [8, 128], strides = [1, 1]} : vector<8x384xf32> to vector<8x128xf32>
    %909 = vector.extract_strided_slice %906 {offsets = [0, 256], sizes = [8, 128], strides = [1, 1]} : vector<8x384xf32> to vector<8x128xf32>
    %910 = vector.extract_strided_slice %900 {offsets = [0, 384], sizes = [8, 128], strides = [1, 1]} : vector<8x512xf32> to vector<8x128xf32>
    %911 = math.tanh %910 : vector<8x128xf32>
    %912 = arith.mulf %908, %888 : vector<8x128xf32>
    %913 = arith.mulf %907, %911 : vector<8x128xf32>
    %914 = arith.addf %912, %913 : vector<8x128xf32>
    %915 = math.tanh %914 : vector<8x128xf32>
    %916 = arith.mulf %909, %915 : vector<8x128xf32>
    %917 = arith.index_cast %c6_i32_306 : i32 to index
    %c0_311 = arith.constant 0 : index
    %c0_312 = arith.constant 0 : index
    %918 = vector.load %arg18[%917, %c0_311, %c0_312] : memref<8x8x128xf32, #tpu.memory_space<vmem>>, vector<1x8x128xf32>
    %919 = vector.shape_cast %918 : vector<1x8x128xf32> to vector<8x128xf32>
    %920 = vector.shape_cast %916 : vector<8x128xf32> to vector<1x8x128xf32>
    tpu.vector_store %arg18[%917, %c0_311, %c0_312], %920 {strides = array<i32>} : memref<8x8x128xf32, #tpu.memory_space<vmem>>, vector<1x8x128xf32>,
    %c7_i32_313 = arith.constant 7 : i32
    %921 = arith.index_cast %c7_i32_313 : i32 to index
    %c0_314 = arith.constant 0 : index
    %c0_315 = arith.constant 0 : index
    %922 = vector.load %arg19[%921, %c0_314, %c0_315] : memref<8x8x512xf32, #tpu.memory_space<vmem>>, vector<1x8x512xf32>
    %923 = vector.shape_cast %922 : vector<1x8x512xf32> to vector<8x512xf32>
    %924 = arith.truncf %916 : vector<8x128xf32> to vector<8x128xbf16>
    %cst_316 = arith.constant dense<0.000000e+00> : vector<8x512xf32>
    %925 = tpu.matmul %924, %727, %cst_316 {dimension_numbers = #tpu.dot_dimension_numbers<[1], [0], [0], [1], [0, 0, 1, 1], [], []>} : vector<8x128xbf16>, vector<128x512xbf16>, vector<8x512xf32> -> vector<8x512xf32>
    %926 = arith.addf %923, %925 : vector<8x512xf32>
    %927 = vector.extract_strided_slice %926 {offsets = [0, 0], sizes = [8, 384], strides = [1, 1]} : vector<8x512xf32> to vector<8x384xf32>
    %928 = arith.negf %927 : vector<8x384xf32>
    %929 = math.exp %928 : vector<8x384xf32>
    %cst_317 = arith.constant 1.000000e+00 : f32
    %930 = vector.broadcast %cst_317 : f32 to vector<8x384xf32>
    %931 = arith.addf %930, %929 : vector<8x384xf32>
    %932 = arith.divf %930, %931 : vector<8x384xf32>
    %933 = vector.extract_strided_slice %932 {offsets = [0, 0], sizes = [8, 128], strides = [1, 1]} : vector<8x384xf32> to vector<8x128xf32>
    %934 = vector.extract_strided_slice %932 {offsets = [0, 128], sizes = [8, 128], strides = [1, 1]} : vector<8x384xf32> to vector<8x128xf32>
    %935 = vector.extract_strided_slice %932 {offsets = [0, 256], sizes = [8, 128], strides = [1, 1]} : vector<8x384xf32> to vector<8x128xf32>
    %936 = vector.extract_strided_slice %926 {offsets = [0, 384], sizes = [8, 128], strides = [1, 1]} : vector<8x512xf32> to vector<8x128xf32>
    %937 = math.tanh %936 : vector<8x128xf32>
    %938 = arith.mulf %934, %914 : vector<8x128xf32>
    %939 = arith.mulf %933, %937 : vector<8x128xf32>
    %940 = arith.addf %938, %939 : vector<8x128xf32>
    %941 = math.tanh %940 : vector<8x128xf32>
    %942 = arith.mulf %935, %941 : vector<8x128xf32>
    %943 = arith.index_cast %c7_i32_313 : i32 to index
    %c0_318 = arith.constant 0 : index
    %c0_319 = arith.constant 0 : index
    %944 = vector.load %arg18[%943, %c0_318, %c0_319] : memref<8x8x128xf32, #tpu.memory_space<vmem>>, vector<1x8x128xf32>
    %945 = vector.shape_cast %944 : vector<1x8x128xf32> to vector<8x128xf32>
    %946 = vector.shape_cast %942 : vector<8x128xf32> to vector<1x8x128xf32>
    tpu.vector_store %arg18[%943, %c0_318, %c0_319], %946 {strides = array<i32>} : memref<8x8x128xf32, #tpu.memory_space<vmem>>, vector<1x8x128xf32>,
    %c8_i32_320 = arith.constant 8 : i32
    %c1_321 = arith.constant 1 : index
    %c0_322 = arith.constant 0 : index
    %c0_323 = arith.constant 0 : index
    %947 = vector.load %arg16[%c1_321, %c0_322, %c0_323] : memref<2x8x128xf32, #tpu.memory_space<vmem>>, vector<1x8x128xf32>
    %948 = vector.shape_cast %947 : vector<1x8x128xf32> to vector<8x128xf32>
    %949 = vector.shape_cast %942 : vector<8x128xf32> to vector<1x8x128xf32>
    tpu.vector_store %arg16[%c1_321, %c0_322, %c0_323], %949 {strides = array<i32>} : memref<2x8x128xf32, #tpu.memory_space<vmem>>, vector<1x8x128xf32>,
    %c1_324 = arith.constant 1 : index
    %c0_325 = arith.constant 0 : index
    %c0_326 = arith.constant 0 : index
    %950 = vector.load %arg17[%c1_324, %c0_325, %c0_326] : memref<2x8x128xf32, #tpu.memory_space<vmem>>, vector<1x8x128xf32>
    %951 = vector.shape_cast %950 : vector<1x8x128xf32> to vector<8x128xf32>
    %952 = vector.shape_cast %940 : vector<8x128xf32> to vector<1x8x128xf32>
    tpu.vector_store %arg17[%c1_324, %c0_325, %c0_326], %952 {strides = array<i32>} : memref<2x8x128xf32, #tpu.memory_space<vmem>>, vector<1x8x128xf32>,
    %c7 = arith.constant 7 : index
    %c0_327 = arith.constant 0 : index
    %c0_328 = arith.constant 0 : index
    %953 = vector.load %arg18[%c7, %c0_327, %c0_328] : memref<8x8x128xf32, #tpu.memory_space<vmem>>, vector<1x8x128xf32>
    %954 = vector.shape_cast %953 : vector<1x8x128xf32> to vector<8x128xf32>
    %c0_329 = arith.constant 0 : index
    %c0_330 = arith.constant 0 : index
    %955 = vector.load %arg9[%c0_329, %c0_330] : memref<128x128xf32, #tpu.memory_space<vmem>>, vector<128x128xf32>
    %cst_331 = arith.constant dense<0.000000e+00> : vector<8x128xf32>
    %956 = tpu.matmul %954, %955, %cst_331 {dimension_numbers = #tpu.dot_dimension_numbers<[1], [0], [0], [1], [0, 0, 1, 1], [], []>} : vector<8x128xf32>, vector<128x128xf32>, vector<8x128xf32> -> vector<8x128xf32>
    %c0_332 = arith.constant 0 : index
    %c0_333 = arith.constant 0 : index
    %957 = vector.load %arg10[%c0_332, %c0_333] : memref<1x128xf32, #tpu.memory_space<vmem>>, vector<1x128xf32>
    %958 = vector.broadcast %957 : vector<1x128xf32> to vector<8x128xf32>
    %959 = arith.addf %956, %958 : vector<8x128xf32>
    %cst_334 = arith.constant 0.000000e+00 : f32
    %960 = vector.broadcast %cst_334 : f32 to vector<8x128xf32>
    %961 = arith.maximumf %959, %960 : vector<8x128xf32>
    %c0_335 = arith.constant 0 : index
    %c0_336 = arith.constant 0 : index
    %962 = vector.load %arg11[%c0_335, %c0_336] : memref<128x128xf32, #tpu.memory_space<vmem>>, vector<128x128xf32>
    %cst_337 = arith.constant dense<0.000000e+00> : vector<8x128xf32>
    %963 = tpu.matmul %961, %962, %cst_337 {dimension_numbers = #tpu.dot_dimension_numbers<[1], [0], [0], [1], [0, 0, 1, 1], [], []>} : vector<8x128xf32>, vector<128x128xf32>, vector<8x128xf32> -> vector<8x128xf32>
    %c0_338 = arith.constant 0 : index
    %c0_339 = arith.constant 0 : index
    %964 = vector.load %arg12[%c0_338, %c0_339] : memref<1x128xf32, #tpu.memory_space<vmem>>, vector<1x128xf32>
    %965 = vector.broadcast %964 : vector<1x128xf32> to vector<8x128xf32>
    %966 = arith.addf %963, %965 : vector<8x128xf32>
    %c0_340 = arith.constant 0 : index
    %c0_341 = arith.constant 0 : index
    %967 = vector.load %arg13[%c0_340, %c0_341] : memref<8x128xf32, #tpu.memory_space<vmem>>, vector<8x128xf32>
    tpu.vector_store %arg13[%c0_340, %c0_341], %966 {strides = array<i32>} : memref<8x128xf32, #tpu.memory_space<vmem>>, vector<8x128xf32>,
    return
  }
}

</mosaic_0001>

<llo_original>
// kernel: lstm_model_forward.1
$region0: #{lstm_model_forward.1}
  #allocation0 [shape = 'u32[]', space=smem, size = 0x4, offset = 0x4, fixed_abs, tag = 'smem constant byte address 0x4 - core index']
  #allocation1 [shape = 'u32[144,128]{1,0:T(1,128)}', space=vmem, size = 0x12000, scoped, tag = 'internal scratch']
  #allocation2 [shape = 'f32[8,8,128]{2,1,0:T(8,128)}', space=vmem, size = 0x8000, scoped, tag = 'scratch operand']
  #allocation3 [shape = 'f32[8,8,512]{2,1,0:T(8,128)}', space=vmem, size = 0x20000, scoped, tag = 'scratch operand']
  %s0 = inlined_call_operand.vmem [shape: f32[8,8,128], index: 0, kind: input, shape index: {}]
  %s1 = inlined_call_operand.hbm [shape: bf16[2,128,512], index: 1, kind: input, shape index: {}]
  %s2 = inlined_call_operand.hbm [shape: bf16[2,128,512], index: 2, kind: input, shape index: {}]
  %s3 = inlined_call_operand.hbm [shape: f32[2,1,512], index: 3, kind: input, shape index: {}]
  %s4 = inlined_call_operand.hbm [shape: bf16[2,128,512], index: 4, kind: input, shape index: {}]
  %s5 = inlined_call_operand.hbm [shape: bf16[2,128,512], index: 5, kind: input, shape index: {}]
  %s6 = inlined_call_operand.hbm [shape: f32[2,1,512], index: 6, kind: input, shape index: {}]
  %s7 = inlined_call_operand.vmem [shape: f32[1,128], index: 7, kind: input, shape index: {}]
  %s8 = inlined_call_operand.vmem [shape: f32[1,128], index: 8, kind: input, shape index: {}]
  %s9 = inlined_call_operand.vmem [shape: f32[128,128], index: 9, kind: input, shape index: {}]
  %s10 = inlined_call_operand.vmem [shape: f32[1,128], index: 10, kind: input, shape index: {}]
  %s11 = inlined_call_operand.hbm [shape: f32[128,128], index: 11, kind: input, shape index: {}]
  %s12 = inlined_call_operand.hbm [shape: f32[1,128], index: 12, kind: input, shape index: {}]
  %s13 = inlined_call_operand.vmem [shape: f32[8,128], index: 13, kind: output, shape index: {0}]
  %s14 = inlined_call_operand.vmem [shape: f32[2,8,128], index: 14, kind: output, shape index: {1}]
  %s15 = inlined_call_operand.vmem [shape: f32[2,8,128], index: 15, kind: output, shape index: {2}]
  %s16 = inlined_call_operand.vmem [shape: f32[2,8,128], index: 16, kind: output, shape index: {3}]
  %s17 = inlined_call_operand.vmem [shape: f32[2,8,128], index: 17, kind: output, shape index: {4}]
  %18 = xla_tuple %s13, %s14, %s15, %s16, %s17
  %s19 = sld [smem:[#allocation0]]
  $region126: #{lstm_model_forward.1} parent=0
    _
  %s21 = ssub.s32 1, %s19
  %s22 = scalar_select 0, %s21, %s19
  $region1: #{lstm_model_forward.1} parent=0
    #allocation4 [shape = 'u8[262144]{0}', space=vmem, size = 0x40000, scoped, tag = 'input window, operand 1, single buffered']
    #allocation5 [shape = 's32[1]{0}', space=sflag, size = 0x4, scoped, tag = 'scoped memory for lstm_model_forward.1']
    #allocation6 [shape = 'u8[262144]{0}', space=vmem, size = 0x40000, scoped, tag = 'input window, operand 2, single buffered']
    #allocation7 [shape = 's32[1]{0}', space=sflag, size = 0x4, scoped, tag = 'scoped memory for lstm_model_forward.1']
    #allocation8 [shape = 'u8[4096]{0}', space=vmem, size = 0x1000, scoped, tag = 'input window, operand 3, single buffered']
    #allocation9 [shape = 'u8[262144]{0}', space=vmem, size = 0x40000, scoped, tag = 'input window, operand 4, single buffered']
    #allocation10 [shape = 's32[1]{0}', space=sflag, size = 0x4, scoped, tag = 'scoped memory for lstm_model_forward.1']
    #allocation11 [shape = 'u8[262144]{0}', space=vmem, size = 0x40000, scoped, tag = 'input window, operand 5, single buffered']
    #allocation12 [shape = 'u8[4096]{0}', space=vmem, size = 0x1000, scoped, tag = 'input window, operand 6, single buffered']
    #allocation13 [shape = 's32[1]{0}', space=sflag, size = 0x4, scoped, tag = 'scoped memory for lstm_model_forward.1']
    #allocation14 [shape = 'u8[65536]{0}', space=vmem, size = 0x10000, scoped, tag = 'input window, operand 11, single buffered']
    #allocation15 [shape = 'u8[512]{0}', space=vmem, size = 0x400, scoped, tag = 'input window, operand 12, single buffered']
    #allocation16 [shape = 's32[1]{0}', space=sflag, size = 0x4, scoped, tag = 'scoped memory for lstm_model_forward.1']
    %23 = vsyncpa [#allocation5], 0
    %24 = vsyncpa [#allocation7], 0
    %25 = vsyncpa [#allocation10], 0
    %26 = vsyncpa [#allocation13], 0
    %27 = vsyncpa [#allocation16], 0
    // Predicated region
    $region2: #{lstm_model_forward.1} parent=1 // pred_check
      _
    $region3: #{lstm_model_forward.1} parent=1 // pred_check_branch
      %29 = sbr.rel (0) target = $region5
    $region4: #{lstm_model_forward.1} parent=1 // pred_region
      _
    $region5: #{lstm_model_forward.1} parent=1 // pred_fallthru
      _
    // Predicated region
    $region6: #{lstm_model_forward.1} parent=1 // pred_check
      _
    $region7: #{lstm_model_forward.1} parent=1 // pred_check_branch
      %31 = sbr.rel (0) target = $region9
    $region8: #{lstm_model_forward.1} parent=1 // pred_region
      %s33 = ssub.s32 8192, 8192
      %34 = vsyncadd [#allocation5], %s33
      %s35 = sshll.u32 [#allocation4], 4
      %s36 = int_to_ptr.vmem [resolvable:$true] %s35
      %41 = dma.hbm_to_vmem [thread:$0]  %s1, 8192, %s36, [#allocation5], 256, 256, 16
    $region9: #{lstm_model_forward.1} parent=1 // pred_fallthru
      _
    // Predicated region
    $region10: #{lstm_model_forward.1} parent=1 // pred_check
      _
    $region11: #{lstm_model_forward.1} parent=1 // pred_check_branch
      %43 = sbr.rel (0) target = $region13
    $region12: #{lstm_model_forward.1} parent=1 // pred_region
      %s45 = ssub.s32 8192, 8192
      %46 = vsyncadd [#allocation7], %s45
      %s47 = sshll.u32 [#allocation6], 4
      %s48 = int_to_ptr.vmem [resolvable:$true] %s47
      %53 = dma.hbm_to_vmem [thread:$0]  %s2, 8192, %s48, [#allocation7], 256, 256, 16
    $region13: #{lstm_model_forward.1} parent=1 // pred_fallthru
      _
    // Predicated region
    $region14: #{lstm_model_forward.1} parent=1 // pred_check
      _
    $region15: #{lstm_model_forward.1} parent=1 // pred_check_branch
      %55 = sbr.rel (0) target = $region17
    $region16: #{lstm_model_forward.1} parent=1 // pred_region
      %s57 = ssub.s32 128, 128
      %58 = vsyncadd [#allocation7], %s57
      %s59 = sshll.u32 [#allocation8], 4
      %s60 = int_to_ptr.vmem [resolvable:$true] %s59
      %65 = dma.hbm_to_vmem [thread:$0]  %s3, 128, %s60, [#allocation7], 64, 64, 4
    $region17: #{lstm_model_forward.1} parent=1 // pred_fallthru
      _
    // Predicated region
    $region18: #{lstm_model_forward.1} parent=1 // pred_check
      _
    $region19: #{lstm_model_forward.1} parent=1 // pred_check_branch
      %67 = sbr.rel (0) target = $region21
    $region20: #{lstm_model_forward.1} parent=1 // pred_region
      %s69 = ssub.s32 8192, 8192
      %70 = vsyncadd [#allocation10], %s69
      %s71 = sshll.u32 [#allocation9], 4
      %s72 = int_to_ptr.vmem [resolvable:$true] %s71
      %77 = dma.hbm_to_vmem [thread:$0]  %s4, 8192, %s72, [#allocation10], 256, 256, 16
    $region21: #{lstm_model_forward.1} parent=1 // pred_fallthru
      _
    // Predicated region
    $region22: #{lstm_model_forward.1} parent=1 // pred_check
      _
    $region23: #{lstm_model_forward.1} parent=1 // pred_check_branch
      %79 = sbr.rel (0) target = $region25
    $region24: #{lstm_model_forward.1} parent=1 // pred_region
      %s81 = ssub.s32 8192, 8192
      %82 = vsyncadd [#allocation10], %s81
      %s83 = sshll.u32 [#allocation11], 4
      %s84 = int_to_ptr.vmem [resolvable:$true] %s83
      %89 = dma.hbm_to_vmem [thread:$0]  %s5, 8192, %s84, [#allocation10], 256, 256, 16
    $region25: #{lstm_model_forward.1} parent=1 // pred_fallthru
      _
    // Predicated region
    $region26: #{lstm_model_forward.1} parent=1 // pred_check
      _
    $region27: #{lstm_model_forward.1} parent=1 // pred_check_branch
      %91 = sbr.rel (0) target = $region29
    $region28: #{lstm_model_forward.1} parent=1 // pred_region
      %s93 = ssub.s32 128, 128
      %94 = vsyncadd [#allocation13], %s93
      %s95 = sshll.u32 [#allocation12], 4
      %s96 = int_to_ptr.vmem [resolvable:$true] %s95
      %101 = dma.hbm_to_vmem [thread:$0]  %s6, 128, %s96, [#allocation13], 64, 64, 4
    $region29: #{lstm_model_forward.1} parent=1 // pred_fallthru
      _
    // Predicated region
    $region30: #{lstm_model_forward.1} parent=1 // pred_check
      _
    $region31: #{lstm_model_forward.1} parent=1 // pred_check_branch
      %103 = sbr.rel (0) target = $region33
    $region32: #{lstm_model_forward.1} parent=1 // pred_region
      _
    $region33: #{lstm_model_forward.1} parent=1 // pred_fallthru
      _
    // Predicated region
    $region34: #{lstm_model_forward.1} parent=1 // pred_check
      _
    $region35: #{lstm_model_forward.1} parent=1 // pred_check_branch
      %105 = sbr.rel (0) target = $region37
    $region36: #{lstm_model_forward.1} parent=1 // pred_region
      _
    $region37: #{lstm_model_forward.1} parent=1 // pred_fallthru
      _
    // Predicated region
    $region38: #{lstm_model_forward.1} parent=1 // pred_check
      _
    $region39: #{lstm_model_forward.1} parent=1 // pred_check_branch
      %107 = sbr.rel (0) target = $region41
    $region40: #{lstm_model_forward.1} parent=1 // pred_region
      _
    $region41: #{lstm_model_forward.1} parent=1 // pred_fallthru
      _
    // Predicated region
    $region42: #{lstm_model_forward.1} parent=1 // pred_check
      _
    $region43: #{lstm_model_forward.1} parent=1 // pred_check_branch
      %109 = sbr.rel (0) target = $region45
    $region44: #{lstm_model_forward.1} parent=1 // pred_region
      _
    $region45: #{lstm_model_forward.1} parent=1 // pred_fallthru
      _
    // Predicated region
    $region46: #{lstm_model_forward.1} parent=1 // pred_check
      _
    $region47: #{lstm_model_forward.1} parent=1 // pred_check_branch
      %111 = sbr.rel (0) target = $region49
    $region48: #{lstm_model_forward.1} parent=1 // pred_region
      %s113 = ssub.s32 2048, 2048
      %114 = vsyncadd [#allocation13], %s113
      %s115 = sshll.u32 [#allocation14], 4
      %s116 = int_to_ptr.vmem [resolvable:$true] %s115
      %121 = dma.hbm_to_vmem [thread:$0]  %s11, 2048, %s116, [#allocation13], 128, 128, 8
    $region49: #{lstm_model_forward.1} parent=1 // pred_fallthru
      _
    // Predicated region
    $region50: #{lstm_model_forward.1} parent=1 // pred_check
      _
    $region51: #{lstm_model_forward.1} parent=1 // pred_check_branch
      %123 = sbr.rel (0) target = $region53
    $region52: #{lstm_model_forward.1} parent=1 // pred_region
      %s125 = ssub.s32 16, 16
      %126 = vsyncadd [#allocation16], %s125
      %s128 = sshll.u32 [#allocation15], 4
      %s129 = int_to_ptr.vmem [resolvable:$true] %s128
      %131 = dma.hbm_to_vmem [thread:$0]  %s12, 16, %s129, [#allocation16]
    $region53: #{lstm_model_forward.1} parent=1 // pred_fallthru
      _
    // Predicated region
    $region54: #{lstm_model_forward.1} parent=1 // pred_check
      _
    $region55: #{lstm_model_forward.1} parent=1 // pred_check_branch
      %133 = sbr.rel (0) target = $region57
    $region56: #{lstm_model_forward.1} parent=1 // pred_region
      %134 = dma.done [#allocation5], 8192
    $region57: #{lstm_model_forward.1} parent=1 // pred_fallthru
      _
    // Predicated region
    $region58: #{lstm_model_forward.1} parent=1 // pred_check
      _
    $region59: #{lstm_model_forward.1} parent=1 // pred_check_branch
      %136 = sbr.rel (0) target = $region61
    $region60: #{lstm_model_forward.1} parent=1 // pred_region
      %137 = dma.done [#allocation7], 8192
    $region61: #{lstm_model_forward.1} parent=1 // pred_fallthru
      _
    // Predicated region
    $region62: #{lstm_model_forward.1} parent=1 // pred_check
      _
    $region63: #{lstm_model_forward.1} parent=1 // pred_check_branch
      %139 = sbr.rel (0) target = $region65
    $region64: #{lstm_model_forward.1} parent=1 // pred_region
      %140 = dma.done [#allocation7], 128
    $region65: #{lstm_model_forward.1} parent=1 // pred_fallthru
      _
    // Predicated region
    $region66: #{lstm_model_forward.1} parent=1 // pred_check
      _
    $region67: #{lstm_model_forward.1} parent=1 // pred_check_branch
      %142 = sbr.rel (0) target = $region69
    $region68: #{lstm_model_forward.1} parent=1 // pred_region
      %143 = dma.done [#allocation10], 8192
    $region69: #{lstm_model_forward.1} parent=1 // pred_fallthru
      _
    // Predicated region
    $region70: #{lstm_model_forward.1} parent=1 // pred_check
      _
    $region71: #{lstm_model_forward.1} parent=1 // pred_check_branch
      %145 = sbr.rel (0) target = $region73
    $region72: #{lstm_model_forward.1} parent=1 // pred_region
      %146 = dma.done [#allocation10], 8192
    $region73: #{lstm_model_forward.1} parent=1 // pred_fallthru
      _
    // Predicated region
    $region74: #{lstm_model_forward.1} parent=1 // pred_check
      _
    $region75: #{lstm_model_forward.1} parent=1 // pred_check_branch
      %148 = sbr.rel (0) target = $region77
    $region76: #{lstm_model_forward.1} parent=1 // pred_region
      %149 = dma.done [#allocation13], 128
    $region77: #{lstm_model_forward.1} parent=1 // pred_fallthru
      _
    // Predicated region
    $region78: #{lstm_model_forward.1} parent=1 // pred_check
      _
    $region79: #{lstm_model_forward.1} parent=1 // pred_check_branch
      %151 = sbr.rel (0) target = $region81
    $region80: #{lstm_model_forward.1} parent=1 // pred_region
      %152 = dma.done [#allocation13], 2048
    $region81: #{lstm_model_forward.1} parent=1 // pred_fallthru
      _
    // Predicated region
    $region82: #{lstm_model_forward.1} parent=1 // pred_check
      _
    $region83: #{lstm_model_forward.1} parent=1 // pred_check_branch
      %154 = sbr.rel (0) target = $region85
    $region84: #{lstm_model_forward.1} parent=1 // pred_region
      %155 = dma.done [#allocation16], 16
    $region85: #{lstm_model_forward.1} parent=1 // pred_fallthru
      _
    %v157 = vld [vmem:[#allocation4] sm:$0xff]
    %v158 = vld [vmem:[#allocation4 + $0x8] sm:$0xff]
    %v159 = vld [vmem:[#allocation4 + $0x10] sm:$0xff]
    %v160 = vld [vmem:[#allocation4 + $0x18] sm:$0xff]
    %v161 = vld [vmem:[#allocation4 + $0x20] sm:$0xff]
    %v162 = vld [vmem:[#allocation4 + $0x28] sm:$0xff]
    %v163 = vld [vmem:[#allocation4 + $0x30] sm:$0xff]
    %v164 = vld [vmem:[#allocation4 + $0x38] sm:$0xff]
    %v165 = vld [vmem:[#allocation4 + $0x40] sm:$0xff]
    %v166 = vld [vmem:[#allocation4 + $0x48] sm:$0xff]
    %v167 = vld [vmem:[#allocation4 + $0x50] sm:$0xff]
    %v168 = vld [vmem:[#allocation4 + $0x58] sm:$0xff]
    %v169 = vld [vmem:[#allocation4 + $0x60] sm:$0xff]
    %v170 = vld [vmem:[#allocation4 + $0x68] sm:$0xff]
    %v171 = vld [vmem:[#allocation4 + $0x70] sm:$0xff]
    %v172 = vld [vmem:[#allocation4 + $0x78] sm:$0xff]
    %v173 = vld [vmem:[#allocation4 + $0x80] sm:$0xff]
    %v174 = vld [vmem:[#allocation4 + $0x88] sm:$0xff]
    %v175 = vld [vmem:[#allocation4 + $0x90] sm:$0xff]
    %v176 = vld [vmem:[#allocation4 + $0x98] sm:$0xff]
    %v177 = vld [vmem:[#allocation4 + $0xa0] sm:$0xff]
    %v178 = vld [vmem:[#allocation4 + $0xa8] sm:$0xff]
    %v179 = vld [vmem:[#allocation4 + $0xb0] sm:$0xff]
    %v180 = vld [vmem:[#allocation4 + $0xb8] sm:$0xff]
    %v181 = vld [vmem:[#allocation4 + $0xc0] sm:$0xff]
    %v182 = vld [vmem:[#allocation4 + $0xc8] sm:$0xff]
    %v183 = vld [vmem:[#allocation4 + $0xd0] sm:$0xff]
    %v184 = vld [vmem:[#allocation4 + $0xd8] sm:$0xff]
    %v185 = vld [vmem:[#allocation4 + $0xe0] sm:$0xff]
    %v186 = vld [vmem:[#allocation4 + $0xe8] sm:$0xff]
    %v187 = vld [vmem:[#allocation4 + $0xf0] sm:$0xff]
    %v188 = vld [vmem:[#allocation4 + $0xf8] sm:$0xff]
    %v189 = vld [vmem:[#allocation6] sm:$0xff]
    %v190 = vld [vmem:[#allocation6 + $0x8] sm:$0xff]
    %v191 = vld [vmem:[#allocation6 + $0x10] sm:$0xff]
    %v192 = vld [vmem:[#allocation6 + $0x18] sm:$0xff]
    %v193 = vld [vmem:[#allocation6 + $0x20] sm:$0xff]
    %v194 = vld [vmem:[#allocation6 + $0x28] sm:$0xff]
    %v195 = vld [vmem:[#allocation6 + $0x30] sm:$0xff]
    %v196 = vld [vmem:[#allocation6 + $0x38] sm:$0xff]
    %v197 = vld [vmem:[#allocation6 + $0x40] sm:$0xff]
    %v198 = vld [vmem:[#allocation6 + $0x48] sm:$0xff]
    %v199 = vld [vmem:[#allocation6 + $0x50] sm:$0xff]
    %v200 = vld [vmem:[#allocation6 + $0x58] sm:$0xff]
    %v201 = vld [vmem:[#allocation6 + $0x60] sm:$0xff]
    %v202 = vld [vmem:[#allocation6 + $0x68] sm:$0xff]
    %v203 = vld [vmem:[#allocation6 + $0x70] sm:$0xff]
    %v204 = vld [vmem:[#allocation6 + $0x78] sm:$0xff]
    %v205 = vld [vmem:[#allocation6 + $0x80] sm:$0xff]
    %v206 = vld [vmem:[#allocation6 + $0x88] sm:$0xff]
    %v207 = vld [vmem:[#allocation6 + $0x90] sm:$0xff]
    %v208 = vld [vmem:[#allocation6 + $0x98] sm:$0xff]
    %v209 = vld [vmem:[#allocation6 + $0xa0] sm:$0xff]
    %v210 = vld [vmem:[#allocation6 + $0xa8] sm:$0xff]
    %v211 = vld [vmem:[#allocation6 + $0xb0] sm:$0xff]
    %v212 = vld [vmem:[#allocation6 + $0xb8] sm:$0xff]
    %v213 = vld [vmem:[#allocation6 + $0xc0] sm:$0xff]
    %v214 = vld [vmem:[#allocation6 + $0xc8] sm:$0xff]
    %v215 = vld [vmem:[#allocation6 + $0xd0] sm:$0xff]
    %v216 = vld [vmem:[#allocation6 + $0xd8] sm:$0xff]
    %v217 = vld [vmem:[#allocation6 + $0xe0] sm:$0xff]
    %v218 = vld [vmem:[#allocation6 + $0xe8] sm:$0xff]
    %v219 = vld [vmem:[#allocation6 + $0xf0] sm:$0xff]
    %v220 = vld [vmem:[#allocation6 + $0xf8] sm:$0xff]
    %v221 = vld [vmem:[#allocation8] sm:$0xf]
    %v222 = vld [vmem:[%s0] sm:$0xff]
    %v223 = vld [vmem:[%s0 + $0x8] sm:$0xff]
    %v224 = vld [vmem:[%s0 + $0x10] sm:$0xff]
    %v225 = vld [vmem:[%s0 + $0x18] sm:$0xff]
    %v226 = vld [vmem:[%s0 + $0x20] sm:$0xff]
    %v227 = vld [vmem:[%s0 + $0x28] sm:$0xff]
    %v228 = vld [vmem:[%s0 + $0x30] sm:$0xff]
    %v229 = vld [vmem:[%s0 + $0x38] sm:$0xff]
    %v230 = vpack.c.bf16 %v223, %v222
    %v231 = vpack.c.bf16 %v225, %v224
    %v232 = vpack.c.bf16 %v227, %v226
    %v233 = vpack.c.bf16 %v229, %v228
    %v235 = vlaneseq
    %v236 = vshrl.u32 %v235, 7
    %v237 = vsub.s32 0, %v236
    %v238 = vrot.slane %v221, %v237
    %v239 = vlaneseq
    %v240 = vshrl.u32 %v239, 7
    %v241 = vsub.s32 1, %v240
    %v242 = vrot.slane %v221, %v241
    %v243 = vlaneseq
    %v244 = vshrl.u32 %v243, 7
    %v245 = vsub.s32 2, %v244
    %v246 = vrot.slane %v221, %v245
    %v247 = vlaneseq
    %v248 = vshrl.u32 %v247, 7
    %v249 = vsub.s32 3, %v248
    %v250 = vrot.slane %v221, %v249
    %v287 = vunpack.c.l.b16 %v157
    %v288 = vunpack.c.h.b16 %v157
    %v289 = vunpack.c.l.b16 %v158
    %v290 = vunpack.c.h.b16 %v158
    %v291 = vunpack.c.l.b16 %v159
    %v292 = vunpack.c.h.b16 %v159
    %v293 = vunpack.c.l.b16 %v160
    %v294 = vunpack.c.h.b16 %v160
    %v295 = vunpack.c.l.b16 %v161
    %v296 = vunpack.c.h.b16 %v161
    %v297 = vunpack.c.l.b16 %v162
    %v298 = vunpack.c.h.b16 %v162
    %v299 = vunpack.c.l.b16 %v163
    %v300 = vunpack.c.h.b16 %v163
    %v301 = vunpack.c.l.b16 %v164
    %v302 = vunpack.c.h.b16 %v164
    %v303 = vunpack.c.l.b16 %v165
    %v304 = vunpack.c.h.b16 %v165
    %v305 = vunpack.c.l.b16 %v166
    %v306 = vunpack.c.h.b16 %v166
    %v307 = vunpack.c.l.b16 %v167
    %v308 = vunpack.c.h.b16 %v167
    %v309 = vunpack.c.l.b16 %v168
    %v310 = vunpack.c.h.b16 %v168
    %v311 = vunpack.c.l.b16 %v169
    %v312 = vunpack.c.h.b16 %v169
    %v313 = vunpack.c.l.b16 %v170
    %v314 = vunpack.c.h.b16 %v170
    %v315 = vunpack.c.l.b16 %v171
    %v316 = vunpack.c.h.b16 %v171
    %v317 = vunpack.c.l.b16 %v172
    %v318 = vunpack.c.h.b16 %v172
    %v319 = vunpack.c.l.b16 %v173
    %v320 = vunpack.c.h.b16 %v173
    %v321 = vunpack.c.l.b16 %v174
    %v322 = vunpack.c.h.b16 %v174
    %v323 = vunpack.c.l.b16 %v175
    %v324 = vunpack.c.h.b16 %v175
    %v325 = vunpack.c.l.b16 %v176
    %v326 = vunpack.c.h.b16 %v176
    %v327 = vunpack.c.l.b16 %v177
    %v328 = vunpack.c.h.b16 %v177
    %v329 = vunpack.c.l.b16 %v178
    %v330 = vunpack.c.h.b16 %v178
    %v331 = vunpack.c.l.b16 %v179
    %v332 = vunpack.c.h.b16 %v179
    %v333 = vunpack.c.l.b16 %v180
    %v334 = vunpack.c.h.b16 %v180
    %v335 = vunpack.c.l.b16 %v181
    %v336 = vunpack.c.h.b16 %v181
    %v337 = vunpack.c.l.b16 %v182
    %v338 = vunpack.c.h.b16 %v182
    %v339 = vunpack.c.l.b16 %v183
    %v340 = vunpack.c.h.b16 %v183
    %v341 = vunpack.c.l.b16 %v184
    %v342 = vunpack.c.h.b16 %v184
    %v343 = vunpack.c.l.b16 %v185
    %v344 = vunpack.c.h.b16 %v185
    %v345 = vunpack.c.l.b16 %v186
    %v346 = vunpack.c.h.b16 %v186
    %v347 = vunpack.c.l.b16 %v187
    %v348 = vunpack.c.h.b16 %v187
    %v349 = vunpack.c.l.b16 %v188
    %v350 = vunpack.c.h.b16 %v188
    %v351 = vpack.c.b16 %v291, %v287
    %v352 = vpack.c.b16 %v292, %v288
    %v353 = vpack.c.b16 %v293, %v289
    %v354 = vpack.c.b16 %v294, %v290
    %v355 = vpack.c.b16 %v299, %v295
    %v356 = vpack.c.b16 %v300, %v296
    %v357 = vpack.c.b16 %v301, %v297
    %v358 = vpack.c.b16 %v302, %v298
    %v359 = vpack.c.b16 %v307, %v303
    %v360 = vpack.c.b16 %v308, %v304
    %v361 = vpack.c.b16 %v309, %v305
    %v362 = vpack.c.b16 %v310, %v306
    %v363 = vpack.c.b16 %v315, %v311
    %v364 = vpack.c.b16 %v316, %v312
    %v365 = vpack.c.b16 %v317, %v313
    %v366 = vpack.c.b16 %v318, %v314
    %v367 = vpack.c.b16 %v323, %v319
    %v368 = vpack.c.b16 %v324, %v320
    %v369 = vpack.c.b16 %v325, %v321
    %v370 = vpack.c.b16 %v326, %v322
    %v371 = vpack.c.b16 %v331, %v327
    %v372 = vpack.c.b16 %v332, %v328
    %v373 = vpack.c.b16 %v333, %v329
    %v374 = vpack.c.b16 %v334, %v330
    %v375 = vpack.c.b16 %v339, %v335
    %v376 = vpack.c.b16 %v340, %v336
    %v377 = vpack.c.b16 %v341, %v337
    %v378 = vpack.c.b16 %v342, %v338
    %v379 = vpack.c.b16 %v347, %v343
    %v380 = vpack.c.b16 %v348, %v344
    %v381 = vpack.c.b16 %v349, %v345
    %v382 = vpack.c.b16 %v350, %v346
    %415 = vmatprep.subr.bf16.mxu0 %v352
    %416 = vmatpush1.bf16.msra.mxu0 %v351
    %417 = vmatprep.subr.bf16.mxu0 %v356
    %418 = vmatpush1.bf16.msra.mxu0 %v355
    %419 = vmatprep.subr.bf16.mxu0 %v360
    %420 = vmatpush1.bf16.msra.mxu0 %v359
    %421 = vmatprep.subr.bf16.mxu0 %v364
    %422 = vmatpush1.bf16.msra.mxu0 %v363
    %423 = vmatprep.subr.bf16.mxu0 %v368
    %424 = vmatpush1.bf16.msra.mxu0 %v367
    %425 = vmatprep.subr.bf16.mxu0 %v372
    %426 = vmatpush1.bf16.msra.mxu0 %v371
    %427 = vmatprep.subr.bf16.mxu0 %v376
    %428 = vmatpush1.bf16.msra.mxu0 %v375
    %429 = vmatprep.subr.bf16.mxu0 %v380
    %430 = vmatpush1.bf16.msra.mxu0 %v379
    %431 = vmatprep.subr.bf16.mxu0 0
    %432 = vmatpush1.bf16.msra.mxu0 0
    %433 = vmatprep.subr.bf16.mxu0 0
    %434 = vmatpush1.bf16.msra.mxu0 0
    %435 = vmatprep.subr.bf16.mxu0 0
    %436 = vmatpush1.bf16.msra.mxu0 0
    %437 = vmatprep.subr.bf16.mxu0 0
    %438 = vmatpush1.bf16.msra.mxu0 0
    %439 = vmatprep.subr.bf16.mxu0 0
    %440 = vmatpush1.bf16.msra.mxu0 0
    %441 = vmatprep.subr.bf16.mxu0 0
    %442 = vmatpush1.bf16.msra.mxu0 0
    %443 = vmatprep.subr.bf16.mxu0 0
    %444 = vmatpush1.bf16.msra.mxu0 0
    %445 = vmatprep.subr.bf16.mxu0 0
    %446 = vmatpush1.bf16.msra.mxu0 0
    %447 = vmatprep.mubr.bf16.mxu0 0
    %448 = vmatmul.mubr.bf16.gmra.mrb[0].mxu0 %v230
    %v449 = vpop.f32.mrb[0].mxu0
    %v450 = vadd.f32 %v238, %v449
    %v451 = vpop.f32.mrb[0].mxu0
    %v452 = vadd.f32 %v242, %v451
    %v453 = vpop.f32.mrb[0].mxu0
    %v454 = vadd.f32 %v238, %v453
    %v455 = vpop.f32.mrb[0].mxu0
    %v456 = vadd.f32 %v242, %v455
    %457 = vmatprep.mubr.bf16.mxu0 0
    %458 = vmatmul.mubr.bf16.gmra.mrb[0].mxu0 %v231
    %v459 = vpop.f32.mrb[0].mxu0
    %v460 = vadd.f32 %v238, %v459
    %v461 = vpop.f32.mrb[0].mxu0
    %v462 = vadd.f32 %v242, %v461
    %v463 = vpop.f32.mrb[0].mxu0
    %v464 = vadd.f32 %v238, %v463
    %v465 = vpop.f32.mrb[0].mxu0
    %v466 = vadd.f32 %v242, %v465
    %467 = vmatprep.mubr.bf16.mxu0 0
    %468 = vmatmul.mubr.bf16.gmra.mrb[0].mxu0 %v232
    %v469 = vpop.f32.mrb[0].mxu0
    %v470 = vadd.f32 %v238, %v469
    %v471 = vpop.f32.mrb[0].mxu0
    %v472 = vadd.f32 %v242, %v471
    %v473 = vpop.f32.mrb[0].mxu0
    %v474 = vadd.f32 %v238, %v473
    %v475 = vpop.f32.mrb[0].mxu0
    %v476 = vadd.f32 %v242, %v475
    %477 = vmatprep.mubr.bf16.mxu0 0
    %478 = vmatmul.mubr.bf16.gmra.mrb[0].mxu0 %v233
    %v479 = vpop.f32.mrb[0].mxu0
    %v480 = vadd.f32 %v238, %v479
    %v481 = vpop.f32.mrb[0].mxu0
    %v482 = vadd.f32 %v242, %v481
    %v483 = vpop.f32.mrb[0].mxu0
    %v484 = vadd.f32 %v238, %v483
    %v485 = vpop.f32.mrb[0].mxu0
    %v486 = vadd.f32 %v242, %v485
    %487 = vdwg.mxu0
    %488 = vmatprep.subr.bf16.mxu0 %v354
    %489 = vmatpush1.bf16.msra.mxu0 %v353
    %490 = vmatprep.subr.bf16.mxu0 %v358
    %491 = vmatpush1.bf16.msra.mxu0 %v357
    %492 = vmatprep.subr.bf16.mxu0 %v362
    %493 = vmatpush1.bf16.msra.mxu0 %v361
    %494 = vmatprep.subr.bf16.mxu0 %v366
    %495 = vmatpush1.bf16.msra.mxu0 %v365
    %496 = vmatprep.subr.bf16.mxu0 %v370
    %497 = vmatpush1.bf16.msra.mxu0 %v369
    %498 = vmatprep.subr.bf16.mxu0 %v374
    %499 = vmatpush1.bf16.msra.mxu0 %v373
    %500 = vmatprep.subr.bf16.mxu0 %v378
    %501 = vmatpush1.bf16.msra.mxu0 %v377
    %502 = vmatprep.subr.bf16.mxu0 %v382
    %503 = vmatpush1.bf16.msra.mxu0 %v381
    %504 = vmatprep.subr.bf16.mxu0 0
    %505 = vmatpush1.bf16.msra.mxu0 0
    %506 = vmatprep.subr.bf16.mxu0 0
    %507 = vmatpush1.bf16.msra.mxu0 0
    %508 = vmatprep.subr.bf16.mxu0 0
    %509 = vmatpush1.bf16.msra.mxu0 0
    %510 = vmatprep.subr.bf16.mxu0 0
    %511 = vmatpush1.bf16.msra.mxu0 0
    %512 = vmatprep.subr.bf16.mxu0 0
    %513 = vmatpush1.bf16.msra.mxu0 0
    %514 = vmatprep.subr.bf16.mxu0 0
    %515 = vmatpush1.bf16.msra.mxu0 0
    %516 = vmatprep.subr.bf16.mxu0 0
    %517 = vmatpush1.bf16.msra.mxu0 0
    %518 = vmatprep.subr.bf16.mxu0 0
    %519 = vmatpush1.bf16.msra.mxu0 0
    %520 = vmatprep.mubr.bf16.mxu0 0
    %521 = vmatmul.mubr.bf16.gmra.mrb[0].mxu0 %v230
    %v522 = vpop.f32.mrb[0].mxu0
    %v523 = vadd.f32 %v246, %v522
    %v524 = vpop.f32.mrb[0].mxu0
    %v525 = vadd.f32 %v250, %v524
    %v526 = vpop.f32.mrb[0].mxu0
    %v527 = vadd.f32 %v246, %v526
    %v528 = vpop.f32.mrb[0].mxu0
    %v529 = vadd.f32 %v250, %v528
    %530 = vmatprep.mubr.bf16.mxu0 0
    %531 = vmatmul.mubr.bf16.gmra.mrb[0].mxu0 %v231
    %v532 = vpop.f32.mrb[0].mxu0
    %v533 = vadd.f32 %v246, %v532
    %v534 = vpop.f32.mrb[0].mxu0
    %v535 = vadd.f32 %v250, %v534
    %v536 = vpop.f32.mrb[0].mxu0
    %v537 = vadd.f32 %v246, %v536
    %v538 = vpop.f32.mrb[0].mxu0
    %v539 = vadd.f32 %v250, %v538
    %540 = vmatprep.mubr.bf16.mxu0 0
    %541 = vmatmul.mubr.bf16.gmra.mrb[0].mxu0 %v232
    %v542 = vpop.f32.mrb[0].mxu0
    %v543 = vadd.f32 %v246, %v542
    %v544 = vpop.f32.mrb[0].mxu0
    %v545 = vadd.f32 %v250, %v544
    %v546 = vpop.f32.mrb[0].mxu0
    %v547 = vadd.f32 %v246, %v546
    %v548 = vpop.f32.mrb[0].mxu0
    %v549 = vadd.f32 %v250, %v548
    %550 = vmatprep.mubr.bf16.mxu0 0
    %551 = vmatmul.mubr.bf16.gmra.mrb[0].mxu0 %v233
    %v552 = vpop.f32.mrb[0].mxu0
    %v553 = vadd.f32 %v246, %v552
    %v554 = vpop.f32.mrb[0].mxu0
    %v555 = vadd.f32 %v250, %v554
    %v556 = vpop.f32.mrb[0].mxu0
    %v557 = vadd.f32 %v246, %v556
    %v558 = vpop.f32.mrb[0].mxu0
    %v559 = vadd.f32 %v250, %v558
    %560 = vdwg.mxu0
    %561 = vst [vmem:[#allocation3] sm:$0xff] %v450
    %562 = vst [vmem:[#allocation3 + $0x8] sm:$0xff] %v452
    %563 = vst [vmem:[#allocation3 + $0x10] sm:$0xff] %v523
    %564 = vst [vmem:[#allocation3 + $0x18] sm:$0xff] %v525
    %565 = vst [vmem:[#allocation3 + $0x20] sm:$0xff] %v454
    %566 = vst [vmem:[#allocation3 + $0x28] sm:$0xff] %v456
    %567 = vst [vmem:[#allocation3 + $0x30] sm:$0xff] %v527
    %568 = vst [vmem:[#allocation3 + $0x38] sm:$0xff] %v529
    %569 = vst [vmem:[#allocation3 + $0x40] sm:$0xff] %v460
    %570 = vst [vmem:[#allocation3 + $0x48] sm:$0xff] %v462
    %571 = vst [vmem:[#allocation3 + $0x50] sm:$0xff] %v533
    %572 = vst [vmem:[#allocation3 + $0x58] sm:$0xff] %v535
    %573 = vst [vmem:[#allocation3 + $0x60] sm:$0xff] %v464
    %574 = vst [vmem:[#allocation3 + $0x68] sm:$0xff] %v466
    %575 = vst [vmem:[#allocation3 + $0x70] sm:$0xff] %v537
    %576 = vst [vmem:[#allocation3 + $0x78] sm:$0xff] %v539
    %577 = vst [vmem:[#allocation3 + $0x80] sm:$0xff] %v470
    %578 = vst [vmem:[#allocation3 + $0x88] sm:$0xff] %v472
    %579 = vst [vmem:[#allocation3 + $0x90] sm:$0xff] %v543
    %580 = vst [vmem:[#allocation3 + $0x98] sm:$0xff] %v545
    %581 = vst [vmem:[#allocation3 + $0xa0] sm:$0xff] %v474
    %582 = vst [vmem:[#allocation3 + $0xa8] sm:$0xff] %v476
    %583 = vst [vmem:[#allocation3 + $0xb0] sm:$0xff] %v547
    %584 = vst [vmem:[#allocation3 + $0xb8] sm:$0xff] %v549
    %585 = vst [vmem:[#allocation3 + $0xc0] sm:$0xff] %v480
    %586 = vst [vmem:[#allocation3 + $0xc8] sm:$0xff] %v482
    %587 = vst [vmem:[#allocation3 + $0xd0] sm:$0xff] %v553
    %588 = vst [vmem:[#allocation3 + $0xd8] sm:$0xff] %v555
    %589 = vst [vmem:[#allocation3 + $0xe0] sm:$0xff] %v484
    %590 = vst [vmem:[#allocation3 + $0xe8] sm:$0xff] %v486
    %591 = vst [vmem:[#allocation3 + $0xf0] sm:$0xff] %v557
    %592 = vst [vmem:[#allocation3 + $0xf8] sm:$0xff] %v559
    %v593 = vld [vmem:[#allocation3] sm:$0xff]
    %v594 = vld [vmem:[#allocation3 + $0x8] sm:$0xff]
    %v595 = vld [vmem:[#allocation3 + $0x10] sm:$0xff]
    %v596 = vld [vmem:[#allocation3 + $0x18] sm:$0xff]
    %v629 = vunpack.c.l.b16 %v189
    %v630 = vunpack.c.h.b16 %v189
    %v631 = vunpack.c.l.b16 %v190
    %v632 = vunpack.c.h.b16 %v190
    %v633 = vunpack.c.l.b16 %v191
    %v634 = vunpack.c.h.b16 %v191
    %v635 = vunpack.c.l.b16 %v192
    %v636 = vunpack.c.h.b16 %v192
    %v637 = vunpack.c.l.b16 %v193
    %v638 = vunpack.c.h.b16 %v193
    %v639 = vunpack.c.l.b16 %v194
    %v640 = vunpack.c.h.b16 %v194
    %v641 = vunpack.c.l.b16 %v195
    %v642 = vunpack.c.h.b16 %v195
    %v643 = vunpack.c.l.b16 %v196
    %v644 = vunpack.c.h.b16 %v196
    %v645 = vunpack.c.l.b16 %v197
    %v646 = vunpack.c.h.b16 %v197
    %v647 = vunpack.c.l.b16 %v198
    %v648 = vunpack.c.h.b16 %v198
    %v649 = vunpack.c.l.b16 %v199
    %v650 = vunpack.c.h.b16 %v199
    %v651 = vunpack.c.l.b16 %v200
    %v652 = vunpack.c.h.b16 %v200
    %v653 = vunpack.c.l.b16 %v201
    %v654 = vunpack.c.h.b16 %v201
    %v655 = vunpack.c.l.b16 %v202
    %v656 = vunpack.c.h.b16 %v202
    %v657 = vunpack.c.l.b16 %v203
    %v658 = vunpack.c.h.b16 %v203
    %v659 = vunpack.c.l.b16 %v204
    %v660 = vunpack.c.h.b16 %v204
    %v661 = vunpack.c.l.b16 %v205
    %v662 = vunpack.c.h.b16 %v205
    %v663 = vunpack.c.l.b16 %v206
    %v664 = vunpack.c.h.b16 %v206
    %v665 = vunpack.c.l.b16 %v207
    %v666 = vunpack.c.h.b16 %v207
    %v667 = vunpack.c.l.b16 %v208
    %v668 = vunpack.c.h.b16 %v208
    %v669 = vunpack.c.l.b16 %v209
    %v670 = vunpack.c.h.b16 %v209
    %v671 = vunpack.c.l.b16 %v210
    %v672 = vunpack.c.h.b16 %v210
    %v673 = vunpack.c.l.b16 %v211
    %v674 = vunpack.c.h.b16 %v211
    %v675 = vunpack.c.l.b16 %v212
    %v676 = vunpack.c.h.b16 %v212
    %v677 = vunpack.c.l.b16 %v213
    %v678 = vunpack.c.h.b16 %v213
    %v679 = vunpack.c.l.b16 %v214
    %v680 = vunpack.c.h.b16 %v214
    %v681 = vunpack.c.l.b16 %v215
    %v682 = vunpack.c.h.b16 %v215
    %v683 = vunpack.c.l.b16 %v216
    %v684 = vunpack.c.h.b16 %v216
    %v685 = vunpack.c.l.b16 %v217
    %v686 = vunpack.c.h.b16 %v217
    %v687 = vunpack.c.l.b16 %v218
    %v688 = vunpack.c.h.b16 %v218
    %v689 = vunpack.c.l.b16 %v219
    %v690 = vunpack.c.h.b16 %v219
    %v691 = vunpack.c.l.b16 %v220
    %v692 = vunpack.c.h.b16 %v220
    %v693 = vpack.c.b16 %v633, %v629
    %v694 = vpack.c.b16 %v634, %v630
    %v695 = vpack.c.b16 %v635, %v631
    %v696 = vpack.c.b16 %v636, %v632
    %v697 = vpack.c.b16 %v641, %v637
    %v698 = vpack.c.b16 %v642, %v638
    %v699 = vpack.c.b16 %v643, %v639
    %v700 = vpack.c.b16 %v644, %v640
    %v701 = vpack.c.b16 %v649, %v645
    %v702 = vpack.c.b16 %v650, %v646
    %v703 = vpack.c.b16 %v651, %v647
    %v704 = vpack.c.b16 %v652, %v648
    %v705 = vpack.c.b16 %v657, %v653
    %v706 = vpack.c.b16 %v658, %v654
    %v707 = vpack.c.b16 %v659, %v655
    %v708 = vpack.c.b16 %v660, %v656
    %v709 = vpack.c.b16 %v665, %v661
    %v710 = vpack.c.b16 %v666, %v662
    %v711 = vpack.c.b16 %v667, %v663
    %v712 = vpack.c.b16 %v668, %v664
    %v713 = vpack.c.b16 %v673, %v669
    %v714 = vpack.c.b16 %v674, %v670
    %v715 = vpack.c.b16 %v675, %v671
    %v716 = vpack.c.b16 %v676, %v672
    %v717 = vpack.c.b16 %v681, %v677
    %v718 = vpack.c.b16 %v682, %v678
    %v719 = vpack.c.b16 %v683, %v679
    %v720 = vpack.c.b16 %v684, %v680
    %v721 = vpack.c.b16 %v689, %v685
    %v722 = vpack.c.b16 %v690, %v686
    %v723 = vpack.c.b16 %v691, %v687
    %v724 = vpack.c.b16 %v692, %v688
    %757 = vmatprep.subr.bf16.mxu0 %v694
    %758 = vmatpush1.bf16.msra.mxu0 %v693
    %759 = vmatprep.subr.bf16.mxu0 %v698
    %760 = vmatpush1.bf16.msra.mxu0 %v697
    %761 = vmatprep.subr.bf16.mxu0 %v702
    %762 = vmatpush1.bf16.msra.mxu0 %v701
    %763 = vmatprep.subr.bf16.mxu0 %v706
    %764 = vmatpush1.bf16.msra.mxu0 %v705
    %765 = vmatprep.subr.bf16.mxu0 %v710
    %766 = vmatpush1.bf16.msra.mxu0 %v709
    %767 = vmatprep.subr.bf16.mxu0 %v714
    %768 = vmatpush1.bf16.msra.mxu0 %v713
    %769 = vmatprep.subr.bf16.mxu0 %v718
    %770 = vmatpush1.bf16.msra.mxu0 %v717
    %771 = vmatprep.subr.bf16.mxu0 %v722
    %772 = vmatpush1.bf16.msra.mxu0 %v721
    %773 = vmatprep.subr.bf16.mxu0 0
    %774 = vmatpush1.bf16.msra.mxu0 0
    %775 = vmatprep.subr.bf16.mxu0 0
    %776 = vmatpush1.bf16.msra.mxu0 0
    %777 = vmatprep.subr.bf16.mxu0 0
    %778 = vmatpush1.bf16.msra.mxu0 0
    %779 = vmatprep.subr.bf16.mxu0 0
    %780 = vmatpush1.bf16.msra.mxu0 0
    %781 = vmatprep.subr.bf16.mxu0 0
    %782 = vmatpush1.bf16.msra.mxu0 0
    %783 = vmatprep.subr.bf16.mxu0 0
    %784 = vmatpush1.bf16.msra.mxu0 0
    %785 = vmatprep.subr.bf16.mxu0 0
    %786 = vmatpush1.bf16.msra.mxu0 0
    %787 = vmatprep.subr.bf16.mxu0 0
    %788 = vmatpush1.bf16.msra.mxu0 0
    %789 = vmatprep.mubr.bf16.mxu0 0
    %790 = vmatmul.mubr.bf16.gmra.mrb[0].mxu0 0
    %v791 = vpop.f32.mrb[0].mxu0
    %v792 = vadd.f32 0.0, %v791
    %v793 = vpop.f32.mrb[0].mxu0
    %v794 = vadd.f32 0.0, %v793
    %v795 = vpop.f32.mrb[0].mxu0
    %v796 = vpop.f32.mrb[0].mxu0
    %797 = vdwg.mxu0
    %798 = vmatprep.subr.bf16.mxu0 %v696
    %799 = vmatpush1.bf16.msra.mxu0 %v695
    %800 = vmatprep.subr.bf16.mxu0 %v700
    %801 = vmatpush1.bf16.msra.mxu0 %v699
    %802 = vmatprep.subr.bf16.mxu0 %v704
    %803 = vmatpush1.bf16.msra.mxu0 %v703
    %804 = vmatprep.subr.bf16.mxu0 %v708
    %805 = vmatpush1.bf16.msra.mxu0 %v707
    %806 = vmatprep.subr.bf16.mxu0 %v712
    %807 = vmatpush1.bf16.msra.mxu0 %v711
    %808 = vmatprep.subr.bf16.mxu0 %v716
    %809 = vmatpush1.bf16.msra.mxu0 %v715
    %810 = vmatprep.subr.bf16.mxu0 %v720
    %811 = vmatpush1.bf16.msra.mxu0 %v719
    %812 = vmatprep.subr.bf16.mxu0 %v724
    %813 = vmatpush1.bf16.msra.mxu0 %v723
    %814 = vmatprep.subr.bf16.mxu0 0
    %815 = vmatpush1.bf16.msra.mxu0 0
    %816 = vmatprep.subr.bf16.mxu0 0
    %817 = vmatpush1.bf16.msra.mxu0 0
    %818 = vmatprep.subr.bf16.mxu0 0
    %819 = vmatpush1.bf16.msra.mxu0 0
    %820 = vmatprep.subr.bf16.mxu0 0
    %821 = vmatpush1.bf16.msra.mxu0 0
    %822 = vmatprep.subr.bf16.mxu0 0
    %823 = vmatpush1.bf16.msra.mxu0 0
    %824 = vmatprep.subr.bf16.mxu0 0
    %825 = vmatpush1.bf16.msra.mxu0 0
    %826 = vmatprep.subr.bf16.mxu0 0
    %827 = vmatpush1.bf16.msra.mxu0 0
    %828 = vmatprep.subr.bf16.mxu0 0
    %829 = vmatpush1.bf16.msra.mxu0 0
    %830 = vmatprep.mubr.bf16.mxu0 0
    %831 = vmatmul.mubr.bf16.gmra.mrb[0].mxu0 0
    %v832 = vpop.f32.mrb[0].mxu0
    %v833 = vadd.f32 0.0, %v832
    %v834 = vpop.f32.mrb[0].mxu0
    %v835 = vadd.f32 0.0, %v834
    %v836 = vpop.f32.mrb[0].mxu0
    %v837 = vpop.f32.mrb[0].mxu0
    %838 = vdwg.mxu0
    %v839 = vadd.f32 %v593, %v792
    %v840 = vadd.f32 %v594, %v794
    %v841 = vadd.f32 %v595, %v833
    %v842 = vadd.f32 %v596, %v835
    %v843 = vxor.u32 %v839, 2147483648
    %v844 = vxor.u32 %v840, 2147483648
    %v845 = vxor.u32 %v841, 2147483648
    %v846 = vmul.f32 %v843, 1.442695
    %v847 = vpow.pop %v846
    %v848 = vmul.f32 %v844, 1.442695
    %v849 = vpow.pop %v848
    %v850 = vmul.f32 %v845, 1.442695
    %v851 = vpow.pop %v850
    %v852 = vadd.f32 %v847, 1.0
    %v853 = vadd.f32 %v849, 1.0
    %v854 = vadd.f32 %v851, 1.0
    %v855 = vrcp.pop %v852
    %v856 = vmul.f32 1.0, %v855
    %v857 = vrcp.pop %v853
    %v858 = vmul.f32 1.0, %v857
    %v859 = vrcp.pop %v854
    %v860 = vmul.f32 1.0, %v859
    %v861 = vtanh.pop %v842
    %v862 = vmul.f32 %v858, 0.0
    %v863 = vmul.f32 %v856, %v861
    %v864 = vadd.f32 %v862, %v863
    %v865 = vtanh.pop %v864
    %v866 = vmul.f32 %v860, %v865
    %867 = vst [vmem:[#allocation2] sm:$0xff] %v866
    %s868 = scalar_lea.vmem [#allocation3], 32
    %v869 = vld [vmem:[%s868] sm:$0xff]
    %v870 = vld [vmem:[%s868 + $0x8] sm:$0xff]
    %v871 = vld [vmem:[%s868 + $0x10] sm:$0xff]
    %v872 = vld [vmem:[%s868 + $0x18] sm:$0xff]
    %v873 = vpack.c.bf16 %v866, %v866
    %874 = vmatprep.subr.bf16.mxu0 %v694
    %875 = vmatpush1.bf16.msra.mxu0 %v693
    %876 = vmatprep.subr.bf16.mxu0 %v698
    %877 = vmatpush1.bf16.msra.mxu0 %v697
    %878 = vmatprep.subr.bf16.mxu0 %v702
    %879 = vmatpush1.bf16.msra.mxu0 %v701
    %880 = vmatprep.subr.bf16.mxu0 %v706
    %881 = vmatpush1.bf16.msra.mxu0 %v705
    %882 = vmatprep.subr.bf16.mxu0 %v710
    %883 = vmatpush1.bf16.msra.mxu0 %v709
    %884 = vmatprep.subr.bf16.mxu0 %v714
    %885 = vmatpush1.bf16.msra.mxu0 %v713
    %886 = vmatprep.subr.bf16.mxu0 %v718
    %887 = vmatpush1.bf16.msra.mxu0 %v717
    %888 = vmatprep.subr.bf16.mxu0 %v722
    %889 = vmatpush1.bf16.msra.mxu0 %v721
    %890 = vmatprep.subr.bf16.mxu0 0
    %891 = vmatpush1.bf16.msra.mxu0 0
    %892 = vmatprep.subr.bf16.mxu0 0
    %893 = vmatpush1.bf16.msra.mxu0 0
    %894 = vmatprep.subr.bf16.mxu0 0
    %895 = vmatpush1.bf16.msra.mxu0 0
    %896 = vmatprep.subr.bf16.mxu0 0
    %897 = vmatpush1.bf16.msra.mxu0 0
    %898 = vmatprep.subr.bf16.mxu0 0
    %899 = vmatpush1.bf16.msra.mxu0 0
    %900 = vmatprep.subr.bf16.mxu0 0
    %901 = vmatpush1.bf16.msra.mxu0 0
    %902 = vmatprep.subr.bf16.mxu0 0
    %903 = vmatpush1.bf16.msra.mxu0 0
    %904 = vmatprep.subr.bf16.mxu0 0
    %905 = vmatpush1.bf16.msra.mxu0 0
    %906 = vmatprep.mubr.bf16.mxu0 0
    %907 = vmatmul.mubr.bf16.gmra.mrb[0].mxu0 %v873
    %v908 = vpop.f32.mrb[0].mxu0
    %v909 = vadd.f32 0.0, %v908
    %v910 = vpop.f32.mrb[0].mxu0
    %v911 = vadd.f32 0.0, %v910
    %v912 = vpop.f32.mrb[0].mxu0
    %v913 = vpop.f32.mrb[0].mxu0
    %914 = vdwg.mxu0
    %915 = vmatprep.subr.bf16.mxu0 %v696
    %916 = vmatpush1.bf16.msra.mxu0 %v695
    %917 = vmatprep.subr.bf16.mxu0 %v700
    %918 = vmatpush1.bf16.msra.mxu0 %v699
    %919 = vmatprep.subr.bf16.mxu0 %v704
    %920 = vmatpush1.bf16.msra.mxu0 %v703
    %921 = vmatprep.subr.bf16.mxu0 %v708
    %922 = vmatpush1.bf16.msra.mxu0 %v707
    %923 = vmatprep.subr.bf16.mxu0 %v712
    %924 = vmatpush1.bf16.msra.mxu0 %v711
    %925 = vmatprep.subr.bf16.mxu0 %v716
    %926 = vmatpush1.bf16.msra.mxu0 %v715
    %927 = vmatprep.subr.bf16.mxu0 %v720
    %928 = vmatpush1.bf16.msra.mxu0 %v719
    %929 = vmatprep.subr.bf16.mxu0 %v724
    %930 = vmatpush1.bf16.msra.mxu0 %v723
    %931 = vmatprep.subr.bf16.mxu0 0
    %932 = vmatpush1.bf16.msra.mxu0 0
    %933 = vmatprep.subr.bf16.mxu0 0
    %934 = vmatpush1.bf16.msra.mxu0 0
    %935 = vmatprep.subr.bf16.mxu0 0
    %936 = vmatpush1.bf16.msra.mxu0 0
    %937 = vmatprep.subr.bf16.mxu0 0
    %938 = vmatpush1.bf16.msra.mxu0 0
    %939 = vmatprep.subr.bf16.mxu0 0
    %940 = vmatpush1.bf16.msra.mxu0 0
    %941 = vmatprep.subr.bf16.mxu0 0
    %942 = vmatpush1.bf16.msra.mxu0 0
    %943 = vmatprep.subr.bf16.mxu0 0
    %944 = vmatpush1.bf16.msra.mxu0 0
    %945 = vmatprep.subr.bf16.mxu0 0
    %946 = vmatpush1.bf16.msra.mxu0 0
    %947 = vmatprep.mubr.bf16.mxu0 0
    %948 = vmatmul.mubr.bf16.gmra.mrb[0].mxu0 %v873
    %v949 = vpop.f32.mrb[0].mxu0
    %v950 = vadd.f32 0.0, %v949
    %v951 = vpop.f32.mrb[0].mxu0
    %v952 = vadd.f32 0.0, %v951
    %v953 = vpop.f32.mrb[0].mxu0
    %v954 = vpop.f32.mrb[0].mxu0
    %955 = vdwg.mxu0
    %v956 = vadd.f32 %v869, %v909
    %v957 = vadd.f32 %v870, %v911
    %v958 = vadd.f32 %v871, %v950
    %v959 = vadd.f32 %v872, %v952
    %v960 = vxor.u32 %v956, 2147483648
    %v961 = vxor.u32 %v957, 2147483648
    %v962 = vxor.u32 %v958, 2147483648
    %v963 = vmul.f32 %v960, 1.442695
    %v964 = vpow.pop %v963
    %v965 = vmul.f32 %v961, 1.442695
    %v966 = vpow.pop %v965
    %v967 = vmul.f32 %v962, 1.442695
    %v968 = vpow.pop %v967
    %v969 = vadd.f32 %v964, 1.0
    %v970 = vadd.f32 %v966, 1.0
    %v971 = vadd.f32 %v968, 1.0
    %v972 = vrcp.pop %v969
    %v973 = vmul.f32 1.0, %v972
    %v974 = vrcp.pop %v970
    %v975 = vmul.f32 1.0, %v974
    %v976 = vrcp.pop %v971
    %v977 = vmul.f32 1.0, %v976
    %v978 = vtanh.pop %v959
    %v979 = vmul.f32 %v975, %v864
    %v980 = vmul.f32 %v973, %v978
    %v981 = vadd.f32 %v979, %v980
    %v982 = vtanh.pop %v981
    %v983 = vmul.f32 %v977, %v982
    %s984 = scalar_lea.vmem [#allocation2], 8
    %985 = vst [vmem:[%s984] sm:$0xff] %v983
    %s986 = scalar_lea.vmem [#allocation3], 64
    %v987 = vld [vmem:[%s986] sm:$0xff]
    %v988 = vld [vmem:[%s986 + $0x8] sm:$0xff]
    %v989 = vld [vmem:[%s986 + $0x10] sm:$0xff]
    %v990 = vld [vmem:[%s986 + $0x18] sm:$0xff]
    %v991 = vpack.c.bf16 %v983, %v983
    %992 = vmatprep.subr.bf16.mxu0 %v694
    %993 = vmatpush1.bf16.msra.mxu0 %v693
    %994 = vmatprep.subr.bf16.mxu0 %v698
    %995 = vmatpush1.bf16.msra.mxu0 %v697
    %996 = vmatprep.subr.bf16.mxu0 %v702
    %997 = vmatpush1.bf16.msra.mxu0 %v701
    %998 = vmatprep.subr.bf16.mxu0 %v706
    %999 = vmatpush1.bf16.msra.mxu0 %v705
    %1000 = vmatprep.subr.bf16.mxu0 %v710
    %1001 = vmatpush1.bf16.msra.mxu0 %v709
    %1002 = vmatprep.subr.bf16.mxu0 %v714
    %1003 = vmatpush1.bf16.msra.mxu0 %v713
    %1004 = vmatprep.subr.bf16.mxu0 %v718
    %1005 = vmatpush1.bf16.msra.mxu0 %v717
    %1006 = vmatprep.subr.bf16.mxu0 %v722
    %1007 = vmatpush1.bf16.msra.mxu0 %v721
    %1008 = vmatprep.subr.bf16.mxu0 0
    %1009 = vmatpush1.bf16.msra.mxu0 0
    %1010 = vmatprep.subr.bf16.mxu0 0
    %1011 = vmatpush1.bf16.msra.mxu0 0
    %1012 = vmatprep.subr.bf16.mxu0 0
    %1013 = vmatpush1.bf16.msra.mxu0 0
    %1014 = vmatprep.subr.bf16.mxu0 0
    %1015 = vmatpush1.bf16.msra.mxu0 0
    %1016 = vmatprep.subr.bf16.mxu0 0
    %1017 = vmatpush1.bf16.msra.mxu0 0
    %1018 = vmatprep.subr.bf16.mxu0 0
    %1019 = vmatpush1.bf16.msra.mxu0 0
    %1020 = vmatprep.subr.bf16.mxu0 0
    %1021 = vmatpush1.bf16.msra.mxu0 0
    %1022 = vmatprep.subr.bf16.mxu0 0
    %1023 = vmatpush1.bf16.msra.mxu0 0
    %1024 = vmatprep.mubr.bf16.mxu0 0
    %1025 = vmatmul.mubr.bf16.gmra.mrb[0].mxu0 %v991
    %v1026 = vpop.f32.mrb[0].mxu0
    %v1027 = vadd.f32 0.0, %v1026
    %v1028 = vpop.f32.mrb[0].mxu0
    %v1029 = vadd.f32 0.0, %v1028
    %v1030 = vpop.f32.mrb[0].mxu0
    %v1031 = vpop.f32.mrb[0].mxu0
    %1032 = vdwg.mxu0
    %1033 = vmatprep.subr.bf16.mxu0 %v696
    %1034 = vmatpush1.bf16.msra.mxu0 %v695
    %1035 = vmatprep.subr.bf16.mxu0 %v700
    %1036 = vmatpush1.bf16.msra.mxu0 %v699
    %1037 = vmatprep.subr.bf16.mxu0 %v704
    %1038 = vmatpush1.bf16.msra.mxu0 %v703
    %1039 = vmatprep.subr.bf16.mxu0 %v708
    %1040 = vmatpush1.bf16.msra.mxu0 %v707
    %1041 = vmatprep.subr.bf16.mxu0 %v712
    %1042 = vmatpush1.bf16.msra.mxu0 %v711
    %1043 = vmatprep.subr.bf16.mxu0 %v716
    %1044 = vmatpush1.bf16.msra.mxu0 %v715
    %1045 = vmatprep.subr.bf16.mxu0 %v720
    %1046 = vmatpush1.bf16.msra.mxu0 %v719
    %1047 = vmatprep.subr.bf16.mxu0 %v724
    %1048 = vmatpush1.bf16.msra.mxu0 %v723
    %1049 = vmatprep.subr.bf16.mxu0 0
    %1050 = vmatpush1.bf16.msra.mxu0 0
    %1051 = vmatprep.subr.bf16.mxu0 0
    %1052 = vmatpush1.bf16.msra.mxu0 0
    %1053 = vmatprep.subr.bf16.mxu0 0
    %1054 = vmatpush1.bf16.msra.mxu0 0
    %1055 = vmatprep.subr.bf16.mxu0 0
    %1056 = vmatpush1.bf16.msra.mxu0 0
    %1057 = vmatprep.subr.bf16.mxu0 0
    %1058 = vmatpush1.bf16.msra.mxu0 0
    %1059 = vmatprep.subr.bf16.mxu0 0
    %1060 = vmatpush1.bf16.msra.mxu0 0
    %1061 = vmatprep.subr.bf16.mxu0 0
    %1062 = vmatpush1.bf16.msra.mxu0 0
    %1063 = vmatprep.subr.bf16.mxu0 0
    %1064 = vmatpush1.bf16.msra.mxu0 0
    %1065 = vmatprep.mubr.bf16.mxu0 0
    %1066 = vmatmul.mubr.bf16.gmra.mrb[0].mxu0 %v991
    %v1067 = vpop.f32.mrb[0].mxu0
    %v1068 = vadd.f32 0.0, %v1067
    %v1069 = vpop.f32.mrb[0].mxu0
    %v1070 = vadd.f32 0.0, %v1069
    %v1071 = vpop.f32.mrb[0].mxu0
    %v1072 = vpop.f32.mrb[0].mxu0
    %1073 = vdwg.mxu0
    %v1074 = vadd.f32 %v987, %v1027
    %v1075 = vadd.f32 %v988, %v1029
    %v1076 = vadd.f32 %v989, %v1068
    %v1077 = vadd.f32 %v990, %v1070
    %v1078 = vxor.u32 %v1074, 2147483648
    %v1079 = vxor.u32 %v1075, 2147483648
    %v1080 = vxor.u32 %v1076, 2147483648
    %v1081 = vmul.f32 %v1078, 1.442695
    %v1082 = vpow.pop %v1081
    %v1083 = vmul.f32 %v1079, 1.442695
    %v1084 = vpow.pop %v1083
    %v1085 = vmul.f32 %v1080, 1.442695
    %v1086 = vpow.pop %v1085
    %v1087 = vadd.f32 %v1082, 1.0
    %v1088 = vadd.f32 %v1084, 1.0
    %v1089 = vadd.f32 %v1086, 1.0
    %v1090 = vrcp.pop %v1087
    %v1091 = vmul.f32 1.0, %v1090
    %v1092 = vrcp.pop %v1088
    %v1093 = vmul.f32 1.0, %v1092
    %v1094 = vrcp.pop %v1089
    %v1095 = vmul.f32 1.0, %v1094
    %v1096 = vtanh.pop %v1077
    %v1097 = vmul.f32 %v1093, %v981
    %v1098 = vmul.f32 %v1091, %v1096
    %v1099 = vadd.f32 %v1097, %v1098
    %v1100 = vtanh.pop %v1099
    %v1101 = vmul.f32 %v1095, %v1100
    %s1102 = scalar_lea.vmem [#allocation2], 16
    %1103 = vst [vmem:[%s1102] sm:$0xff] %v1101
    %s1104 = scalar_lea.vmem [#allocation3], 96
    %v1105 = vld [vmem:[%s1104] sm:$0xff]
    %v1106 = vld [vmem:[%s1104 + $0x8] sm:$0xff]
    %v1107 = vld [vmem:[%s1104 + $0x10] sm:$0xff]
    %v1108 = vld [vmem:[%s1104 + $0x18] sm:$0xff]
    %v1109 = vpack.c.bf16 %v1101, %v1101
    %1110 = vmatprep.subr.bf16.mxu0 %v694
    %1111 = vmatpush1.bf16.msra.mxu0 %v693
    %1112 = vmatprep.subr.bf16.mxu0 %v698
    %1113 = vmatpush1.bf16.msra.mxu0 %v697
    %1114 = vmatprep.subr.bf16.mxu0 %v702
    %1115 = vmatpush1.bf16.msra.mxu0 %v701
    %1116 = vmatprep.subr.bf16.mxu0 %v706
    %1117 = vmatpush1.bf16.msra.mxu0 %v705
    %1118 = vmatprep.subr.bf16.mxu0 %v710
    %1119 = vmatpush1.bf16.msra.mxu0 %v709
    %1120 = vmatprep.subr.bf16.mxu0 %v714
    %1121 = vmatpush1.bf16.msra.mxu0 %v713
    %1122 = vmatprep.subr.bf16.mxu0 %v718
    %1123 = vmatpush1.bf16.msra.mxu0 %v717
    %1124 = vmatprep.subr.bf16.mxu0 %v722
    %1125 = vmatpush1.bf16.msra.mxu0 %v721
    %1126 = vmatprep.subr.bf16.mxu0 0
    %1127 = vmatpush1.bf16.msra.mxu0 0
    %1128 = vmatprep.subr.bf16.mxu0 0
    %1129 = vmatpush1.bf16.msra.mxu0 0
    %1130 = vmatprep.subr.bf16.mxu0 0
    %1131 = vmatpush1.bf16.msra.mxu0 0
    %1132 = vmatprep.subr.bf16.mxu0 0
    %1133 = vmatpush1.bf16.msra.mxu0 0
    %1134 = vmatprep.subr.bf16.mxu0 0
    %1135 = vmatpush1.bf16.msra.mxu0 0
    %1136 = vmatprep.subr.bf16.mxu0 0
    %1137 = vmatpush1.bf16.msra.mxu0 0
    %1138 = vmatprep.subr.bf16.mxu0 0
    %1139 = vmatpush1.bf16.msra.mxu0 0
    %1140 = vmatprep.subr.bf16.mxu0 0
    %1141 = vmatpush1.bf16.msra.mxu0 0
    %1142 = vmatprep.mubr.bf16.mxu0 0
    %1143 = vmatmul.mubr.bf16.gmra.mrb[0].mxu0 %v1109
    %v1144 = vpop.f32.mrb[0].mxu0
    %v1145 = vadd.f32 0.0, %v1144
    %v1146 = vpop.f32.mrb[0].mxu0
    %v1147 = vadd.f32 0.0, %v1146
    %v1148 = vpop.f32.mrb[0].mxu0
    %v1149 = vpop.f32.mrb[0].mxu0
    %1150 = vdwg.mxu0
    %1151 = vmatprep.subr.bf16.mxu0 %v696
    %1152 = vmatpush1.bf16.msra.mxu0 %v695
    %1153 = vmatprep.subr.bf16.mxu0 %v700
    %1154 = vmatpush1.bf16.msra.mxu0 %v699
    %1155 = vmatprep.subr.bf16.mxu0 %v704
    %1156 = vmatpush1.bf16.msra.mxu0 %v703
    %1157 = vmatprep.subr.bf16.mxu0 %v708
    %1158 = vmatpush1.bf16.msra.mxu0 %v707
    %1159 = vmatprep.subr.bf16.mxu0 %v712
    %1160 = vmatpush1.bf16.msra.mxu0 %v711
    %1161 = vmatprep.subr.bf16.mxu0 %v716
    %1162 = vmatpush1.bf16.msra.mxu0 %v715
    %1163 = vmatprep.subr.bf16.mxu0 %v720
    %1164 = vmatpush1.bf16.msra.mxu0 %v719
    %1165 = vmatprep.subr.bf16.mxu0 %v724
    %1166 = vmatpush1.bf16.msra.mxu0 %v723
    %1167 = vmatprep.subr.bf16.mxu0 0
    %1168 = vmatpush1.bf16.msra.mxu0 0
    %1169 = vmatprep.subr.bf16.mxu0 0
    %1170 = vmatpush1.bf16.msra.mxu0 0
    %1171 = vmatprep.subr.bf16.mxu0 0
    %1172 = vmatpush1.bf16.msra.mxu0 0
    %1173 = vmatprep.subr.bf16.mxu0 0
    %1174 = vmatpush1.bf16.msra.mxu0 0
    %1175 = vmatprep.subr.bf16.mxu0 0
    %1176 = vmatpush1.bf16.msra.mxu0 0
    %1177 = vmatprep.subr.bf16.mxu0 0
    %1178 = vmatpush1.bf16.msra.mxu0 0
    %1179 = vmatprep.subr.bf16.mxu0 0
    %1180 = vmatpush1.bf16.msra.mxu0 0
    %1181 = vmatprep.subr.bf16.mxu0 0
    %1182 = vmatpush1.bf16.msra.mxu0 0
    %1183 = vmatprep.mubr.bf16.mxu0 0
    %1184 = vmatmul.mubr.bf16.gmra.mrb[0].mxu0 %v1109
    %v1185 = vpop.f32.mrb[0].mxu0
    %v1186 = vadd.f32 0.0, %v1185
    %v1187 = vpop.f32.mrb[0].mxu0
    %v1188 = vadd.f32 0.0, %v1187
    %v1189 = vpop.f32.mrb[0].mxu0
    %v1190 = vpop.f32.mrb[0].mxu0
    %1191 = vdwg.mxu0
    %v1192 = vadd.f32 %v1105, %v1145
    %v1193 = vadd.f32 %v1106, %v1147
    %v1194 = vadd.f32 %v1107, %v1186
    %v1195 = vadd.f32 %v1108, %v1188
    %v1196 = vxor.u32 %v1192, 2147483648
    %v1197 = vxor.u32 %v1193, 2147483648
    %v1198 = vxor.u32 %v1194, 2147483648
    %v1199 = vmul.f32 %v1196, 1.442695
    %v1200 = vpow.pop %v1199
    %v1201 = vmul.f32 %v1197, 1.442695
    %v1202 = vpow.pop %v1201
    %v1203 = vmul.f32 %v1198, 1.442695
    %v1204 = vpow.pop %v1203
    %v1205 = vadd.f32 %v1200, 1.0
    %v1206 = vadd.f32 %v1202, 1.0
    %v1207 = vadd.f32 %v1204, 1.0
    %v1208 = vrcp.pop %v1205
    %v1209 = vmul.f32 1.0, %v1208
    %v1210 = vrcp.pop %v1206
    %v1211 = vmul.f32 1.0, %v1210
    %v1212 = vrcp.pop %v1207
    %v1213 = vmul.f32 1.0, %v1212
    %v1214 = vtanh.pop %v1195
    %v1215 = vmul.f32 %v1211, %v1099
    %v1216 = vmul.f32 %v1209, %v1214
    %v1217 = vadd.f32 %v1215, %v1216
    %v1218 = vtanh.pop %v1217
    %v1219 = vmul.f32 %v1213, %v1218
    %s1220 = scalar_lea.vmem [#allocation2], 24
    %1221 = vst [vmem:[%s1220] sm:$0xff] %v1219
    %s1222 = scalar_lea.vmem [#allocation3], 128
    %v1223 = vld [vmem:[%s1222] sm:$0xff]
    %v1224 = vld [vmem:[%s1222 + $0x8] sm:$0xff]
    %v1225 = vld [vmem:[%s1222 + $0x10] sm:$0xff]
    %v1226 = vld [vmem:[%s1222 + $0x18] sm:$0xff]
    %v1227 = vpack.c.bf16 %v1219, %v1219
    %1228 = vmatprep.subr.bf16.mxu0 %v694
    %1229 = vmatpush1.bf16.msra.mxu0 %v693
    %1230 = vmatprep.subr.bf16.mxu0 %v698
    %1231 = vmatpush1.bf16.msra.mxu0 %v697
    %1232 = vmatprep.subr.bf16.mxu0 %v702
    %1233 = vmatpush1.bf16.msra.mxu0 %v701
    %1234 = vmatprep.subr.bf16.mxu0 %v706
    %1235 = vmatpush1.bf16.msra.mxu0 %v705
    %1236 = vmatprep.subr.bf16.mxu0 %v710
    %1237 = vmatpush1.bf16.msra.mxu0 %v709
    %1238 = vmatprep.subr.bf16.mxu0 %v714
    %1239 = vmatpush1.bf16.msra.mxu0 %v713
    %1240 = vmatprep.subr.bf16.mxu0 %v718
    %1241 = vmatpush1.bf16.msra.mxu0 %v717
    %1242 = vmatprep.subr.bf16.mxu0 %v722
    %1243 = vmatpush1.bf16.msra.mxu0 %v721
    %1244 = vmatprep.subr.bf16.mxu0 0
    %1245 = vmatpush1.bf16.msra.mxu0 0
    %1246 = vmatprep.subr.bf16.mxu0 0
    %1247 = vmatpush1.bf16.msra.mxu0 0
    %1248 = vmatprep.subr.bf16.mxu0 0
    %1249 = vmatpush1.bf16.msra.mxu0 0
    %1250 = vmatprep.subr.bf16.mxu0 0
    %1251 = vmatpush1.bf16.msra.mxu0 0
    %1252 = vmatprep.subr.bf16.mxu0 0
    %1253 = vmatpush1.bf16.msra.mxu0 0
    %1254 = vmatprep.subr.bf16.mxu0 0
    %1255 = vmatpush1.bf16.msra.mxu0 0
    %1256 = vmatprep.subr.bf16.mxu0 0
    %1257 = vmatpush1.bf16.msra.mxu0 0
    %1258 = vmatprep.subr.bf16.mxu0 0
    %1259 = vmatpush1.bf16.msra.mxu0 0
    %1260 = vmatprep.mubr.bf16.mxu0 0
    %1261 = vmatmul.mubr.bf16.gmra.mrb[0].mxu0 %v1227
    %v1262 = vpop.f32.mrb[0].mxu0
    %v1263 = vadd.f32 0.0, %v1262
    %v1264 = vpop.f32.mrb[0].mxu0
    %v1265 = vadd.f32 0.0, %v1264
    %v1266 = vpop.f32.mrb[0].mxu0
    %v1267 = vpop.f32.mrb[0].mxu0
    %1268 = vdwg.mxu0
    %1269 = vmatprep.subr.bf16.mxu0 %v696
    %1270 = vmatpush1.bf16.msra.mxu0 %v695
    %1271 = vmatprep.subr.bf16.mxu0 %v700
    %1272 = vmatpush1.bf16.msra.mxu0 %v699
    %1273 = vmatprep.subr.bf16.mxu0 %v704
    %1274 = vmatpush1.bf16.msra.mxu0 %v703
    %1275 = vmatprep.subr.bf16.mxu0 %v708
    %1276 = vmatpush1.bf16.msra.mxu0 %v707
    %1277 = vmatprep.subr.bf16.mxu0 %v712
    %1278 = vmatpush1.bf16.msra.mxu0 %v711
    %1279 = vmatprep.subr.bf16.mxu0 %v716
    %1280 = vmatpush1.bf16.msra.mxu0 %v715
    %1281 = vmatprep.subr.bf16.mxu0 %v720
    %1282 = vmatpush1.bf16.msra.mxu0 %v719
    %1283 = vmatprep.subr.bf16.mxu0 %v724
    %1284 = vmatpush1.bf16.msra.mxu0 %v723
    %1285 = vmatprep.subr.bf16.mxu0 0
    %1286 = vmatpush1.bf16.msra.mxu0 0
    %1287 = vmatprep.subr.bf16.mxu0 0
    %1288 = vmatpush1.bf16.msra.mxu0 0
    %1289 = vmatprep.subr.bf16.mxu0 0
    %1290 = vmatpush1.bf16.msra.mxu0 0
    %1291 = vmatprep.subr.bf16.mxu0 0
    %1292 = vmatpush1.bf16.msra.mxu0 0
    %1293 = vmatprep.subr.bf16.mxu0 0
    %1294 = vmatpush1.bf16.msra.mxu0 0
    %1295 = vmatprep.subr.bf16.mxu0 0
    %1296 = vmatpush1.bf16.msra.mxu0 0
    %1297 = vmatprep.subr.bf16.mxu0 0
    %1298 = vmatpush1.bf16.msra.mxu0 0
    %1299 = vmatprep.subr.bf16.mxu0 0
    %1300 = vmatpush1.bf16.msra.mxu0 0
    %1301 = vmatprep.mubr.bf16.mxu0 0
    %1302 = vmatmul.mubr.bf16.gmra.mrb[0].mxu0 %v1227
    %v1303 = vpop.f32.mrb[0].mxu0
    %v1304 = vadd.f32 0.0, %v1303
    %v1305 = vpop.f32.mrb[0].mxu0
    %v1306 = vadd.f32 0.0, %v1305
    %v1307 = vpop.f32.mrb[0].mxu0
    %v1308 = vpop.f32.mrb[0].mxu0
    %1309 = vdwg.mxu0
    %v1310 = vadd.f32 %v1223, %v1263
    %v1311 = vadd.f32 %v1224, %v1265
    %v1312 = vadd.f32 %v1225, %v1304
    %v1313 = vadd.f32 %v1226, %v1306
    %v1314 = vxor.u32 %v1310, 2147483648
    %v1315 = vxor.u32 %v1311, 2147483648
    %v1316 = vxor.u32 %v1312, 2147483648
    %v1317 = vmul.f32 %v1314, 1.442695
    %v1318 = vpow.pop %v1317
    %v1319 = vmul.f32 %v1315, 1.442695
    %v1320 = vpow.pop %v1319
    %v1321 = vmul.f32 %v1316, 1.442695
    %v1322 = vpow.pop %v1321
    %v1323 = vadd.f32 %v1318, 1.0
    %v1324 = vadd.f32 %v1320, 1.0
    %v1325 = vadd.f32 %v1322, 1.0
    %v1326 = vrcp.pop %v1323
    %v1327 = vmul.f32 1.0, %v1326
    %v1328 = vrcp.pop %v1324
    %v1329 = vmul.f32 1.0, %v1328
    %v1330 = vrcp.pop %v1325
    %v1331 = vmul.f32 1.0, %v1330
    %v1332 = vtanh.pop %v1313
    %v1333 = vmul.f32 %v1329, %v1217
    %v1334 = vmul.f32 %v1327, %v1332
    %v1335 = vadd.f32 %v1333, %v1334
    %v1336 = vtanh.pop %v1335
    %v1337 = vmul.f32 %v1331, %v1336
    %s1338 = scalar_lea.vmem [#allocation2], 32
    %1339 = vst [vmem:[%s1338] sm:$0xff] %v1337
    %s1340 = scalar_lea.vmem [#allocation3], 160
    %v1341 = vld [vmem:[%s1340] sm:$0xff]
    %v1342 = vld [vmem:[%s1340 + $0x8] sm:$0xff]
    %v1343 = vld [vmem:[%s1340 + $0x10] sm:$0xff]
    %v1344 = vld [vmem:[%s1340 + $0x18] sm:$0xff]
    %v1345 = vpack.c.bf16 %v1337, %v1337
    %1346 = vmatprep.subr.bf16.mxu0 %v694
    %1347 = vmatpush1.bf16.msra.mxu0 %v693
    %1348 = vmatprep.subr.bf16.mxu0 %v698
    %1349 = vmatpush1.bf16.msra.mxu0 %v697
    %1350 = vmatprep.subr.bf16.mxu0 %v702
    %1351 = vmatpush1.bf16.msra.mxu0 %v701
    %1352 = vmatprep.subr.bf16.mxu0 %v706
    %1353 = vmatpush1.bf16.msra.mxu0 %v705
    %1354 = vmatprep.subr.bf16.mxu0 %v710
    %1355 = vmatpush1.bf16.msra.mxu0 %v709
    %1356 = vmatprep.subr.bf16.mxu0 %v714
    %1357 = vmatpush1.bf16.msra.mxu0 %v713
    %1358 = vmatprep.subr.bf16.mxu0 %v718
    %1359 = vmatpush1.bf16.msra.mxu0 %v717
    %1360 = vmatprep.subr.bf16.mxu0 %v722
    %1361 = vmatpush1.bf16.msra.mxu0 %v721
    %1362 = vmatprep.subr.bf16.mxu0 0
    %1363 = vmatpush1.bf16.msra.mxu0 0
    %1364 = vmatprep.subr.bf16.mxu0 0
    %1365 = vmatpush1.bf16.msra.mxu0 0
    %1366 = vmatprep.subr.bf16.mxu0 0
    %1367 = vmatpush1.bf16.msra.mxu0 0
    %1368 = vmatprep.subr.bf16.mxu0 0
    %1369 = vmatpush1.bf16.msra.mxu0 0
    %1370 = vmatprep.subr.bf16.mxu0 0
    %1371 = vmatpush1.bf16.msra.mxu0 0
    %1372 = vmatprep.subr.bf16.mxu0 0
    %1373 = vmatpush1.bf16.msra.mxu0 0
    %1374 = vmatprep.subr.bf16.mxu0 0
    %1375 = vmatpush1.bf16.msra.mxu0 0
    %1376 = vmatprep.subr.bf16.mxu0 0
    %1377 = vmatpush1.bf16.msra.mxu0 0
    %1378 = vmatprep.mubr.bf16.mxu0 0
    %1379 = vmatmul.mubr.bf16.gmra.mrb[0].mxu0 %v1345
    %v1380 = vpop.f32.mrb[0].mxu0
    %v1381 = vadd.f32 0.0, %v1380
    %v1382 = vpop.f32.mrb[0].mxu0
    %v1383 = vadd.f32 0.0, %v1382
    %v1384 = vpop.f32.mrb[0].mxu0
    %v1385 = vpop.f32.mrb[0].mxu0
    %1386 = vdwg.mxu0
    %1387 = vmatprep.subr.bf16.mxu0 %v696
    %1388 = vmatpush1.bf16.msra.mxu0 %v695
    %1389 = vmatprep.subr.bf16.mxu0 %v700
    %1390 = vmatpush1.bf16.msra.mxu0 %v699
    %1391 = vmatprep.subr.bf16.mxu0 %v704
    %1392 = vmatpush1.bf16.msra.mxu0 %v703
    %1393 = vmatprep.subr.bf16.mxu0 %v708
    %1394 = vmatpush1.bf16.msra.mxu0 %v707
    %1395 = vmatprep.subr.bf16.mxu0 %v712
    %1396 = vmatpush1.bf16.msra.mxu0 %v711
    %1397 = vmatprep.subr.bf16.mxu0 %v716
    %1398 = vmatpush1.bf16.msra.mxu0 %v715
    %1399 = vmatprep.subr.bf16.mxu0 %v720
    %1400 = vmatpush1.bf16.msra.mxu0 %v719
    %1401 = vmatprep.subr.bf16.mxu0 %v724
    %1402 = vmatpush1.bf16.msra.mxu0 %v723
    %1403 = vmatprep.subr.bf16.mxu0 0
    %1404 = vmatpush1.bf16.msra.mxu0 0
    %1405 = vmatprep.subr.bf16.mxu0 0
    %1406 = vmatpush1.bf16.msra.mxu0 0
    %1407 = vmatprep.subr.bf16.mxu0 0
    %1408 = vmatpush1.bf16.msra.mxu0 0
    %1409 = vmatprep.subr.bf16.mxu0 0
    %1410 = vmatpush1.bf16.msra.mxu0 0
    %1411 = vmatprep.subr.bf16.mxu0 0
    %1412 = vmatpush1.bf16.msra.mxu0 0
    %1413 = vmatprep.subr.bf16.mxu0 0
    %1414 = vmatpush1.bf16.msra.mxu0 0
    %1415 = vmatprep.subr.bf16.mxu0 0
    %1416 = vmatpush1.bf16.msra.mxu0 0
    %1417 = vmatprep.subr.bf16.mxu0 0
    %1418 = vmatpush1.bf16.msra.mxu0 0
    %1419 = vmatprep.mubr.bf16.mxu0 0
    %1420 = vmatmul.mubr.bf16.gmra.mrb[0].mxu0 %v1345
    %v1421 = vpop.f32.mrb[0].mxu0
    %v1422 = vadd.f32 0.0, %v1421
    %v1423 = vpop.f32.mrb[0].mxu0
    %v1424 = vadd.f32 0.0, %v1423
    %v1425 = vpop.f32.mrb[0].mxu0
    %v1426 = vpop.f32.mrb[0].mxu0
    %1427 = vdwg.mxu0
    %v1428 = vadd.f32 %v1341, %v1381
    %v1429 = vadd.f32 %v1342, %v1383
    %v1430 = vadd.f32 %v1343, %v1422
    %v1431 = vadd.f32 %v1344, %v1424
    %v1432 = vxor.u32 %v1428, 2147483648
    %v1433 = vxor.u32 %v1429, 2147483648
    %v1434 = vxor.u32 %v1430, 2147483648
    %v1435 = vmul.f32 %v1432, 1.442695
    %v1436 = vpow.pop %v1435
    %v1437 = vmul.f32 %v1433, 1.442695
    %v1438 = vpow.pop %v1437
    %v1439 = vmul.f32 %v1434, 1.442695
    %v1440 = vpow.pop %v1439
    %v1441 = vadd.f32 %v1436, 1.0
    %v1442 = vadd.f32 %v1438, 1.0
    %v1443 = vadd.f32 %v1440, 1.0
    %v1444 = vrcp.pop %v1441
    %v1445 = vmul.f32 1.0, %v1444
    %v1446 = vrcp.pop %v1442
    %v1447 = vmul.f32 1.0, %v1446
    %v1448 = vrcp.pop %v1443
    %v1449 = vmul.f32 1.0, %v1448
    %v1450 = vtanh.pop %v1431
    %v1451 = vmul.f32 %v1447, %v1335
    %v1452 = vmul.f32 %v1445, %v1450
    %v1453 = vadd.f32 %v1451, %v1452
    %v1454 = vtanh.pop %v1453
    %v1455 = vmul.f32 %v1449, %v1454
    %s1456 = scalar_lea.vmem [#allocation2], 40
    %1457 = vst [vmem:[%s1456] sm:$0xff] %v1455
    %s1458 = scalar_lea.vmem [#allocation3], 192
    %v1459 = vld [vmem:[%s1458] sm:$0xff]
    %v1460 = vld [vmem:[%s1458 + $0x8] sm:$0xff]
    %v1461 = vld [vmem:[%s1458 + $0x10] sm:$0xff]
    %v1462 = vld [vmem:[%s1458 + $0x18] sm:$0xff]
    %v1463 = vpack.c.bf16 %v1455, %v1455
    %1464 = vmatprep.subr.bf16.mxu0 %v694
    %1465 = vmatpush1.bf16.msra.mxu0 %v693
    %1466 = vmatprep.subr.bf16.mxu0 %v698
    %1467 = vmatpush1.bf16.msra.mxu0 %v697
    %1468 = vmatprep.subr.bf16.mxu0 %v702
    %1469 = vmatpush1.bf16.msra.mxu0 %v701
    %1470 = vmatprep.subr.bf16.mxu0 %v706
    %1471 = vmatpush1.bf16.msra.mxu0 %v705
    %1472 = vmatprep.subr.bf16.mxu0 %v710
    %1473 = vmatpush1.bf16.msra.mxu0 %v709
    %1474 = vmatprep.subr.bf16.mxu0 %v714
    %1475 = vmatpush1.bf16.msra.mxu0 %v713
    %1476 = vmatprep.subr.bf16.mxu0 %v718
    %1477 = vmatpush1.bf16.msra.mxu0 %v717
    %1478 = vmatprep.subr.bf16.mxu0 %v722
    %1479 = vmatpush1.bf16.msra.mxu0 %v721
    %1480 = vmatprep.subr.bf16.mxu0 0
    %1481 = vmatpush1.bf16.msra.mxu0 0
    %1482 = vmatprep.subr.bf16.mxu0 0
    %1483 = vmatpush1.bf16.msra.mxu0 0
    %1484 = vmatprep.subr.bf16.mxu0 0
    %1485 = vmatpush1.bf16.msra.mxu0 0
    %1486 = vmatprep.subr.bf16.mxu0 0
    %1487 = vmatpush1.bf16.msra.mxu0 0
    %1488 = vmatprep.subr.bf16.mxu0 0
    %1489 = vmatpush1.bf16.msra.mxu0 0
    %1490 = vmatprep.subr.bf16.mxu0 0
    %1491 = vmatpush1.bf16.msra.mxu0 0
    %1492 = vmatprep.subr.bf16.mxu0 0
    %1493 = vmatpush1.bf16.msra.mxu0 0
    %1494 = vmatprep.subr.bf16.mxu0 0
    %1495 = vmatpush1.bf16.msra.mxu0 0
    %1496 = vmatprep.mubr.bf16.mxu0 0
    %1497 = vmatmul.mubr.bf16.gmra.mrb[0].mxu0 %v1463
    %v1498 = vpop.f32.mrb[0].mxu0
    %v1499 = vadd.f32 0.0, %v1498
    %v1500 = vpop.f32.mrb[0].mxu0
    %v1501 = vadd.f32 0.0, %v1500
    %v1502 = vpop.f32.mrb[0].mxu0
    %v1503 = vpop.f32.mrb[0].mxu0
    %1504 = vdwg.mxu0
    %1505 = vmatprep.subr.bf16.mxu0 %v696
    %1506 = vmatpush1.bf16.msra.mxu0 %v695
    %1507 = vmatprep.subr.bf16.mxu0 %v700
    %1508 = vmatpush1.bf16.msra.mxu0 %v699
    %1509 = vmatprep.subr.bf16.mxu0 %v704
    %1510 = vmatpush1.bf16.msra.mxu0 %v703
    %1511 = vmatprep.subr.bf16.mxu0 %v708
    %1512 = vmatpush1.bf16.msra.mxu0 %v707
    %1513 = vmatprep.subr.bf16.mxu0 %v712
    %1514 = vmatpush1.bf16.msra.mxu0 %v711
    %1515 = vmatprep.subr.bf16.mxu0 %v716
    %1516 = vmatpush1.bf16.msra.mxu0 %v715
    %1517 = vmatprep.subr.bf16.mxu0 %v720
    %1518 = vmatpush1.bf16.msra.mxu0 %v719
    %1519 = vmatprep.subr.bf16.mxu0 %v724
    %1520 = vmatpush1.bf16.msra.mxu0 %v723
    %1521 = vmatprep.subr.bf16.mxu0 0
    %1522 = vmatpush1.bf16.msra.mxu0 0
    %1523 = vmatprep.subr.bf16.mxu0 0
    %1524 = vmatpush1.bf16.msra.mxu0 0
    %1525 = vmatprep.subr.bf16.mxu0 0
    %1526 = vmatpush1.bf16.msra.mxu0 0
    %1527 = vmatprep.subr.bf16.mxu0 0
    %1528 = vmatpush1.bf16.msra.mxu0 0
    %1529 = vmatprep.subr.bf16.mxu0 0
    %1530 = vmatpush1.bf16.msra.mxu0 0
    %1531 = vmatprep.subr.bf16.mxu0 0
    %1532 = vmatpush1.bf16.msra.mxu0 0
    %1533 = vmatprep.subr.bf16.mxu0 0
    %1534 = vmatpush1.bf16.msra.mxu0 0
    %1535 = vmatprep.subr.bf16.mxu0 0
    %1536 = vmatpush1.bf16.msra.mxu0 0
    %1537 = vmatprep.mubr.bf16.mxu0 0
    %1538 = vmatmul.mubr.bf16.gmra.mrb[0].mxu0 %v1463
    %v1539 = vpop.f32.mrb[0].mxu0
    %v1540 = vadd.f32 0.0, %v1539
    %v1541 = vpop.f32.mrb[0].mxu0
    %v1542 = vadd.f32 0.0, %v1541
    %v1543 = vpop.f32.mrb[0].mxu0
    %v1544 = vpop.f32.mrb[0].mxu0
    %1545 = vdwg.mxu0
    %v1546 = vadd.f32 %v1459, %v1499
    %v1547 = vadd.f32 %v1460, %v1501
    %v1548 = vadd.f32 %v1461, %v1540
    %v1549 = vadd.f32 %v1462, %v1542
    %v1550 = vxor.u32 %v1546, 2147483648
    %v1551 = vxor.u32 %v1547, 2147483648
    %v1552 = vxor.u32 %v1548, 2147483648
    %v1553 = vmul.f32 %v1550, 1.442695
    %v1554 = vpow.pop %v1553
    %v1555 = vmul.f32 %v1551, 1.442695
    %v1556 = vpow.pop %v1555
    %v1557 = vmul.f32 %v1552, 1.442695
    %v1558 = vpow.pop %v1557
    %v1559 = vadd.f32 %v1554, 1.0
    %v1560 = vadd.f32 %v1556, 1.0
    %v1561 = vadd.f32 %v1558, 1.0
    %v1562 = vrcp.pop %v1559
    %v1563 = vmul.f32 1.0, %v1562
    %v1564 = vrcp.pop %v1560
    %v1565 = vmul.f32 1.0, %v1564
    %v1566 = vrcp.pop %v1561
    %v1567 = vmul.f32 1.0, %v1566
    %v1568 = vtanh.pop %v1549
    %v1569 = vmul.f32 %v1565, %v1453
    %v1570 = vmul.f32 %v1563, %v1568
    %v1571 = vadd.f32 %v1569, %v1570
    %v1572 = vtanh.pop %v1571
    %v1573 = vmul.f32 %v1567, %v1572
    %s1574 = scalar_lea.vmem [#allocation2], 48
    %1575 = vst [vmem:[%s1574] sm:$0xff] %v1573
    %s1576 = scalar_lea.vmem [#allocation3], 224
    %v1577 = vld [vmem:[%s1576] sm:$0xff]
    %v1578 = vld [vmem:[%s1576 + $0x8] sm:$0xff]
    %v1579 = vld [vmem:[%s1576 + $0x10] sm:$0xff]
    %v1580 = vld [vmem:[%s1576 + $0x18] sm:$0xff]
    %v1581 = vpack.c.bf16 %v1573, %v1573
    %1582 = vmatprep.subr.bf16.mxu0 %v694
    %1583 = vmatpush1.bf16.msra.mxu0 %v693
    %1584 = vmatprep.subr.bf16.mxu0 %v698
    %1585 = vmatpush1.bf16.msra.mxu0 %v697
    %1586 = vmatprep.subr.bf16.mxu0 %v702
    %1587 = vmatpush1.bf16.msra.mxu0 %v701
    %1588 = vmatprep.subr.bf16.mxu0 %v706
    %1589 = vmatpush1.bf16.msra.mxu0 %v705
    %1590 = vmatprep.subr.bf16.mxu0 %v710
    %1591 = vmatpush1.bf16.msra.mxu0 %v709
    %1592 = vmatprep.subr.bf16.mxu0 %v714
    %1593 = vmatpush1.bf16.msra.mxu0 %v713
    %1594 = vmatprep.subr.bf16.mxu0 %v718
    %1595 = vmatpush1.bf16.msra.mxu0 %v717
    %1596 = vmatprep.subr.bf16.mxu0 %v722
    %1597 = vmatpush1.bf16.msra.mxu0 %v721
    %1598 = vmatprep.subr.bf16.mxu0 0
    %1599 = vmatpush1.bf16.msra.mxu0 0
    %1600 = vmatprep.subr.bf16.mxu0 0
    %1601 = vmatpush1.bf16.msra.mxu0 0
    %1602 = vmatprep.subr.bf16.mxu0 0
    %1603 = vmatpush1.bf16.msra.mxu0 0
    %1604 = vmatprep.subr.bf16.mxu0 0
    %1605 = vmatpush1.bf16.msra.mxu0 0
    %1606 = vmatprep.subr.bf16.mxu0 0
    %1607 = vmatpush1.bf16.msra.mxu0 0
    %1608 = vmatprep.subr.bf16.mxu0 0
    %1609 = vmatpush1.bf16.msra.mxu0 0
    %1610 = vmatprep.subr.bf16.mxu0 0
    %1611 = vmatpush1.bf16.msra.mxu0 0
    %1612 = vmatprep.subr.bf16.mxu0 0
    %1613 = vmatpush1.bf16.msra.mxu0 0
    %1614 = vmatprep.mubr.bf16.mxu0 0
    %1615 = vmatmul.mubr.bf16.gmra.mrb[0].mxu0 %v1581
    %v1616 = vpop.f32.mrb[0].mxu0
    %v1617 = vadd.f32 0.0, %v1616
    %v1618 = vpop.f32.mrb[0].mxu0
    %v1619 = vadd.f32 0.0, %v1618
    %v1620 = vpop.f32.mrb[0].mxu0
    %v1621 = vpop.f32.mrb[0].mxu0
    %1622 = vdwg.mxu0
    %1623 = vmatprep.subr.bf16.mxu0 %v696
    %1624 = vmatpush1.bf16.msra.mxu0 %v695
    %1625 = vmatprep.subr.bf16.mxu0 %v700
    %1626 = vmatpush1.bf16.msra.mxu0 %v699
    %1627 = vmatprep.subr.bf16.mxu0 %v704
    %1628 = vmatpush1.bf16.msra.mxu0 %v703
    %1629 = vmatprep.subr.bf16.mxu0 %v708
    %1630 = vmatpush1.bf16.msra.mxu0 %v707
    %1631 = vmatprep.subr.bf16.mxu0 %v712
    %1632 = vmatpush1.bf16.msra.mxu0 %v711
    %1633 = vmatprep.subr.bf16.mxu0 %v716
    %1634 = vmatpush1.bf16.msra.mxu0 %v715
    %1635 = vmatprep.subr.bf16.mxu0 %v720
    %1636 = vmatpush1.bf16.msra.mxu0 %v719
    %1637 = vmatprep.subr.bf16.mxu0 %v724
    %1638 = vmatpush1.bf16.msra.mxu0 %v723
    %1639 = vmatprep.subr.bf16.mxu0 0
    %1640 = vmatpush1.bf16.msra.mxu0 0
    %1641 = vmatprep.subr.bf16.mxu0 0
    %1642 = vmatpush1.bf16.msra.mxu0 0
    %1643 = vmatprep.subr.bf16.mxu0 0
    %1644 = vmatpush1.bf16.msra.mxu0 0
    %1645 = vmatprep.subr.bf16.mxu0 0
    %1646 = vmatpush1.bf16.msra.mxu0 0
    %1647 = vmatprep.subr.bf16.mxu0 0
    %1648 = vmatpush1.bf16.msra.mxu0 0
    %1649 = vmatprep.subr.bf16.mxu0 0
    %1650 = vmatpush1.bf16.msra.mxu0 0
    %1651 = vmatprep.subr.bf16.mxu0 0
    %1652 = vmatpush1.bf16.msra.mxu0 0
    %1653 = vmatprep.subr.bf16.mxu0 0
    %1654 = vmatpush1.bf16.msra.mxu0 0
    %1655 = vmatprep.mubr.bf16.mxu0 0
    %1656 = vmatmul.mubr.bf16.gmra.mrb[0].mxu0 %v1581
    %v1657 = vpop.f32.mrb[0].mxu0
    %v1658 = vadd.f32 0.0, %v1657
    %v1659 = vpop.f32.mrb[0].mxu0
    %v1660 = vadd.f32 0.0, %v1659
    %v1661 = vpop.f32.mrb[0].mxu0
    %v1662 = vpop.f32.mrb[0].mxu0
    %1663 = vdwg.mxu0
    %v1664 = vadd.f32 %v1577, %v1617
    %v1665 = vadd.f32 %v1578, %v1619
    %v1666 = vadd.f32 %v1579, %v1658
    %v1667 = vadd.f32 %v1580, %v1660
    %v1668 = vxor.u32 %v1664, 2147483648
    %v1669 = vxor.u32 %v1665, 2147483648
    %v1670 = vxor.u32 %v1666, 2147483648
    %v1671 = vmul.f32 %v1668, 1.442695
    %v1672 = vpow.pop %v1671
    %v1673 = vmul.f32 %v1669, 1.442695
    %v1674 = vpow.pop %v1673
    %v1675 = vmul.f32 %v1670, 1.442695
    %v1676 = vpow.pop %v1675
    %v1677 = vadd.f32 %v1672, 1.0
    %v1678 = vadd.f32 %v1674, 1.0
    %v1679 = vadd.f32 %v1676, 1.0
    %v1680 = vrcp.pop %v1677
    %v1681 = vmul.f32 1.0, %v1680
    %v1682 = vrcp.pop %v1678
    %v1683 = vmul.f32 1.0, %v1682
    %v1684 = vrcp.pop %v1679
    %v1685 = vmul.f32 1.0, %v1684
    %v1686 = vtanh.pop %v1667
    %v1687 = vmul.f32 %v1683, %v1571
    %v1688 = vmul.f32 %v1681, %v1686
    %v1689 = vadd.f32 %v1687, %v1688
    %v1690 = vtanh.pop %v1689
    %v1691 = vmul.f32 %v1685, %v1690
    %s1692 = scalar_lea.vmem [#allocation2], 56
    %1693 = vst [vmem:[%s1692] sm:$0xff] %v1691
    %1694 = vst [vmem:[%s14] sm:$0xff] %v1691
    %1695 = vst [vmem:[%s15] sm:$0xff] %v1689
    %s1696 = scalar_lea.vmem [#allocation4], 256
    %v1697 = vld [vmem:[%s1696] sm:$0xff]
    %v1698 = vld [vmem:[%s1696 + $0x8] sm:$0xff]
    %v1699 = vld [vmem:[%s1696 + $0x10] sm:$0xff]
    %v1700 = vld [vmem:[%s1696 + $0x18] sm:$0xff]
    %v1701 = vld [vmem:[%s1696 + $0x20] sm:$0xff]
    %v1702 = vld [vmem:[%s1696 + $0x28] sm:$0xff]
    %v1703 = vld [vmem:[%s1696 + $0x30] sm:$0xff]
    %v1704 = vld [vmem:[%s1696 + $0x38] sm:$0xff]
    %v1705 = vld [vmem:[%s1696 + $0x40] sm:$0xff]
    %v1706 = vld [vmem:[%s1696 + $0x48] sm:$0xff]
    %v1707 = vld [vmem:[%s1696 + $0x50] sm:$0xff]
    %v1708 = vld [vmem:[%s1696 + $0x58] sm:$0xff]
    %v1709 = vld [vmem:[%s1696 + $0x60] sm:$0xff]
    %v1710 = vld [vmem:[%s1696 + $0x68] sm:$0xff]
    %v1711 = vld [vmem:[%s1696 + $0x70] sm:$0xff]
    %v1712 = vld [vmem:[%s1696 + $0x78] sm:$0xff]
    %v1713 = vld [vmem:[%s1696 + $0x80] sm:$0xff]
    %v1714 = vld [vmem:[%s1696 + $0x88] sm:$0xff]
    %v1715 = vld [vmem:[%s1696 + $0x90] sm:$0xff]
    %v1716 = vld [vmem:[%s1696 + $0x98] sm:$0xff]
    %v1717 = vld [vmem:[%s1696 + $0xa0] sm:$0xff]
    %v1718 = vld [vmem:[%s1696 + $0xa8] sm:$0xff]
    %v1719 = vld [vmem:[%s1696 + $0xb0] sm:$0xff]
    %v1720 = vld [vmem:[%s1696 + $0xb8] sm:$0xff]
    %v1721 = vld [vmem:[%s1696 + $0xc0] sm:$0xff]
    %v1722 = vld [vmem:[%s1696 + $0xc8] sm:$0xff]
    %v1723 = vld [vmem:[%s1696 + $0xd0] sm:$0xff]
    %v1724 = vld [vmem:[%s1696 + $0xd8] sm:$0xff]
    %v1725 = vld [vmem:[%s1696 + $0xe0] sm:$0xff]
    %v1726 = vld [vmem:[%s1696 + $0xe8] sm:$0xff]
    %v1727 = vld [vmem:[%s1696 + $0xf0] sm:$0xff]
    %v1728 = vld [vmem:[%s1696 + $0xf8] sm:$0xff]
    %s1729 = scalar_lea.vmem [#allocation6], 256
    %v1730 = vld [vmem:[%s1729] sm:$0xff]
    %v1731 = vld [vmem:[%s1729 + $0x8] sm:$0xff]
    %v1732 = vld [vmem:[%s1729 + $0x10] sm:$0xff]
    %v1733 = vld [vmem:[%s1729 + $0x18] sm:$0xff]
    %v1734 = vld [vmem:[%s1729 + $0x20] sm:$0xff]
    %v1735 = vld [vmem:[%s1729 + $0x28] sm:$0xff]
    %v1736 = vld [vmem:[%s1729 + $0x30] sm:$0xff]
    %v1737 = vld [vmem:[%s1729 + $0x38] sm:$0xff]
    %v1738 = vld [vmem:[%s1729 + $0x40] sm:$0xff]
    %v1739 = vld [vmem:[%s1729 + $0x48] sm:$0xff]
    %v1740 = vld [vmem:[%s1729 + $0x50] sm:$0xff]
    %v1741 = vld [vmem:[%s1729 + $0x58] sm:$0xff]
    %v1742 = vld [vmem:[%s1729 + $0x60] sm:$0xff]
    %v1743 = vld [vmem:[%s1729 + $0x68] sm:$0xff]
    %v1744 = vld [vmem:[%s1729 + $0x70] sm:$0xff]
    %v1745 = vld [vmem:[%s1729 + $0x78] sm:$0xff]
    %v1746 = vld [vmem:[%s1729 + $0x80] sm:$0xff]
    %v1747 = vld [vmem:[%s1729 + $0x88] sm:$0xff]
    %v1748 = vld [vmem:[%s1729 + $0x90] sm:$0xff]
    %v1749 = vld [vmem:[%s1729 + $0x98] sm:$0xff]
    %v1750 = vld [vmem:[%s1729 + $0xa0] sm:$0xff]
    %v1751 = vld [vmem:[%s1729 + $0xa8] sm:$0xff]
    %v1752 = vld [vmem:[%s1729 + $0xb0] sm:$0xff]
    %v1753 = vld [vmem:[%s1729 + $0xb8] sm:$0xff]
    %v1754 = vld [vmem:[%s1729 + $0xc0] sm:$0xff]
    %v1755 = vld [vmem:[%s1729 + $0xc8] sm:$0xff]
    %v1756 = vld [vmem:[%s1729 + $0xd0] sm:$0xff]
    %v1757 = vld [vmem:[%s1729 + $0xd8] sm:$0xff]
    %v1758 = vld [vmem:[%s1729 + $0xe0] sm:$0xff]
    %v1759 = vld [vmem:[%s1729 + $0xe8] sm:$0xff]
    %v1760 = vld [vmem:[%s1729 + $0xf0] sm:$0xff]
    %v1761 = vld [vmem:[%s1729 + $0xf8] sm:$0xff]
    %s1762 = scalar_lea.vmem [#allocation8], 4
    %v1763 = vld [vmem:[%s1762] sm:$0xf]
    %v1764 = vld [vmem:[#allocation2] sm:$0xff]
    %v1765 = vld [vmem:[#allocation2 + $0x8] sm:$0xff]
    %v1766 = vld [vmem:[#allocation2 + $0x10] sm:$0xff]
    %v1767 = vld [vmem:[#allocation2 + $0x18] sm:$0xff]
    %v1768 = vld [vmem:[#allocation2 + $0x20] sm:$0xff]
    %v1769 = vld [vmem:[#allocation2 + $0x28] sm:$0xff]
    %v1770 = vld [vmem:[#allocation2 + $0x30] sm:$0xff]
    %v1771 = vld [vmem:[#allocation2 + $0x38] sm:$0xff]
    %v1772 = vpack.c.bf16 %v1765, %v1764
    %v1773 = vpack.c.bf16 %v1767, %v1766
    %v1774 = vpack.c.bf16 %v1769, %v1768
    %v1775 = vpack.c.bf16 %v1771, %v1770
    %v1777 = vlaneseq
    %v1778 = vshrl.u32 %v1777, 7
    %v1779 = vsub.s32 0, %v1778
    %v1780 = vrot.slane %v1763, %v1779
    %v1781 = vlaneseq
    %v1782 = vshrl.u32 %v1781, 7
    %v1783 = vsub.s32 1, %v1782
    %v1784 = vrot.slane %v1763, %v1783
    %v1785 = vlaneseq
    %v1786 = vshrl.u32 %v1785, 7
    %v1787 = vsub.s32 2, %v1786
    %v1788 = vrot.slane %v1763, %v1787
    %v1789 = vlaneseq
    %v1790 = vshrl.u32 %v1789, 7
    %v1791 = vsub.s32 3, %v1790
    %v1792 = vrot.slane %v1763, %v1791
    %v1829 = vunpack.c.l.b16 %v1697
    %v1830 = vunpack.c.h.b16 %v1697
    %v1831 = vunpack.c.l.b16 %v1698
    %v1832 = vunpack.c.h.b16 %v1698
    %v1833 = vunpack.c.l.b16 %v1699
    %v1834 = vunpack.c.h.b16 %v1699
    %v1835 = vunpack.c.l.b16 %v1700
    %v1836 = vunpack.c.h.b16 %v1700
    %v1837 = vunpack.c.l.b16 %v1701
    %v1838 = vunpack.c.h.b16 %v1701
    %v1839 = vunpack.c.l.b16 %v1702
    %v1840 = vunpack.c.h.b16 %v1702
    %v1841 = vunpack.c.l.b16 %v1703
    %v1842 = vunpack.c.h.b16 %v1703
    %v1843 = vunpack.c.l.b16 %v1704
    %v1844 = vunpack.c.h.b16 %v1704
    %v1845 = vunpack.c.l.b16 %v1705
    %v1846 = vunpack.c.h.b16 %v1705
    %v1847 = vunpack.c.l.b16 %v1706
    %v1848 = vunpack.c.h.b16 %v1706
    %v1849 = vunpack.c.l.b16 %v1707
    %v1850 = vunpack.c.h.b16 %v1707
    %v1851 = vunpack.c.l.b16 %v1708
    %v1852 = vunpack.c.h.b16 %v1708
    %v1853 = vunpack.c.l.b16 %v1709
    %v1854 = vunpack.c.h.b16 %v1709
    %v1855 = vunpack.c.l.b16 %v1710
    %v1856 = vunpack.c.h.b16 %v1710
    %v1857 = vunpack.c.l.b16 %v1711
    %v1858 = vunpack.c.h.b16 %v1711
    %v1859 = vunpack.c.l.b16 %v1712
    %v1860 = vunpack.c.h.b16 %v1712
    %v1861 = vunpack.c.l.b16 %v1713
    %v1862 = vunpack.c.h.b16 %v1713
    %v1863 = vunpack.c.l.b16 %v1714
    %v1864 = vunpack.c.h.b16 %v1714
    %v1865 = vunpack.c.l.b16 %v1715
    %v1866 = vunpack.c.h.b16 %v1715
    %v1867 = vunpack.c.l.b16 %v1716
    %v1868 = vunpack.c.h.b16 %v1716
    %v1869 = vunpack.c.l.b16 %v1717
    %v1870 = vunpack.c.h.b16 %v1717
    %v1871 = vunpack.c.l.b16 %v1718
    %v1872 = vunpack.c.h.b16 %v1718
    %v1873 = vunpack.c.l.b16 %v1719
    %v1874 = vunpack.c.h.b16 %v1719
    %v1875 = vunpack.c.l.b16 %v1720
    %v1876 = vunpack.c.h.b16 %v1720
    %v1877 = vunpack.c.l.b16 %v1721
    %v1878 = vunpack.c.h.b16 %v1721
    %v1879 = vunpack.c.l.b16 %v1722
    %v1880 = vunpack.c.h.b16 %v1722
    %v1881 = vunpack.c.l.b16 %v1723
    %v1882 = vunpack.c.h.b16 %v1723
    %v1883 = vunpack.c.l.b16 %v1724
    %v1884 = vunpack.c.h.b16 %v1724
    %v1885 = vunpack.c.l.b16 %v1725
    %v1886 = vunpack.c.h.b16 %v1725
    %v1887 = vunpack.c.l.b16 %v1726
    %v1888 = vunpack.c.h.b16 %v1726
    %v1889 = vunpack.c.l.b16 %v1727
    %v1890 = vunpack.c.h.b16 %v1727
    %v1891 = vunpack.c.l.b16 %v1728
    %v1892 = vunpack.c.h.b16 %v1728
    %v1893 = vpack.c.b16 %v1833, %v1829
    %v1894 = vpack.c.b16 %v1834, %v1830
    %v1895 = vpack.c.b16 %v1835, %v1831
    %v1896 = vpack.c.b16 %v1836, %v1832
    %v1897 = vpack.c.b16 %v1841, %v1837
    %v1898 = vpack.c.b16 %v1842, %v1838
    %v1899 = vpack.c.b16 %v1843, %v1839
    %v1900 = vpack.c.b16 %v1844, %v1840
    %v1901 = vpack.c.b16 %v1849, %v1845
    %v1902 = vpack.c.b16 %v1850, %v1846
    %v1903 = vpack.c.b16 %v1851, %v1847
    %v1904 = vpack.c.b16 %v1852, %v1848
    %v1905 = vpack.c.b16 %v1857, %v1853
    %v1906 = vpack.c.b16 %v1858, %v1854
    %v1907 = vpack.c.b16 %v1859, %v1855
    %v1908 = vpack.c.b16 %v1860, %v1856
    %v1909 = vpack.c.b16 %v1865, %v1861
    %v1910 = vpack.c.b16 %v1866, %v1862
    %v1911 = vpack.c.b16 %v1867, %v1863
    %v1912 = vpack.c.b16 %v1868, %v1864
    %v1913 = vpack.c.b16 %v1873, %v1869
    %v1914 = vpack.c.b16 %v1874, %v1870
    %v1915 = vpack.c.b16 %v1875, %v1871
    %v1916 = vpack.c.b16 %v1876, %v1872
    %v1917 = vpack.c.b16 %v1881, %v1877
    %v1918 = vpack.c.b16 %v1882, %v1878
    %v1919 = vpack.c.b16 %v1883, %v1879
    %v1920 = vpack.c.b16 %v1884, %v1880
    %v1921 = vpack.c.b16 %v1889, %v1885
    %v1922 = vpack.c.b16 %v1890, %v1886
    %v1923 = vpack.c.b16 %v1891, %v1887
    %v1924 = vpack.c.b16 %v1892, %v1888
    %1957 = vmatprep.subr.bf16.mxu0 %v1894
    %1958 = vmatpush1.bf16.msra.mxu0 %v1893
    %1959 = vmatprep.subr.bf16.mxu0 %v1898
    %1960 = vmatpush1.bf16.msra.mxu0 %v1897
    %1961 = vmatprep.subr.bf16.mxu0 %v1902
    %1962 = vmatpush1.bf16.msra.mxu0 %v1901
    %1963 = vmatprep.subr.bf16.mxu0 %v1906
    %1964 = vmatpush1.bf16.msra.mxu0 %v1905
    %1965 = vmatprep.subr.bf16.mxu0 %v1910
    %1966 = vmatpush1.bf16.msra.mxu0 %v1909
    %1967 = vmatprep.subr.bf16.mxu0 %v1914
    %1968 = vmatpush1.bf16.msra.mxu0 %v1913
    %1969 = vmatprep.subr.bf16.mxu0 %v1918
    %1970 = vmatpush1.bf16.msra.mxu0 %v1917
    %1971 = vmatprep.subr.bf16.mxu0 %v1922
    %1972 = vmatpush1.bf16.msra.mxu0 %v1921
    %1973 = vmatprep.subr.bf16.mxu0 0
    %1974 = vmatpush1.bf16.msra.mxu0 0
    %1975 = vmatprep.subr.bf16.mxu0 0
    %1976 = vmatpush1.bf16.msra.mxu0 0
    %1977 = vmatprep.subr.bf16.mxu0 0
    %1978 = vmatpush1.bf16.msra.mxu0 0
    %1979 = vmatprep.subr.bf16.mxu0 0
    %1980 = vmatpush1.bf16.msra.mxu0 0
    %1981 = vmatprep.subr.bf16.mxu0 0
    %1982 = vmatpush1.bf16.msra.mxu0 0
    %1983 = vmatprep.subr.bf16.mxu0 0
    %1984 = vmatpush1.bf16.msra.mxu0 0
    %1985 = vmatprep.subr.bf16.mxu0 0
    %1986 = vmatpush1.bf16.msra.mxu0 0
    %1987 = vmatprep.subr.bf16.mxu0 0
    %1988 = vmatpush1.bf16.msra.mxu0 0
    %1989 = vmatprep.mubr.bf16.mxu0 0
    %1990 = vmatmul.mubr.bf16.gmra.mrb[0].mxu0 %v1772
    %v1991 = vpop.f32.mrb[0].mxu0
    %v1992 = vadd.f32 %v1780, %v1991
    %v1993 = vpop.f32.mrb[0].mxu0
    %v1994 = vadd.f32 %v1784, %v1993
    %v1995 = vpop.f32.mrb[0].mxu0
    %v1996 = vadd.f32 %v1780, %v1995
    %v1997 = vpop.f32.mrb[0].mxu0
    %v1998 = vadd.f32 %v1784, %v1997
    %1999 = vmatprep.mubr.bf16.mxu0 0
    %2000 = vmatmul.mubr.bf16.gmra.mrb[0].mxu0 %v1773
    %v2001 = vpop.f32.mrb[0].mxu0
    %v2002 = vadd.f32 %v1780, %v2001
    %v2003 = vpop.f32.mrb[0].mxu0
    %v2004 = vadd.f32 %v1784, %v2003
    %v2005 = vpop.f32.mrb[0].mxu0
    %v2006 = vadd.f32 %v1780, %v2005
    %v2007 = vpop.f32.mrb[0].mxu0
    %v2008 = vadd.f32 %v1784, %v2007
    %2009 = vmatprep.mubr.bf16.mxu0 0
    %2010 = vmatmul.mubr.bf16.gmra.mrb[0].mxu0 %v1774
    %v2011 = vpop.f32.mrb[0].mxu0
    %v2012 = vadd.f32 %v1780, %v2011
    %v2013 = vpop.f32.mrb[0].mxu0
    %v2014 = vadd.f32 %v1784, %v2013
    %v2015 = vpop.f32.mrb[0].mxu0
    %v2016 = vadd.f32 %v1780, %v2015
    %v2017 = vpop.f32.mrb[0].mxu0
    %v2018 = vadd.f32 %v1784, %v2017
    %2019 = vmatprep.mubr.bf16.mxu0 0
    %2020 = vmatmul.mubr.bf16.gmra.mrb[0].mxu0 %v1775
    %v2021 = vpop.f32.mrb[0].mxu0
    %v2022 = vadd.f32 %v1780, %v2021
    %v2023 = vpop.f32.mrb[0].mxu0
    %v2024 = vadd.f32 %v1784, %v2023
    %v2025 = vpop.f32.mrb[0].mxu0
    %v2026 = vadd.f32 %v1780, %v2025
    %v2027 = vpop.f32.mrb[0].mxu0
    %v2028 = vadd.f32 %v1784, %v2027
    %2029 = vdwg.mxu0
    %2030 = vmatprep.subr.bf16.mxu0 %v1896
    %2031 = vmatpush1.bf16.msra.mxu0 %v1895
    %2032 = vmatprep.subr.bf16.mxu0 %v1900
    %2033 = vmatpush1.bf16.msra.mxu0 %v1899
    %2034 = vmatprep.subr.bf16.mxu0 %v1904
    %2035 = vmatpush1.bf16.msra.mxu0 %v1903
    %2036 = vmatprep.subr.bf16.mxu0 %v1908
    %2037 = vmatpush1.bf16.msra.mxu0 %v1907
    %2038 = vmatprep.subr.bf16.mxu0 %v1912
    %2039 = vmatpush1.bf16.msra.mxu0 %v1911
    %2040 = vmatprep.subr.bf16.mxu0 %v1916
    %2041 = vmatpush1.bf16.msra.mxu0 %v1915
    %2042 = vmatprep.subr.bf16.mxu0 %v1920
    %2043 = vmatpush1.bf16.msra.mxu0 %v1919
    %2044 = vmatprep.subr.bf16.mxu0 %v1924
    %2045 = vmatpush1.bf16.msra.mxu0 %v1923
    %2046 = vmatprep.subr.bf16.mxu0 0
    %2047 = vmatpush1.bf16.msra.mxu0 0
    %2048 = vmatprep.subr.bf16.mxu0 0
    %2049 = vmatpush1.bf16.msra.mxu0 0
    %2050 = vmatprep.subr.bf16.mxu0 0
    %2051 = vmatpush1.bf16.msra.mxu0 0
    %2052 = vmatprep.subr.bf16.mxu0 0
    %2053 = vmatpush1.bf16.msra.mxu0 0
    %2054 = vmatprep.subr.bf16.mxu0 0
    %2055 = vmatpush1.bf16.msra.mxu0 0
    %2056 = vmatprep.subr.bf16.mxu0 0
    %2057 = vmatpush1.bf16.msra.mxu0 0
    %2058 = vmatprep.subr.bf16.mxu0 0
    %2059 = vmatpush1.bf16.msra.mxu0 0
    %2060 = vmatprep.subr.bf16.mxu0 0
    %2061 = vmatpush1.bf16.msra.mxu0 0
    %2062 = vmatprep.mubr.bf16.mxu0 0
    %2063 = vmatmul.mubr.bf16.gmra.mrb[0].mxu0 %v1772
    %v2064 = vpop.f32.mrb[0].mxu0
    %v2065 = vadd.f32 %v1788, %v2064
    %v2066 = vpop.f32.mrb[0].mxu0
    %v2067 = vadd.f32 %v1792, %v2066
    %v2068 = vpop.f32.mrb[0].mxu0
    %v2069 = vadd.f32 %v1788, %v2068
    %v2070 = vpop.f32.mrb[0].mxu0
    %v2071 = vadd.f32 %v1792, %v2070
    %2072 = vmatprep.mubr.bf16.mxu0 0
    %2073 = vmatmul.mubr.bf16.gmra.mrb[0].mxu0 %v1773
    %v2074 = vpop.f32.mrb[0].mxu0
    %v2075 = vadd.f32 %v1788, %v2074
    %v2076 = vpop.f32.mrb[0].mxu0
    %v2077 = vadd.f32 %v1792, %v2076
    %v2078 = vpop.f32.mrb[0].mxu0
    %v2079 = vadd.f32 %v1788, %v2078
    %v2080 = vpop.f32.mrb[0].mxu0
    %v2081 = vadd.f32 %v1792, %v2080
    %2082 = vmatprep.mubr.bf16.mxu0 0
    %2083 = vmatmul.mubr.bf16.gmra.mrb[0].mxu0 %v1774
    %v2084 = vpop.f32.mrb[0].mxu0
    %v2085 = vadd.f32 %v1788, %v2084
    %v2086 = vpop.f32.mrb[0].mxu0
    %v2087 = vadd.f32 %v1792, %v2086
    %v2088 = vpop.f32.mrb[0].mxu0
    %v2089 = vadd.f32 %v1788, %v2088
    %v2090 = vpop.f32.mrb[0].mxu0
    %v2091 = vadd.f32 %v1792, %v2090
    %2092 = vmatprep.mubr.bf16.mxu0 0
    %2093 = vmatmul.mubr.bf16.gmra.mrb[0].mxu0 %v1775
    %v2094 = vpop.f32.mrb[0].mxu0
    %v2095 = vadd.f32 %v1788, %v2094
    %v2096 = vpop.f32.mrb[0].mxu0
    %v2097 = vadd.f32 %v1792, %v2096
    %v2098 = vpop.f32.mrb[0].mxu0
    %v2099 = vadd.f32 %v1788, %v2098
    %v2100 = vpop.f32.mrb[0].mxu0
    %v2101 = vadd.f32 %v1792, %v2100
    %2102 = vdwg.mxu0
    %2103 = vst [vmem:[#allocation3] sm:$0xff] %v1992
    %2104 = vst [vmem:[#allocation3 + $0x8] sm:$0xff] %v1994
    %2105 = vst [vmem:[#allocation3 + $0x10] sm:$0xff] %v2065
    %2106 = vst [vmem:[#allocation3 + $0x18] sm:$0xff] %v2067
    %2107 = vst [vmem:[#allocation3 + $0x20] sm:$0xff] %v1996
    %2108 = vst [vmem:[#allocation3 + $0x28] sm:$0xff] %v1998
    %2109 = vst [vmem:[#allocation3 + $0x30] sm:$0xff] %v2069
    %2110 = vst [vmem:[#allocation3 + $0x38] sm:$0xff] %v2071
    %2111 = vst [vmem:[#allocation3 + $0x40] sm:$0xff] %v2002
    %2112 = vst [vmem:[#allocation3 + $0x48] sm:$0xff] %v2004
    %2113 = vst [vmem:[#allocation3 + $0x50] sm:$0xff] %v2075
    %2114 = vst [vmem:[#allocation3 + $0x58] sm:$0xff] %v2077
    %2115 = vst [vmem:[#allocation3 + $0x60] sm:$0xff] %v2006
    %2116 = vst [vmem:[#allocation3 + $0x68] sm:$0xff] %v2008
    %2117 = vst [vmem:[#allocation3 + $0x70] sm:$0xff] %v2079
    %2118 = vst [vmem:[#allocation3 + $0x78] sm:$0xff] %v2081
    %2119 = vst [vmem:[#allocation3 + $0x80] sm:$0xff] %v2012
    %2120 = vst [vmem:[#allocation3 + $0x88] sm:$0xff] %v2014
    %2121 = vst [vmem:[#allocation3 + $0x90] sm:$0xff] %v2085
    %2122 = vst [vmem:[#allocation3 + $0x98] sm:$0xff] %v2087
    %2123 = vst [vmem:[#allocation3 + $0xa0] sm:$0xff] %v2016
    %2124 = vst [vmem:[#allocation3 + $0xa8] sm:$0xff] %v2018
    %2125 = vst [vmem:[#allocation3 + $0xb0] sm:$0xff] %v2089
    %2126 = vst [vmem:[#allocation3 + $0xb8] sm:$0xff] %v2091
    %2127 = vst [vmem:[#allocation3 + $0xc0] sm:$0xff] %v2022
    %2128 = vst [vmem:[#allocation3 + $0xc8] sm:$0xff] %v2024
    %2129 = vst [vmem:[#allocation3 + $0xd0] sm:$0xff] %v2095
    %2130 = vst [vmem:[#allocation3 + $0xd8] sm:$0xff] %v2097
    %2131 = vst [vmem:[#allocation3 + $0xe0] sm:$0xff] %v2026
    %2132 = vst [vmem:[#allocation3 + $0xe8] sm:$0xff] %v2028
    %2133 = vst [vmem:[#allocation3 + $0xf0] sm:$0xff] %v2099
    %2134 = vst [vmem:[#allocation3 + $0xf8] sm:$0xff] %v2101
    %v2135 = vld [vmem:[#allocation3] sm:$0xff]
    %v2136 = vld [vmem:[#allocation3 + $0x8] sm:$0xff]
    %v2137 = vld [vmem:[#allocation3 + $0x10] sm:$0xff]
    %v2138 = vld [vmem:[#allocation3 + $0x18] sm:$0xff]
    %v2171 = vunpack.c.l.b16 %v1730
    %v2172 = vunpack.c.h.b16 %v1730
    %v2173 = vunpack.c.l.b16 %v1731
    %v2174 = vunpack.c.h.b16 %v1731
    %v2175 = vunpack.c.l.b16 %v1732
    %v2176 = vunpack.c.h.b16 %v1732
    %v2177 = vunpack.c.l.b16 %v1733
    %v2178 = vunpack.c.h.b16 %v1733
    %v2179 = vunpack.c.l.b16 %v1734
    %v2180 = vunpack.c.h.b16 %v1734
    %v2181 = vunpack.c.l.b16 %v1735
    %v2182 = vunpack.c.h.b16 %v1735
    %v2183 = vunpack.c.l.b16 %v1736
    %v2184 = vunpack.c.h.b16 %v1736
    %v2185 = vunpack.c.l.b16 %v1737
    %v2186 = vunpack.c.h.b16 %v1737
    %v2187 = vunpack.c.l.b16 %v1738
    %v2188 = vunpack.c.h.b16 %v1738
    %v2189 = vunpack.c.l.b16 %v1739
    %v2190 = vunpack.c.h.b16 %v1739
    %v2191 = vunpack.c.l.b16 %v1740
    %v2192 = vunpack.c.h.b16 %v1740
    %v2193 = vunpack.c.l.b16 %v1741
    %v2194 = vunpack.c.h.b16 %v1741
    %v2195 = vunpack.c.l.b16 %v1742
    %v2196 = vunpack.c.h.b16 %v1742
    %v2197 = vunpack.c.l.b16 %v1743
    %v2198 = vunpack.c.h.b16 %v1743
    %v2199 = vunpack.c.l.b16 %v1744
    %v2200 = vunpack.c.h.b16 %v1744
    %v2201 = vunpack.c.l.b16 %v1745
    %v2202 = vunpack.c.h.b16 %v1745
    %v2203 = vunpack.c.l.b16 %v1746
    %v2204 = vunpack.c.h.b16 %v1746
    %v2205 = vunpack.c.l.b16 %v1747
    %v2206 = vunpack.c.h.b16 %v1747
    %v2207 = vunpack.c.l.b16 %v1748
    %v2208 = vunpack.c.h.b16 %v1748
    %v2209 = vunpack.c.l.b16 %v1749
    %v2210 = vunpack.c.h.b16 %v1749
    %v2211 = vunpack.c.l.b16 %v1750
    %v2212 = vunpack.c.h.b16 %v1750
    %v2213 = vunpack.c.l.b16 %v1751
    %v2214 = vunpack.c.h.b16 %v1751
    %v2215 = vunpack.c.l.b16 %v1752
    %v2216 = vunpack.c.h.b16 %v1752
    %v2217 = vunpack.c.l.b16 %v1753
    %v2218 = vunpack.c.h.b16 %v1753
    %v2219 = vunpack.c.l.b16 %v1754
    %v2220 = vunpack.c.h.b16 %v1754
    %v2221 = vunpack.c.l.b16 %v1755
    %v2222 = vunpack.c.h.b16 %v1755
    %v2223 = vunpack.c.l.b16 %v1756
    %v2224 = vunpack.c.h.b16 %v1756
    %v2225 = vunpack.c.l.b16 %v1757
    %v2226 = vunpack.c.h.b16 %v1757
    %v2227 = vunpack.c.l.b16 %v1758
    %v2228 = vunpack.c.h.b16 %v1758
    %v2229 = vunpack.c.l.b16 %v1759
    %v2230 = vunpack.c.h.b16 %v1759
    %v2231 = vunpack.c.l.b16 %v1760
    %v2232 = vunpack.c.h.b16 %v1760
    %v2233 = vunpack.c.l.b16 %v1761
    %v2234 = vunpack.c.h.b16 %v1761
    %v2235 = vpack.c.b16 %v2175, %v2171
    %v2236 = vpack.c.b16 %v2176, %v2172
    %v2237 = vpack.c.b16 %v2177, %v2173
    %v2238 = vpack.c.b16 %v2178, %v2174
    %v2239 = vpack.c.b16 %v2183, %v2179
    %v2240 = vpack.c.b16 %v2184, %v2180
    %v2241 = vpack.c.b16 %v2185, %v2181
    %v2242 = vpack.c.b16 %v2186, %v2182
    %v2243 = vpack.c.b16 %v2191, %v2187
    %v2244 = vpack.c.b16 %v2192, %v2188
    %v2245 = vpack.c.b16 %v2193, %v2189
    %v2246 = vpack.c.b16 %v2194, %v2190
    %v2247 = vpack.c.b16 %v2199, %v2195
    %v2248 = vpack.c.b16 %v2200, %v2196
    %v2249 = vpack.c.b16 %v2201, %v2197
    %v2250 = vpack.c.b16 %v2202, %v2198
    %v2251 = vpack.c.b16 %v2207, %v2203
    %v2252 = vpack.c.b16 %v2208, %v2204
    %v2253 = vpack.c.b16 %v2209, %v2205
    %v2254 = vpack.c.b16 %v2210, %v2206
    %v2255 = vpack.c.b16 %v2215, %v2211
    %v2256 = vpack.c.b16 %v2216, %v2212
    %v2257 = vpack.c.b16 %v2217, %v2213
    %v2258 = vpack.c.b16 %v2218, %v2214
    %v2259 = vpack.c.b16 %v2223, %v2219
    %v2260 = vpack.c.b16 %v2224, %v2220
    %v2261 = vpack.c.b16 %v2225, %v2221
    %v2262 = vpack.c.b16 %v2226, %v2222
    %v2263 = vpack.c.b16 %v2231, %v2227
    %v2264 = vpack.c.b16 %v2232, %v2228
    %v2265 = vpack.c.b16 %v2233, %v2229
    %v2266 = vpack.c.b16 %v2234, %v2230
    %2299 = vmatprep.subr.bf16.mxu0 %v2236
    %2300 = vmatpush1.bf16.msra.mxu0 %v2235
    %2301 = vmatprep.subr.bf16.mxu0 %v2240
    %2302 = vmatpush1.bf16.msra.mxu0 %v2239
    %2303 = vmatprep.subr.bf16.mxu0 %v2244
    %2304 = vmatpush1.bf16.msra.mxu0 %v2243
    %2305 = vmatprep.subr.bf16.mxu0 %v2248
    %2306 = vmatpush1.bf16.msra.mxu0 %v2247
    %2307 = vmatprep.subr.bf16.mxu0 %v2252
    %2308 = vmatpush1.bf16.msra.mxu0 %v2251
    %2309 = vmatprep.subr.bf16.mxu0 %v2256
    %2310 = vmatpush1.bf16.msra.mxu0 %v2255
    %2311 = vmatprep.subr.bf16.mxu0 %v2260
    %2312 = vmatpush1.bf16.msra.mxu0 %v2259
    %2313 = vmatprep.subr.bf16.mxu0 %v2264
    %2314 = vmatpush1.bf16.msra.mxu0 %v2263
    %2315 = vmatprep.subr.bf16.mxu0 0
    %2316 = vmatpush1.bf16.msra.mxu0 0
    %2317 = vmatprep.subr.bf16.mxu0 0
    %2318 = vmatpush1.bf16.msra.mxu0 0
    %2319 = vmatprep.subr.bf16.mxu0 0
    %2320 = vmatpush1.bf16.msra.mxu0 0
    %2321 = vmatprep.subr.bf16.mxu0 0
    %2322 = vmatpush1.bf16.msra.mxu0 0
    %2323 = vmatprep.subr.bf16.mxu0 0
    %2324 = vmatpush1.bf16.msra.mxu0 0
    %2325 = vmatprep.subr.bf16.mxu0 0
    %2326 = vmatpush1.bf16.msra.mxu0 0
    %2327 = vmatprep.subr.bf16.mxu0 0
    %2328 = vmatpush1.bf16.msra.mxu0 0
    %2329 = vmatprep.subr.bf16.mxu0 0
    %2330 = vmatpush1.bf16.msra.mxu0 0
    %2331 = vmatprep.mubr.bf16.mxu0 0
    %2332 = vmatmul.mubr.bf16.gmra.mrb[0].mxu0 0
    %v2333 = vpop.f32.mrb[0].mxu0
    %v2334 = vadd.f32 0.0, %v2333
    %v2335 = vpop.f32.mrb[0].mxu0
    %v2336 = vadd.f32 0.0, %v2335
    %v2337 = vpop.f32.mrb[0].mxu0
    %v2338 = vpop.f32.mrb[0].mxu0
    %2339 = vdwg.mxu0
    %2340 = vmatprep.subr.bf16.mxu0 %v2238
    %2341 = vmatpush1.bf16.msra.mxu0 %v2237
    %2342 = vmatprep.subr.bf16.mxu0 %v2242
    %2343 = vmatpush1.bf16.msra.mxu0 %v2241
    %2344 = vmatprep.subr.bf16.mxu0 %v2246
    %2345 = vmatpush1.bf16.msra.mxu0 %v2245
    %2346 = vmatprep.subr.bf16.mxu0 %v2250
    %2347 = vmatpush1.bf16.msra.mxu0 %v2249
    %2348 = vmatprep.subr.bf16.mxu0 %v2254
    %2349 = vmatpush1.bf16.msra.mxu0 %v2253
    %2350 = vmatprep.subr.bf16.mxu0 %v2258
    %2351 = vmatpush1.bf16.msra.mxu0 %v2257
    %2352 = vmatprep.subr.bf16.mxu0 %v2262
    %2353 = vmatpush1.bf16.msra.mxu0 %v2261
    %2354 = vmatprep.subr.bf16.mxu0 %v2266
    %2355 = vmatpush1.bf16.msra.mxu0 %v2265
    %2356 = vmatprep.subr.bf16.mxu0 0
    %2357 = vmatpush1.bf16.msra.mxu0 0
    %2358 = vmatprep.subr.bf16.mxu0 0
    %2359 = vmatpush1.bf16.msra.mxu0 0
    %2360 = vmatprep.subr.bf16.mxu0 0
    %2361 = vmatpush1.bf16.msra.mxu0 0
    %2362 = vmatprep.subr.bf16.mxu0 0
    %2363 = vmatpush1.bf16.msra.mxu0 0
    %2364 = vmatprep.subr.bf16.mxu0 0
    %2365 = vmatpush1.bf16.msra.mxu0 0
    %2366 = vmatprep.subr.bf16.mxu0 0
    %2367 = vmatpush1.bf16.msra.mxu0 0
    %2368 = vmatprep.subr.bf16.mxu0 0
    %2369 = vmatpush1.bf16.msra.mxu0 0
    %2370 = vmatprep.subr.bf16.mxu0 0
    %2371 = vmatpush1.bf16.msra.mxu0 0
    %2372 = vmatprep.mubr.bf16.mxu0 0
    %2373 = vmatmul.mubr.bf16.gmra.mrb[0].mxu0 0
    %v2374 = vpop.f32.mrb[0].mxu0
    %v2375 = vadd.f32 0.0, %v2374
    %v2376 = vpop.f32.mrb[0].mxu0
    %v2377 = vadd.f32 0.0, %v2376
    %v2378 = vpop.f32.mrb[0].mxu0
    %v2379 = vpop.f32.mrb[0].mxu0
    %2380 = vdwg.mxu0
    %v2381 = vadd.f32 %v2135, %v2334
    %v2382 = vadd.f32 %v2136, %v2336
    %v2383 = vadd.f32 %v2137, %v2375
    %v2384 = vadd.f32 %v2138, %v2377
    %v2385 = vxor.u32 %v2381, 2147483648
    %v2386 = vxor.u32 %v2382, 2147483648
    %v2387 = vxor.u32 %v2383, 2147483648
    %v2388 = vmul.f32 %v2385, 1.442695
    %v2389 = vpow.pop %v2388
    %v2390 = vmul.f32 %v2386, 1.442695
    %v2391 = vpow.pop %v2390
    %v2392 = vmul.f32 %v2387, 1.442695
    %v2393 = vpow.pop %v2392
    %v2394 = vadd.f32 %v2389, 1.0
    %v2395 = vadd.f32 %v2391, 1.0
    %v2396 = vadd.f32 %v2393, 1.0
    %v2397 = vrcp.pop %v2394
    %v2398 = vmul.f32 1.0, %v2397
    %v2399 = vrcp.pop %v2395
    %v2400 = vmul.f32 1.0, %v2399
    %v2401 = vrcp.pop %v2396
    %v2402 = vmul.f32 1.0, %v2401
    %v2403 = vtanh.pop %v2384
    %v2404 = vmul.f32 %v2400, 0.0
    %v2405 = vmul.f32 %v2398, %v2403
    %v2406 = vadd.f32 %v2404, %v2405
    %v2407 = vtanh.pop %v2406
    %v2408 = vmul.f32 %v2402, %v2407
    %2409 = vst [vmem:[#allocation2] sm:$0xff] %v2408
    %v2410 = vld [vmem:[%s868] sm:$0xff]
    %v2411 = vld [vmem:[%s868 + $0x8] sm:$0xff]
    %v2412 = vld [vmem:[%s868 + $0x10] sm:$0xff]
    %v2413 = vld [vmem:[%s868 + $0x18] sm:$0xff]
    %v2414 = vpack.c.bf16 %v2408, %v2408
    %2415 = vmatprep.subr.bf16.mxu0 %v2236
    %2416 = vmatpush1.bf16.msra.mxu0 %v2235
    %2417 = vmatprep.subr.bf16.mxu0 %v2240
    %2418 = vmatpush1.bf16.msra.mxu0 %v2239
    %2419 = vmatprep.subr.bf16.mxu0 %v2244
    %2420 = vmatpush1.bf16.msra.mxu0 %v2243
    %2421 = vmatprep.subr.bf16.mxu0 %v2248
    %2422 = vmatpush1.bf16.msra.mxu0 %v2247
    %2423 = vmatprep.subr.bf16.mxu0 %v2252
    %2424 = vmatpush1.bf16.msra.mxu0 %v2251
    %2425 = vmatprep.subr.bf16.mxu0 %v2256
    %2426 = vmatpush1.bf16.msra.mxu0 %v2255
    %2427 = vmatprep.subr.bf16.mxu0 %v2260
    %2428 = vmatpush1.bf16.msra.mxu0 %v2259
    %2429 = vmatprep.subr.bf16.mxu0 %v2264
    %2430 = vmatpush1.bf16.msra.mxu0 %v2263
    %2431 = vmatprep.subr.bf16.mxu0 0
    %2432 = vmatpush1.bf16.msra.mxu0 0
    %2433 = vmatprep.subr.bf16.mxu0 0
    %2434 = vmatpush1.bf16.msra.mxu0 0
    %2435 = vmatprep.subr.bf16.mxu0 0
    %2436 = vmatpush1.bf16.msra.mxu0 0
    %2437 = vmatprep.subr.bf16.mxu0 0
    %2438 = vmatpush1.bf16.msra.mxu0 0
    %2439 = vmatprep.subr.bf16.mxu0 0
    %2440 = vmatpush1.bf16.msra.mxu0 0
    %2441 = vmatprep.subr.bf16.mxu0 0
    %2442 = vmatpush1.bf16.msra.mxu0 0
    %2443 = vmatprep.subr.bf16.mxu0 0
    %2444 = vmatpush1.bf16.msra.mxu0 0
    %2445 = vmatprep.subr.bf16.mxu0 0
    %2446 = vmatpush1.bf16.msra.mxu0 0
    %2447 = vmatprep.mubr.bf16.mxu0 0
    %2448 = vmatmul.mubr.bf16.gmra.mrb[0].mxu0 %v2414
    %v2449 = vpop.f32.mrb[0].mxu0
    %v2450 = vadd.f32 0.0, %v2449
    %v2451 = vpop.f32.mrb[0].mxu0
    %v2452 = vadd.f32 0.0, %v2451
    %v2453 = vpop.f32.mrb[0].mxu0
    %v2454 = vpop.f32.mrb[0].mxu0
    %2455 = vdwg.mxu0
    %2456 = vmatprep.subr.bf16.mxu0 %v2238
    %2457 = vmatpush1.bf16.msra.mxu0 %v2237
    %2458 = vmatprep.subr.bf16.mxu0 %v2242
    %2459 = vmatpush1.bf16.msra.mxu0 %v2241
    %2460 = vmatprep.subr.bf16.mxu0 %v2246
    %2461 = vmatpush1.bf16.msra.mxu0 %v2245
    %2462 = vmatprep.subr.bf16.mxu0 %v2250
    %2463 = vmatpush1.bf16.msra.mxu0 %v2249
    %2464 = vmatprep.subr.bf16.mxu0 %v2254
    %2465 = vmatpush1.bf16.msra.mxu0 %v2253
    %2466 = vmatprep.subr.bf16.mxu0 %v2258
    %2467 = vmatpush1.bf16.msra.mxu0 %v2257
    %2468 = vmatprep.subr.bf16.mxu0 %v2262
    %2469 = vmatpush1.bf16.msra.mxu0 %v2261
    %2470 = vmatprep.subr.bf16.mxu0 %v2266
    %2471 = vmatpush1.bf16.msra.mxu0 %v2265
    %2472 = vmatprep.subr.bf16.mxu0 0
    %2473 = vmatpush1.bf16.msra.mxu0 0
    %2474 = vmatprep.subr.bf16.mxu0 0
    %2475 = vmatpush1.bf16.msra.mxu0 0
    %2476 = vmatprep.subr.bf16.mxu0 0
    %2477 = vmatpush1.bf16.msra.mxu0 0
    %2478 = vmatprep.subr.bf16.mxu0 0
    %2479 = vmatpush1.bf16.msra.mxu0 0
    %2480 = vmatprep.subr.bf16.mxu0 0
    %2481 = vmatpush1.bf16.msra.mxu0 0
    %2482 = vmatprep.subr.bf16.mxu0 0
    %2483 = vmatpush1.bf16.msra.mxu0 0
    %2484 = vmatprep.subr.bf16.mxu0 0
    %2485 = vmatpush1.bf16.msra.mxu0 0
    %2486 = vmatprep.subr.bf16.mxu0 0
    %2487 = vmatpush1.bf16.msra.mxu0 0
    %2488 = vmatprep.mubr.bf16.mxu0 0
    %2489 = vmatmul.mubr.bf16.gmra.mrb[0].mxu0 %v2414
    %v2490 = vpop.f32.mrb[0].mxu0
    %v2491 = vadd.f32 0.0, %v2490
    %v2492 = vpop.f32.mrb[0].mxu0
    %v2493 = vadd.f32 0.0, %v2492
    %v2494 = vpop.f32.mrb[0].mxu0
    %v2495 = vpop.f32.mrb[0].mxu0
    %2496 = vdwg.mxu0
    %v2497 = vadd.f32 %v2410, %v2450
    %v2498 = vadd.f32 %v2411, %v2452
    %v2499 = vadd.f32 %v2412, %v2491
    %v2500 = vadd.f32 %v2413, %v2493
    %v2501 = vxor.u32 %v2497, 2147483648
    %v2502 = vxor.u32 %v2498, 2147483648
    %v2503 = vxor.u32 %v2499, 2147483648
    %v2504 = vmul.f32 %v2501, 1.442695
    %v2505 = vpow.pop %v2504
    %v2506 = vmul.f32 %v2502, 1.442695
    %v2507 = vpow.pop %v2506
    %v2508 = vmul.f32 %v2503, 1.442695
    %v2509 = vpow.pop %v2508
    %v2510 = vadd.f32 %v2505, 1.0
    %v2511 = vadd.f32 %v2507, 1.0
    %v2512 = vadd.f32 %v2509, 1.0
    %v2513 = vrcp.pop %v2510
    %v2514 = vmul.f32 1.0, %v2513
    %v2515 = vrcp.pop %v2511
    %v2516 = vmul.f32 1.0, %v2515
    %v2517 = vrcp.pop %v2512
    %v2518 = vmul.f32 1.0, %v2517
    %v2519 = vtanh.pop %v2500
    %v2520 = vmul.f32 %v2516, %v2406
    %v2521 = vmul.f32 %v2514, %v2519
    %v2522 = vadd.f32 %v2520, %v2521
    %v2523 = vtanh.pop %v2522
    %v2524 = vmul.f32 %v2518, %v2523
    %2525 = vst [vmem:[%s984] sm:$0xff] %v2524
    %v2526 = vld [vmem:[%s986] sm:$0xff]
    %v2527 = vld [vmem:[%s986 + $0x8] sm:$0xff]
    %v2528 = vld [vmem:[%s986 + $0x10] sm:$0xff]
    %v2529 = vld [vmem:[%s986 + $0x18] sm:$0xff]
    %v2530 = vpack.c.bf16 %v2524, %v2524
    %2531 = vmatprep.subr.bf16.mxu0 %v2236
    %2532 = vmatpush1.bf16.msra.mxu0 %v2235
    %2533 = vmatprep.subr.bf16.mxu0 %v2240
    %2534 = vmatpush1.bf16.msra.mxu0 %v2239
    %2535 = vmatprep.subr.bf16.mxu0 %v2244
    %2536 = vmatpush1.bf16.msra.mxu0 %v2243
    %2537 = vmatprep.subr.bf16.mxu0 %v2248
    %2538 = vmatpush1.bf16.msra.mxu0 %v2247
    %2539 = vmatprep.subr.bf16.mxu0 %v2252
    %2540 = vmatpush1.bf16.msra.mxu0 %v2251
    %2541 = vmatprep.subr.bf16.mxu0 %v2256
    %2542 = vmatpush1.bf16.msra.mxu0 %v2255
    %2543 = vmatprep.subr.bf16.mxu0 %v2260
    %2544 = vmatpush1.bf16.msra.mxu0 %v2259
    %2545 = vmatprep.subr.bf16.mxu0 %v2264
    %2546 = vmatpush1.bf16.msra.mxu0 %v2263
    %2547 = vmatprep.subr.bf16.mxu0 0
    %2548 = vmatpush1.bf16.msra.mxu0 0
    %2549 = vmatprep.subr.bf16.mxu0 0
    %2550 = vmatpush1.bf16.msra.mxu0 0
    %2551 = vmatprep.subr.bf16.mxu0 0
    %2552 = vmatpush1.bf16.msra.mxu0 0
    %2553 = vmatprep.subr.bf16.mxu0 0
    %2554 = vmatpush1.bf16.msra.mxu0 0
    %2555 = vmatprep.subr.bf16.mxu0 0
    %2556 = vmatpush1.bf16.msra.mxu0 0
    %2557 = vmatprep.subr.bf16.mxu0 0
    %2558 = vmatpush1.bf16.msra.mxu0 0
    %2559 = vmatprep.subr.bf16.mxu0 0
    %2560 = vmatpush1.bf16.msra.mxu0 0
    %2561 = vmatprep.subr.bf16.mxu0 0
    %2562 = vmatpush1.bf16.msra.mxu0 0
    %2563 = vmatprep.mubr.bf16.mxu0 0
    %2564 = vmatmul.mubr.bf16.gmra.mrb[0].mxu0 %v2530
    %v2565 = vpop.f32.mrb[0].mxu0
    %v2566 = vadd.f32 0.0, %v2565
    %v2567 = vpop.f32.mrb[0].mxu0
    %v2568 = vadd.f32 0.0, %v2567
    %v2569 = vpop.f32.mrb[0].mxu0
    %v2570 = vpop.f32.mrb[0].mxu0
    %2571 = vdwg.mxu0
    %2572 = vmatprep.subr.bf16.mxu0 %v2238
    %2573 = vmatpush1.bf16.msra.mxu0 %v2237
    %2574 = vmatprep.subr.bf16.mxu0 %v2242
    %2575 = vmatpush1.bf16.msra.mxu0 %v2241
    %2576 = vmatprep.subr.bf16.mxu0 %v2246
    %2577 = vmatpush1.bf16.msra.mxu0 %v2245
    %2578 = vmatprep.subr.bf16.mxu0 %v2250
    %2579 = vmatpush1.bf16.msra.mxu0 %v2249
    %2580 = vmatprep.subr.bf16.mxu0 %v2254
    %2581 = vmatpush1.bf16.msra.mxu0 %v2253
    %2582 = vmatprep.subr.bf16.mxu0 %v2258
    %2583 = vmatpush1.bf16.msra.mxu0 %v2257
    %2584 = vmatprep.subr.bf16.mxu0 %v2262
    %2585 = vmatpush1.bf16.msra.mxu0 %v2261
    %2586 = vmatprep.subr.bf16.mxu0 %v2266
    %2587 = vmatpush1.bf16.msra.mxu0 %v2265
    %2588 = vmatprep.subr.bf16.mxu0 0
    %2589 = vmatpush1.bf16.msra.mxu0 0
    %2590 = vmatprep.subr.bf16.mxu0 0
    %2591 = vmatpush1.bf16.msra.mxu0 0
    %2592 = vmatprep.subr.bf16.mxu0 0
    %2593 = vmatpush1.bf16.msra.mxu0 0
    %2594 = vmatprep.subr.bf16.mxu0 0
    %2595 = vmatpush1.bf16.msra.mxu0 0
    %2596 = vmatprep.subr.bf16.mxu0 0
    %2597 = vmatpush1.bf16.msra.mxu0 0
    %2598 = vmatprep.subr.bf16.mxu0 0
    %2599 = vmatpush1.bf16.msra.mxu0 0
    %2600 = vmatprep.subr.bf16.mxu0 0
    %2601 = vmatpush1.bf16.msra.mxu0 0
    %2602 = vmatprep.subr.bf16.mxu0 0
    %2603 = vmatpush1.bf16.msra.mxu0 0
    %2604 = vmatprep.mubr.bf16.mxu0 0
    %2605 = vmatmul.mubr.bf16.gmra.mrb[0].mxu0 %v2530
    %v2606 = vpop.f32.mrb[0].mxu0
    %v2607 = vadd.f32 0.0, %v2606
    %v2608 = vpop.f32.mrb[0].mxu0
    %v2609 = vadd.f32 0.0, %v2608
    %v2610 = vpop.f32.mrb[0].mxu0
    %v2611 = vpop.f32.mrb[0].mxu0
    %2612 = vdwg.mxu0
    %v2613 = vadd.f32 %v2526, %v2566
    %v2614 = vadd.f32 %v2527, %v2568
    %v2615 = vadd.f32 %v2528, %v2607
    %v2616 = vadd.f32 %v2529, %v2609
    %v2617 = vxor.u32 %v2613, 2147483648
    %v2618 = vxor.u32 %v2614, 2147483648
    %v2619 = vxor.u32 %v2615, 2147483648
    %v2620 = vmul.f32 %v2617, 1.442695
    %v2621 = vpow.pop %v2620
    %v2622 = vmul.f32 %v2618, 1.442695
    %v2623 = vpow.pop %v2622
    %v2624 = vmul.f32 %v2619, 1.442695
    %v2625 = vpow.pop %v2624
    %v2626 = vadd.f32 %v2621, 1.0
    %v2627 = vadd.f32 %v2623, 1.0
    %v2628 = vadd.f32 %v2625, 1.0
    %v2629 = vrcp.pop %v2626
    %v2630 = vmul.f32 1.0, %v2629
    %v2631 = vrcp.pop %v2627
    %v2632 = vmul.f32 1.0, %v2631
    %v2633 = vrcp.pop %v2628
    %v2634 = vmul.f32 1.0, %v2633
    %v2635 = vtanh.pop %v2616
    %v2636 = vmul.f32 %v2632, %v2522
    %v2637 = vmul.f32 %v2630, %v2635
    %v2638 = vadd.f32 %v2636, %v2637
    %v2639 = vtanh.pop %v2638
    %v2640 = vmul.f32 %v2634, %v2639
    %2641 = vst [vmem:[%s1102] sm:$0xff] %v2640
    %v2642 = vld [vmem:[%s1104] sm:$0xff]
    %v2643 = vld [vmem:[%s1104 + $0x8] sm:$0xff]
    %v2644 = vld [vmem:[%s1104 + $0x10] sm:$0xff]
    %v2645 = vld [vmem:[%s1104 + $0x18] sm:$0xff]
    %v2646 = vpack.c.bf16 %v2640, %v2640
    %2647 = vmatprep.subr.bf16.mxu0 %v2236
    %2648 = vmatpush1.bf16.msra.mxu0 %v2235
    %2649 = vmatprep.subr.bf16.mxu0 %v2240
    %2650 = vmatpush1.bf16.msra.mxu0 %v2239
    %2651 = vmatprep.subr.bf16.mxu0 %v2244
    %2652 = vmatpush1.bf16.msra.mxu0 %v2243
    %2653 = vmatprep.subr.bf16.mxu0 %v2248
    %2654 = vmatpush1.bf16.msra.mxu0 %v2247
    %2655 = vmatprep.subr.bf16.mxu0 %v2252
    %2656 = vmatpush1.bf16.msra.mxu0 %v2251
    %2657 = vmatprep.subr.bf16.mxu0 %v2256
    %2658 = vmatpush1.bf16.msra.mxu0 %v2255
    %2659 = vmatprep.subr.bf16.mxu0 %v2260
    %2660 = vmatpush1.bf16.msra.mxu0 %v2259
    %2661 = vmatprep.subr.bf16.mxu0 %v2264
    %2662 = vmatpush1.bf16.msra.mxu0 %v2263
    %2663 = vmatprep.subr.bf16.mxu0 0
    %2664 = vmatpush1.bf16.msra.mxu0 0
    %2665 = vmatprep.subr.bf16.mxu0 0
    %2666 = vmatpush1.bf16.msra.mxu0 0
    %2667 = vmatprep.subr.bf16.mxu0 0
    %2668 = vmatpush1.bf16.msra.mxu0 0
    %2669 = vmatprep.subr.bf16.mxu0 0
    %2670 = vmatpush1.bf16.msra.mxu0 0
    %2671 = vmatprep.subr.bf16.mxu0 0
    %2672 = vmatpush1.bf16.msra.mxu0 0
    %2673 = vmatprep.subr.bf16.mxu0 0
    %2674 = vmatpush1.bf16.msra.mxu0 0
    %2675 = vmatprep.subr.bf16.mxu0 0
    %2676 = vmatpush1.bf16.msra.mxu0 0
    %2677 = vmatprep.subr.bf16.mxu0 0
    %2678 = vmatpush1.bf16.msra.mxu0 0
    %2679 = vmatprep.mubr.bf16.mxu0 0
    %2680 = vmatmul.mubr.bf16.gmra.mrb[0].mxu0 %v2646
    %v2681 = vpop.f32.mrb[0].mxu0
    %v2682 = vadd.f32 0.0, %v2681
    %v2683 = vpop.f32.mrb[0].mxu0
    %v2684 = vadd.f32 0.0, %v2683
    %v2685 = vpop.f32.mrb[0].mxu0
    %v2686 = vpop.f32.mrb[0].mxu0
    %2687 = vdwg.mxu0
    %2688 = vmatprep.subr.bf16.mxu0 %v2238
    %2689 = vmatpush1.bf16.msra.mxu0 %v2237
    %2690 = vmatprep.subr.bf16.mxu0 %v2242
    %2691 = vmatpush1.bf16.msra.mxu0 %v2241
    %2692 = vmatprep.subr.bf16.mxu0 %v2246
    %2693 = vmatpush1.bf16.msra.mxu0 %v2245
    %2694 = vmatprep.subr.bf16.mxu0 %v2250
    %2695 = vmatpush1.bf16.msra.mxu0 %v2249
    %2696 = vmatprep.subr.bf16.mxu0 %v2254
    %2697 = vmatpush1.bf16.msra.mxu0 %v2253
    %2698 = vmatprep.subr.bf16.mxu0 %v2258
    %2699 = vmatpush1.bf16.msra.mxu0 %v2257
    %2700 = vmatprep.subr.bf16.mxu0 %v2262
    %2701 = vmatpush1.bf16.msra.mxu0 %v2261
    %2702 = vmatprep.subr.bf16.mxu0 %v2266
    %2703 = vmatpush1.bf16.msra.mxu0 %v2265
    %2704 = vmatprep.subr.bf16.mxu0 0
    %2705 = vmatpush1.bf16.msra.mxu0 0
    %2706 = vmatprep.subr.bf16.mxu0 0
    %2707 = vmatpush1.bf16.msra.mxu0 0
    %2708 = vmatprep.subr.bf16.mxu0 0
    %2709 = vmatpush1.bf16.msra.mxu0 0
    %2710 = vmatprep.subr.bf16.mxu0 0
    %2711 = vmatpush1.bf16.msra.mxu0 0
    %2712 = vmatprep.subr.bf16.mxu0 0
    %2713 = vmatpush1.bf16.msra.mxu0 0
    %2714 = vmatprep.subr.bf16.mxu0 0
    %2715 = vmatpush1.bf16.msra.mxu0 0
    %2716 = vmatprep.subr.bf16.mxu0 0
    %2717 = vmatpush1.bf16.msra.mxu0 0
    %2718 = vmatprep.subr.bf16.mxu0 0
    %2719 = vmatpush1.bf16.msra.mxu0 0
    %2720 = vmatprep.mubr.bf16.mxu0 0
    %2721 = vmatmul.mubr.bf16.gmra.mrb[0].mxu0 %v2646
    %v2722 = vpop.f32.mrb[0].mxu0
    %v2723 = vadd.f32 0.0, %v2722
    %v2724 = vpop.f32.mrb[0].mxu0
    %v2725 = vadd.f32 0.0, %v2724
    %v2726 = vpop.f32.mrb[0].mxu0
    %v2727 = vpop.f32.mrb[0].mxu0
    %2728 = vdwg.mxu0
    %v2729 = vadd.f32 %v2642, %v2682
    %v2730 = vadd.f32 %v2643, %v2684
    %v2731 = vadd.f32 %v2644, %v2723
    %v2732 = vadd.f32 %v2645, %v2725
    %v2733 = vxor.u32 %v2729, 2147483648
    %v2734 = vxor.u32 %v2730, 2147483648
    %v2735 = vxor.u32 %v2731, 2147483648
    %v2736 = vmul.f32 %v2733, 1.442695
    %v2737 = vpow.pop %v2736
    %v2738 = vmul.f32 %v2734, 1.442695
    %v2739 = vpow.pop %v2738
    %v2740 = vmul.f32 %v2735, 1.442695
    %v2741 = vpow.pop %v2740
    %v2742 = vadd.f32 %v2737, 1.0
    %v2743 = vadd.f32 %v2739, 1.0
    %v2744 = vadd.f32 %v2741, 1.0
    %v2745 = vrcp.pop %v2742
    %v2746 = vmul.f32 1.0, %v2745
    %v2747 = vrcp.pop %v2743
    %v2748 = vmul.f32 1.0, %v2747
    %v2749 = vrcp.pop %v2744
    %v2750 = vmul.f32 1.0, %v2749
    %v2751 = vtanh.pop %v2732
    %v2752 = vmul.f32 %v2748, %v2638
    %v2753 = vmul.f32 %v2746, %v2751
    %v2754 = vadd.f32 %v2752, %v2753
    %v2755 = vtanh.pop %v2754
    %v2756 = vmul.f32 %v2750, %v2755
    %2757 = vst [vmem:[%s1220] sm:$0xff] %v2756
    %v2758 = vld [vmem:[%s1222] sm:$0xff]
    %v2759 = vld [vmem:[%s1222 + $0x8] sm:$0xff]
    %v2760 = vld [vmem:[%s1222 + $0x10] sm:$0xff]
    %v2761 = vld [vmem:[%s1222 + $0x18] sm:$0xff]
    %v2762 = vpack.c.bf16 %v2756, %v2756
    %2763 = vmatprep.subr.bf16.mxu0 %v2236
    %2764 = vmatpush1.bf16.msra.mxu0 %v2235
    %2765 = vmatprep.subr.bf16.mxu0 %v2240
    %2766 = vmatpush1.bf16.msra.mxu0 %v2239
    %2767 = vmatprep.subr.bf16.mxu0 %v2244
    %2768 = vmatpush1.bf16.msra.mxu0 %v2243
    %2769 = vmatprep.subr.bf16.mxu0 %v2248
    %2770 = vmatpush1.bf16.msra.mxu0 %v2247
    %2771 = vmatprep.subr.bf16.mxu0 %v2252
    %2772 = vmatpush1.bf16.msra.mxu0 %v2251
    %2773 = vmatprep.subr.bf16.mxu0 %v2256
    %2774 = vmatpush1.bf16.msra.mxu0 %v2255
    %2775 = vmatprep.subr.bf16.mxu0 %v2260
    %2776 = vmatpush1.bf16.msra.mxu0 %v2259
    %2777 = vmatprep.subr.bf16.mxu0 %v2264
    %2778 = vmatpush1.bf16.msra.mxu0 %v2263
    %2779 = vmatprep.subr.bf16.mxu0 0
    %2780 = vmatpush1.bf16.msra.mxu0 0
    %2781 = vmatprep.subr.bf16.mxu0 0
    %2782 = vmatpush1.bf16.msra.mxu0 0
    %2783 = vmatprep.subr.bf16.mxu0 0
    %2784 = vmatpush1.bf16.msra.mxu0 0
    %2785 = vmatprep.subr.bf16.mxu0 0
    %2786 = vmatpush1.bf16.msra.mxu0 0
    %2787 = vmatprep.subr.bf16.mxu0 0
    %2788 = vmatpush1.bf16.msra.mxu0 0
    %2789 = vmatprep.subr.bf16.mxu0 0
    %2790 = vmatpush1.bf16.msra.mxu0 0
    %2791 = vmatprep.subr.bf16.mxu0 0
    %2792 = vmatpush1.bf16.msra.mxu0 0
    %2793 = vmatprep.subr.bf16.mxu0 0
    %2794 = vmatpush1.bf16.msra.mxu0 0
    %2795 = vmatprep.mubr.bf16.mxu0 0
    %2796 = vmatmul.mubr.bf16.gmra.mrb[0].mxu0 %v2762
    %v2797 = vpop.f32.mrb[0].mxu0
    %v2798 = vadd.f32 0.0, %v2797
    %v2799 = vpop.f32.mrb[0].mxu0
    %v2800 = vadd.f32 0.0, %v2799
    %v2801 = vpop.f32.mrb[0].mxu0
    %v2802 = vpop.f32.mrb[0].mxu0
    %2803 = vdwg.mxu0
    %2804 = vmatprep.subr.bf16.mxu0 %v2238
    %2805 = vmatpush1.bf16.msra.mxu0 %v2237
    %2806 = vmatprep.subr.bf16.mxu0 %v2242
    %2807 = vmatpush1.bf16.msra.mxu0 %v2241
    %2808 = vmatprep.subr.bf16.mxu0 %v2246
    %2809 = vmatpush1.bf16.msra.mxu0 %v2245
    %2810 = vmatprep.subr.bf16.mxu0 %v2250
    %2811 = vmatpush1.bf16.msra.mxu0 %v2249
    %2812 = vmatprep.subr.bf16.mxu0 %v2254
    %2813 = vmatpush1.bf16.msra.mxu0 %v2253
    %2814 = vmatprep.subr.bf16.mxu0 %v2258
    %2815 = vmatpush1.bf16.msra.mxu0 %v2257
    %2816 = vmatprep.subr.bf16.mxu0 %v2262
    %2817 = vmatpush1.bf16.msra.mxu0 %v2261
    %2818 = vmatprep.subr.bf16.mxu0 %v2266
    %2819 = vmatpush1.bf16.msra.mxu0 %v2265
    %2820 = vmatprep.subr.bf16.mxu0 0
    %2821 = vmatpush1.bf16.msra.mxu0 0
    %2822 = vmatprep.subr.bf16.mxu0 0
    %2823 = vmatpush1.bf16.msra.mxu0 0
    %2824 = vmatprep.subr.bf16.mxu0 0
    %2825 = vmatpush1.bf16.msra.mxu0 0
    %2826 = vmatprep.subr.bf16.mxu0 0
    %2827 = vmatpush1.bf16.msra.mxu0 0
    %2828 = vmatprep.subr.bf16.mxu0 0
    %2829 = vmatpush1.bf16.msra.mxu0 0
    %2830 = vmatprep.subr.bf16.mxu0 0
    %2831 = vmatpush1.bf16.msra.mxu0 0
    %2832 = vmatprep.subr.bf16.mxu0 0
    %2833 = vmatpush1.bf16.msra.mxu0 0
    %2834 = vmatprep.subr.bf16.mxu0 0
    %2835 = vmatpush1.bf16.msra.mxu0 0
    %2836 = vmatprep.mubr.bf16.mxu0 0
    %2837 = vmatmul.mubr.bf16.gmra.mrb[0].mxu0 %v2762
    %v2838 = vpop.f32.mrb[0].mxu0
    %v2839 = vadd.f32 0.0, %v2838
    %v2840 = vpop.f32.mrb[0].mxu0
    %v2841 = vadd.f32 0.0, %v2840
    %v2842 = vpop.f32.mrb[0].mxu0
    %v2843 = vpop.f32.mrb[0].mxu0
    %2844 = vdwg.mxu0
    %v2845 = vadd.f32 %v2758, %v2798
    %v2846 = vadd.f32 %v2759, %v2800
    %v2847 = vadd.f32 %v2760, %v2839
    %v2848 = vadd.f32 %v2761, %v2841
    %v2849 = vxor.u32 %v2845, 2147483648
    %v2850 = vxor.u32 %v2846, 2147483648
    %v2851 = vxor.u32 %v2847, 2147483648
    %v2852 = vmul.f32 %v2849, 1.442695
    %v2853 = vpow.pop %v2852
    %v2854 = vmul.f32 %v2850, 1.442695
    %v2855 = vpow.pop %v2854
    %v2856 = vmul.f32 %v2851, 1.442695
    %v2857 = vpow.pop %v2856
    %v2858 = vadd.f32 %v2853, 1.0
    %v2859 = vadd.f32 %v2855, 1.0
    %v2860 = vadd.f32 %v2857, 1.0
    %v2861 = vrcp.pop %v2858
    %v2862 = vmul.f32 1.0, %v2861
    %v2863 = vrcp.pop %v2859
    %v2864 = vmul.f32 1.0, %v2863
    %v2865 = vrcp.pop %v2860
    %v2866 = vmul.f32 1.0, %v2865
    %v2867 = vtanh.pop %v2848
    %v2868 = vmul.f32 %v2864, %v2754
    %v2869 = vmul.f32 %v2862, %v2867
    %v2870 = vadd.f32 %v2868, %v2869
    %v2871 = vtanh.pop %v2870
    %v2872 = vmul.f32 %v2866, %v2871
    %2873 = vst [vmem:[%s1338] sm:$0xff] %v2872
    %v2874 = vld [vmem:[%s1340] sm:$0xff]
    %v2875 = vld [vmem:[%s1340 + $0x8] sm:$0xff]
    %v2876 = vld [vmem:[%s1340 + $0x10] sm:$0xff]
    %v2877 = vld [vmem:[%s1340 + $0x18] sm:$0xff]
    %v2878 = vpack.c.bf16 %v2872, %v2872
    %2879 = vmatprep.subr.bf16.mxu0 %v2236
    %2880 = vmatpush1.bf16.msra.mxu0 %v2235
    %2881 = vmatprep.subr.bf16.mxu0 %v2240
    %2882 = vmatpush1.bf16.msra.mxu0 %v2239
    %2883 = vmatprep.subr.bf16.mxu0 %v2244
    %2884 = vmatpush1.bf16.msra.mxu0 %v2243
    %2885 = vmatprep.subr.bf16.mxu0 %v2248
    %2886 = vmatpush1.bf16.msra.mxu0 %v2247
    %2887 = vmatprep.subr.bf16.mxu0 %v2252
    %2888 = vmatpush1.bf16.msra.mxu0 %v2251
    %2889 = vmatprep.subr.bf16.mxu0 %v2256
    %2890 = vmatpush1.bf16.msra.mxu0 %v2255
    %2891 = vmatprep.subr.bf16.mxu0 %v2260
    %2892 = vmatpush1.bf16.msra.mxu0 %v2259
    %2893 = vmatprep.subr.bf16.mxu0 %v2264
    %2894 = vmatpush1.bf16.msra.mxu0 %v2263
    %2895 = vmatprep.subr.bf16.mxu0 0
    %2896 = vmatpush1.bf16.msra.mxu0 0
    %2897 = vmatprep.subr.bf16.mxu0 0
    %2898 = vmatpush1.bf16.msra.mxu0 0
    %2899 = vmatprep.subr.bf16.mxu0 0
    %2900 = vmatpush1.bf16.msra.mxu0 0
    %2901 = vmatprep.subr.bf16.mxu0 0
    %2902 = vmatpush1.bf16.msra.mxu0 0
    %2903 = vmatprep.subr.bf16.mxu0 0
    %2904 = vmatpush1.bf16.msra.mxu0 0
    %2905 = vmatprep.subr.bf16.mxu0 0
    %2906 = vmatpush1.bf16.msra.mxu0 0
    %2907 = vmatprep.subr.bf16.mxu0 0
    %2908 = vmatpush1.bf16.msra.mxu0 0
    %2909 = vmatprep.subr.bf16.mxu0 0
    %2910 = vmatpush1.bf16.msra.mxu0 0
    %2911 = vmatprep.mubr.bf16.mxu0 0
    %2912 = vmatmul.mubr.bf16.gmra.mrb[0].mxu0 %v2878
    %v2913 = vpop.f32.mrb[0].mxu0
    %v2914 = vadd.f32 0.0, %v2913
    %v2915 = vpop.f32.mrb[0].mxu0
    %v2916 = vadd.f32 0.0, %v2915
    %v2917 = vpop.f32.mrb[0].mxu0
    %v2918 = vpop.f32.mrb[0].mxu0
    %2919 = vdwg.mxu0
    %2920 = vmatprep.subr.bf16.mxu0 %v2238
    %2921 = vmatpush1.bf16.msra.mxu0 %v2237
    %2922 = vmatprep.subr.bf16.mxu0 %v2242
    %2923 = vmatpush1.bf16.msra.mxu0 %v2241
    %2924 = vmatprep.subr.bf16.mxu0 %v2246
    %2925 = vmatpush1.bf16.msra.mxu0 %v2245
    %2926 = vmatprep.subr.bf16.mxu0 %v2250
    %2927 = vmatpush1.bf16.msra.mxu0 %v2249
    %2928 = vmatprep.subr.bf16.mxu0 %v2254
    %2929 = vmatpush1.bf16.msra.mxu0 %v2253
    %2930 = vmatprep.subr.bf16.mxu0 %v2258
    %2931 = vmatpush1.bf16.msra.mxu0 %v2257
    %2932 = vmatprep.subr.bf16.mxu0 %v2262
    %2933 = vmatpush1.bf16.msra.mxu0 %v2261
    %2934 = vmatprep.subr.bf16.mxu0 %v2266
    %2935 = vmatpush1.bf16.msra.mxu0 %v2265
    %2936 = vmatprep.subr.bf16.mxu0 0
    %2937 = vmatpush1.bf16.msra.mxu0 0
    %2938 = vmatprep.subr.bf16.mxu0 0
    %2939 = vmatpush1.bf16.msra.mxu0 0
    %2940 = vmatprep.subr.bf16.mxu0 0
    %2941 = vmatpush1.bf16.msra.mxu0 0
    %2942 = vmatprep.subr.bf16.mxu0 0
    %2943 = vmatpush1.bf16.msra.mxu0 0
    %2944 = vmatprep.subr.bf16.mxu0 0
    %2945 = vmatpush1.bf16.msra.mxu0 0
    %2946 = vmatprep.subr.bf16.mxu0 0
    %2947 = vmatpush1.bf16.msra.mxu0 0
    %2948 = vmatprep.subr.bf16.mxu0 0
    %2949 = vmatpush1.bf16.msra.mxu0 0
    %2950 = vmatprep.subr.bf16.mxu0 0
    %2951 = vmatpush1.bf16.msra.mxu0 0
    %2952 = vmatprep.mubr.bf16.mxu0 0
    %2953 = vmatmul.mubr.bf16.gmra.mrb[0].mxu0 %v2878
    %v2954 = vpop.f32.mrb[0].mxu0
    %v2955 = vadd.f32 0.0, %v2954
    %v2956 = vpop.f32.mrb[0].mxu0
    %v2957 = vadd.f32 0.0, %v2956
    %v2958 = vpop.f32.mrb[0].mxu0
    %v2959 = vpop.f32.mrb[0].mxu0
    %2960 = vdwg.mxu0
    %v2961 = vadd.f32 %v2874, %v2914
    %v2962 = vadd.f32 %v2875, %v2916
    %v2963 = vadd.f32 %v2876, %v2955
    %v2964 = vadd.f32 %v2877, %v2957
    %v2965 = vxor.u32 %v2961, 2147483648
    %v2966 = vxor.u32 %v2962, 2147483648
    %v2967 = vxor.u32 %v2963, 2147483648
    %v2968 = vmul.f32 %v2965, 1.442695
    %v2969 = vpow.pop %v2968
    %v2970 = vmul.f32 %v2966, 1.442695
    %v2971 = vpow.pop %v2970
    %v2972 = vmul.f32 %v2967, 1.442695
    %v2973 = vpow.pop %v2972
    %v2974 = vadd.f32 %v2969, 1.0
    %v2975 = vadd.f32 %v2971, 1.0
    %v2976 = vadd.f32 %v2973, 1.0
    %v2977 = vrcp.pop %v2974
    %v2978 = vmul.f32 1.0, %v2977
    %v2979 = vrcp.pop %v2975
    %v2980 = vmul.f32 1.0, %v2979
    %v2981 = vrcp.pop %v2976
    %v2982 = vmul.f32 1.0, %v2981
    %v2983 = vtanh.pop %v2964
    %v2984 = vmul.f32 %v2980, %v2870
    %v2985 = vmul.f32 %v2978, %v2983
    %v2986 = vadd.f32 %v2984, %v2985
    %v2987 = vtanh.pop %v2986
    %v2988 = vmul.f32 %v2982, %v2987
    %2989 = vst [vmem:[%s1456] sm:$0xff] %v2988
    %v2990 = vld [vmem:[%s1458] sm:$0xff]
    %v2991 = vld [vmem:[%s1458 + $0x8] sm:$0xff]
    %v2992 = vld [vmem:[%s1458 + $0x10] sm:$0xff]
    %v2993 = vld [vmem:[%s1458 + $0x18] sm:$0xff]
    %v2994 = vpack.c.bf16 %v2988, %v2988
    %2995 = vmatprep.subr.bf16.mxu0 %v2236
    %2996 = vmatpush1.bf16.msra.mxu0 %v2235
    %2997 = vmatprep.subr.bf16.mxu0 %v2240
    %2998 = vmatpush1.bf16.msra.mxu0 %v2239
    %2999 = vmatprep.subr.bf16.mxu0 %v2244
    %3000 = vmatpush1.bf16.msra.mxu0 %v2243
    %3001 = vmatprep.subr.bf16.mxu0 %v2248
    %3002 = vmatpush1.bf16.msra.mxu0 %v2247
    %3003 = vmatprep.subr.bf16.mxu0 %v2252
    %3004 = vmatpush1.bf16.msra.mxu0 %v2251
    %3005 = vmatprep.subr.bf16.mxu0 %v2256
    %3006 = vmatpush1.bf16.msra.mxu0 %v2255
    %3007 = vmatprep.subr.bf16.mxu0 %v2260
    %3008 = vmatpush1.bf16.msra.mxu0 %v2259
    %3009 = vmatprep.subr.bf16.mxu0 %v2264
    %3010 = vmatpush1.bf16.msra.mxu0 %v2263
    %3011 = vmatprep.subr.bf16.mxu0 0
    %3012 = vmatpush1.bf16.msra.mxu0 0
    %3013 = vmatprep.subr.bf16.mxu0 0
    %3014 = vmatpush1.bf16.msra.mxu0 0
    %3015 = vmatprep.subr.bf16.mxu0 0
    %3016 = vmatpush1.bf16.msra.mxu0 0
    %3017 = vmatprep.subr.bf16.mxu0 0
    %3018 = vmatpush1.bf16.msra.mxu0 0
    %3019 = vmatprep.subr.bf16.mxu0 0
    %3020 = vmatpush1.bf16.msra.mxu0 0
    %3021 = vmatprep.subr.bf16.mxu0 0
    %3022 = vmatpush1.bf16.msra.mxu0 0
    %3023 = vmatprep.subr.bf16.mxu0 0
    %3024 = vmatpush1.bf16.msra.mxu0 0
    %3025 = vmatprep.subr.bf16.mxu0 0
    %3026 = vmatpush1.bf16.msra.mxu0 0
    %3027 = vmatprep.mubr.bf16.mxu0 0
    %3028 = vmatmul.mubr.bf16.gmra.mrb[0].mxu0 %v2994
    %v3029 = vpop.f32.mrb[0].mxu0
    %v3030 = vadd.f32 0.0, %v3029
    %v3031 = vpop.f32.mrb[0].mxu0
    %v3032 = vadd.f32 0.0, %v3031
    %v3033 = vpop.f32.mrb[0].mxu0
    %v3034 = vpop.f32.mrb[0].mxu0
    %3035 = vdwg.mxu0
    %3036 = vmatprep.subr.bf16.mxu0 %v2238
    %3037 = vmatpush1.bf16.msra.mxu0 %v2237
    %3038 = vmatprep.subr.bf16.mxu0 %v2242
    %3039 = vmatpush1.bf16.msra.mxu0 %v2241
    %3040 = vmatprep.subr.bf16.mxu0 %v2246
    %3041 = vmatpush1.bf16.msra.mxu0 %v2245
    %3042 = vmatprep.subr.bf16.mxu0 %v2250
    %3043 = vmatpush1.bf16.msra.mxu0 %v2249
    %3044 = vmatprep.subr.bf16.mxu0 %v2254
    %3045 = vmatpush1.bf16.msra.mxu0 %v2253
    %3046 = vmatprep.subr.bf16.mxu0 %v2258
    %3047 = vmatpush1.bf16.msra.mxu0 %v2257
    %3048 = vmatprep.subr.bf16.mxu0 %v2262
    %3049 = vmatpush1.bf16.msra.mxu0 %v2261
    %3050 = vmatprep.subr.bf16.mxu0 %v2266
    %3051 = vmatpush1.bf16.msra.mxu0 %v2265
    %3052 = vmatprep.subr.bf16.mxu0 0
    %3053 = vmatpush1.bf16.msra.mxu0 0
    %3054 = vmatprep.subr.bf16.mxu0 0
    %3055 = vmatpush1.bf16.msra.mxu0 0
    %3056 = vmatprep.subr.bf16.mxu0 0
    %3057 = vmatpush1.bf16.msra.mxu0 0
    %3058 = vmatprep.subr.bf16.mxu0 0
    %3059 = vmatpush1.bf16.msra.mxu0 0
    %3060 = vmatprep.subr.bf16.mxu0 0
    %3061 = vmatpush1.bf16.msra.mxu0 0
    %3062 = vmatprep.subr.bf16.mxu0 0
    %3063 = vmatpush1.bf16.msra.mxu0 0
    %3064 = vmatprep.subr.bf16.mxu0 0
    %3065 = vmatpush1.bf16.msra.mxu0 0
    %3066 = vmatprep.subr.bf16.mxu0 0
    %3067 = vmatpush1.bf16.msra.mxu0 0
    %3068 = vmatprep.mubr.bf16.mxu0 0
    %3069 = vmatmul.mubr.bf16.gmra.mrb[0].mxu0 %v2994
    %v3070 = vpop.f32.mrb[0].mxu0
    %v3071 = vadd.f32 0.0, %v3070
    %v3072 = vpop.f32.mrb[0].mxu0
    %v3073 = vadd.f32 0.0, %v3072
    %v3074 = vpop.f32.mrb[0].mxu0
    %v3075 = vpop.f32.mrb[0].mxu0
    %3076 = vdwg.mxu0
    %v3077 = vadd.f32 %v2990, %v3030
    %v3078 = vadd.f32 %v2991, %v3032
    %v3079 = vadd.f32 %v2992, %v3071
    %v3080 = vadd.f32 %v2993, %v3073
    %v3081 = vxor.u32 %v3077, 2147483648
    %v3082 = vxor.u32 %v3078, 2147483648
    %v3083 = vxor.u32 %v3079, 2147483648
    %v3084 = vmul.f32 %v3081, 1.442695
    %v3085 = vpow.pop %v3084
    %v3086 = vmul.f32 %v3082, 1.442695
    %v3087 = vpow.pop %v3086
    %v3088 = vmul.f32 %v3083, 1.442695
    %v3089 = vpow.pop %v3088
    %v3090 = vadd.f32 %v3085, 1.0
    %v3091 = vadd.f32 %v3087, 1.0
    %v3092 = vadd.f32 %v3089, 1.0
    %v3093 = vrcp.pop %v3090
    %v3094 = vmul.f32 1.0, %v3093
    %v3095 = vrcp.pop %v3091
    %v3096 = vmul.f32 1.0, %v3095
    %v3097 = vrcp.pop %v3092
    %v3098 = vmul.f32 1.0, %v3097
    %v3099 = vtanh.pop %v3080
    %v3100 = vmul.f32 %v3096, %v2986
    %v3101 = vmul.f32 %v3094, %v3099
    %v3102 = vadd.f32 %v3100, %v3101
    %v3103 = vtanh.pop %v3102
    %v3104 = vmul.f32 %v3098, %v3103
    %3105 = vst [vmem:[%s1574] sm:$0xff] %v3104
    %v3106 = vld [vmem:[%s1576] sm:$0xff]
    %v3107 = vld [vmem:[%s1576 + $0x8] sm:$0xff]
    %v3108 = vld [vmem:[%s1576 + $0x10] sm:$0xff]
    %v3109 = vld [vmem:[%s1576 + $0x18] sm:$0xff]
    %v3110 = vpack.c.bf16 %v3104, %v3104
    %3111 = vmatprep.subr.bf16.mxu0 %v2236
    %3112 = vmatpush1.bf16.msra.mxu0 %v2235
    %3113 = vmatprep.subr.bf16.mxu0 %v2240
    %3114 = vmatpush1.bf16.msra.mxu0 %v2239
    %3115 = vmatprep.subr.bf16.mxu0 %v2244
    %3116 = vmatpush1.bf16.msra.mxu0 %v2243
    %3117 = vmatprep.subr.bf16.mxu0 %v2248
    %3118 = vmatpush1.bf16.msra.mxu0 %v2247
    %3119 = vmatprep.subr.bf16.mxu0 %v2252
    %3120 = vmatpush1.bf16.msra.mxu0 %v2251
    %3121 = vmatprep.subr.bf16.mxu0 %v2256
    %3122 = vmatpush1.bf16.msra.mxu0 %v2255
    %3123 = vmatprep.subr.bf16.mxu0 %v2260
    %3124 = vmatpush1.bf16.msra.mxu0 %v2259
    %3125 = vmatprep.subr.bf16.mxu0 %v2264
    %3126 = vmatpush1.bf16.msra.mxu0 %v2263
    %3127 = vmatprep.subr.bf16.mxu0 0
    %3128 = vmatpush1.bf16.msra.mxu0 0
    %3129 = vmatprep.subr.bf16.mxu0 0
    %3130 = vmatpush1.bf16.msra.mxu0 0
    %3131 = vmatprep.subr.bf16.mxu0 0
    %3132 = vmatpush1.bf16.msra.mxu0 0
    %3133 = vmatprep.subr.bf16.mxu0 0
    %3134 = vmatpush1.bf16.msra.mxu0 0
    %3135 = vmatprep.subr.bf16.mxu0 0
    %3136 = vmatpush1.bf16.msra.mxu0 0
    %3137 = vmatprep.subr.bf16.mxu0 0
    %3138 = vmatpush1.bf16.msra.mxu0 0
    %3139 = vmatprep.subr.bf16.mxu0 0
    %3140 = vmatpush1.bf16.msra.mxu0 0
    %3141 = vmatprep.subr.bf16.mxu0 0
    %3142 = vmatpush1.bf16.msra.mxu0 0
    %3143 = vmatprep.mubr.bf16.mxu0 0
    %3144 = vmatmul.mubr.bf16.gmra.mrb[0].mxu0 %v3110
    %v3145 = vpop.f32.mrb[0].mxu0
    %v3146 = vadd.f32 0.0, %v3145
    %v3147 = vpop.f32.mrb[0].mxu0
    %v3148 = vadd.f32 0.0, %v3147
    %v3149 = vpop.f32.mrb[0].mxu0
    %v3150 = vpop.f32.mrb[0].mxu0
    %3151 = vdwg.mxu0
    %3152 = vmatprep.subr.bf16.mxu0 %v2238
    %3153 = vmatpush1.bf16.msra.mxu0 %v2237
    %3154 = vmatprep.subr.bf16.mxu0 %v2242
    %3155 = vmatpush1.bf16.msra.mxu0 %v2241
    %3156 = vmatprep.subr.bf16.mxu0 %v2246
    %3157 = vmatpush1.bf16.msra.mxu0 %v2245
    %3158 = vmatprep.subr.bf16.mxu0 %v2250
    %3159 = vmatpush1.bf16.msra.mxu0 %v2249
    %3160 = vmatprep.subr.bf16.mxu0 %v2254
    %3161 = vmatpush1.bf16.msra.mxu0 %v2253
    %3162 = vmatprep.subr.bf16.mxu0 %v2258
    %3163 = vmatpush1.bf16.msra.mxu0 %v2257
    %3164 = vmatprep.subr.bf16.mxu0 %v2262
    %3165 = vmatpush1.bf16.msra.mxu0 %v2261
    %3166 = vmatprep.subr.bf16.mxu0 %v2266
    %3167 = vmatpush1.bf16.msra.mxu0 %v2265
    %3168 = vmatprep.subr.bf16.mxu0 0
    %3169 = vmatpush1.bf16.msra.mxu0 0
    %3170 = vmatprep.subr.bf16.mxu0 0
    %3171 = vmatpush1.bf16.msra.mxu0 0
    %3172 = vmatprep.subr.bf16.mxu0 0
    %3173 = vmatpush1.bf16.msra.mxu0 0
    %3174 = vmatprep.subr.bf16.mxu0 0
    %3175 = vmatpush1.bf16.msra.mxu0 0
    %3176 = vmatprep.subr.bf16.mxu0 0
    %3177 = vmatpush1.bf16.msra.mxu0 0
    %3178 = vmatprep.subr.bf16.mxu0 0
    %3179 = vmatpush1.bf16.msra.mxu0 0
    %3180 = vmatprep.subr.bf16.mxu0 0
    %3181 = vmatpush1.bf16.msra.mxu0 0
    %3182 = vmatprep.subr.bf16.mxu0 0
    %3183 = vmatpush1.bf16.msra.mxu0 0
    %3184 = vmatprep.mubr.bf16.mxu0 0
    %3185 = vmatmul.mubr.bf16.gmra.mrb[0].mxu0 %v3110
    %v3186 = vpop.f32.mrb[0].mxu0
    %v3187 = vadd.f32 0.0, %v3186
    %v3188 = vpop.f32.mrb[0].mxu0
    %v3189 = vadd.f32 0.0, %v3188
    %v3190 = vpop.f32.mrb[0].mxu0
    %v3191 = vpop.f32.mrb[0].mxu0
    %3192 = vdwg.mxu0
    %v3193 = vadd.f32 %v3106, %v3146
    %v3194 = vadd.f32 %v3107, %v3148
    %v3195 = vadd.f32 %v3108, %v3187
    %v3196 = vadd.f32 %v3109, %v3189
    %v3197 = vxor.u32 %v3193, 2147483648
    %v3198 = vxor.u32 %v3194, 2147483648
    %v3199 = vxor.u32 %v3195, 2147483648
    %v3200 = vmul.f32 %v3197, 1.442695
    %v3201 = vpow.pop %v3200
    %v3202 = vmul.f32 %v3198, 1.442695
    %v3203 = vpow.pop %v3202
    %v3204 = vmul.f32 %v3199, 1.442695
    %v3205 = vpow.pop %v3204
    %v3206 = vadd.f32 %v3201, 1.0
    %v3207 = vadd.f32 %v3203, 1.0
    %v3208 = vadd.f32 %v3205, 1.0
    %v3209 = vrcp.pop %v3206
    %v3210 = vmul.f32 1.0, %v3209
    %v3211 = vrcp.pop %v3207
    %v3212 = vmul.f32 1.0, %v3211
    %v3213 = vrcp.pop %v3208
    %v3214 = vmul.f32 1.0, %v3213
    %v3215 = vtanh.pop %v3196
    %v3216 = vmul.f32 %v3212, %v3102
    %v3217 = vmul.f32 %v3210, %v3215
    %v3218 = vadd.f32 %v3216, %v3217
    %v3219 = vtanh.pop %v3218
    %v3220 = vmul.f32 %v3214, %v3219
    %3221 = vst [vmem:[%s1692] sm:$0xff] %v3220
    %s3222 = scalar_lea.vmem %s14, 8
    %3223 = vst [vmem:[%s3222] sm:$0xff] %v3220
    %s3224 = scalar_lea.vmem %s15, 8
    %3225 = vst [vmem:[%s3224] sm:$0xff] %v3218
    %v3226 = vld [vmem:[#allocation2] sm:$0xff]
    %v3227 = vld [vmem:[#allocation2 + $0x8] sm:$0xff]
    %v3228 = vld [vmem:[#allocation2 + $0x10] sm:$0xff]
    %v3229 = vld [vmem:[#allocation2 + $0x18] sm:$0xff]
    %v3230 = vld [vmem:[#allocation2 + $0x20] sm:$0xff]
    %v3231 = vld [vmem:[#allocation2 + $0x28] sm:$0xff]
    %v3232 = vld [vmem:[#allocation2 + $0x30] sm:$0xff]
    %v3233 = vld [vmem:[#allocation2 + $0x38] sm:$0xff]
    %v3234 = vlaneseq
    %v3235 = vshrl.u32 %v3234, 7
    %vm3236 = vcmp.lt.s32.totalorder %v3235, 2
    %v3237 = vsel %vm3236, 1, 0
    %v3238 = vcvt.s32.f32 %v3237
    %v3239 = vmul.f32 %v3226, %v3238
    %v3240 = vmul.f32 %v3227, %v3238
    %v3241 = vmul.f32 %v3228, %v3238
    %v3242 = vmul.f32 %v3229, %v3238
    %v3243 = vmul.f32 %v3230, %v3238
    %v3244 = vmul.f32 %v3231, %v3238
    %v3245 = vmul.f32 %v3232, %v3238
    %v3246 = vmul.f32 %v3233, %v3238
    %v3247 = vadd.f32 %v3239, %v3240
    %v3248 = vadd.f32 %v3247, %v3241
    %v3249 = vadd.f32 %v3248, %v3242
    %v3250 = vadd.f32 %v3249, %v3243
    %v3251 = vadd.f32 %v3250, %v3244
    %v3252 = vadd.f32 %v3251, %v3245
    %v3253 = vadd.f32 %v3252, %v3246
    %v3254 = vrot.slane %v3253, 4
    %v3255 = vadd.f32 %v3253, %v3254
    %v3256 = vrot.slane %v3255, 2
    %v3257 = vadd.f32 %v3255, %v3256
    %v3258 = vrot.slane %v3257, 1
    %v3259 = vadd.f32 %v3257, %v3258
    %v3260 = vmul.f32 %v3239, %v3226
    %v3261 = vmul.f32 %v3240, %v3227
    %v3262 = vmul.f32 %v3241, %v3228
    %v3263 = vmul.f32 %v3242, %v3229
    %v3264 = vmul.f32 %v3243, %v3230
    %v3265 = vmul.f32 %v3244, %v3231
    %v3266 = vmul.f32 %v3245, %v3232
    %v3267 = vmul.f32 %v3246, %v3233
    %v3268 = vadd.f32 %v3260, %v3261
    %v3269 = vadd.f32 %v3268, %v3262
    %v3270 = vadd.f32 %v3269, %v3263
    %v3271 = vadd.f32 %v3270, %v3264
    %v3272 = vadd.f32 %v3271, %v3265
    %v3273 = vadd.f32 %v3272, %v3266
    %v3274 = vadd.f32 %v3273, %v3267
    %v3275 = vrot.slane %v3274, 4
    %v3276 = vadd.f32 %v3274, %v3275
    %v3277 = vrot.slane %v3276, 2
    %v3278 = vadd.f32 %v3276, %v3277
    %v3279 = vrot.slane %v3278, 1
    %v3280 = vadd.f32 %v3278, %v3279
    %v3281 = vrcp.pop 16.0
    %v3282 = vmul.f32 %v3259, %v3281
    %v3283 = vmul.f32 %v3280, %v3281
    %v3284 = vmul.f32 %v3282, %v3282
    %v3285 = vsub.f32 %v3283, %v3284
    %v3286 = vmax.f32 %v3285, 0.0
    %v3287 = vadd.f32 %v3286, 1e-05
    %v3288 = vrsqrt.pop %v3287
    %v3289 = vld [vmem:[%s7] sm:$0x1]
    %v3290 = vmul.f32 %v3288, %v3289
    %v3291 = vld [vmem:[%s8] sm:$0x1]
    %v3292 = vmul.f32 %v3282, %v3290
    %v3293 = vsub.f32 %v3291, %v3292
    %v3294 = vlaneseq
    %v3295 = vshrl.u32 %v3294, 7
    %v3296 = vsub.s32 0, %v3295
    %v3297 = vrot.slane %v3290, %v3296
    %v3298 = vmul.f32 %v3226, %v3297
    %v3299 = vmul.f32 %v3227, %v3297
    %v3300 = vmul.f32 %v3228, %v3297
    %v3301 = vmul.f32 %v3229, %v3297
    %v3302 = vmul.f32 %v3230, %v3297
    %v3303 = vmul.f32 %v3231, %v3297
    %v3304 = vmul.f32 %v3232, %v3297
    %v3305 = vmul.f32 %v3233, %v3297
    %v3307 = vlaneseq
    %v3308 = vshrl.u32 %v3307, 7
    %v3309 = vsub.s32 0, %v3308
    %v3310 = vrot.slane %v3293, %v3309
    %v3312 = vadd.f32 %v3298, %v3310
    %v3313 = vadd.f32 %v3299, %v3310
    %v3314 = vadd.f32 %v3300, %v3310
    %v3315 = vadd.f32 %v3301, %v3310
    %v3316 = vadd.f32 %v3302, %v3310
    %v3317 = vadd.f32 %v3303, %v3310
    %v3318 = vadd.f32 %v3304, %v3310
    %v3319 = vadd.f32 %v3305, %v3310
    %3320 = vst [vmem:[#allocation2] sm:$0xff] %v3312
    %3321 = vst [vmem:[#allocation2 + $0x8] sm:$0xff] %v3313
    %3322 = vst [vmem:[#allocation2 + $0x10] sm:$0xff] %v3314
    %3323 = vst [vmem:[#allocation2 + $0x18] sm:$0xff] %v3315
    %3324 = vst [vmem:[#allocation2 + $0x20] sm:$0xff] %v3316
    %3325 = vst [vmem:[#allocation2 + $0x28] sm:$0xff] %v3317
    %3326 = vst [vmem:[#allocation2 + $0x30] sm:$0xff] %v3318
    %3327 = vst [vmem:[#allocation2 + $0x38] sm:$0xff] %v3319
    %v3328 = vld [vmem:[#allocation9] sm:$0xff]
    %v3329 = vld [vmem:[#allocation9 + $0x8] sm:$0xff]
    %v3330 = vld [vmem:[#allocation9 + $0x10] sm:$0xff]
    %v3331 = vld [vmem:[#allocation9 + $0x18] sm:$0xff]
    %v3332 = vld [vmem:[#allocation9 + $0x20] sm:$0xff]
    %v3333 = vld [vmem:[#allocation9 + $0x28] sm:$0xff]
    %v3334 = vld [vmem:[#allocation9 + $0x30] sm:$0xff]
    %v3335 = vld [vmem:[#allocation9 + $0x38] sm:$0xff]
    %v3336 = vld [vmem:[#allocation9 + $0x40] sm:$0xff]
    %v3337 = vld [vmem:[#allocation9 + $0x48] sm:$0xff]
    %v3338 = vld [vmem:[#allocation9 + $0x50] sm:$0xff]
    %v3339 = vld [vmem:[#allocation9 + $0x58] sm:$0xff]
    %v3340 = vld [vmem:[#allocation9 + $0x60] sm:$0xff]
    %v3341 = vld [vmem:[#allocation9 + $0x68] sm:$0xff]
    %v3342 = vld [vmem:[#allocation9 + $0x70] sm:$0xff]
    %v3343 = vld [vmem:[#allocation9 + $0x78] sm:$0xff]
    %v3344 = vld [vmem:[#allocation9 + $0x80] sm:$0xff]
    %v3345 = vld [vmem:[#allocation9 + $0x88] sm:$0xff]
    %v3346 = vld [vmem:[#allocation9 + $0x90] sm:$0xff]
    %v3347 = vld [vmem:[#allocation9 + $0x98] sm:$0xff]
    %v3348 = vld [vmem:[#allocation9 + $0xa0] sm:$0xff]
    %v3349 = vld [vmem:[#allocation9 + $0xa8] sm:$0xff]
    %v3350 = vld [vmem:[#allocation9 + $0xb0] sm:$0xff]
    %v3351 = vld [vmem:[#allocation9 + $0xb8] sm:$0xff]
    %v3352 = vld [vmem:[#allocation9 + $0xc0] sm:$0xff]
    %v3353 = vld [vmem:[#allocation9 + $0xc8] sm:$0xff]
    %v3354 = vld [vmem:[#allocation9 + $0xd0] sm:$0xff]
    %v3355 = vld [vmem:[#allocation9 + $0xd8] sm:$0xff]
    %v3356 = vld [vmem:[#allocation9 + $0xe0] sm:$0xff]
    %v3357 = vld [vmem:[#allocation9 + $0xe8] sm:$0xff]
    %v3358 = vld [vmem:[#allocation9 + $0xf0] sm:$0xff]
    %v3359 = vld [vmem:[#allocation9 + $0xf8] sm:$0xff]
    %v3360 = vld [vmem:[#allocation11] sm:$0xff]
    %v3361 = vld [vmem:[#allocation11 + $0x8] sm:$0xff]
    %v3362 = vld [vmem:[#allocation11 + $0x10] sm:$0xff]
    %v3363 = vld [vmem:[#allocation11 + $0x18] sm:$0xff]
    %v3364 = vld [vmem:[#allocation11 + $0x20] sm:$0xff]
    %v3365 = vld [vmem:[#allocation11 + $0x28] sm:$0xff]
    %v3366 = vld [vmem:[#allocation11 + $0x30] sm:$0xff]
    %v3367 = vld [vmem:[#allocation11 + $0x38] sm:$0xff]
    %v3368 = vld [vmem:[#allocation11 + $0x40] sm:$0xff]
    %v3369 = vld [vmem:[#allocation11 + $0x48] sm:$0xff]
    %v3370 = vld [vmem:[#allocation11 + $0x50] sm:$0xff]
    %v3371 = vld [vmem:[#allocation11 + $0x58] sm:$0xff]
    %v3372 = vld [vmem:[#allocation11 + $0x60] sm:$0xff]
    %v3373 = vld [vmem:[#allocation11 + $0x68] sm:$0xff]
    %v3374 = vld [vmem:[#allocation11 + $0x70] sm:$0xff]
    %v3375 = vld [vmem:[#allocation11 + $0x78] sm:$0xff]
    %v3376 = vld [vmem:[#allocation11 + $0x80] sm:$0xff]
    %v3377 = vld [vmem:[#allocation11 + $0x88] sm:$0xff]
    %v3378 = vld [vmem:[#allocation11 + $0x90] sm:$0xff]
    %v3379 = vld [vmem:[#allocation11 + $0x98] sm:$0xff]
    %v3380 = vld [vmem:[#allocation11 + $0xa0] sm:$0xff]
    %v3381 = vld [vmem:[#allocation11 + $0xa8] sm:$0xff]
    %v3382 = vld [vmem:[#allocation11 + $0xb0] sm:$0xff]
    %v3383 = vld [vmem:[#allocation11 + $0xb8] sm:$0xff]
    %v3384 = vld [vmem:[#allocation11 + $0xc0] sm:$0xff]
    %v3385 = vld [vmem:[#allocation11 + $0xc8] sm:$0xff]
    %v3386 = vld [vmem:[#allocation11 + $0xd0] sm:$0xff]
    %v3387 = vld [vmem:[#allocation11 + $0xd8] sm:$0xff]
    %v3388 = vld [vmem:[#allocation11 + $0xe0] sm:$0xff]
    %v3389 = vld [vmem:[#allocation11 + $0xe8] sm:$0xff]
    %v3390 = vld [vmem:[#allocation11 + $0xf0] sm:$0xff]
    %v3391 = vld [vmem:[#allocation11 + $0xf8] sm:$0xff]
    %v3392 = vld [vmem:[#allocation12] sm:$0xf]
    %v3393 = vld [vmem:[#allocation2] sm:$0xff]
    %v3394 = vld [vmem:[#allocation2 + $0x8] sm:$0xff]
    %v3395 = vld [vmem:[#allocation2 + $0x10] sm:$0xff]
    %v3396 = vld [vmem:[#allocation2 + $0x18] sm:$0xff]
    %v3397 = vld [vmem:[#allocation2 + $0x20] sm:$0xff]
    %v3398 = vld [vmem:[#allocation2 + $0x28] sm:$0xff]
    %v3399 = vld [vmem:[#allocation2 + $0x30] sm:$0xff]
    %v3400 = vld [vmem:[#allocation2 + $0x38] sm:$0xff]
    %v3401 = vpack.c.bf16 %v3394, %v3393
    %v3402 = vpack.c.bf16 %v3396, %v3395
    %v3403 = vpack.c.bf16 %v3398, %v3397
    %v3404 = vpack.c.bf16 %v3400, %v3399
    %v3406 = vlaneseq
    %v3407 = vshrl.u32 %v3406, 7
    %v3408 = vsub.s32 0, %v3407
    %v3409 = vrot.slane %v3392, %v3408
    %v3410 = vlaneseq
    %v3411 = vshrl.u32 %v3410, 7
    %v3412 = vsub.s32 1, %v3411
    %v3413 = vrot.slane %v3392, %v3412
    %v3414 = vlaneseq
    %v3415 = vshrl.u32 %v3414, 7
    %v3416 = vsub.s32 2, %v3415
    %v3417 = vrot.slane %v3392, %v3416
    %v3418 = vlaneseq
    %v3419 = vshrl.u32 %v3418, 7
    %v3420 = vsub.s32 3, %v3419
    %v3421 = vrot.slane %v3392, %v3420
    %v3458 = vunpack.c.l.b16 %v3328
    %v3459 = vunpack.c.h.b16 %v3328
    %v3460 = vunpack.c.l.b16 %v3329
    %v3461 = vunpack.c.h.b16 %v3329
    %v3462 = vunpack.c.l.b16 %v3330
    %v3463 = vunpack.c.h.b16 %v3330
    %v3464 = vunpack.c.l.b16 %v3331
    %v3465 = vunpack.c.h.b16 %v3331
    %v3466 = vunpack.c.l.b16 %v3332
    %v3467 = vunpack.c.h.b16 %v3332
    %v3468 = vunpack.c.l.b16 %v3333
    %v3469 = vunpack.c.h.b16 %v3333
    %v3470 = vunpack.c.l.b16 %v3334
    %v3471 = vunpack.c.h.b16 %v3334
    %v3472 = vunpack.c.l.b16 %v3335
    %v3473 = vunpack.c.h.b16 %v3335
    %v3474 = vunpack.c.l.b16 %v3336
    %v3475 = vunpack.c.h.b16 %v3336
    %v3476 = vunpack.c.l.b16 %v3337
    %v3477 = vunpack.c.h.b16 %v3337
    %v3478 = vunpack.c.l.b16 %v3338
    %v3479 = vunpack.c.h.b16 %v3338
    %v3480 = vunpack.c.l.b16 %v3339
    %v3481 = vunpack.c.h.b16 %v3339
    %v3482 = vunpack.c.l.b16 %v3340
    %v3483 = vunpack.c.h.b16 %v3340
    %v3484 = vunpack.c.l.b16 %v3341
    %v3485 = vunpack.c.h.b16 %v3341
    %v3486 = vunpack.c.l.b16 %v3342
    %v3487 = vunpack.c.h.b16 %v3342
    %v3488 = vunpack.c.l.b16 %v3343
    %v3489 = vunpack.c.h.b16 %v3343
    %v3490 = vunpack.c.l.b16 %v3344
    %v3491 = vunpack.c.h.b16 %v3344
    %v3492 = vunpack.c.l.b16 %v3345
    %v3493 = vunpack.c.h.b16 %v3345
    %v3494 = vunpack.c.l.b16 %v3346
    %v3495 = vunpack.c.h.b16 %v3346
    %v3496 = vunpack.c.l.b16 %v3347
    %v3497 = vunpack.c.h.b16 %v3347
    %v3498 = vunpack.c.l.b16 %v3348
    %v3499 = vunpack.c.h.b16 %v3348
    %v3500 = vunpack.c.l.b16 %v3349
    %v3501 = vunpack.c.h.b16 %v3349
    %v3502 = vunpack.c.l.b16 %v3350
    %v3503 = vunpack.c.h.b16 %v3350
    %v3504 = vunpack.c.l.b16 %v3351
    %v3505 = vunpack.c.h.b16 %v3351
    %v3506 = vunpack.c.l.b16 %v3352
    %v3507 = vunpack.c.h.b16 %v3352
    %v3508 = vunpack.c.l.b16 %v3353
    %v3509 = vunpack.c.h.b16 %v3353
    %v3510 = vunpack.c.l.b16 %v3354
    %v3511 = vunpack.c.h.b16 %v3354
    %v3512 = vunpack.c.l.b16 %v3355
    %v3513 = vunpack.c.h.b16 %v3355
    %v3514 = vunpack.c.l.b16 %v3356
    %v3515 = vunpack.c.h.b16 %v3356
    %v3516 = vunpack.c.l.b16 %v3357
    %v3517 = vunpack.c.h.b16 %v3357
    %v3518 = vunpack.c.l.b16 %v3358
    %v3519 = vunpack.c.h.b16 %v3358
    %v3520 = vunpack.c.l.b16 %v3359
    %v3521 = vunpack.c.h.b16 %v3359
    %v3522 = vpack.c.b16 %v3462, %v3458
    %v3523 = vpack.c.b16 %v3463, %v3459
    %v3524 = vpack.c.b16 %v3464, %v3460
    %v3525 = vpack.c.b16 %v3465, %v3461
    %v3526 = vpack.c.b16 %v3470, %v3466
    %v3527 = vpack.c.b16 %v3471, %v3467
    %v3528 = vpack.c.b16 %v3472, %v3468
    %v3529 = vpack.c.b16 %v3473, %v3469
    %v3530 = vpack.c.b16 %v3478, %v3474
    %v3531 = vpack.c.b16 %v3479, %v3475
    %v3532 = vpack.c.b16 %v3480, %v3476
    %v3533 = vpack.c.b16 %v3481, %v3477
    %v3534 = vpack.c.b16 %v3486, %v3482
    %v3535 = vpack.c.b16 %v3487, %v3483
    %v3536 = vpack.c.b16 %v3488, %v3484
    %v3537 = vpack.c.b16 %v3489, %v3485
    %v3538 = vpack.c.b16 %v3494, %v3490
    %v3539 = vpack.c.b16 %v3495, %v3491
    %v3540 = vpack.c.b16 %v3496, %v3492
    %v3541 = vpack.c.b16 %v3497, %v3493
    %v3542 = vpack.c.b16 %v3502, %v3498
    %v3543 = vpack.c.b16 %v3503, %v3499
    %v3544 = vpack.c.b16 %v3504, %v3500
    %v3545 = vpack.c.b16 %v3505, %v3501
    %v3546 = vpack.c.b16 %v3510, %v3506
    %v3547 = vpack.c.b16 %v3511, %v3507
    %v3548 = vpack.c.b16 %v3512, %v3508
    %v3549 = vpack.c.b16 %v3513, %v3509
    %v3550 = vpack.c.b16 %v3518, %v3514
    %v3551 = vpack.c.b16 %v3519, %v3515
    %v3552 = vpack.c.b16 %v3520, %v3516
    %v3553 = vpack.c.b16 %v3521, %v3517
    %3586 = vmatprep.subr.bf16.mxu0 %v3523
    %3587 = vmatpush1.bf16.msra.mxu0 %v3522
    %3588 = vmatprep.subr.bf16.mxu0 %v3527
    %3589 = vmatpush1.bf16.msra.mxu0 %v3526
    %3590 = vmatprep.subr.bf16.mxu0 %v3531
    %3591 = vmatpush1.bf16.msra.mxu0 %v3530
    %3592 = vmatprep.subr.bf16.mxu0 %v3535
    %3593 = vmatpush1.bf16.msra.mxu0 %v3534
    %3594 = vmatprep.subr.bf16.mxu0 %v3539
    %3595 = vmatpush1.bf16.msra.mxu0 %v3538
    %3596 = vmatprep.subr.bf16.mxu0 %v3543
    %3597 = vmatpush1.bf16.msra.mxu0 %v3542
    %3598 = vmatprep.subr.bf16.mxu0 %v3547
    %3599 = vmatpush1.bf16.msra.mxu0 %v3546
    %3600 = vmatprep.subr.bf16.mxu0 %v3551
    %3601 = vmatpush1.bf16.msra.mxu0 %v3550
    %3602 = vmatprep.subr.bf16.mxu0 0
    %3603 = vmatpush1.bf16.msra.mxu0 0
    %3604 = vmatprep.subr.bf16.mxu0 0
    %3605 = vmatpush1.bf16.msra.mxu0 0
    %3606 = vmatprep.subr.bf16.mxu0 0
    %3607 = vmatpush1.bf16.msra.mxu0 0
    %3608 = vmatprep.subr.bf16.mxu0 0
    %3609 = vmatpush1.bf16.msra.mxu0 0
    %3610 = vmatprep.subr.bf16.mxu0 0
    %3611 = vmatpush1.bf16.msra.mxu0 0
    %3612 = vmatprep.subr.bf16.mxu0 0
    %3613 = vmatpush1.bf16.msra.mxu0 0
    %3614 = vmatprep.subr.bf16.mxu0 0
    %3615 = vmatpush1.bf16.msra.mxu0 0
    %3616 = vmatprep.subr.bf16.mxu0 0
    %3617 = vmatpush1.bf16.msra.mxu0 0
    %3618 = vmatprep.mubr.bf16.mxu0 0
    %3619 = vmatmul.mubr.bf16.gmra.mrb[0].mxu0 %v3401
    %v3620 = vpop.f32.mrb[0].mxu0
    %v3621 = vadd.f32 %v3409, %v3620
    %v3622 = vpop.f32.mrb[0].mxu0
    %v3623 = vadd.f32 %v3413, %v3622
    %v3624 = vpop.f32.mrb[0].mxu0
    %v3625 = vadd.f32 %v3409, %v3624
    %v3626 = vpop.f32.mrb[0].mxu0
    %v3627 = vadd.f32 %v3413, %v3626
    %3628 = vmatprep.mubr.bf16.mxu0 0
    %3629 = vmatmul.mubr.bf16.gmra.mrb[0].mxu0 %v3402
    %v3630 = vpop.f32.mrb[0].mxu0
    %v3631 = vadd.f32 %v3409, %v3630
    %v3632 = vpop.f32.mrb[0].mxu0
    %v3633 = vadd.f32 %v3413, %v3632
    %v3634 = vpop.f32.mrb[0].mxu0
    %v3635 = vadd.f32 %v3409, %v3634
    %v3636 = vpop.f32.mrb[0].mxu0
    %v3637 = vadd.f32 %v3413, %v3636
    %3638 = vmatprep.mubr.bf16.mxu0 0
    %3639 = vmatmul.mubr.bf16.gmra.mrb[0].mxu0 %v3403
    %v3640 = vpop.f32.mrb[0].mxu0
    %v3641 = vadd.f32 %v3409, %v3640
    %v3642 = vpop.f32.mrb[0].mxu0
    %v3643 = vadd.f32 %v3413, %v3642
    %v3644 = vpop.f32.mrb[0].mxu0
    %v3645 = vadd.f32 %v3409, %v3644
    %v3646 = vpop.f32.mrb[0].mxu0
    %v3647 = vadd.f32 %v3413, %v3646
    %3648 = vmatprep.mubr.bf16.mxu0 0
    %3649 = vmatmul.mubr.bf16.gmra.mrb[0].mxu0 %v3404
    %v3650 = vpop.f32.mrb[0].mxu0
    %v3651 = vadd.f32 %v3409, %v3650
    %v3652 = vpop.f32.mrb[0].mxu0
    %v3653 = vadd.f32 %v3413, %v3652
    %v3654 = vpop.f32.mrb[0].mxu0
    %v3655 = vadd.f32 %v3409, %v3654
    %v3656 = vpop.f32.mrb[0].mxu0
    %v3657 = vadd.f32 %v3413, %v3656
    %3658 = vdwg.mxu0
    %3659 = vmatprep.subr.bf16.mxu0 %v3525
    %3660 = vmatpush1.bf16.msra.mxu0 %v3524
    %3661 = vmatprep.subr.bf16.mxu0 %v3529
    %3662 = vmatpush1.bf16.msra.mxu0 %v3528
    %3663 = vmatprep.subr.bf16.mxu0 %v3533
    %3664 = vmatpush1.bf16.msra.mxu0 %v3532
    %3665 = vmatprep.subr.bf16.mxu0 %v3537
    %3666 = vmatpush1.bf16.msra.mxu0 %v3536
    %3667 = vmatprep.subr.bf16.mxu0 %v3541
    %3668 = vmatpush1.bf16.msra.mxu0 %v3540
    %3669 = vmatprep.subr.bf16.mxu0 %v3545
    %3670 = vmatpush1.bf16.msra.mxu0 %v3544
    %3671 = vmatprep.subr.bf16.mxu0 %v3549
    %3672 = vmatpush1.bf16.msra.mxu0 %v3548
    %3673 = vmatprep.subr.bf16.mxu0 %v3553
    %3674 = vmatpush1.bf16.msra.mxu0 %v3552
    %3675 = vmatprep.subr.bf16.mxu0 0
    %3676 = vmatpush1.bf16.msra.mxu0 0
    %3677 = vmatprep.subr.bf16.mxu0 0
    %3678 = vmatpush1.bf16.msra.mxu0 0
    %3679 = vmatprep.subr.bf16.mxu0 0
    %3680 = vmatpush1.bf16.msra.mxu0 0
    %3681 = vmatprep.subr.bf16.mxu0 0
    %3682 = vmatpush1.bf16.msra.mxu0 0
    %3683 = vmatprep.subr.bf16.mxu0 0
    %3684 = vmatpush1.bf16.msra.mxu0 0
    %3685 = vmatprep.subr.bf16.mxu0 0
    %3686 = vmatpush1.bf16.msra.mxu0 0
    %3687 = vmatprep.subr.bf16.mxu0 0
    %3688 = vmatpush1.bf16.msra.mxu0 0
    %3689 = vmatprep.subr.bf16.mxu0 0
    %3690 = vmatpush1.bf16.msra.mxu0 0
    %3691 = vmatprep.mubr.bf16.mxu0 0
    %3692 = vmatmul.mubr.bf16.gmra.mrb[0].mxu0 %v3401
    %v3693 = vpop.f32.mrb[0].mxu0
    %v3694 = vadd.f32 %v3417, %v3693
    %v3695 = vpop.f32.mrb[0].mxu0
    %v3696 = vadd.f32 %v3421, %v3695
    %v3697 = vpop.f32.mrb[0].mxu0
    %v3698 = vadd.f32 %v3417, %v3697
    %v3699 = vpop.f32.mrb[0].mxu0
    %v3700 = vadd.f32 %v3421, %v3699
    %3701 = vmatprep.mubr.bf16.mxu0 0
    %3702 = vmatmul.mubr.bf16.gmra.mrb[0].mxu0 %v3402
    %v3703 = vpop.f32.mrb[0].mxu0
    %v3704 = vadd.f32 %v3417, %v3703
    %v3705 = vpop.f32.mrb[0].mxu0
    %v3706 = vadd.f32 %v3421, %v3705
    %v3707 = vpop.f32.mrb[0].mxu0
    %v3708 = vadd.f32 %v3417, %v3707
    %v3709 = vpop.f32.mrb[0].mxu0
    %v3710 = vadd.f32 %v3421, %v3709
    %3711 = vmatprep.mubr.bf16.mxu0 0
    %3712 = vmatmul.mubr.bf16.gmra.mrb[0].mxu0 %v3403
    %v3713 = vpop.f32.mrb[0].mxu0
    %v3714 = vadd.f32 %v3417, %v3713
    %v3715 = vpop.f32.mrb[0].mxu0
    %v3716 = vadd.f32 %v3421, %v3715
    %v3717 = vpop.f32.mrb[0].mxu0
    %v3718 = vadd.f32 %v3417, %v3717
    %v3719 = vpop.f32.mrb[0].mxu0
    %v3720 = vadd.f32 %v3421, %v3719
    %3721 = vmatprep.mubr.bf16.mxu0 0
    %3722 = vmatmul.mubr.bf16.gmra.mrb[0].mxu0 %v3404
    %v3723 = vpop.f32.mrb[0].mxu0
    %v3724 = vadd.f32 %v3417, %v3723
    %v3725 = vpop.f32.mrb[0].mxu0
    %v3726 = vadd.f32 %v3421, %v3725
    %v3727 = vpop.f32.mrb[0].mxu0
    %v3728 = vadd.f32 %v3417, %v3727
    %v3729 = vpop.f32.mrb[0].mxu0
    %v3730 = vadd.f32 %v3421, %v3729
    %3731 = vdwg.mxu0
    %3732 = vst [vmem:[#allocation3] sm:$0xff] %v3621
    %3733 = vst [vmem:[#allocation3 + $0x8] sm:$0xff] %v3623
    %3734 = vst [vmem:[#allocation3 + $0x10] sm:$0xff] %v3694
    %3735 = vst [vmem:[#allocation3 + $0x18] sm:$0xff] %v3696
    %3736 = vst [vmem:[#allocation3 + $0x20] sm:$0xff] %v3625
    %3737 = vst [vmem:[#allocation3 + $0x28] sm:$0xff] %v3627
    %3738 = vst [vmem:[#allocation3 + $0x30] sm:$0xff] %v3698
    %3739 = vst [vmem:[#allocation3 + $0x38] sm:$0xff] %v3700
    %3740 = vst [vmem:[#allocation3 + $0x40] sm:$0xff] %v3631
    %3741 = vst [vmem:[#allocation3 + $0x48] sm:$0xff] %v3633
    %3742 = vst [vmem:[#allocation3 + $0x50] sm:$0xff] %v3704
    %3743 = vst [vmem:[#allocation3 + $0x58] sm:$0xff] %v3706
    %3744 = vst [vmem:[#allocation3 + $0x60] sm:$0xff] %v3635
    %3745 = vst [vmem:[#allocation3 + $0x68] sm:$0xff] %v3637
    %3746 = vst [vmem:[#allocation3 + $0x70] sm:$0xff] %v3708
    %3747 = vst [vmem:[#allocation3 + $0x78] sm:$0xff] %v3710
    %3748 = vst [vmem:[#allocation3 + $0x80] sm:$0xff] %v3641
    %3749 = vst [vmem:[#allocation3 + $0x88] sm:$0xff] %v3643
    %3750 = vst [vmem:[#allocation3 + $0x90] sm:$0xff] %v3714
    %3751 = vst [vmem:[#allocation3 + $0x98] sm:$0xff] %v3716
    %3752 = vst [vmem:[#allocation3 + $0xa0] sm:$0xff] %v3645
    %3753 = vst [vmem:[#allocation3 + $0xa8] sm:$0xff] %v3647
    %3754 = vst [vmem:[#allocation3 + $0xb0] sm:$0xff] %v3718
    %3755 = vst [vmem:[#allocation3 + $0xb8] sm:$0xff] %v3720
    %3756 = vst [vmem:[#allocation3 + $0xc0] sm:$0xff] %v3651
    %3757 = vst [vmem:[#allocation3 + $0xc8] sm:$0xff] %v3653
    %3758 = vst [vmem:[#allocation3 + $0xd0] sm:$0xff] %v3724
    %3759 = vst [vmem:[#allocation3 + $0xd8] sm:$0xff] %v3726
    %3760 = vst [vmem:[#allocation3 + $0xe0] sm:$0xff] %v3655
    %3761 = vst [vmem:[#allocation3 + $0xe8] sm:$0xff] %v3657
    %3762 = vst [vmem:[#allocation3 + $0xf0] sm:$0xff] %v3728
    %3763 = vst [vmem:[#allocation3 + $0xf8] sm:$0xff] %v3730
    %v3764 = vld [vmem:[#allocation3] sm:$0xff]
    %v3765 = vld [vmem:[#allocation3 + $0x8] sm:$0xff]
    %v3766 = vld [vmem:[#allocation3 + $0x10] sm:$0xff]
    %v3767 = vld [vmem:[#allocation3 + $0x18] sm:$0xff]
    %v3800 = vunpack.c.l.b16 %v3360
    %v3801 = vunpack.c.h.b16 %v3360
    %v3802 = vunpack.c.l.b16 %v3361
    %v3803 = vunpack.c.h.b16 %v3361
    %v3804 = vunpack.c.l.b16 %v3362
    %v3805 = vunpack.c.h.b16 %v3362
    %v3806 = vunpack.c.l.b16 %v3363
    %v3807 = vunpack.c.h.b16 %v3363
    %v3808 = vunpack.c.l.b16 %v3364
    %v3809 = vunpack.c.h.b16 %v3364
    %v3810 = vunpack.c.l.b16 %v3365
    %v3811 = vunpack.c.h.b16 %v3365
    %v3812 = vunpack.c.l.b16 %v3366
    %v3813 = vunpack.c.h.b16 %v3366
    %v3814 = vunpack.c.l.b16 %v3367
    %v3815 = vunpack.c.h.b16 %v3367
    %v3816 = vunpack.c.l.b16 %v3368
    %v3817 = vunpack.c.h.b16 %v3368
    %v3818 = vunpack.c.l.b16 %v3369
    %v3819 = vunpack.c.h.b16 %v3369
    %v3820 = vunpack.c.l.b16 %v3370
    %v3821 = vunpack.c.h.b16 %v3370
    %v3822 = vunpack.c.l.b16 %v3371
    %v3823 = vunpack.c.h.b16 %v3371
    %v3824 = vunpack.c.l.b16 %v3372
    %v3825 = vunpack.c.h.b16 %v3372
    %v3826 = vunpack.c.l.b16 %v3373
    %v3827 = vunpack.c.h.b16 %v3373
    %v3828 = vunpack.c.l.b16 %v3374
    %v3829 = vunpack.c.h.b16 %v3374
    %v3830 = vunpack.c.l.b16 %v3375
    %v3831 = vunpack.c.h.b16 %v3375
    %v3832 = vunpack.c.l.b16 %v3376
    %v3833 = vunpack.c.h.b16 %v3376
    %v3834 = vunpack.c.l.b16 %v3377
    %v3835 = vunpack.c.h.b16 %v3377
    %v3836 = vunpack.c.l.b16 %v3378
    %v3837 = vunpack.c.h.b16 %v3378
    %v3838 = vunpack.c.l.b16 %v3379
    %v3839 = vunpack.c.h.b16 %v3379
    %v3840 = vunpack.c.l.b16 %v3380
    %v3841 = vunpack.c.h.b16 %v3380
    %v3842 = vunpack.c.l.b16 %v3381
    %v3843 = vunpack.c.h.b16 %v3381
    %v3844 = vunpack.c.l.b16 %v3382
    %v3845 = vunpack.c.h.b16 %v3382
    %v3846 = vunpack.c.l.b16 %v3383
    %v3847 = vunpack.c.h.b16 %v3383
    %v3848 = vunpack.c.l.b16 %v3384
    %v3849 = vunpack.c.h.b16 %v3384
    %v3850 = vunpack.c.l.b16 %v3385
    %v3851 = vunpack.c.h.b16 %v3385
    %v3852 = vunpack.c.l.b16 %v3386
    %v3853 = vunpack.c.h.b16 %v3386
    %v3854 = vunpack.c.l.b16 %v3387
    %v3855 = vunpack.c.h.b16 %v3387
    %v3856 = vunpack.c.l.b16 %v3388
    %v3857 = vunpack.c.h.b16 %v3388
    %v3858 = vunpack.c.l.b16 %v3389
    %v3859 = vunpack.c.h.b16 %v3389
    %v3860 = vunpack.c.l.b16 %v3390
    %v3861 = vunpack.c.h.b16 %v3390
    %v3862 = vunpack.c.l.b16 %v3391
    %v3863 = vunpack.c.h.b16 %v3391
    %v3864 = vpack.c.b16 %v3804, %v3800
    %v3865 = vpack.c.b16 %v3805, %v3801
    %v3866 = vpack.c.b16 %v3806, %v3802
    %v3867 = vpack.c.b16 %v3807, %v3803
    %v3868 = vpack.c.b16 %v3812, %v3808
    %v3869 = vpack.c.b16 %v3813, %v3809
    %v3870 = vpack.c.b16 %v3814, %v3810
    %v3871 = vpack.c.b16 %v3815, %v3811
    %v3872 = vpack.c.b16 %v3820, %v3816
    %v3873 = vpack.c.b16 %v3821, %v3817
    %v3874 = vpack.c.b16 %v3822, %v3818
    %v3875 = vpack.c.b16 %v3823, %v3819
    %v3876 = vpack.c.b16 %v3828, %v3824
    %v3877 = vpack.c.b16 %v3829, %v3825
    %v3878 = vpack.c.b16 %v3830, %v3826
    %v3879 = vpack.c.b16 %v3831, %v3827
    %v3880 = vpack.c.b16 %v3836, %v3832
    %v3881 = vpack.c.b16 %v3837, %v3833
    %v3882 = vpack.c.b16 %v3838, %v3834
    %v3883 = vpack.c.b16 %v3839, %v3835
    %v3884 = vpack.c.b16 %v3844, %v3840
    %v3885 = vpack.c.b16 %v3845, %v3841
    %v3886 = vpack.c.b16 %v3846, %v3842
    %v3887 = vpack.c.b16 %v3847, %v3843
    %v3888 = vpack.c.b16 %v3852, %v3848
    %v3889 = vpack.c.b16 %v3853, %v3849
    %v3890 = vpack.c.b16 %v3854, %v3850
    %v3891 = vpack.c.b16 %v3855, %v3851
    %v3892 = vpack.c.b16 %v3860, %v3856
    %v3893 = vpack.c.b16 %v3861, %v3857
    %v3894 = vpack.c.b16 %v3862, %v3858
    %v3895 = vpack.c.b16 %v3863, %v3859
    %3928 = vmatprep.subr.bf16.mxu0 %v3865
    %3929 = vmatpush1.bf16.msra.mxu0 %v3864
    %3930 = vmatprep.subr.bf16.mxu0 %v3869
    %3931 = vmatpush1.bf16.msra.mxu0 %v3868
    %3932 = vmatprep.subr.bf16.mxu0 %v3873
    %3933 = vmatpush1.bf16.msra.mxu0 %v3872
    %3934 = vmatprep.subr.bf16.mxu0 %v3877
    %3935 = vmatpush1.bf16.msra.mxu0 %v3876
    %3936 = vmatprep.subr.bf16.mxu0 %v3881
    %3937 = vmatpush1.bf16.msra.mxu0 %v3880
    %3938 = vmatprep.subr.bf16.mxu0 %v3885
    %3939 = vmatpush1.bf16.msra.mxu0 %v3884
    %3940 = vmatprep.subr.bf16.mxu0 %v3889
    %3941 = vmatpush1.bf16.msra.mxu0 %v3888
    %3942 = vmatprep.subr.bf16.mxu0 %v3893
    %3943 = vmatpush1.bf16.msra.mxu0 %v3892
    %3944 = vmatprep.subr.bf16.mxu0 0
    %3945 = vmatpush1.bf16.msra.mxu0 0
    %3946 = vmatprep.subr.bf16.mxu0 0
    %3947 = vmatpush1.bf16.msra.mxu0 0
    %3948 = vmatprep.subr.bf16.mxu0 0
    %3949 = vmatpush1.bf16.msra.mxu0 0
    %3950 = vmatprep.subr.bf16.mxu0 0
    %3951 = vmatpush1.bf16.msra.mxu0 0
    %3952 = vmatprep.subr.bf16.mxu0 0
    %3953 = vmatpush1.bf16.msra.mxu0 0
    %3954 = vmatprep.subr.bf16.mxu0 0
    %3955 = vmatpush1.bf16.msra.mxu0 0
    %3956 = vmatprep.subr.bf16.mxu0 0
    %3957 = vmatpush1.bf16.msra.mxu0 0
    %3958 = vmatprep.subr.bf16.mxu0 0
    %3959 = vmatpush1.bf16.msra.mxu0 0
    %3960 = vmatprep.mubr.bf16.mxu0 0
    %3961 = vmatmul.mubr.bf16.gmra.mrb[0].mxu0 0
    %v3962 = vpop.f32.mrb[0].mxu0
    %v3963 = vadd.f32 0.0, %v3962
    %v3964 = vpop.f32.mrb[0].mxu0
    %v3965 = vadd.f32 0.0, %v3964
    %v3966 = vpop.f32.mrb[0].mxu0
    %v3967 = vpop.f32.mrb[0].mxu0
    %3968 = vdwg.mxu0
    %3969 = vmatprep.subr.bf16.mxu0 %v3867
    %3970 = vmatpush1.bf16.msra.mxu0 %v3866
    %3971 = vmatprep.subr.bf16.mxu0 %v3871
    %3972 = vmatpush1.bf16.msra.mxu0 %v3870
    %3973 = vmatprep.subr.bf16.mxu0 %v3875
    %3974 = vmatpush1.bf16.msra.mxu0 %v3874
    %3975 = vmatprep.subr.bf16.mxu0 %v3879
    %3976 = vmatpush1.bf16.msra.mxu0 %v3878
    %3977 = vmatprep.subr.bf16.mxu0 %v3883
    %3978 = vmatpush1.bf16.msra.mxu0 %v3882
    %3979 = vmatprep.subr.bf16.mxu0 %v3887
    %3980 = vmatpush1.bf16.msra.mxu0 %v3886
    %3981 = vmatprep.subr.bf16.mxu0 %v3891
    %3982 = vmatpush1.bf16.msra.mxu0 %v3890
    %3983 = vmatprep.subr.bf16.mxu0 %v3895
    %3984 = vmatpush1.bf16.msra.mxu0 %v3894
    %3985 = vmatprep.subr.bf16.mxu0 0
    %3986 = vmatpush1.bf16.msra.mxu0 0
    %3987 = vmatprep.subr.bf16.mxu0 0
    %3988 = vmatpush1.bf16.msra.mxu0 0
    %3989 = vmatprep.subr.bf16.mxu0 0
    %3990 = vmatpush1.bf16.msra.mxu0 0
    %3991 = vmatprep.subr.bf16.mxu0 0
    %3992 = vmatpush1.bf16.msra.mxu0 0
    %3993 = vmatprep.subr.bf16.mxu0 0
    %3994 = vmatpush1.bf16.msra.mxu0 0
    %3995 = vmatprep.subr.bf16.mxu0 0
    %3996 = vmatpush1.bf16.msra.mxu0 0
    %3997 = vmatprep.subr.bf16.mxu0 0
    %3998 = vmatpush1.bf16.msra.mxu0 0
    %3999 = vmatprep.subr.bf16.mxu0 0
    %4000 = vmatpush1.bf16.msra.mxu0 0
    %4001 = vmatprep.mubr.bf16.mxu0 0
    %4002 = vmatmul.mubr.bf16.gmra.mrb[0].mxu0 0
    %v4003 = vpop.f32.mrb[0].mxu0
    %v4004 = vadd.f32 0.0, %v4003
    %v4005 = vpop.f32.mrb[0].mxu0
    %v4006 = vadd.f32 0.0, %v4005
    %v4007 = vpop.f32.mrb[0].mxu0
    %v4008 = vpop.f32.mrb[0].mxu0
    %4009 = vdwg.mxu0
    %v4010 = vadd.f32 %v3764, %v3963
    %v4011 = vadd.f32 %v3765, %v3965
    %v4012 = vadd.f32 %v3766, %v4004
    %v4013 = vadd.f32 %v3767, %v4006
    %v4014 = vxor.u32 %v4010, 2147483648
    %v4015 = vxor.u32 %v4011, 2147483648
    %v4016 = vxor.u32 %v4012, 2147483648
    %v4017 = vmul.f32 %v4014, 1.442695
    %v4018 = vpow.pop %v4017
    %v4019 = vmul.f32 %v4015, 1.442695
    %v4020 = vpow.pop %v4019
    %v4021 = vmul.f32 %v4016, 1.442695
    %v4022 = vpow.pop %v4021
    %v4023 = vadd.f32 %v4018, 1.0
    %v4024 = vadd.f32 %v4020, 1.0
    %v4025 = vadd.f32 %v4022, 1.0
    %v4026 = vrcp.pop %v4023
    %v4027 = vmul.f32 1.0, %v4026
    %v4028 = vrcp.pop %v4024
    %v4029 = vmul.f32 1.0, %v4028
    %v4030 = vrcp.pop %v4025
    %v4031 = vmul.f32 1.0, %v4030
    %v4032 = vtanh.pop %v4013
    %v4033 = vmul.f32 %v4029, 0.0
    %v4034 = vmul.f32 %v4027, %v4032
    %v4035 = vadd.f32 %v4033, %v4034
    %v4036 = vtanh.pop %v4035
    %v4037 = vmul.f32 %v4031, %v4036
    %4038 = vst [vmem:[#allocation2] sm:$0xff] %v4037
    %v4039 = vld [vmem:[%s868] sm:$0xff]
    %v4040 = vld [vmem:[%s868 + $0x8] sm:$0xff]
    %v4041 = vld [vmem:[%s868 + $0x10] sm:$0xff]
    %v4042 = vld [vmem:[%s868 + $0x18] sm:$0xff]
    %v4043 = vpack.c.bf16 %v4037, %v4037
    %4044 = vmatprep.subr.bf16.mxu0 %v3865
    %4045 = vmatpush1.bf16.msra.mxu0 %v3864
    %4046 = vmatprep.subr.bf16.mxu0 %v3869
    %4047 = vmatpush1.bf16.msra.mxu0 %v3868
    %4048 = vmatprep.subr.bf16.mxu0 %v3873
    %4049 = vmatpush1.bf16.msra.mxu0 %v3872
    %4050 = vmatprep.subr.bf16.mxu0 %v3877
    %4051 = vmatpush1.bf16.msra.mxu0 %v3876
    %4052 = vmatprep.subr.bf16.mxu0 %v3881
    %4053 = vmatpush1.bf16.msra.mxu0 %v3880
    %4054 = vmatprep.subr.bf16.mxu0 %v3885
    %4055 = vmatpush1.bf16.msra.mxu0 %v3884
    %4056 = vmatprep.subr.bf16.mxu0 %v3889
    %4057 = vmatpush1.bf16.msra.mxu0 %v3888
    %4058 = vmatprep.subr.bf16.mxu0 %v3893
    %4059 = vmatpush1.bf16.msra.mxu0 %v3892
    %4060 = vmatprep.subr.bf16.mxu0 0
    %4061 = vmatpush1.bf16.msra.mxu0 0
    %4062 = vmatprep.subr.bf16.mxu0 0
    %4063 = vmatpush1.bf16.msra.mxu0 0
    %4064 = vmatprep.subr.bf16.mxu0 0
    %4065 = vmatpush1.bf16.msra.mxu0 0
    %4066 = vmatprep.subr.bf16.mxu0 0
    %4067 = vmatpush1.bf16.msra.mxu0 0
    %4068 = vmatprep.subr.bf16.mxu0 0
    %4069 = vmatpush1.bf16.msra.mxu0 0
    %4070 = vmatprep.subr.bf16.mxu0 0
    %4071 = vmatpush1.bf16.msra.mxu0 0
    %4072 = vmatprep.subr.bf16.mxu0 0
    %4073 = vmatpush1.bf16.msra.mxu0 0
    %4074 = vmatprep.subr.bf16.mxu0 0
    %4075 = vmatpush1.bf16.msra.mxu0 0
    %4076 = vmatprep.mubr.bf16.mxu0 0
    %4077 = vmatmul.mubr.bf16.gmra.mrb[0].mxu0 %v4043
    %v4078 = vpop.f32.mrb[0].mxu0
    %v4079 = vadd.f32 0.0, %v4078
    %v4080 = vpop.f32.mrb[0].mxu0
    %v4081 = vadd.f32 0.0, %v4080
    %v4082 = vpop.f32.mrb[0].mxu0
    %v4083 = vpop.f32.mrb[0].mxu0
    %4084 = vdwg.mxu0
    %4085 = vmatprep.subr.bf16.mxu0 %v3867
    %4086 = vmatpush1.bf16.msra.mxu0 %v3866
    %4087 = vmatprep.subr.bf16.mxu0 %v3871
    %4088 = vmatpush1.bf16.msra.mxu0 %v3870
    %4089 = vmatprep.subr.bf16.mxu0 %v3875
    %4090 = vmatpush1.bf16.msra.mxu0 %v3874
    %4091 = vmatprep.subr.bf16.mxu0 %v3879
    %4092 = vmatpush1.bf16.msra.mxu0 %v3878
    %4093 = vmatprep.subr.bf16.mxu0 %v3883
    %4094 = vmatpush1.bf16.msra.mxu0 %v3882
    %4095 = vmatprep.subr.bf16.mxu0 %v3887
    %4096 = vmatpush1.bf16.msra.mxu0 %v3886
    %4097 = vmatprep.subr.bf16.mxu0 %v3891
    %4098 = vmatpush1.bf16.msra.mxu0 %v3890
    %4099 = vmatprep.subr.bf16.mxu0 %v3895
    %4100 = vmatpush1.bf16.msra.mxu0 %v3894
    %4101 = vmatprep.subr.bf16.mxu0 0
    %4102 = vmatpush1.bf16.msra.mxu0 0
    %4103 = vmatprep.subr.bf16.mxu0 0
    %4104 = vmatpush1.bf16.msra.mxu0 0
    %4105 = vmatprep.subr.bf16.mxu0 0
    %4106 = vmatpush1.bf16.msra.mxu0 0
    %4107 = vmatprep.subr.bf16.mxu0 0
    %4108 = vmatpush1.bf16.msra.mxu0 0
    %4109 = vmatprep.subr.bf16.mxu0 0
    %4110 = vmatpush1.bf16.msra.mxu0 0
    %4111 = vmatprep.subr.bf16.mxu0 0
    %4112 = vmatpush1.bf16.msra.mxu0 0
    %4113 = vmatprep.subr.bf16.mxu0 0
    %4114 = vmatpush1.bf16.msra.mxu0 0
    %4115 = vmatprep.subr.bf16.mxu0 0
    %4116 = vmatpush1.bf16.msra.mxu0 0
    %4117 = vmatprep.mubr.bf16.mxu0 0
    %4118 = vmatmul.mubr.bf16.gmra.mrb[0].mxu0 %v4043
    %v4119 = vpop.f32.mrb[0].mxu0
    %v4120 = vadd.f32 0.0, %v4119
    %v4121 = vpop.f32.mrb[0].mxu0
    %v4122 = vadd.f32 0.0, %v4121
    %v4123 = vpop.f32.mrb[0].mxu0
    %v4124 = vpop.f32.mrb[0].mxu0
    %4125 = vdwg.mxu0
    %v4126 = vadd.f32 %v4039, %v4079
    %v4127 = vadd.f32 %v4040, %v4081
    %v4128 = vadd.f32 %v4041, %v4120
    %v4129 = vadd.f32 %v4042, %v4122
    %v4130 = vxor.u32 %v4126, 2147483648
    %v4131 = vxor.u32 %v4127, 2147483648
    %v4132 = vxor.u32 %v4128, 2147483648
    %v4133 = vmul.f32 %v4130, 1.442695
    %v4134 = vpow.pop %v4133
    %v4135 = vmul.f32 %v4131, 1.442695
    %v4136 = vpow.pop %v4135
    %v4137 = vmul.f32 %v4132, 1.442695
    %v4138 = vpow.pop %v4137
    %v4139 = vadd.f32 %v4134, 1.0
    %v4140 = vadd.f32 %v4136, 1.0
    %v4141 = vadd.f32 %v4138, 1.0
    %v4142 = vrcp.pop %v4139
    %v4143 = vmul.f32 1.0, %v4142
    %v4144 = vrcp.pop %v4140
    %v4145 = vmul.f32 1.0, %v4144
    %v4146 = vrcp.pop %v4141
    %v4147 = vmul.f32 1.0, %v4146
    %v4148 = vtanh.pop %v4129
    %v4149 = vmul.f32 %v4145, %v4035
    %v4150 = vmul.f32 %v4143, %v4148
    %v4151 = vadd.f32 %v4149, %v4150
    %v4152 = vtanh.pop %v4151
    %v4153 = vmul.f32 %v4147, %v4152
    %4154 = vst [vmem:[%s984] sm:$0xff] %v4153
    %v4155 = vld [vmem:[%s986] sm:$0xff]
    %v4156 = vld [vmem:[%s986 + $0x8] sm:$0xff]
    %v4157 = vld [vmem:[%s986 + $0x10] sm:$0xff]
    %v4158 = vld [vmem:[%s986 + $0x18] sm:$0xff]
    %v4159 = vpack.c.bf16 %v4153, %v4153
    %4160 = vmatprep.subr.bf16.mxu0 %v3865
    %4161 = vmatpush1.bf16.msra.mxu0 %v3864
    %4162 = vmatprep.subr.bf16.mxu0 %v3869
    %4163 = vmatpush1.bf16.msra.mxu0 %v3868
    %4164 = vmatprep.subr.bf16.mxu0 %v3873
    %4165 = vmatpush1.bf16.msra.mxu0 %v3872
    %4166 = vmatprep.subr.bf16.mxu0 %v3877
    %4167 = vmatpush1.bf16.msra.mxu0 %v3876
    %4168 = vmatprep.subr.bf16.mxu0 %v3881
    %4169 = vmatpush1.bf16.msra.mxu0 %v3880
    %4170 = vmatprep.subr.bf16.mxu0 %v3885
    %4171 = vmatpush1.bf16.msra.mxu0 %v3884
    %4172 = vmatprep.subr.bf16.mxu0 %v3889
    %4173 = vmatpush1.bf16.msra.mxu0 %v3888
    %4174 = vmatprep.subr.bf16.mxu0 %v3893
    %4175 = vmatpush1.bf16.msra.mxu0 %v3892
    %4176 = vmatprep.subr.bf16.mxu0 0
    %4177 = vmatpush1.bf16.msra.mxu0 0
    %4178 = vmatprep.subr.bf16.mxu0 0
    %4179 = vmatpush1.bf16.msra.mxu0 0
    %4180 = vmatprep.subr.bf16.mxu0 0
    %4181 = vmatpush1.bf16.msra.mxu0 0
    %4182 = vmatprep.subr.bf16.mxu0 0
    %4183 = vmatpush1.bf16.msra.mxu0 0
    %4184 = vmatprep.subr.bf16.mxu0 0
    %4185 = vmatpush1.bf16.msra.mxu0 0
    %4186 = vmatprep.subr.bf16.mxu0 0
    %4187 = vmatpush1.bf16.msra.mxu0 0
    %4188 = vmatprep.subr.bf16.mxu0 0
    %4189 = vmatpush1.bf16.msra.mxu0 0
    %4190 = vmatprep.subr.bf16.mxu0 0
    %4191 = vmatpush1.bf16.msra.mxu0 0
    %4192 = vmatprep.mubr.bf16.mxu0 0
    %4193 = vmatmul.mubr.bf16.gmra.mrb[0].mxu0 %v4159
    %v4194 = vpop.f32.mrb[0].mxu0
    %v4195 = vadd.f32 0.0, %v4194
    %v4196 = vpop.f32.mrb[0].mxu0
    %v4197 = vadd.f32 0.0, %v4196
    %v4198 = vpop.f32.mrb[0].mxu0
    %v4199 = vpop.f32.mrb[0].mxu0
    %4200 = vdwg.mxu0
    %4201 = vmatprep.subr.bf16.mxu0 %v3867
    %4202 = vmatpush1.bf16.msra.mxu0 %v3866
    %4203 = vmatprep.subr.bf16.mxu0 %v3871
    %4204 = vmatpush1.bf16.msra.mxu0 %v3870
    %4205 = vmatprep.subr.bf16.mxu0 %v3875
    %4206 = vmatpush1.bf16.msra.mxu0 %v3874
    %4207 = vmatprep.subr.bf16.mxu0 %v3879
    %4208 = vmatpush1.bf16.msra.mxu0 %v3878
    %4209 = vmatprep.subr.bf16.mxu0 %v3883
    %4210 = vmatpush1.bf16.msra.mxu0 %v3882
    %4211 = vmatprep.subr.bf16.mxu0 %v3887
    %4212 = vmatpush1.bf16.msra.mxu0 %v3886
    %4213 = vmatprep.subr.bf16.mxu0 %v3891
    %4214 = vmatpush1.bf16.msra.mxu0 %v3890
    %4215 = vmatprep.subr.bf16.mxu0 %v3895
    %4216 = vmatpush1.bf16.msra.mxu0 %v3894
    %4217 = vmatprep.subr.bf16.mxu0 0
    %4218 = vmatpush1.bf16.msra.mxu0 0
    %4219 = vmatprep.subr.bf16.mxu0 0
    %4220 = vmatpush1.bf16.msra.mxu0 0
    %4221 = vmatprep.subr.bf16.mxu0 0
    %4222 = vmatpush1.bf16.msra.mxu0 0
    %4223 = vmatprep.subr.bf16.mxu0 0
    %4224 = vmatpush1.bf16.msra.mxu0 0
    %4225 = vmatprep.subr.bf16.mxu0 0
    %4226 = vmatpush1.bf16.msra.mxu0 0
    %4227 = vmatprep.subr.bf16.mxu0 0
    %4228 = vmatpush1.bf16.msra.mxu0 0
    %4229 = vmatprep.subr.bf16.mxu0 0
    %4230 = vmatpush1.bf16.msra.mxu0 0
    %4231 = vmatprep.subr.bf16.mxu0 0
    %4232 = vmatpush1.bf16.msra.mxu0 0
    %4233 = vmatprep.mubr.bf16.mxu0 0
    %4234 = vmatmul.mubr.bf16.gmra.mrb[0].mxu0 %v4159
    %v4235 = vpop.f32.mrb[0].mxu0
    %v4236 = vadd.f32 0.0, %v4235
    %v4237 = vpop.f32.mrb[0].mxu0
    %v4238 = vadd.f32 0.0, %v4237
    %v4239 = vpop.f32.mrb[0].mxu0
    %v4240 = vpop.f32.mrb[0].mxu0
    %4241 = vdwg.mxu0
    %v4242 = vadd.f32 %v4155, %v4195
    %v4243 = vadd.f32 %v4156, %v4197
    %v4244 = vadd.f32 %v4157, %v4236
    %v4245 = vadd.f32 %v4158, %v4238
    %v4246 = vxor.u32 %v4242, 2147483648
    %v4247 = vxor.u32 %v4243, 2147483648
    %v4248 = vxor.u32 %v4244, 2147483648
    %v4249 = vmul.f32 %v4246, 1.442695
    %v4250 = vpow.pop %v4249
    %v4251 = vmul.f32 %v4247, 1.442695
    %v4252 = vpow.pop %v4251
    %v4253 = vmul.f32 %v4248, 1.442695
    %v4254 = vpow.pop %v4253
    %v4255 = vadd.f32 %v4250, 1.0
    %v4256 = vadd.f32 %v4252, 1.0
    %v4257 = vadd.f32 %v4254, 1.0
    %v4258 = vrcp.pop %v4255
    %v4259 = vmul.f32 1.0, %v4258
    %v4260 = vrcp.pop %v4256
    %v4261 = vmul.f32 1.0, %v4260
    %v4262 = vrcp.pop %v4257
    %v4263 = vmul.f32 1.0, %v4262
    %v4264 = vtanh.pop %v4245
    %v4265 = vmul.f32 %v4261, %v4151
    %v4266 = vmul.f32 %v4259, %v4264
    %v4267 = vadd.f32 %v4265, %v4266
    %v4268 = vtanh.pop %v4267
    %v4269 = vmul.f32 %v4263, %v4268
    %4270 = vst [vmem:[%s1102] sm:$0xff] %v4269
    %v4271 = vld [vmem:[%s1104] sm:$0xff]
    %v4272 = vld [vmem:[%s1104 + $0x8] sm:$0xff]
    %v4273 = vld [vmem:[%s1104 + $0x10] sm:$0xff]
    %v4274 = vld [vmem:[%s1104 + $0x18] sm:$0xff]
    %v4275 = vpack.c.bf16 %v4269, %v4269
    %4276 = vmatprep.subr.bf16.mxu0 %v3865
    %4277 = vmatpush1.bf16.msra.mxu0 %v3864
    %4278 = vmatprep.subr.bf16.mxu0 %v3869
    %4279 = vmatpush1.bf16.msra.mxu0 %v3868
    %4280 = vmatprep.subr.bf16.mxu0 %v3873
    %4281 = vmatpush1.bf16.msra.mxu0 %v3872
    %4282 = vmatprep.subr.bf16.mxu0 %v3877
    %4283 = vmatpush1.bf16.msra.mxu0 %v3876
    %4284 = vmatprep.subr.bf16.mxu0 %v3881
    %4285 = vmatpush1.bf16.msra.mxu0 %v3880
    %4286 = vmatprep.subr.bf16.mxu0 %v3885
    %4287 = vmatpush1.bf16.msra.mxu0 %v3884
    %4288 = vmatprep.subr.bf16.mxu0 %v3889
    %4289 = vmatpush1.bf16.msra.mxu0 %v3888
    %4290 = vmatprep.subr.bf16.mxu0 %v3893
    %4291 = vmatpush1.bf16.msra.mxu0 %v3892
    %4292 = vmatprep.subr.bf16.mxu0 0
    %4293 = vmatpush1.bf16.msra.mxu0 0
    %4294 = vmatprep.subr.bf16.mxu0 0
    %4295 = vmatpush1.bf16.msra.mxu0 0
    %4296 = vmatprep.subr.bf16.mxu0 0
    %4297 = vmatpush1.bf16.msra.mxu0 0
    %4298 = vmatprep.subr.bf16.mxu0 0
    %4299 = vmatpush1.bf16.msra.mxu0 0
    %4300 = vmatprep.subr.bf16.mxu0 0
    %4301 = vmatpush1.bf16.msra.mxu0 0
    %4302 = vmatprep.subr.bf16.mxu0 0
    %4303 = vmatpush1.bf16.msra.mxu0 0
    %4304 = vmatprep.subr.bf16.mxu0 0
    %4305 = vmatpush1.bf16.msra.mxu0 0
    %4306 = vmatprep.subr.bf16.mxu0 0
    %4307 = vmatpush1.bf16.msra.mxu0 0
    %4308 = vmatprep.mubr.bf16.mxu0 0
    %4309 = vmatmul.mubr.bf16.gmra.mrb[0].mxu0 %v4275
    %v4310 = vpop.f32.mrb[0].mxu0
    %v4311 = vadd.f32 0.0, %v4310
    %v4312 = vpop.f32.mrb[0].mxu0
    %v4313 = vadd.f32 0.0, %v4312
    %v4314 = vpop.f32.mrb[0].mxu0
    %v4315 = vpop.f32.mrb[0].mxu0
    %4316 = vdwg.mxu0
    %4317 = vmatprep.subr.bf16.mxu0 %v3867
    %4318 = vmatpush1.bf16.msra.mxu0 %v3866
    %4319 = vmatprep.subr.bf16.mxu0 %v3871
    %4320 = vmatpush1.bf16.msra.mxu0 %v3870
    %4321 = vmatprep.subr.bf16.mxu0 %v3875
    %4322 = vmatpush1.bf16.msra.mxu0 %v3874
    %4323 = vmatprep.subr.bf16.mxu0 %v3879
    %4324 = vmatpush1.bf16.msra.mxu0 %v3878
    %4325 = vmatprep.subr.bf16.mxu0 %v3883
    %4326 = vmatpush1.bf16.msra.mxu0 %v3882
    %4327 = vmatprep.subr.bf16.mxu0 %v3887
    %4328 = vmatpush1.bf16.msra.mxu0 %v3886
    %4329 = vmatprep.subr.bf16.mxu0 %v3891
    %4330 = vmatpush1.bf16.msra.mxu0 %v3890
    %4331 = vmatprep.subr.bf16.mxu0 %v3895
    %4332 = vmatpush1.bf16.msra.mxu0 %v3894
    %4333 = vmatprep.subr.bf16.mxu0 0
    %4334 = vmatpush1.bf16.msra.mxu0 0
    %4335 = vmatprep.subr.bf16.mxu0 0
    %4336 = vmatpush1.bf16.msra.mxu0 0
    %4337 = vmatprep.subr.bf16.mxu0 0
    %4338 = vmatpush1.bf16.msra.mxu0 0
    %4339 = vmatprep.subr.bf16.mxu0 0
    %4340 = vmatpush1.bf16.msra.mxu0 0
    %4341 = vmatprep.subr.bf16.mxu0 0
    %4342 = vmatpush1.bf16.msra.mxu0 0
    %4343 = vmatprep.subr.bf16.mxu0 0
    %4344 = vmatpush1.bf16.msra.mxu0 0
    %4345 = vmatprep.subr.bf16.mxu0 0
    %4346 = vmatpush1.bf16.msra.mxu0 0
    %4347 = vmatprep.subr.bf16.mxu0 0
    %4348 = vmatpush1.bf16.msra.mxu0 0
    %4349 = vmatprep.mubr.bf16.mxu0 0
    %4350 = vmatmul.mubr.bf16.gmra.mrb[0].mxu0 %v4275
    %v4351 = vpop.f32.mrb[0].mxu0
    %v4352 = vadd.f32 0.0, %v4351
    %v4353 = vpop.f32.mrb[0].mxu0
    %v4354 = vadd.f32 0.0, %v4353
    %v4355 = vpop.f32.mrb[0].mxu0
    %v4356 = vpop.f32.mrb[0].mxu0
    %4357 = vdwg.mxu0
    %v4358 = vadd.f32 %v4271, %v4311
    %v4359 = vadd.f32 %v4272, %v4313
    %v4360 = vadd.f32 %v4273, %v4352
    %v4361 = vadd.f32 %v4274, %v4354
    %v4362 = vxor.u32 %v4358, 2147483648
    %v4363 = vxor.u32 %v4359, 2147483648
    %v4364 = vxor.u32 %v4360, 2147483648
    %v4365 = vmul.f32 %v4362, 1.442695
    %v4366 = vpow.pop %v4365
    %v4367 = vmul.f32 %v4363, 1.442695
    %v4368 = vpow.pop %v4367
    %v4369 = vmul.f32 %v4364, 1.442695
    %v4370 = vpow.pop %v4369
    %v4371 = vadd.f32 %v4366, 1.0
    %v4372 = vadd.f32 %v4368, 1.0
    %v4373 = vadd.f32 %v4370, 1.0
    %v4374 = vrcp.pop %v4371
    %v4375 = vmul.f32 1.0, %v4374
    %v4376 = vrcp.pop %v4372
    %v4377 = vmul.f32 1.0, %v4376
    %v4378 = vrcp.pop %v4373
    %v4379 = vmul.f32 1.0, %v4378
    %v4380 = vtanh.pop %v4361
    %v4381 = vmul.f32 %v4377, %v4267
    %v4382 = vmul.f32 %v4375, %v4380
    %v4383 = vadd.f32 %v4381, %v4382
    %v4384 = vtanh.pop %v4383
    %v4385 = vmul.f32 %v4379, %v4384
    %4386 = vst [vmem:[%s1220] sm:$0xff] %v4385
    %v4387 = vld [vmem:[%s1222] sm:$0xff]
    %v4388 = vld [vmem:[%s1222 + $0x8] sm:$0xff]
    %v4389 = vld [vmem:[%s1222 + $0x10] sm:$0xff]
    %v4390 = vld [vmem:[%s1222 + $0x18] sm:$0xff]
    %v4391 = vpack.c.bf16 %v4385, %v4385
    %4392 = vmatprep.subr.bf16.mxu0 %v3865
    %4393 = vmatpush1.bf16.msra.mxu0 %v3864
    %4394 = vmatprep.subr.bf16.mxu0 %v3869
    %4395 = vmatpush1.bf16.msra.mxu0 %v3868
    %4396 = vmatprep.subr.bf16.mxu0 %v3873
    %4397 = vmatpush1.bf16.msra.mxu0 %v3872
    %4398 = vmatprep.subr.bf16.mxu0 %v3877
    %4399 = vmatpush1.bf16.msra.mxu0 %v3876
    %4400 = vmatprep.subr.bf16.mxu0 %v3881
    %4401 = vmatpush1.bf16.msra.mxu0 %v3880
    %4402 = vmatprep.subr.bf16.mxu0 %v3885
    %4403 = vmatpush1.bf16.msra.mxu0 %v3884
    %4404 = vmatprep.subr.bf16.mxu0 %v3889
    %4405 = vmatpush1.bf16.msra.mxu0 %v3888
    %4406 = vmatprep.subr.bf16.mxu0 %v3893
    %4407 = vmatpush1.bf16.msra.mxu0 %v3892
    %4408 = vmatprep.subr.bf16.mxu0 0
    %4409 = vmatpush1.bf16.msra.mxu0 0
    %4410 = vmatprep.subr.bf16.mxu0 0
    %4411 = vmatpush1.bf16.msra.mxu0 0
    %4412 = vmatprep.subr.bf16.mxu0 0
    %4413 = vmatpush1.bf16.msra.mxu0 0
    %4414 = vmatprep.subr.bf16.mxu0 0
    %4415 = vmatpush1.bf16.msra.mxu0 0
    %4416 = vmatprep.subr.bf16.mxu0 0
    %4417 = vmatpush1.bf16.msra.mxu0 0
    %4418 = vmatprep.subr.bf16.mxu0 0
    %4419 = vmatpush1.bf16.msra.mxu0 0
    %4420 = vmatprep.subr.bf16.mxu0 0
    %4421 = vmatpush1.bf16.msra.mxu0 0
    %4422 = vmatprep.subr.bf16.mxu0 0
    %4423 = vmatpush1.bf16.msra.mxu0 0
    %4424 = vmatprep.mubr.bf16.mxu0 0
    %4425 = vmatmul.mubr.bf16.gmra.mrb[0].mxu0 %v4391
    %v4426 = vpop.f32.mrb[0].mxu0
    %v4427 = vadd.f32 0.0, %v4426
    %v4428 = vpop.f32.mrb[0].mxu0
    %v4429 = vadd.f32 0.0, %v4428
    %v4430 = vpop.f32.mrb[0].mxu0
    %v4431 = vpop.f32.mrb[0].mxu0
    %4432 = vdwg.mxu0
    %4433 = vmatprep.subr.bf16.mxu0 %v3867
    %4434 = vmatpush1.bf16.msra.mxu0 %v3866
    %4435 = vmatprep.subr.bf16.mxu0 %v3871
    %4436 = vmatpush1.bf16.msra.mxu0 %v3870
    %4437 = vmatprep.subr.bf16.mxu0 %v3875
    %4438 = vmatpush1.bf16.msra.mxu0 %v3874
    %4439 = vmatprep.subr.bf16.mxu0 %v3879
    %4440 = vmatpush1.bf16.msra.mxu0 %v3878
    %4441 = vmatprep.subr.bf16.mxu0 %v3883
    %4442 = vmatpush1.bf16.msra.mxu0 %v3882
    %4443 = vmatprep.subr.bf16.mxu0 %v3887
    %4444 = vmatpush1.bf16.msra.mxu0 %v3886
    %4445 = vmatprep.subr.bf16.mxu0 %v3891
    %4446 = vmatpush1.bf16.msra.mxu0 %v3890
    %4447 = vmatprep.subr.bf16.mxu0 %v3895
    %4448 = vmatpush1.bf16.msra.mxu0 %v3894
    %4449 = vmatprep.subr.bf16.mxu0 0
    %4450 = vmatpush1.bf16.msra.mxu0 0
    %4451 = vmatprep.subr.bf16.mxu0 0
    %4452 = vmatpush1.bf16.msra.mxu0 0
    %4453 = vmatprep.subr.bf16.mxu0 0
    %4454 = vmatpush1.bf16.msra.mxu0 0
    %4455 = vmatprep.subr.bf16.mxu0 0
    %4456 = vmatpush1.bf16.msra.mxu0 0
    %4457 = vmatprep.subr.bf16.mxu0 0
    %4458 = vmatpush1.bf16.msra.mxu0 0
    %4459 = vmatprep.subr.bf16.mxu0 0
    %4460 = vmatpush1.bf16.msra.mxu0 0
    %4461 = vmatprep.subr.bf16.mxu0 0
    %4462 = vmatpush1.bf16.msra.mxu0 0
    %4463 = vmatprep.subr.bf16.mxu0 0
    %4464 = vmatpush1.bf16.msra.mxu0 0
    %4465 = vmatprep.mubr.bf16.mxu0 0
    %4466 = vmatmul.mubr.bf16.gmra.mrb[0].mxu0 %v4391
    %v4467 = vpop.f32.mrb[0].mxu0
    %v4468 = vadd.f32 0.0, %v4467
    %v4469 = vpop.f32.mrb[0].mxu0
    %v4470 = vadd.f32 0.0, %v4469
    %v4471 = vpop.f32.mrb[0].mxu0
    %v4472 = vpop.f32.mrb[0].mxu0
    %4473 = vdwg.mxu0
    %v4474 = vadd.f32 %v4387, %v4427
    %v4475 = vadd.f32 %v4388, %v4429
    %v4476 = vadd.f32 %v4389, %v4468
    %v4477 = vadd.f32 %v4390, %v4470
    %v4478 = vxor.u32 %v4474, 2147483648
    %v4479 = vxor.u32 %v4475, 2147483648
    %v4480 = vxor.u32 %v4476, 2147483648
    %v4481 = vmul.f32 %v4478, 1.442695
    %v4482 = vpow.pop %v4481
    %v4483 = vmul.f32 %v4479, 1.442695
    %v4484 = vpow.pop %v4483
    %v4485 = vmul.f32 %v4480, 1.442695
    %v4486 = vpow.pop %v4485
    %v4487 = vadd.f32 %v4482, 1.0
    %v4488 = vadd.f32 %v4484, 1.0
    %v4489 = vadd.f32 %v4486, 1.0
    %v4490 = vrcp.pop %v4487
    %v4491 = vmul.f32 1.0, %v4490
    %v4492 = vrcp.pop %v4488
    %v4493 = vmul.f32 1.0, %v4492
    %v4494 = vrcp.pop %v4489
    %v4495 = vmul.f32 1.0, %v4494
    %v4496 = vtanh.pop %v4477
    %v4497 = vmul.f32 %v4493, %v4383
    %v4498 = vmul.f32 %v4491, %v4496
    %v4499 = vadd.f32 %v4497, %v4498
    %v4500 = vtanh.pop %v4499
    %v4501 = vmul.f32 %v4495, %v4500
    %4502 = vst [vmem:[%s1338] sm:$0xff] %v4501
    %v4503 = vld [vmem:[%s1340] sm:$0xff]
    %v4504 = vld [vmem:[%s1340 + $0x8] sm:$0xff]
    %v4505 = vld [vmem:[%s1340 + $0x10] sm:$0xff]
    %v4506 = vld [vmem:[%s1340 + $0x18] sm:$0xff]
    %v4507 = vpack.c.bf16 %v4501, %v4501
    %4508 = vmatprep.subr.bf16.mxu0 %v3865
    %4509 = vmatpush1.bf16.msra.mxu0 %v3864
    %4510 = vmatprep.subr.bf16.mxu0 %v3869
    %4511 = vmatpush1.bf16.msra.mxu0 %v3868
    %4512 = vmatprep.subr.bf16.mxu0 %v3873
    %4513 = vmatpush1.bf16.msra.mxu0 %v3872
    %4514 = vmatprep.subr.bf16.mxu0 %v3877
    %4515 = vmatpush1.bf16.msra.mxu0 %v3876
    %4516 = vmatprep.subr.bf16.mxu0 %v3881
    %4517 = vmatpush1.bf16.msra.mxu0 %v3880
    %4518 = vmatprep.subr.bf16.mxu0 %v3885
    %4519 = vmatpush1.bf16.msra.mxu0 %v3884
    %4520 = vmatprep.subr.bf16.mxu0 %v3889
    %4521 = vmatpush1.bf16.msra.mxu0 %v3888
    %4522 = vmatprep.subr.bf16.mxu0 %v3893
    %4523 = vmatpush1.bf16.msra.mxu0 %v3892
    %4524 = vmatprep.subr.bf16.mxu0 0
    %4525 = vmatpush1.bf16.msra.mxu0 0
    %4526 = vmatprep.subr.bf16.mxu0 0
    %4527 = vmatpush1.bf16.msra.mxu0 0
    %4528 = vmatprep.subr.bf16.mxu0 0
    %4529 = vmatpush1.bf16.msra.mxu0 0
    %4530 = vmatprep.subr.bf16.mxu0 0
    %4531 = vmatpush1.bf16.msra.mxu0 0
    %4532 = vmatprep.subr.bf16.mxu0 0
    %4533 = vmatpush1.bf16.msra.mxu0 0
    %4534 = vmatprep.subr.bf16.mxu0 0
    %4535 = vmatpush1.bf16.msra.mxu0 0
    %4536 = vmatprep.subr.bf16.mxu0 0
    %4537 = vmatpush1.bf16.msra.mxu0 0
    %4538 = vmatprep.subr.bf16.mxu0 0
    %4539 = vmatpush1.bf16.msra.mxu0 0
    %4540 = vmatprep.mubr.bf16.mxu0 0
    %4541 = vmatmul.mubr.bf16.gmra.mrb[0].mxu0 %v4507
    %v4542 = vpop.f32.mrb[0].mxu0
    %v4543 = vadd.f32 0.0, %v4542
    %v4544 = vpop.f32.mrb[0].mxu0
    %v4545 = vadd.f32 0.0, %v4544
    %v4546 = vpop.f32.mrb[0].mxu0
    %v4547 = vpop.f32.mrb[0].mxu0
    %4548 = vdwg.mxu0
    %4549 = vmatprep.subr.bf16.mxu0 %v3867
    %4550 = vmatpush1.bf16.msra.mxu0 %v3866
    %4551 = vmatprep.subr.bf16.mxu0 %v3871
    %4552 = vmatpush1.bf16.msra.mxu0 %v3870
    %4553 = vmatprep.subr.bf16.mxu0 %v3875
    %4554 = vmatpush1.bf16.msra.mxu0 %v3874
    %4555 = vmatprep.subr.bf16.mxu0 %v3879
    %4556 = vmatpush1.bf16.msra.mxu0 %v3878
    %4557 = vmatprep.subr.bf16.mxu0 %v3883
    %4558 = vmatpush1.bf16.msra.mxu0 %v3882
    %4559 = vmatprep.subr.bf16.mxu0 %v3887
    %4560 = vmatpush1.bf16.msra.mxu0 %v3886
    %4561 = vmatprep.subr.bf16.mxu0 %v3891
    %4562 = vmatpush1.bf16.msra.mxu0 %v3890
    %4563 = vmatprep.subr.bf16.mxu0 %v3895
    %4564 = vmatpush1.bf16.msra.mxu0 %v3894
    %4565 = vmatprep.subr.bf16.mxu0 0
    %4566 = vmatpush1.bf16.msra.mxu0 0
    %4567 = vmatprep.subr.bf16.mxu0 0
    %4568 = vmatpush1.bf16.msra.mxu0 0
    %4569 = vmatprep.subr.bf16.mxu0 0
    %4570 = vmatpush1.bf16.msra.mxu0 0
    %4571 = vmatprep.subr.bf16.mxu0 0
    %4572 = vmatpush1.bf16.msra.mxu0 0
    %4573 = vmatprep.subr.bf16.mxu0 0
    %4574 = vmatpush1.bf16.msra.mxu0 0
    %4575 = vmatprep.subr.bf16.mxu0 0
    %4576 = vmatpush1.bf16.msra.mxu0 0
    %4577 = vmatprep.subr.bf16.mxu0 0
    %4578 = vmatpush1.bf16.msra.mxu0 0
    %4579 = vmatprep.subr.bf16.mxu0 0
    %4580 = vmatpush1.bf16.msra.mxu0 0
    %4581 = vmatprep.mubr.bf16.mxu0 0
    %4582 = vmatmul.mubr.bf16.gmra.mrb[0].mxu0 %v4507
    %v4583 = vpop.f32.mrb[0].mxu0
    %v4584 = vadd.f32 0.0, %v4583
    %v4585 = vpop.f32.mrb[0].mxu0
    %v4586 = vadd.f32 0.0, %v4585
    %v4587 = vpop.f32.mrb[0].mxu0
    %v4588 = vpop.f32.mrb[0].mxu0
    %4589 = vdwg.mxu0
    %v4590 = vadd.f32 %v4503, %v4543
    %v4591 = vadd.f32 %v4504, %v4545
    %v4592 = vadd.f32 %v4505, %v4584
    %v4593 = vadd.f32 %v4506, %v4586
    %v4594 = vxor.u32 %v4590, 2147483648
    %v4595 = vxor.u32 %v4591, 2147483648
    %v4596 = vxor.u32 %v4592, 2147483648
    %v4597 = vmul.f32 %v4594, 1.442695
    %v4598 = vpow.pop %v4597
    %v4599 = vmul.f32 %v4595, 1.442695
    %v4600 = vpow.pop %v4599
    %v4601 = vmul.f32 %v4596, 1.442695
    %v4602 = vpow.pop %v4601
    %v4603 = vadd.f32 %v4598, 1.0
    %v4604 = vadd.f32 %v4600, 1.0
    %v4605 = vadd.f32 %v4602, 1.0
    %v4606 = vrcp.pop %v4603
    %v4607 = vmul.f32 1.0, %v4606
    %v4608 = vrcp.pop %v4604
    %v4609 = vmul.f32 1.0, %v4608
    %v4610 = vrcp.pop %v4605
    %v4611 = vmul.f32 1.0, %v4610
    %v4612 = vtanh.pop %v4593
    %v4613 = vmul.f32 %v4609, %v4499
    %v4614 = vmul.f32 %v4607, %v4612
    %v4615 = vadd.f32 %v4613, %v4614
    %v4616 = vtanh.pop %v4615
    %v4617 = vmul.f32 %v4611, %v4616
    %4618 = vst [vmem:[%s1456] sm:$0xff] %v4617
    %v4619 = vld [vmem:[%s1458] sm:$0xff]
    %v4620 = vld [vmem:[%s1458 + $0x8] sm:$0xff]
    %v4621 = vld [vmem:[%s1458 + $0x10] sm:$0xff]
    %v4622 = vld [vmem:[%s1458 + $0x18] sm:$0xff]
    %v4623 = vpack.c.bf16 %v4617, %v4617
    %4624 = vmatprep.subr.bf16.mxu0 %v3865
    %4625 = vmatpush1.bf16.msra.mxu0 %v3864
    %4626 = vmatprep.subr.bf16.mxu0 %v3869
    %4627 = vmatpush1.bf16.msra.mxu0 %v3868
    %4628 = vmatprep.subr.bf16.mxu0 %v3873
    %4629 = vmatpush1.bf16.msra.mxu0 %v3872
    %4630 = vmatprep.subr.bf16.mxu0 %v3877
    %4631 = vmatpush1.bf16.msra.mxu0 %v3876
    %4632 = vmatprep.subr.bf16.mxu0 %v3881
    %4633 = vmatpush1.bf16.msra.mxu0 %v3880
    %4634 = vmatprep.subr.bf16.mxu0 %v3885
    %4635 = vmatpush1.bf16.msra.mxu0 %v3884
    %4636 = vmatprep.subr.bf16.mxu0 %v3889
    %4637 = vmatpush1.bf16.msra.mxu0 %v3888
    %4638 = vmatprep.subr.bf16.mxu0 %v3893
    %4639 = vmatpush1.bf16.msra.mxu0 %v3892
    %4640 = vmatprep.subr.bf16.mxu0 0
    %4641 = vmatpush1.bf16.msra.mxu0 0
    %4642 = vmatprep.subr.bf16.mxu0 0
    %4643 = vmatpush1.bf16.msra.mxu0 0
    %4644 = vmatprep.subr.bf16.mxu0 0
    %4645 = vmatpush1.bf16.msra.mxu0 0
    %4646 = vmatprep.subr.bf16.mxu0 0
    %4647 = vmatpush1.bf16.msra.mxu0 0
    %4648 = vmatprep.subr.bf16.mxu0 0
    %4649 = vmatpush1.bf16.msra.mxu0 0
    %4650 = vmatprep.subr.bf16.mxu0 0
    %4651 = vmatpush1.bf16.msra.mxu0 0
    %4652 = vmatprep.subr.bf16.mxu0 0
    %4653 = vmatpush1.bf16.msra.mxu0 0
    %4654 = vmatprep.subr.bf16.mxu0 0
    %4655 = vmatpush1.bf16.msra.mxu0 0
    %4656 = vmatprep.mubr.bf16.mxu0 0
    %4657 = vmatmul.mubr.bf16.gmra.mrb[0].mxu0 %v4623
    %v4658 = vpop.f32.mrb[0].mxu0
    %v4659 = vadd.f32 0.0, %v4658
    %v4660 = vpop.f32.mrb[0].mxu0
    %v4661 = vadd.f32 0.0, %v4660
    %v4662 = vpop.f32.mrb[0].mxu0
    %v4663 = vpop.f32.mrb[0].mxu0
    %4664 = vdwg.mxu0
    %4665 = vmatprep.subr.bf16.mxu0 %v3867
    %4666 = vmatpush1.bf16.msra.mxu0 %v3866
    %4667 = vmatprep.subr.bf16.mxu0 %v3871
    %4668 = vmatpush1.bf16.msra.mxu0 %v3870
    %4669 = vmatprep.subr.bf16.mxu0 %v3875
    %4670 = vmatpush1.bf16.msra.mxu0 %v3874
    %4671 = vmatprep.subr.bf16.mxu0 %v3879
    %4672 = vmatpush1.bf16.msra.mxu0 %v3878
    %4673 = vmatprep.subr.bf16.mxu0 %v3883
    %4674 = vmatpush1.bf16.msra.mxu0 %v3882
    %4675 = vmatprep.subr.bf16.mxu0 %v3887
    %4676 = vmatpush1.bf16.msra.mxu0 %v3886
    %4677 = vmatprep.subr.bf16.mxu0 %v3891
    %4678 = vmatpush1.bf16.msra.mxu0 %v3890
    %4679 = vmatprep.subr.bf16.mxu0 %v3895
    %4680 = vmatpush1.bf16.msra.mxu0 %v3894
    %4681 = vmatprep.subr.bf16.mxu0 0
    %4682 = vmatpush1.bf16.msra.mxu0 0
    %4683 = vmatprep.subr.bf16.mxu0 0
    %4684 = vmatpush1.bf16.msra.mxu0 0
    %4685 = vmatprep.subr.bf16.mxu0 0
    %4686 = vmatpush1.bf16.msra.mxu0 0
    %4687 = vmatprep.subr.bf16.mxu0 0
    %4688 = vmatpush1.bf16.msra.mxu0 0
    %4689 = vmatprep.subr.bf16.mxu0 0
    %4690 = vmatpush1.bf16.msra.mxu0 0
    %4691 = vmatprep.subr.bf16.mxu0 0
    %4692 = vmatpush1.bf16.msra.mxu0 0
    %4693 = vmatprep.subr.bf16.mxu0 0
    %4694 = vmatpush1.bf16.msra.mxu0 0
    %4695 = vmatprep.subr.bf16.mxu0 0
    %4696 = vmatpush1.bf16.msra.mxu0 0
    %4697 = vmatprep.mubr.bf16.mxu0 0
    %4698 = vmatmul.mubr.bf16.gmra.mrb[0].mxu0 %v4623
    %v4699 = vpop.f32.mrb[0].mxu0
    %v4700 = vadd.f32 0.0, %v4699
    %v4701 = vpop.f32.mrb[0].mxu0
    %v4702 = vadd.f32 0.0, %v4701
    %v4703 = vpop.f32.mrb[0].mxu0
    %v4704 = vpop.f32.mrb[0].mxu0
    %4705 = vdwg.mxu0
    %v4706 = vadd.f32 %v4619, %v4659
    %v4707 = vadd.f32 %v4620, %v4661
    %v4708 = vadd.f32 %v4621, %v4700
    %v4709 = vadd.f32 %v4622, %v4702
    %v4710 = vxor.u32 %v4706, 2147483648
    %v4711 = vxor.u32 %v4707, 2147483648
    %v4712 = vxor.u32 %v4708, 2147483648
    %v4713 = vmul.f32 %v4710, 1.442695
    %v4714 = vpow.pop %v4713
    %v4715 = vmul.f32 %v4711, 1.442695
    %v4716 = vpow.pop %v4715
    %v4717 = vmul.f32 %v4712, 1.442695
    %v4718 = vpow.pop %v4717
    %v4719 = vadd.f32 %v4714, 1.0
    %v4720 = vadd.f32 %v4716, 1.0
    %v4721 = vadd.f32 %v4718, 1.0
    %v4722 = vrcp.pop %v4719
    %v4723 = vmul.f32 1.0, %v4722
    %v4724 = vrcp.pop %v4720
    %v4725 = vmul.f32 1.0, %v4724
    %v4726 = vrcp.pop %v4721
    %v4727 = vmul.f32 1.0, %v4726
    %v4728 = vtanh.pop %v4709
    %v4729 = vmul.f32 %v4725, %v4615
    %v4730 = vmul.f32 %v4723, %v4728
    %v4731 = vadd.f32 %v4729, %v4730
    %v4732 = vtanh.pop %v4731
    %v4733 = vmul.f32 %v4727, %v4732
    %4734 = vst [vmem:[%s1574] sm:$0xff] %v4733
    %v4735 = vld [vmem:[%s1576] sm:$0xff]
    %v4736 = vld [vmem:[%s1576 + $0x8] sm:$0xff]
    %v4737 = vld [vmem:[%s1576 + $0x10] sm:$0xff]
    %v4738 = vld [vmem:[%s1576 + $0x18] sm:$0xff]
    %v4739 = vpack.c.bf16 %v4733, %v4733
    %4740 = vmatprep.subr.bf16.mxu0 %v3865
    %4741 = vmatpush1.bf16.msra.mxu0 %v3864
    %4742 = vmatprep.subr.bf16.mxu0 %v3869
    %4743 = vmatpush1.bf16.msra.mxu0 %v3868
    %4744 = vmatprep.subr.bf16.mxu0 %v3873
    %4745 = vmatpush1.bf16.msra.mxu0 %v3872
    %4746 = vmatprep.subr.bf16.mxu0 %v3877
    %4747 = vmatpush1.bf16.msra.mxu0 %v3876
    %4748 = vmatprep.subr.bf16.mxu0 %v3881
    %4749 = vmatpush1.bf16.msra.mxu0 %v3880
    %4750 = vmatprep.subr.bf16.mxu0 %v3885
    %4751 = vmatpush1.bf16.msra.mxu0 %v3884
    %4752 = vmatprep.subr.bf16.mxu0 %v3889
    %4753 = vmatpush1.bf16.msra.mxu0 %v3888
    %4754 = vmatprep.subr.bf16.mxu0 %v3893
    %4755 = vmatpush1.bf16.msra.mxu0 %v3892
    %4756 = vmatprep.subr.bf16.mxu0 0
    %4757 = vmatpush1.bf16.msra.mxu0 0
    %4758 = vmatprep.subr.bf16.mxu0 0
    %4759 = vmatpush1.bf16.msra.mxu0 0
    %4760 = vmatprep.subr.bf16.mxu0 0
    %4761 = vmatpush1.bf16.msra.mxu0 0
    %4762 = vmatprep.subr.bf16.mxu0 0
    %4763 = vmatpush1.bf16.msra.mxu0 0
    %4764 = vmatprep.subr.bf16.mxu0 0
    %4765 = vmatpush1.bf16.msra.mxu0 0
    %4766 = vmatprep.subr.bf16.mxu0 0
    %4767 = vmatpush1.bf16.msra.mxu0 0
    %4768 = vmatprep.subr.bf16.mxu0 0
    %4769 = vmatpush1.bf16.msra.mxu0 0
    %4770 = vmatprep.subr.bf16.mxu0 0
    %4771 = vmatpush1.bf16.msra.mxu0 0
    %4772 = vmatprep.mubr.bf16.mxu0 0
    %4773 = vmatmul.mubr.bf16.gmra.mrb[0].mxu0 %v4739
    %v4774 = vpop.f32.mrb[0].mxu0
    %v4775 = vadd.f32 0.0, %v4774
    %v4776 = vpop.f32.mrb[0].mxu0
    %v4777 = vadd.f32 0.0, %v4776
    %v4778 = vpop.f32.mrb[0].mxu0
    %v4779 = vpop.f32.mrb[0].mxu0
    %4780 = vdwg.mxu0
    %4781 = vmatprep.subr.bf16.mxu0 %v3867
    %4782 = vmatpush1.bf16.msra.mxu0 %v3866
    %4783 = vmatprep.subr.bf16.mxu0 %v3871
    %4784 = vmatpush1.bf16.msra.mxu0 %v3870
    %4785 = vmatprep.subr.bf16.mxu0 %v3875
    %4786 = vmatpush1.bf16.msra.mxu0 %v3874
    %4787 = vmatprep.subr.bf16.mxu0 %v3879
    %4788 = vmatpush1.bf16.msra.mxu0 %v3878
    %4789 = vmatprep.subr.bf16.mxu0 %v3883
    %4790 = vmatpush1.bf16.msra.mxu0 %v3882
    %4791 = vmatprep.subr.bf16.mxu0 %v3887
    %4792 = vmatpush1.bf16.msra.mxu0 %v3886
    %4793 = vmatprep.subr.bf16.mxu0 %v3891
    %4794 = vmatpush1.bf16.msra.mxu0 %v3890
    %4795 = vmatprep.subr.bf16.mxu0 %v3895
    %4796 = vmatpush1.bf16.msra.mxu0 %v3894
    %4797 = vmatprep.subr.bf16.mxu0 0
    %4798 = vmatpush1.bf16.msra.mxu0 0
    %4799 = vmatprep.subr.bf16.mxu0 0
    %4800 = vmatpush1.bf16.msra.mxu0 0
    %4801 = vmatprep.subr.bf16.mxu0 0
    %4802 = vmatpush1.bf16.msra.mxu0 0
    %4803 = vmatprep.subr.bf16.mxu0 0
    %4804 = vmatpush1.bf16.msra.mxu0 0
    %4805 = vmatprep.subr.bf16.mxu0 0
    %4806 = vmatpush1.bf16.msra.mxu0 0
    %4807 = vmatprep.subr.bf16.mxu0 0
    %4808 = vmatpush1.bf16.msra.mxu0 0
    %4809 = vmatprep.subr.bf16.mxu0 0
    %4810 = vmatpush1.bf16.msra.mxu0 0
    %4811 = vmatprep.subr.bf16.mxu0 0
    %4812 = vmatpush1.bf16.msra.mxu0 0
    %4813 = vmatprep.mubr.bf16.mxu0 0
    %4814 = vmatmul.mubr.bf16.gmra.mrb[0].mxu0 %v4739
    %v4815 = vpop.f32.mrb[0].mxu0
    %v4816 = vadd.f32 0.0, %v4815
    %v4817 = vpop.f32.mrb[0].mxu0
    %v4818 = vadd.f32 0.0, %v4817
    %v4819 = vpop.f32.mrb[0].mxu0
    %v4820 = vpop.f32.mrb[0].mxu0
    %4821 = vdwg.mxu0
    %v4822 = vadd.f32 %v4735, %v4775
    %v4823 = vadd.f32 %v4736, %v4777
    %v4824 = vadd.f32 %v4737, %v4816
    %v4825 = vadd.f32 %v4738, %v4818
    %v4826 = vxor.u32 %v4822, 2147483648
    %v4827 = vxor.u32 %v4823, 2147483648
    %v4828 = vxor.u32 %v4824, 2147483648
    %v4829 = vmul.f32 %v4826, 1.442695
    %v4830 = vpow.pop %v4829
    %v4831 = vmul.f32 %v4827, 1.442695
    %v4832 = vpow.pop %v4831
    %v4833 = vmul.f32 %v4828, 1.442695
    %v4834 = vpow.pop %v4833
    %v4835 = vadd.f32 %v4830, 1.0
    %v4836 = vadd.f32 %v4832, 1.0
    %v4837 = vadd.f32 %v4834, 1.0
    %v4838 = vrcp.pop %v4835
    %v4839 = vmul.f32 1.0, %v4838
    %v4840 = vrcp.pop %v4836
    %v4841 = vmul.f32 1.0, %v4840
    %v4842 = vrcp.pop %v4837
    %v4843 = vmul.f32 1.0, %v4842
    %v4844 = vtanh.pop %v4825
    %v4845 = vmul.f32 %v4841, %v4731
    %v4846 = vmul.f32 %v4839, %v4844
    %v4847 = vadd.f32 %v4845, %v4846
    %v4848 = vtanh.pop %v4847
    %v4849 = vmul.f32 %v4843, %v4848
    %4850 = vst [vmem:[%s1692] sm:$0xff] %v4849
    %4851 = vst [vmem:[%s16] sm:$0xff] %v4849
    %4852 = vst [vmem:[%s17] sm:$0xff] %v4847
    %s4853 = scalar_lea.vmem [#allocation9], 256
    %v4854 = vld [vmem:[%s4853] sm:$0xff]
    %v4855 = vld [vmem:[%s4853 + $0x8] sm:$0xff]
    %v4856 = vld [vmem:[%s4853 + $0x10] sm:$0xff]
    %v4857 = vld [vmem:[%s4853 + $0x18] sm:$0xff]
    %v4858 = vld [vmem:[%s4853 + $0x20] sm:$0xff]
    %v4859 = vld [vmem:[%s4853 + $0x28] sm:$0xff]
    %v4860 = vld [vmem:[%s4853 + $0x30] sm:$0xff]
    %v4861 = vld [vmem:[%s4853 + $0x38] sm:$0xff]
    %v4862 = vld [vmem:[%s4853 + $0x40] sm:$0xff]
    %v4863 = vld [vmem:[%s4853 + $0x48] sm:$0xff]
    %v4864 = vld [vmem:[%s4853 + $0x50] sm:$0xff]
    %v4865 = vld [vmem:[%s4853 + $0x58] sm:$0xff]
    %v4866 = vld [vmem:[%s4853 + $0x60] sm:$0xff]
    %v4867 = vld [vmem:[%s4853 + $0x68] sm:$0xff]
    %v4868 = vld [vmem:[%s4853 + $0x70] sm:$0xff]
    %v4869 = vld [vmem:[%s4853 + $0x78] sm:$0xff]
    %v4870 = vld [vmem:[%s4853 + $0x80] sm:$0xff]
    %v4871 = vld [vmem:[%s4853 + $0x88] sm:$0xff]
    %v4872 = vld [vmem:[%s4853 + $0x90] sm:$0xff]
    %v4873 = vld [vmem:[%s4853 + $0x98] sm:$0xff]
    %v4874 = vld [vmem:[%s4853 + $0xa0] sm:$0xff]
    %v4875 = vld [vmem:[%s4853 + $0xa8] sm:$0xff]
    %v4876 = vld [vmem:[%s4853 + $0xb0] sm:$0xff]
    %v4877 = vld [vmem:[%s4853 + $0xb8] sm:$0xff]
    %v4878 = vld [vmem:[%s4853 + $0xc0] sm:$0xff]
    %v4879 = vld [vmem:[%s4853 + $0xc8] sm:$0xff]
    %v4880 = vld [vmem:[%s4853 + $0xd0] sm:$0xff]
    %v4881 = vld [vmem:[%s4853 + $0xd8] sm:$0xff]
    %v4882 = vld [vmem:[%s4853 + $0xe0] sm:$0xff]
    %v4883 = vld [vmem:[%s4853 + $0xe8] sm:$0xff]
    %v4884 = vld [vmem:[%s4853 + $0xf0] sm:$0xff]
    %v4885 = vld [vmem:[%s4853 + $0xf8] sm:$0xff]
    %s4886 = scalar_lea.vmem [#allocation11], 256
    %v4887 = vld [vmem:[%s4886] sm:$0xff]
    %v4888 = vld [vmem:[%s4886 + $0x8] sm:$0xff]
    %v4889 = vld [vmem:[%s4886 + $0x10] sm:$0xff]
    %v4890 = vld [vmem:[%s4886 + $0x18] sm:$0xff]
    %v4891 = vld [vmem:[%s4886 + $0x20] sm:$0xff]
    %v4892 = vld [vmem:[%s4886 + $0x28] sm:$0xff]
    %v4893 = vld [vmem:[%s4886 + $0x30] sm:$0xff]
    %v4894 = vld [vmem:[%s4886 + $0x38] sm:$0xff]
    %v4895 = vld [vmem:[%s4886 + $0x40] sm:$0xff]
    %v4896 = vld [vmem:[%s4886 + $0x48] sm:$0xff]
    %v4897 = vld [vmem:[%s4886 + $0x50] sm:$0xff]
    %v4898 = vld [vmem:[%s4886 + $0x58] sm:$0xff]
    %v4899 = vld [vmem:[%s4886 + $0x60] sm:$0xff]
    %v4900 = vld [vmem:[%s4886 + $0x68] sm:$0xff]
    %v4901 = vld [vmem:[%s4886 + $0x70] sm:$0xff]
    %v4902 = vld [vmem:[%s4886 + $0x78] sm:$0xff]
    %v4903 = vld [vmem:[%s4886 + $0x80] sm:$0xff]
    %v4904 = vld [vmem:[%s4886 + $0x88] sm:$0xff]
    %v4905 = vld [vmem:[%s4886 + $0x90] sm:$0xff]
    %v4906 = vld [vmem:[%s4886 + $0x98] sm:$0xff]
    %v4907 = vld [vmem:[%s4886 + $0xa0] sm:$0xff]
    %v4908 = vld [vmem:[%s4886 + $0xa8] sm:$0xff]
    %v4909 = vld [vmem:[%s4886 + $0xb0] sm:$0xff]
    %v4910 = vld [vmem:[%s4886 + $0xb8] sm:$0xff]
    %v4911 = vld [vmem:[%s4886 + $0xc0] sm:$0xff]
    %v4912 = vld [vmem:[%s4886 + $0xc8] sm:$0xff]
    %v4913 = vld [vmem:[%s4886 + $0xd0] sm:$0xff]
    %v4914 = vld [vmem:[%s4886 + $0xd8] sm:$0xff]
    %v4915 = vld [vmem:[%s4886 + $0xe0] sm:$0xff]
    %v4916 = vld [vmem:[%s4886 + $0xe8] sm:$0xff]
    %v4917 = vld [vmem:[%s4886 + $0xf0] sm:$0xff]
    %v4918 = vld [vmem:[%s4886 + $0xf8] sm:$0xff]
    %s4919 = scalar_lea.vmem [#allocation12], 4
    %v4920 = vld [vmem:[%s4919] sm:$0xf]
    %v4921 = vld [vmem:[#allocation2] sm:$0xff]
    %v4922 = vld [vmem:[#allocation2 + $0x8] sm:$0xff]
    %v4923 = vld [vmem:[#allocation2 + $0x10] sm:$0xff]
    %v4924 = vld [vmem:[#allocation2 + $0x18] sm:$0xff]
    %v4925 = vld [vmem:[#allocation2 + $0x20] sm:$0xff]
    %v4926 = vld [vmem:[#allocation2 + $0x28] sm:$0xff]
    %v4927 = vld [vmem:[#allocation2 + $0x30] sm:$0xff]
    %v4928 = vld [vmem:[#allocation2 + $0x38] sm:$0xff]
    %v4929 = vpack.c.bf16 %v4922, %v4921
    %v4930 = vpack.c.bf16 %v4924, %v4923
    %v4931 = vpack.c.bf16 %v4926, %v4925
    %v4932 = vpack.c.bf16 %v4928, %v4927
    %v4934 = vlaneseq
    %v4935 = vshrl.u32 %v4934, 7
    %v4936 = vsub.s32 0, %v4935
    %v4937 = vrot.slane %v4920, %v4936
    %v4938 = vlaneseq
    %v4939 = vshrl.u32 %v4938, 7
    %v4940 = vsub.s32 1, %v4939
    %v4941 = vrot.slane %v4920, %v4940
    %v4942 = vlaneseq
    %v4943 = vshrl.u32 %v4942, 7
    %v4944 = vsub.s32 2, %v4943
    %v4945 = vrot.slane %v4920, %v4944
    %v4946 = vlaneseq
    %v4947 = vshrl.u32 %v4946, 7
    %v4948 = vsub.s32 3, %v4947
    %v4949 = vrot.slane %v4920, %v4948
    %v4986 = vunpack.c.l.b16 %v4854
    %v4987 = vunpack.c.h.b16 %v4854
    %v4988 = vunpack.c.l.b16 %v4855
    %v4989 = vunpack.c.h.b16 %v4855
    %v4990 = vunpack.c.l.b16 %v4856
    %v4991 = vunpack.c.h.b16 %v4856
    %v4992 = vunpack.c.l.b16 %v4857
    %v4993 = vunpack.c.h.b16 %v4857
    %v4994 = vunpack.c.l.b16 %v4858
    %v4995 = vunpack.c.h.b16 %v4858
    %v4996 = vunpack.c.l.b16 %v4859
    %v4997 = vunpack.c.h.b16 %v4859
    %v4998 = vunpack.c.l.b16 %v4860
    %v4999 = vunpack.c.h.b16 %v4860
    %v5000 = vunpack.c.l.b16 %v4861
    %v5001 = vunpack.c.h.b16 %v4861
    %v5002 = vunpack.c.l.b16 %v4862
    %v5003 = vunpack.c.h.b16 %v4862
    %v5004 = vunpack.c.l.b16 %v4863
    %v5005 = vunpack.c.h.b16 %v4863
    %v5006 = vunpack.c.l.b16 %v4864
    %v5007 = vunpack.c.h.b16 %v4864
    %v5008 = vunpack.c.l.b16 %v4865
    %v5009 = vunpack.c.h.b16 %v4865
    %v5010 = vunpack.c.l.b16 %v4866
    %v5011 = vunpack.c.h.b16 %v4866
    %v5012 = vunpack.c.l.b16 %v4867
    %v5013 = vunpack.c.h.b16 %v4867
    %v5014 = vunpack.c.l.b16 %v4868
    %v5015 = vunpack.c.h.b16 %v4868
    %v5016 = vunpack.c.l.b16 %v4869
    %v5017 = vunpack.c.h.b16 %v4869
    %v5018 = vunpack.c.l.b16 %v4870
    %v5019 = vunpack.c.h.b16 %v4870
    %v5020 = vunpack.c.l.b16 %v4871
    %v5021 = vunpack.c.h.b16 %v4871
    %v5022 = vunpack.c.l.b16 %v4872
    %v5023 = vunpack.c.h.b16 %v4872
    %v5024 = vunpack.c.l.b16 %v4873
    %v5025 = vunpack.c.h.b16 %v4873
    %v5026 = vunpack.c.l.b16 %v4874
    %v5027 = vunpack.c.h.b16 %v4874
    %v5028 = vunpack.c.l.b16 %v4875
    %v5029 = vunpack.c.h.b16 %v4875
    %v5030 = vunpack.c.l.b16 %v4876
    %v5031 = vunpack.c.h.b16 %v4876
    %v5032 = vunpack.c.l.b16 %v4877
    %v5033 = vunpack.c.h.b16 %v4877
    %v5034 = vunpack.c.l.b16 %v4878
    %v5035 = vunpack.c.h.b16 %v4878
    %v5036 = vunpack.c.l.b16 %v4879
    %v5037 = vunpack.c.h.b16 %v4879
    %v5038 = vunpack.c.l.b16 %v4880
    %v5039 = vunpack.c.h.b16 %v4880
    %v5040 = vunpack.c.l.b16 %v4881
    %v5041 = vunpack.c.h.b16 %v4881
    %v5042 = vunpack.c.l.b16 %v4882
    %v5043 = vunpack.c.h.b16 %v4882
    %v5044 = vunpack.c.l.b16 %v4883
    %v5045 = vunpack.c.h.b16 %v4883
    %v5046 = vunpack.c.l.b16 %v4884
    %v5047 = vunpack.c.h.b16 %v4884
    %v5048 = vunpack.c.l.b16 %v4885
    %v5049 = vunpack.c.h.b16 %v4885
    %v5050 = vpack.c.b16 %v4990, %v4986
    %v5051 = vpack.c.b16 %v4991, %v4987
    %v5052 = vpack.c.b16 %v4992, %v4988
    %v5053 = vpack.c.b16 %v4993, %v4989
    %v5054 = vpack.c.b16 %v4998, %v4994
    %v5055 = vpack.c.b16 %v4999, %v4995
    %v5056 = vpack.c.b16 %v5000, %v4996
    %v5057 = vpack.c.b16 %v5001, %v4997
    %v5058 = vpack.c.b16 %v5006, %v5002
    %v5059 = vpack.c.b16 %v5007, %v5003
    %v5060 = vpack.c.b16 %v5008, %v5004
    %v5061 = vpack.c.b16 %v5009, %v5005
    %v5062 = vpack.c.b16 %v5014, %v5010
    %v5063 = vpack.c.b16 %v5015, %v5011
    %v5064 = vpack.c.b16 %v5016, %v5012
    %v5065 = vpack.c.b16 %v5017, %v5013
    %v5066 = vpack.c.b16 %v5022, %v5018
    %v5067 = vpack.c.b16 %v5023, %v5019
    %v5068 = vpack.c.b16 %v5024, %v5020
    %v5069 = vpack.c.b16 %v5025, %v5021
    %v5070 = vpack.c.b16 %v5030, %v5026
    %v5071 = vpack.c.b16 %v5031, %v5027
    %v5072 = vpack.c.b16 %v5032, %v5028
    %v5073 = vpack.c.b16 %v5033, %v5029
    %v5074 = vpack.c.b16 %v5038, %v5034
    %v5075 = vpack.c.b16 %v5039, %v5035
    %v5076 = vpack.c.b16 %v5040, %v5036
    %v5077 = vpack.c.b16 %v5041, %v5037
    %v5078 = vpack.c.b16 %v5046, %v5042
    %v5079 = vpack.c.b16 %v5047, %v5043
    %v5080 = vpack.c.b16 %v5048, %v5044
    %v5081 = vpack.c.b16 %v5049, %v5045
    %5114 = vmatprep.subr.bf16.mxu0 %v5051
    %5115 = vmatpush1.bf16.msra.mxu0 %v5050
    %5116 = vmatprep.subr.bf16.mxu0 %v5055
    %5117 = vmatpush1.bf16.msra.mxu0 %v5054
    %5118 = vmatprep.subr.bf16.mxu0 %v5059
    %5119 = vmatpush1.bf16.msra.mxu0 %v5058
    %5120 = vmatprep.subr.bf16.mxu0 %v5063
    %5121 = vmatpush1.bf16.msra.mxu0 %v5062
    %5122 = vmatprep.subr.bf16.mxu0 %v5067
    %5123 = vmatpush1.bf16.msra.mxu0 %v5066
    %5124 = vmatprep.subr.bf16.mxu0 %v5071
    %5125 = vmatpush1.bf16.msra.mxu0 %v5070
    %5126 = vmatprep.subr.bf16.mxu0 %v5075
    %5127 = vmatpush1.bf16.msra.mxu0 %v5074
    %5128 = vmatprep.subr.bf16.mxu0 %v5079
    %5129 = vmatpush1.bf16.msra.mxu0 %v5078
    %5130 = vmatprep.subr.bf16.mxu0 0
    %5131 = vmatpush1.bf16.msra.mxu0 0
    %5132 = vmatprep.subr.bf16.mxu0 0
    %5133 = vmatpush1.bf16.msra.mxu0 0
    %5134 = vmatprep.subr.bf16.mxu0 0
    %5135 = vmatpush1.bf16.msra.mxu0 0
    %5136 = vmatprep.subr.bf16.mxu0 0
    %5137 = vmatpush1.bf16.msra.mxu0 0
    %5138 = vmatprep.subr.bf16.mxu0 0
    %5139 = vmatpush1.bf16.msra.mxu0 0
    %5140 = vmatprep.subr.bf16.mxu0 0
    %5141 = vmatpush1.bf16.msra.mxu0 0
    %5142 = vmatprep.subr.bf16.mxu0 0
    %5143 = vmatpush1.bf16.msra.mxu0 0
    %5144 = vmatprep.subr.bf16.mxu0 0
    %5145 = vmatpush1.bf16.msra.mxu0 0
    %5146 = vmatprep.mubr.bf16.mxu0 0
    %5147 = vmatmul.mubr.bf16.gmra.mrb[0].mxu0 %v4929
    %v5148 = vpop.f32.mrb[0].mxu0
    %v5149 = vadd.f32 %v4937, %v5148
    %v5150 = vpop.f32.mrb[0].mxu0
    %v5151 = vadd.f32 %v4941, %v5150
    %v5152 = vpop.f32.mrb[0].mxu0
    %v5153 = vadd.f32 %v4937, %v5152
    %v5154 = vpop.f32.mrb[0].mxu0
    %v5155 = vadd.f32 %v4941, %v5154
    %5156 = vmatprep.mubr.bf16.mxu0 0
    %5157 = vmatmul.mubr.bf16.gmra.mrb[0].mxu0 %v4930
    %v5158 = vpop.f32.mrb[0].mxu0
    %v5159 = vadd.f32 %v4937, %v5158
    %v5160 = vpop.f32.mrb[0].mxu0
    %v5161 = vadd.f32 %v4941, %v5160
    %v5162 = vpop.f32.mrb[0].mxu0
    %v5163 = vadd.f32 %v4937, %v5162
    %v5164 = vpop.f32.mrb[0].mxu0
    %v5165 = vadd.f32 %v4941, %v5164
    %5166 = vmatprep.mubr.bf16.mxu0 0
    %5167 = vmatmul.mubr.bf16.gmra.mrb[0].mxu0 %v4931
    %v5168 = vpop.f32.mrb[0].mxu0
    %v5169 = vadd.f32 %v4937, %v5168
    %v5170 = vpop.f32.mrb[0].mxu0
    %v5171 = vadd.f32 %v4941, %v5170
    %v5172 = vpop.f32.mrb[0].mxu0
    %v5173 = vadd.f32 %v4937, %v5172
    %v5174 = vpop.f32.mrb[0].mxu0
    %v5175 = vadd.f32 %v4941, %v5174
    %5176 = vmatprep.mubr.bf16.mxu0 0
    %5177 = vmatmul.mubr.bf16.gmra.mrb[0].mxu0 %v4932
    %v5178 = vpop.f32.mrb[0].mxu0
    %v5179 = vadd.f32 %v4937, %v5178
    %v5180 = vpop.f32.mrb[0].mxu0
    %v5181 = vadd.f32 %v4941, %v5180
    %v5182 = vpop.f32.mrb[0].mxu0
    %v5183 = vadd.f32 %v4937, %v5182
    %v5184 = vpop.f32.mrb[0].mxu0
    %v5185 = vadd.f32 %v4941, %v5184
    %5186 = vdwg.mxu0
    %5187 = vmatprep.subr.bf16.mxu0 %v5053
    %5188 = vmatpush1.bf16.msra.mxu0 %v5052
    %5189 = vmatprep.subr.bf16.mxu0 %v5057
    %5190 = vmatpush1.bf16.msra.mxu0 %v5056
    %5191 = vmatprep.subr.bf16.mxu0 %v5061
    %5192 = vmatpush1.bf16.msra.mxu0 %v5060
    %5193 = vmatprep.subr.bf16.mxu0 %v5065
    %5194 = vmatpush1.bf16.msra.mxu0 %v5064
    %5195 = vmatprep.subr.bf16.mxu0 %v5069
    %5196 = vmatpush1.bf16.msra.mxu0 %v5068
    %5197 = vmatprep.subr.bf16.mxu0 %v5073
    %5198 = vmatpush1.bf16.msra.mxu0 %v5072
    %5199 = vmatprep.subr.bf16.mxu0 %v5077
    %5200 = vmatpush1.bf16.msra.mxu0 %v5076
    %5201 = vmatprep.subr.bf16.mxu0 %v5081
    %5202 = vmatpush1.bf16.msra.mxu0 %v5080
    %5203 = vmatprep.subr.bf16.mxu0 0
    %5204 = vmatpush1.bf16.msra.mxu0 0
    %5205 = vmatprep.subr.bf16.mxu0 0
    %5206 = vmatpush1.bf16.msra.mxu0 0
    %5207 = vmatprep.subr.bf16.mxu0 0
    %5208 = vmatpush1.bf16.msra.mxu0 0
    %5209 = vmatprep.subr.bf16.mxu0 0
    %5210 = vmatpush1.bf16.msra.mxu0 0
    %5211 = vmatprep.subr.bf16.mxu0 0
    %5212 = vmatpush1.bf16.msra.mxu0 0
    %5213 = vmatprep.subr.bf16.mxu0 0
    %5214 = vmatpush1.bf16.msra.mxu0 0
    %5215 = vmatprep.subr.bf16.mxu0 0
    %5216 = vmatpush1.bf16.msra.mxu0 0
    %5217 = vmatprep.subr.bf16.mxu0 0
    %5218 = vmatpush1.bf16.msra.mxu0 0
    %5219 = vmatprep.mubr.bf16.mxu0 0
    %5220 = vmatmul.mubr.bf16.gmra.mrb[0].mxu0 %v4929
    %v5221 = vpop.f32.mrb[0].mxu0
    %v5222 = vadd.f32 %v4945, %v5221
    %v5223 = vpop.f32.mrb[0].mxu0
    %v5224 = vadd.f32 %v4949, %v5223
    %v5225 = vpop.f32.mrb[0].mxu0
    %v5226 = vadd.f32 %v4945, %v5225
    %v5227 = vpop.f32.mrb[0].mxu0
    %v5228 = vadd.f32 %v4949, %v5227
    %5229 = vmatprep.mubr.bf16.mxu0 0
    %5230 = vmatmul.mubr.bf16.gmra.mrb[0].mxu0 %v4930
    %v5231 = vpop.f32.mrb[0].mxu0
    %v5232 = vadd.f32 %v4945, %v5231
    %v5233 = vpop.f32.mrb[0].mxu0
    %v5234 = vadd.f32 %v4949, %v5233
    %v5235 = vpop.f32.mrb[0].mxu0
    %v5236 = vadd.f32 %v4945, %v5235
    %v5237 = vpop.f32.mrb[0].mxu0
    %v5238 = vadd.f32 %v4949, %v5237
    %5239 = vmatprep.mubr.bf16.mxu0 0
    %5240 = vmatmul.mubr.bf16.gmra.mrb[0].mxu0 %v4931
    %v5241 = vpop.f32.mrb[0].mxu0
    %v5242 = vadd.f32 %v4945, %v5241
    %v5243 = vpop.f32.mrb[0].mxu0
    %v5244 = vadd.f32 %v4949, %v5243
    %v5245 = vpop.f32.mrb[0].mxu0
    %v5246 = vadd.f32 %v4945, %v5245
    %v5247 = vpop.f32.mrb[0].mxu0
    %v5248 = vadd.f32 %v4949, %v5247
    %5249 = vmatprep.mubr.bf16.mxu0 0
    %5250 = vmatmul.mubr.bf16.gmra.mrb[0].mxu0 %v4932
    %v5251 = vpop.f32.mrb[0].mxu0
    %v5252 = vadd.f32 %v4945, %v5251
    %v5253 = vpop.f32.mrb[0].mxu0
    %v5254 = vadd.f32 %v4949, %v5253
    %v5255 = vpop.f32.mrb[0].mxu0
    %v5256 = vadd.f32 %v4945, %v5255
    %v5257 = vpop.f32.mrb[0].mxu0
    %v5258 = vadd.f32 %v4949, %v5257
    %5259 = vdwg.mxu0
    %5260 = vst [vmem:[#allocation3] sm:$0xff] %v5149
    %5261 = vst [vmem:[#allocation3 + $0x8] sm:$0xff] %v5151
    %5262 = vst [vmem:[#allocation3 + $0x10] sm:$0xff] %v5222
    %5263 = vst [vmem:[#allocation3 + $0x18] sm:$0xff] %v5224
    %5264 = vst [vmem:[#allocation3 + $0x20] sm:$0xff] %v5153
    %5265 = vst [vmem:[#allocation3 + $0x28] sm:$0xff] %v5155
    %5266 = vst [vmem:[#allocation3 + $0x30] sm:$0xff] %v5226
    %5267 = vst [vmem:[#allocation3 + $0x38] sm:$0xff] %v5228
    %5268 = vst [vmem:[#allocation3 + $0x40] sm:$0xff] %v5159
    %5269 = vst [vmem:[#allocation3 + $0x48] sm:$0xff] %v5161
    %5270 = vst [vmem:[#allocation3 + $0x50] sm:$0xff] %v5232
    %5271 = vst [vmem:[#allocation3 + $0x58] sm:$0xff] %v5234
    %5272 = vst [vmem:[#allocation3 + $0x60] sm:$0xff] %v5163
    %5273 = vst [vmem:[#allocation3 + $0x68] sm:$0xff] %v5165
    %5274 = vst [vmem:[#allocation3 + $0x70] sm:$0xff] %v5236
    %5275 = vst [vmem:[#allocation3 + $0x78] sm:$0xff] %v5238
    %5276 = vst [vmem:[#allocation3 + $0x80] sm:$0xff] %v5169
    %5277 = vst [vmem:[#allocation3 + $0x88] sm:$0xff] %v5171
    %5278 = vst [vmem:[#allocation3 + $0x90] sm:$0xff] %v5242
    %5279 = vst [vmem:[#allocation3 + $0x98] sm:$0xff] %v5244
    %5280 = vst [vmem:[#allocation3 + $0xa0] sm:$0xff] %v5173
    %5281 = vst [vmem:[#allocation3 + $0xa8] sm:$0xff] %v5175
    %5282 = vst [vmem:[#allocation3 + $0xb0] sm:$0xff] %v5246
    %5283 = vst [vmem:[#allocation3 + $0xb8] sm:$0xff] %v5248
    %5284 = vst [vmem:[#allocation3 + $0xc0] sm:$0xff] %v5179
    %5285 = vst [vmem:[#allocation3 + $0xc8] sm:$0xff] %v5181
    %5286 = vst [vmem:[#allocation3 + $0xd0] sm:$0xff] %v5252
    %5287 = vst [vmem:[#allocation3 + $0xd8] sm:$0xff] %v5254
    %5288 = vst [vmem:[#allocation3 + $0xe0] sm:$0xff] %v5183
    %5289 = vst [vmem:[#allocation3 + $0xe8] sm:$0xff] %v5185
    %5290 = vst [vmem:[#allocation3 + $0xf0] sm:$0xff] %v5256
    %5291 = vst [vmem:[#allocation3 + $0xf8] sm:$0xff] %v5258
    %v5292 = vld [vmem:[#allocation3] sm:$0xff]
    %v5293 = vld [vmem:[#allocation3 + $0x8] sm:$0xff]
    %v5294 = vld [vmem:[#allocation3 + $0x10] sm:$0xff]
    %v5295 = vld [vmem:[#allocation3 + $0x18] sm:$0xff]
    %v5328 = vunpack.c.l.b16 %v4887
    %v5329 = vunpack.c.h.b16 %v4887
    %v5330 = vunpack.c.l.b16 %v4888
    %v5331 = vunpack.c.h.b16 %v4888
    %v5332 = vunpack.c.l.b16 %v4889
    %v5333 = vunpack.c.h.b16 %v4889
    %v5334 = vunpack.c.l.b16 %v4890
    %v5335 = vunpack.c.h.b16 %v4890
    %v5336 = vunpack.c.l.b16 %v4891
    %v5337 = vunpack.c.h.b16 %v4891
    %v5338 = vunpack.c.l.b16 %v4892
    %v5339 = vunpack.c.h.b16 %v4892
    %v5340 = vunpack.c.l.b16 %v4893
    %v5341 = vunpack.c.h.b16 %v4893
    %v5342 = vunpack.c.l.b16 %v4894
    %v5343 = vunpack.c.h.b16 %v4894
    %v5344 = vunpack.c.l.b16 %v4895
    %v5345 = vunpack.c.h.b16 %v4895
    %v5346 = vunpack.c.l.b16 %v4896
    %v5347 = vunpack.c.h.b16 %v4896
    %v5348 = vunpack.c.l.b16 %v4897
    %v5349 = vunpack.c.h.b16 %v4897
    %v5350 = vunpack.c.l.b16 %v4898
    %v5351 = vunpack.c.h.b16 %v4898
    %v5352 = vunpack.c.l.b16 %v4899
    %v5353 = vunpack.c.h.b16 %v4899
    %v5354 = vunpack.c.l.b16 %v4900
    %v5355 = vunpack.c.h.b16 %v4900
    %v5356 = vunpack.c.l.b16 %v4901
    %v5357 = vunpack.c.h.b16 %v4901
    %v5358 = vunpack.c.l.b16 %v4902
    %v5359 = vunpack.c.h.b16 %v4902
    %v5360 = vunpack.c.l.b16 %v4903
    %v5361 = vunpack.c.h.b16 %v4903
    %v5362 = vunpack.c.l.b16 %v4904
    %v5363 = vunpack.c.h.b16 %v4904
    %v5364 = vunpack.c.l.b16 %v4905
    %v5365 = vunpack.c.h.b16 %v4905
    %v5366 = vunpack.c.l.b16 %v4906
    %v5367 = vunpack.c.h.b16 %v4906
    %v5368 = vunpack.c.l.b16 %v4907
    %v5369 = vunpack.c.h.b16 %v4907
    %v5370 = vunpack.c.l.b16 %v4908
    %v5371 = vunpack.c.h.b16 %v4908
    %v5372 = vunpack.c.l.b16 %v4909
    %v5373 = vunpack.c.h.b16 %v4909
    %v5374 = vunpack.c.l.b16 %v4910
    %v5375 = vunpack.c.h.b16 %v4910
    %v5376 = vunpack.c.l.b16 %v4911
    %v5377 = vunpack.c.h.b16 %v4911
    %v5378 = vunpack.c.l.b16 %v4912
    %v5379 = vunpack.c.h.b16 %v4912
    %v5380 = vunpack.c.l.b16 %v4913
    %v5381 = vunpack.c.h.b16 %v4913
    %v5382 = vunpack.c.l.b16 %v4914
    %v5383 = vunpack.c.h.b16 %v4914
    %v5384 = vunpack.c.l.b16 %v4915
    %v5385 = vunpack.c.h.b16 %v4915
    %v5386 = vunpack.c.l.b16 %v4916
    %v5387 = vunpack.c.h.b16 %v4916
    %v5388 = vunpack.c.l.b16 %v4917
    %v5389 = vunpack.c.h.b16 %v4917
    %v5390 = vunpack.c.l.b16 %v4918
    %v5391 = vunpack.c.h.b16 %v4918
    %v5392 = vpack.c.b16 %v5332, %v5328
    %v5393 = vpack.c.b16 %v5333, %v5329
    %v5394 = vpack.c.b16 %v5334, %v5330
    %v5395 = vpack.c.b16 %v5335, %v5331
    %v5396 = vpack.c.b16 %v5340, %v5336
    %v5397 = vpack.c.b16 %v5341, %v5337
    %v5398 = vpack.c.b16 %v5342, %v5338
    %v5399 = vpack.c.b16 %v5343, %v5339
    %v5400 = vpack.c.b16 %v5348, %v5344
    %v5401 = vpack.c.b16 %v5349, %v5345
    %v5402 = vpack.c.b16 %v5350, %v5346
    %v5403 = vpack.c.b16 %v5351, %v5347
    %v5404 = vpack.c.b16 %v5356, %v5352
    %v5405 = vpack.c.b16 %v5357, %v5353
    %v5406 = vpack.c.b16 %v5358, %v5354
    %v5407 = vpack.c.b16 %v5359, %v5355
    %v5408 = vpack.c.b16 %v5364, %v5360
    %v5409 = vpack.c.b16 %v5365, %v5361
    %v5410 = vpack.c.b16 %v5366, %v5362
    %v5411 = vpack.c.b16 %v5367, %v5363
    %v5412 = vpack.c.b16 %v5372, %v5368
    %v5413 = vpack.c.b16 %v5373, %v5369
    %v5414 = vpack.c.b16 %v5374, %v5370
    %v5415 = vpack.c.b16 %v5375, %v5371
    %v5416 = vpack.c.b16 %v5380, %v5376
    %v5417 = vpack.c.b16 %v5381, %v5377
    %v5418 = vpack.c.b16 %v5382, %v5378
    %v5419 = vpack.c.b16 %v5383, %v5379
    %v5420 = vpack.c.b16 %v5388, %v5384
    %v5421 = vpack.c.b16 %v5389, %v5385
    %v5422 = vpack.c.b16 %v5390, %v5386
    %v5423 = vpack.c.b16 %v5391, %v5387
    %5456 = vmatprep.subr.bf16.mxu0 %v5393
    %5457 = vmatpush1.bf16.msra.mxu0 %v5392
    %5458 = vmatprep.subr.bf16.mxu0 %v5397
    %5459 = vmatpush1.bf16.msra.mxu0 %v5396
    %5460 = vmatprep.subr.bf16.mxu0 %v5401
    %5461 = vmatpush1.bf16.msra.mxu0 %v5400
    %5462 = vmatprep.subr.bf16.mxu0 %v5405
    %5463 = vmatpush1.bf16.msra.mxu0 %v5404
    %5464 = vmatprep.subr.bf16.mxu0 %v5409
    %5465 = vmatpush1.bf16.msra.mxu0 %v5408
    %5466 = vmatprep.subr.bf16.mxu0 %v5413
    %5467 = vmatpush1.bf16.msra.mxu0 %v5412
    %5468 = vmatprep.subr.bf16.mxu0 %v5417
    %5469 = vmatpush1.bf16.msra.mxu0 %v5416
    %5470 = vmatprep.subr.bf16.mxu0 %v5421
    %5471 = vmatpush1.bf16.msra.mxu0 %v5420
    %5472 = vmatprep.subr.bf16.mxu0 0
    %5473 = vmatpush1.bf16.msra.mxu0 0
    %5474 = vmatprep.subr.bf16.mxu0 0
    %5475 = vmatpush1.bf16.msra.mxu0 0
    %5476 = vmatprep.subr.bf16.mxu0 0
    %5477 = vmatpush1.bf16.msra.mxu0 0
    %5478 = vmatprep.subr.bf16.mxu0 0
    %5479 = vmatpush1.bf16.msra.mxu0 0
    %5480 = vmatprep.subr.bf16.mxu0 0
    %5481 = vmatpush1.bf16.msra.mxu0 0
    %5482 = vmatprep.subr.bf16.mxu0 0
    %5483 = vmatpush1.bf16.msra.mxu0 0
    %5484 = vmatprep.subr.bf16.mxu0 0
    %5485 = vmatpush1.bf16.msra.mxu0 0
    %5486 = vmatprep.subr.bf16.mxu0 0
    %5487 = vmatpush1.bf16.msra.mxu0 0
    %5488 = vmatprep.mubr.bf16.mxu0 0
    %5489 = vmatmul.mubr.bf16.gmra.mrb[0].mxu0 0
    %v5490 = vpop.f32.mrb[0].mxu0
    %v5491 = vadd.f32 0.0, %v5490
    %v5492 = vpop.f32.mrb[0].mxu0
    %v5493 = vadd.f32 0.0, %v5492
    %v5494 = vpop.f32.mrb[0].mxu0
    %v5495 = vpop.f32.mrb[0].mxu0
    %5496 = vdwg.mxu0
    %5497 = vmatprep.subr.bf16.mxu0 %v5395
    %5498 = vmatpush1.bf16.msra.mxu0 %v5394
    %5499 = vmatprep.subr.bf16.mxu0 %v5399
    %5500 = vmatpush1.bf16.msra.mxu0 %v5398
    %5501 = vmatprep.subr.bf16.mxu0 %v5403
    %5502 = vmatpush1.bf16.msra.mxu0 %v5402
    %5503 = vmatprep.subr.bf16.mxu0 %v5407
    %5504 = vmatpush1.bf16.msra.mxu0 %v5406
    %5505 = vmatprep.subr.bf16.mxu0 %v5411
    %5506 = vmatpush1.bf16.msra.mxu0 %v5410
    %5507 = vmatprep.subr.bf16.mxu0 %v5415
    %5508 = vmatpush1.bf16.msra.mxu0 %v5414
    %5509 = vmatprep.subr.bf16.mxu0 %v5419
    %5510 = vmatpush1.bf16.msra.mxu0 %v5418
    %5511 = vmatprep.subr.bf16.mxu0 %v5423
    %5512 = vmatpush1.bf16.msra.mxu0 %v5422
    %5513 = vmatprep.subr.bf16.mxu0 0
    %5514 = vmatpush1.bf16.msra.mxu0 0
    %5515 = vmatprep.subr.bf16.mxu0 0
    %5516 = vmatpush1.bf16.msra.mxu0 0
    %5517 = vmatprep.subr.bf16.mxu0 0
    %5518 = vmatpush1.bf16.msra.mxu0 0
    %5519 = vmatprep.subr.bf16.mxu0 0
    %5520 = vmatpush1.bf16.msra.mxu0 0
    %5521 = vmatprep.subr.bf16.mxu0 0
    %5522 = vmatpush1.bf16.msra.mxu0 0
    %5523 = vmatprep.subr.bf16.mxu0 0
    %5524 = vmatpush1.bf16.msra.mxu0 0
    %5525 = vmatprep.subr.bf16.mxu0 0
    %5526 = vmatpush1.bf16.msra.mxu0 0
    %5527 = vmatprep.subr.bf16.mxu0 0
    %5528 = vmatpush1.bf16.msra.mxu0 0
    %5529 = vmatprep.mubr.bf16.mxu0 0
    %5530 = vmatmul.mubr.bf16.gmra.mrb[0].mxu0 0
    %v5531 = vpop.f32.mrb[0].mxu0
    %v5532 = vadd.f32 0.0, %v5531
    %v5533 = vpop.f32.mrb[0].mxu0
    %v5534 = vadd.f32 0.0, %v5533
    %v5535 = vpop.f32.mrb[0].mxu0
    %v5536 = vpop.f32.mrb[0].mxu0
    %5537 = vdwg.mxu0
    %v5538 = vadd.f32 %v5292, %v5491
    %v5539 = vadd.f32 %v5293, %v5493
    %v5540 = vadd.f32 %v5294, %v5532
    %v5541 = vadd.f32 %v5295, %v5534
    %v5542 = vxor.u32 %v5538, 2147483648
    %v5543 = vxor.u32 %v5539, 2147483648
    %v5544 = vxor.u32 %v5540, 2147483648
    %v5545 = vmul.f32 %v5542, 1.442695
    %v5546 = vpow.pop %v5545
    %v5547 = vmul.f32 %v5543, 1.442695
    %v5548 = vpow.pop %v5547
    %v5549 = vmul.f32 %v5544, 1.442695
    %v5550 = vpow.pop %v5549
    %v5551 = vadd.f32 %v5546, 1.0
    %v5552 = vadd.f32 %v5548, 1.0
    %v5553 = vadd.f32 %v5550, 1.0
    %v5554 = vrcp.pop %v5551
    %v5555 = vmul.f32 1.0, %v5554
    %v5556 = vrcp.pop %v5552
    %v5557 = vmul.f32 1.0, %v5556
    %v5558 = vrcp.pop %v5553
    %v5559 = vmul.f32 1.0, %v5558
    %v5560 = vtanh.pop %v5541
    %v5561 = vmul.f32 %v5557, 0.0
    %v5562 = vmul.f32 %v5555, %v5560
    %v5563 = vadd.f32 %v5561, %v5562
    %v5564 = vtanh.pop %v5563
    %v5565 = vmul.f32 %v5559, %v5564
    %5566 = vst [vmem:[#allocation2] sm:$0xff] %v5565
    %v5567 = vld [vmem:[%s868] sm:$0xff]
    %v5568 = vld [vmem:[%s868 + $0x8] sm:$0xff]
    %v5569 = vld [vmem:[%s868 + $0x10] sm:$0xff]
    %v5570 = vld [vmem:[%s868 + $0x18] sm:$0xff]
    %v5571 = vpack.c.bf16 %v5565, %v5565
    %5572 = vmatprep.subr.bf16.mxu0 %v5393
    %5573 = vmatpush1.bf16.msra.mxu0 %v5392
    %5574 = vmatprep.subr.bf16.mxu0 %v5397
    %5575 = vmatpush1.bf16.msra.mxu0 %v5396
    %5576 = vmatprep.subr.bf16.mxu0 %v5401
    %5577 = vmatpush1.bf16.msra.mxu0 %v5400
    %5578 = vmatprep.subr.bf16.mxu0 %v5405
    %5579 = vmatpush1.bf16.msra.mxu0 %v5404
    %5580 = vmatprep.subr.bf16.mxu0 %v5409
    %5581 = vmatpush1.bf16.msra.mxu0 %v5408
    %5582 = vmatprep.subr.bf16.mxu0 %v5413
    %5583 = vmatpush1.bf16.msra.mxu0 %v5412
    %5584 = vmatprep.subr.bf16.mxu0 %v5417
    %5585 = vmatpush1.bf16.msra.mxu0 %v5416
    %5586 = vmatprep.subr.bf16.mxu0 %v5421
    %5587 = vmatpush1.bf16.msra.mxu0 %v5420
    %5588 = vmatprep.subr.bf16.mxu0 0
    %5589 = vmatpush1.bf16.msra.mxu0 0
    %5590 = vmatprep.subr.bf16.mxu0 0
    %5591 = vmatpush1.bf16.msra.mxu0 0
    %5592 = vmatprep.subr.bf16.mxu0 0
    %5593 = vmatpush1.bf16.msra.mxu0 0
    %5594 = vmatprep.subr.bf16.mxu0 0
    %5595 = vmatpush1.bf16.msra.mxu0 0
    %5596 = vmatprep.subr.bf16.mxu0 0
    %5597 = vmatpush1.bf16.msra.mxu0 0
    %5598 = vmatprep.subr.bf16.mxu0 0
    %5599 = vmatpush1.bf16.msra.mxu0 0
    %5600 = vmatprep.subr.bf16.mxu0 0
    %5601 = vmatpush1.bf16.msra.mxu0 0
    %5602 = vmatprep.subr.bf16.mxu0 0
    %5603 = vmatpush1.bf16.msra.mxu0 0
    %5604 = vmatprep.mubr.bf16.mxu0 0
    %5605 = vmatmul.mubr.bf16.gmra.mrb[0].mxu0 %v5571
    %v5606 = vpop.f32.mrb[0].mxu0
    %v5607 = vadd.f32 0.0, %v5606
    %v5608 = vpop.f32.mrb[0].mxu0
    %v5609 = vadd.f32 0.0, %v5608
    %v5610 = vpop.f32.mrb[0].mxu0
    %v5611 = vpop.f32.mrb[0].mxu0
    %5612 = vdwg.mxu0
    %5613 = vmatprep.subr.bf16.mxu0 %v5395
    %5614 = vmatpush1.bf16.msra.mxu0 %v5394
    %5615 = vmatprep.subr.bf16.mxu0 %v5399
    %5616 = vmatpush1.bf16.msra.mxu0 %v5398
    %5617 = vmatprep.subr.bf16.mxu0 %v5403
    %5618 = vmatpush1.bf16.msra.mxu0 %v5402
    %5619 = vmatprep.subr.bf16.mxu0 %v5407
    %5620 = vmatpush1.bf16.msra.mxu0 %v5406
    %5621 = vmatprep.subr.bf16.mxu0 %v5411
    %5622 = vmatpush1.bf16.msra.mxu0 %v5410
    %5623 = vmatprep.subr.bf16.mxu0 %v5415
    %5624 = vmatpush1.bf16.msra.mxu0 %v5414
    %5625 = vmatprep.subr.bf16.mxu0 %v5419
    %5626 = vmatpush1.bf16.msra.mxu0 %v5418
    %5627 = vmatprep.subr.bf16.mxu0 %v5423
    %5628 = vmatpush1.bf16.msra.mxu0 %v5422
    %5629 = vmatprep.subr.bf16.mxu0 0
    %5630 = vmatpush1.bf16.msra.mxu0 0
    %5631 = vmatprep.subr.bf16.mxu0 0
    %5632 = vmatpush1.bf16.msra.mxu0 0
    %5633 = vmatprep.subr.bf16.mxu0 0
    %5634 = vmatpush1.bf16.msra.mxu0 0
    %5635 = vmatprep.subr.bf16.mxu0 0
    %5636 = vmatpush1.bf16.msra.mxu0 0
    %5637 = vmatprep.subr.bf16.mxu0 0
    %5638 = vmatpush1.bf16.msra.mxu0 0
    %5639 = vmatprep.subr.bf16.mxu0 0
    %5640 = vmatpush1.bf16.msra.mxu0 0
    %5641 = vmatprep.subr.bf16.mxu0 0
    %5642 = vmatpush1.bf16.msra.mxu0 0
    %5643 = vmatprep.subr.bf16.mxu0 0
    %5644 = vmatpush1.bf16.msra.mxu0 0
    %5645 = vmatprep.mubr.bf16.mxu0 0
    %5646 = vmatmul.mubr.bf16.gmra.mrb[0].mxu0 %v5571
    %v5647 = vpop.f32.mrb[0].mxu0
    %v5648 = vadd.f32 0.0, %v5647
    %v5649 = vpop.f32.mrb[0].mxu0
    %v5650 = vadd.f32 0.0, %v5649
    %v5651 = vpop.f32.mrb[0].mxu0
    %v5652 = vpop.f32.mrb[0].mxu0
    %5653 = vdwg.mxu0
    %v5654 = vadd.f32 %v5567, %v5607
    %v5655 = vadd.f32 %v5568, %v5609
    %v5656 = vadd.f32 %v5569, %v5648
    %v5657 = vadd.f32 %v5570, %v5650
    %v5658 = vxor.u32 %v5654, 2147483648
    %v5659 = vxor.u32 %v5655, 2147483648
    %v5660 = vxor.u32 %v5656, 2147483648
    %v5661 = vmul.f32 %v5658, 1.442695
    %v5662 = vpow.pop %v5661
    %v5663 = vmul.f32 %v5659, 1.442695
    %v5664 = vpow.pop %v5663
    %v5665 = vmul.f32 %v5660, 1.442695
    %v5666 = vpow.pop %v5665
    %v5667 = vadd.f32 %v5662, 1.0
    %v5668 = vadd.f32 %v5664, 1.0
    %v5669 = vadd.f32 %v5666, 1.0
    %v5670 = vrcp.pop %v5667
    %v5671 = vmul.f32 1.0, %v5670
    %v5672 = vrcp.pop %v5668
    %v5673 = vmul.f32 1.0, %v5672
    %v5674 = vrcp.pop %v5669
    %v5675 = vmul.f32 1.0, %v5674
    %v5676 = vtanh.pop %v5657
    %v5677 = vmul.f32 %v5673, %v5563
    %v5678 = vmul.f32 %v5671, %v5676
    %v5679 = vadd.f32 %v5677, %v5678
    %v5680 = vtanh.pop %v5679
    %v5681 = vmul.f32 %v5675, %v5680
    %5682 = vst [vmem:[%s984] sm:$0xff] %v5681
    %v5683 = vld [vmem:[%s986] sm:$0xff]
    %v5684 = vld [vmem:[%s986 + $0x8] sm:$0xff]
    %v5685 = vld [vmem:[%s986 + $0x10] sm:$0xff]
    %v5686 = vld [vmem:[%s986 + $0x18] sm:$0xff]
    %v5687 = vpack.c.bf16 %v5681, %v5681
    %5688 = vmatprep.subr.bf16.mxu0 %v5393
    %5689 = vmatpush1.bf16.msra.mxu0 %v5392
    %5690 = vmatprep.subr.bf16.mxu0 %v5397
    %5691 = vmatpush1.bf16.msra.mxu0 %v5396
    %5692 = vmatprep.subr.bf16.mxu0 %v5401
    %5693 = vmatpush1.bf16.msra.mxu0 %v5400
    %5694 = vmatprep.subr.bf16.mxu0 %v5405
    %5695 = vmatpush1.bf16.msra.mxu0 %v5404
    %5696 = vmatprep.subr.bf16.mxu0 %v5409
    %5697 = vmatpush1.bf16.msra.mxu0 %v5408
    %5698 = vmatprep.subr.bf16.mxu0 %v5413
    %5699 = vmatpush1.bf16.msra.mxu0 %v5412
    %5700 = vmatprep.subr.bf16.mxu0 %v5417
    %5701 = vmatpush1.bf16.msra.mxu0 %v5416
    %5702 = vmatprep.subr.bf16.mxu0 %v5421
    %5703 = vmatpush1.bf16.msra.mxu0 %v5420
    %5704 = vmatprep.subr.bf16.mxu0 0
    %5705 = vmatpush1.bf16.msra.mxu0 0
    %5706 = vmatprep.subr.bf16.mxu0 0
    %5707 = vmatpush1.bf16.msra.mxu0 0
    %5708 = vmatprep.subr.bf16.mxu0 0
    %5709 = vmatpush1.bf16.msra.mxu0 0
    %5710 = vmatprep.subr.bf16.mxu0 0
    %5711 = vmatpush1.bf16.msra.mxu0 0
    %5712 = vmatprep.subr.bf16.mxu0 0
    %5713 = vmatpush1.bf16.msra.mxu0 0
    %5714 = vmatprep.subr.bf16.mxu0 0
    %5715 = vmatpush1.bf16.msra.mxu0 0
    %5716 = vmatprep.subr.bf16.mxu0 0
    %5717 = vmatpush1.bf16.msra.mxu0 0
    %5718 = vmatprep.subr.bf16.mxu0 0
    %5719 = vmatpush1.bf16.msra.mxu0 0
    %5720 = vmatprep.mubr.bf16.mxu0 0
    %5721 = vmatmul.mubr.bf16.gmra.mrb[0].mxu0 %v5687
    %v5722 = vpop.f32.mrb[0].mxu0
    %v5723 = vadd.f32 0.0, %v5722
    %v5724 = vpop.f32.mrb[0].mxu0
    %v5725 = vadd.f32 0.0, %v5724
    %v5726 = vpop.f32.mrb[0].mxu0
    %v5727 = vpop.f32.mrb[0].mxu0
    %5728 = vdwg.mxu0
    %5729 = vmatprep.subr.bf16.mxu0 %v5395
    %5730 = vmatpush1.bf16.msra.mxu0 %v5394
    %5731 = vmatprep.subr.bf16.mxu0 %v5399
    %5732 = vmatpush1.bf16.msra.mxu0 %v5398
    %5733 = vmatprep.subr.bf16.mxu0 %v5403
    %5734 = vmatpush1.bf16.msra.mxu0 %v5402
    %5735 = vmatprep.subr.bf16.mxu0 %v5407
    %5736 = vmatpush1.bf16.msra.mxu0 %v5406
    %5737 = vmatprep.subr.bf16.mxu0 %v5411
    %5738 = vmatpush1.bf16.msra.mxu0 %v5410
    %5739 = vmatprep.subr.bf16.mxu0 %v5415
    %5740 = vmatpush1.bf16.msra.mxu0 %v5414
    %5741 = vmatprep.subr.bf16.mxu0 %v5419
    %5742 = vmatpush1.bf16.msra.mxu0 %v5418
    %5743 = vmatprep.subr.bf16.mxu0 %v5423
    %5744 = vmatpush1.bf16.msra.mxu0 %v5422
    %5745 = vmatprep.subr.bf16.mxu0 0
    %5746 = vmatpush1.bf16.msra.mxu0 0
    %5747 = vmatprep.subr.bf16.mxu0 0
    %5748 = vmatpush1.bf16.msra.mxu0 0
    %5749 = vmatprep.subr.bf16.mxu0 0
    %5750 = vmatpush1.bf16.msra.mxu0 0
    %5751 = vmatprep.subr.bf16.mxu0 0
    %5752 = vmatpush1.bf16.msra.mxu0 0
    %5753 = vmatprep.subr.bf16.mxu0 0
    %5754 = vmatpush1.bf16.msra.mxu0 0
    %5755 = vmatprep.subr.bf16.mxu0 0
    %5756 = vmatpush1.bf16.msra.mxu0 0
    %5757 = vmatprep.subr.bf16.mxu0 0
    %5758 = vmatpush1.bf16.msra.mxu0 0
    %5759 = vmatprep.subr.bf16.mxu0 0
    %5760 = vmatpush1.bf16.msra.mxu0 0
    %5761 = vmatprep.mubr.bf16.mxu0 0
    %5762 = vmatmul.mubr.bf16.gmra.mrb[0].mxu0 %v5687
    %v5763 = vpop.f32.mrb[0].mxu0
    %v5764 = vadd.f32 0.0, %v5763
    %v5765 = vpop.f32.mrb[0].mxu0
    %v5766 = vadd.f32 0.0, %v5765
    %v5767 = vpop.f32.mrb[0].mxu0
    %v5768 = vpop.f32.mrb[0].mxu0
    %5769 = vdwg.mxu0
    %v5770 = vadd.f32 %v5683, %v5723
    %v5771 = vadd.f32 %v5684, %v5725
    %v5772 = vadd.f32 %v5685, %v5764
    %v5773 = vadd.f32 %v5686, %v5766
    %v5774 = vxor.u32 %v5770, 2147483648
    %v5775 = vxor.u32 %v5771, 2147483648
    %v5776 = vxor.u32 %v5772, 2147483648
    %v5777 = vmul.f32 %v5774, 1.442695
    %v5778 = vpow.pop %v5777
    %v5779 = vmul.f32 %v5775, 1.442695
    %v5780 = vpow.pop %v5779
    %v5781 = vmul.f32 %v5776, 1.442695
    %v5782 = vpow.pop %v5781
    %v5783 = vadd.f32 %v5778, 1.0
    %v5784 = vadd.f32 %v5780, 1.0
    %v5785 = vadd.f32 %v5782, 1.0
    %v5786 = vrcp.pop %v5783
    %v5787 = vmul.f32 1.0, %v5786
    %v5788 = vrcp.pop %v5784
    %v5789 = vmul.f32 1.0, %v5788
    %v5790 = vrcp.pop %v5785
    %v5791 = vmul.f32 1.0, %v5790
    %v5792 = vtanh.pop %v5773
    %v5793 = vmul.f32 %v5789, %v5679
    %v5794 = vmul.f32 %v5787, %v5792
    %v5795 = vadd.f32 %v5793, %v5794
    %v5796 = vtanh.pop %v5795
    %v5797 = vmul.f32 %v5791, %v5796
    %5798 = vst [vmem:[%s1102] sm:$0xff] %v5797
    %v5799 = vld [vmem:[%s1104] sm:$0xff]
    %v5800 = vld [vmem:[%s1104 + $0x8] sm:$0xff]
    %v5801 = vld [vmem:[%s1104 + $0x10] sm:$0xff]
    %v5802 = vld [vmem:[%s1104 + $0x18] sm:$0xff]
    %v5803 = vpack.c.bf16 %v5797, %v5797
    %5804 = vmatprep.subr.bf16.mxu0 %v5393
    %5805 = vmatpush1.bf16.msra.mxu0 %v5392
    %5806 = vmatprep.subr.bf16.mxu0 %v5397
    %5807 = vmatpush1.bf16.msra.mxu0 %v5396
    %5808 = vmatprep.subr.bf16.mxu0 %v5401
    %5809 = vmatpush1.bf16.msra.mxu0 %v5400
    %5810 = vmatprep.subr.bf16.mxu0 %v5405
    %5811 = vmatpush1.bf16.msra.mxu0 %v5404
    %5812 = vmatprep.subr.bf16.mxu0 %v5409
    %5813 = vmatpush1.bf16.msra.mxu0 %v5408
    %5814 = vmatprep.subr.bf16.mxu0 %v5413
    %5815 = vmatpush1.bf16.msra.mxu0 %v5412
    %5816 = vmatprep.subr.bf16.mxu0 %v5417
    %5817 = vmatpush1.bf16.msra.mxu0 %v5416
    %5818 = vmatprep.subr.bf16.mxu0 %v5421
    %5819 = vmatpush1.bf16.msra.mxu0 %v5420
    %5820 = vmatprep.subr.bf16.mxu0 0
    %5821 = vmatpush1.bf16.msra.mxu0 0
    %5822 = vmatprep.subr.bf16.mxu0 0
    %5823 = vmatpush1.bf16.msra.mxu0 0
    %5824 = vmatprep.subr.bf16.mxu0 0
    %5825 = vmatpush1.bf16.msra.mxu0 0
    %5826 = vmatprep.subr.bf16.mxu0 0
    %5827 = vmatpush1.bf16.msra.mxu0 0
    %5828 = vmatprep.subr.bf16.mxu0 0
    %5829 = vmatpush1.bf16.msra.mxu0 0
    %5830 = vmatprep.subr.bf16.mxu0 0
    %5831 = vmatpush1.bf16.msra.mxu0 0
    %5832 = vmatprep.subr.bf16.mxu0 0
    %5833 = vmatpush1.bf16.msra.mxu0 0
    %5834 = vmatprep.subr.bf16.mxu0 0
    %5835 = vmatpush1.bf16.msra.mxu0 0
    %5836 = vmatprep.mubr.bf16.mxu0 0
    %5837 = vmatmul.mubr.bf16.gmra.mrb[0].mxu0 %v5803
    %v5838 = vpop.f32.mrb[0].mxu0
    %v5839 = vadd.f32 0.0, %v5838
    %v5840 = vpop.f32.mrb[0].mxu0
    %v5841 = vadd.f32 0.0, %v5840
    %v5842 = vpop.f32.mrb[0].mxu0
    %v5843 = vpop.f32.mrb[0].mxu0
    %5844 = vdwg.mxu0
    %5845 = vmatprep.subr.bf16.mxu0 %v5395
    %5846 = vmatpush1.bf16.msra.mxu0 %v5394
    %5847 = vmatprep.subr.bf16.mxu0 %v5399
    %5848 = vmatpush1.bf16.msra.mxu0 %v5398
    %5849 = vmatprep.subr.bf16.mxu0 %v5403
    %5850 = vmatpush1.bf16.msra.mxu0 %v5402
    %5851 = vmatprep.subr.bf16.mxu0 %v5407
    %5852 = vmatpush1.bf16.msra.mxu0 %v5406
    %5853 = vmatprep.subr.bf16.mxu0 %v5411
    %5854 = vmatpush1.bf16.msra.mxu0 %v5410
    %5855 = vmatprep.subr.bf16.mxu0 %v5415
    %5856 = vmatpush1.bf16.msra.mxu0 %v5414
    %5857 = vmatprep.subr.bf16.mxu0 %v5419
    %5858 = vmatpush1.bf16.msra.mxu0 %v5418
    %5859 = vmatprep.subr.bf16.mxu0 %v5423
    %5860 = vmatpush1.bf16.msra.mxu0 %v5422
    %5861 = vmatprep.subr.bf16.mxu0 0
    %5862 = vmatpush1.bf16.msra.mxu0 0
    %5863 = vmatprep.subr.bf16.mxu0 0
    %5864 = vmatpush1.bf16.msra.mxu0 0
    %5865 = vmatprep.subr.bf16.mxu0 0
    %5866 = vmatpush1.bf16.msra.mxu0 0
    %5867 = vmatprep.subr.bf16.mxu0 0
    %5868 = vmatpush1.bf16.msra.mxu0 0
    %5869 = vmatprep.subr.bf16.mxu0 0
    %5870 = vmatpush1.bf16.msra.mxu0 0
    %5871 = vmatprep.subr.bf16.mxu0 0
    %5872 = vmatpush1.bf16.msra.mxu0 0
    %5873 = vmatprep.subr.bf16.mxu0 0
    %5874 = vmatpush1.bf16.msra.mxu0 0
    %5875 = vmatprep.subr.bf16.mxu0 0
    %5876 = vmatpush1.bf16.msra.mxu0 0
    %5877 = vmatprep.mubr.bf16.mxu0 0
    %5878 = vmatmul.mubr.bf16.gmra.mrb[0].mxu0 %v5803
    %v5879 = vpop.f32.mrb[0].mxu0
    %v5880 = vadd.f32 0.0, %v5879
    %v5881 = vpop.f32.mrb[0].mxu0
    %v5882 = vadd.f32 0.0, %v5881
    %v5883 = vpop.f32.mrb[0].mxu0
    %v5884 = vpop.f32.mrb[0].mxu0
    %5885 = vdwg.mxu0
    %v5886 = vadd.f32 %v5799, %v5839
    %v5887 = vadd.f32 %v5800, %v5841
    %v5888 = vadd.f32 %v5801, %v5880
    %v5889 = vadd.f32 %v5802, %v5882
    %v5890 = vxor.u32 %v5886, 2147483648
    %v5891 = vxor.u32 %v5887, 2147483648
    %v5892 = vxor.u32 %v5888, 2147483648
    %v5893 = vmul.f32 %v5890, 1.442695
    %v5894 = vpow.pop %v5893
    %v5895 = vmul.f32 %v5891, 1.442695
    %v5896 = vpow.pop %v5895
    %v5897 = vmul.f32 %v5892, 1.442695
    %v5898 = vpow.pop %v5897
    %v5899 = vadd.f32 %v5894, 1.0
    %v5900 = vadd.f32 %v5896, 1.0
    %v5901 = vadd.f32 %v5898, 1.0
    %v5902 = vrcp.pop %v5899
    %v5903 = vmul.f32 1.0, %v5902
    %v5904 = vrcp.pop %v5900
    %v5905 = vmul.f32 1.0, %v5904
    %v5906 = vrcp.pop %v5901
    %v5907 = vmul.f32 1.0, %v5906
    %v5908 = vtanh.pop %v5889
    %v5909 = vmul.f32 %v5905, %v5795
    %v5910 = vmul.f32 %v5903, %v5908
    %v5911 = vadd.f32 %v5909, %v5910
    %v5912 = vtanh.pop %v5911
    %v5913 = vmul.f32 %v5907, %v5912
    %5914 = vst [vmem:[%s1220] sm:$0xff] %v5913
    %v5915 = vld [vmem:[%s1222] sm:$0xff]
    %v5916 = vld [vmem:[%s1222 + $0x8] sm:$0xff]
    %v5917 = vld [vmem:[%s1222 + $0x10] sm:$0xff]
    %v5918 = vld [vmem:[%s1222 + $0x18] sm:$0xff]
    %v5919 = vpack.c.bf16 %v5913, %v5913
    %5920 = vmatprep.subr.bf16.mxu0 %v5393
    %5921 = vmatpush1.bf16.msra.mxu0 %v5392
    %5922 = vmatprep.subr.bf16.mxu0 %v5397
    %5923 = vmatpush1.bf16.msra.mxu0 %v5396
    %5924 = vmatprep.subr.bf16.mxu0 %v5401
    %5925 = vmatpush1.bf16.msra.mxu0 %v5400
    %5926 = vmatprep.subr.bf16.mxu0 %v5405
    %5927 = vmatpush1.bf16.msra.mxu0 %v5404
    %5928 = vmatprep.subr.bf16.mxu0 %v5409
    %5929 = vmatpush1.bf16.msra.mxu0 %v5408
    %5930 = vmatprep.subr.bf16.mxu0 %v5413
    %5931 = vmatpush1.bf16.msra.mxu0 %v5412
    %5932 = vmatprep.subr.bf16.mxu0 %v5417
    %5933 = vmatpush1.bf16.msra.mxu0 %v5416
    %5934 = vmatprep.subr.bf16.mxu0 %v5421
    %5935 = vmatpush1.bf16.msra.mxu0 %v5420
    %5936 = vmatprep.subr.bf16.mxu0 0
    %5937 = vmatpush1.bf16.msra.mxu0 0
    %5938 = vmatprep.subr.bf16.mxu0 0
    %5939 = vmatpush1.bf16.msra.mxu0 0
    %5940 = vmatprep.subr.bf16.mxu0 0
    %5941 = vmatpush1.bf16.msra.mxu0 0
    %5942 = vmatprep.subr.bf16.mxu0 0
    %5943 = vmatpush1.bf16.msra.mxu0 0
    %5944 = vmatprep.subr.bf16.mxu0 0
    %5945 = vmatpush1.bf16.msra.mxu0 0
    %5946 = vmatprep.subr.bf16.mxu0 0
    %5947 = vmatpush1.bf16.msra.mxu0 0
    %5948 = vmatprep.subr.bf16.mxu0 0
    %5949 = vmatpush1.bf16.msra.mxu0 0
    %5950 = vmatprep.subr.bf16.mxu0 0
    %5951 = vmatpush1.bf16.msra.mxu0 0
    %5952 = vmatprep.mubr.bf16.mxu0 0
    %5953 = vmatmul.mubr.bf16.gmra.mrb[0].mxu0 %v5919
    %v5954 = vpop.f32.mrb[0].mxu0
    %v5955 = vadd.f32 0.0, %v5954
    %v5956 = vpop.f32.mrb[0].mxu0
    %v5957 = vadd.f32 0.0, %v5956
    %v5958 = vpop.f32.mrb[0].mxu0
    %v5959 = vpop.f32.mrb[0].mxu0
    %5960 = vdwg.mxu0
    %5961 = vmatprep.subr.bf16.mxu0 %v5395
    %5962 = vmatpush1.bf16.msra.mxu0 %v5394
    %5963 = vmatprep.subr.bf16.mxu0 %v5399
    %5964 = vmatpush1.bf16.msra.mxu0 %v5398
    %5965 = vmatprep.subr.bf16.mxu0 %v5403
    %5966 = vmatpush1.bf16.msra.mxu0 %v5402
    %5967 = vmatprep.subr.bf16.mxu0 %v5407
    %5968 = vmatpush1.bf16.msra.mxu0 %v5406
    %5969 = vmatprep.subr.bf16.mxu0 %v5411
    %5970 = vmatpush1.bf16.msra.mxu0 %v5410
    %5971 = vmatprep.subr.bf16.mxu0 %v5415
    %5972 = vmatpush1.bf16.msra.mxu0 %v5414
    %5973 = vmatprep.subr.bf16.mxu0 %v5419
    %5974 = vmatpush1.bf16.msra.mxu0 %v5418
    %5975 = vmatprep.subr.bf16.mxu0 %v5423
    %5976 = vmatpush1.bf16.msra.mxu0 %v5422
    %5977 = vmatprep.subr.bf16.mxu0 0
    %5978 = vmatpush1.bf16.msra.mxu0 0
    %5979 = vmatprep.subr.bf16.mxu0 0
    %5980 = vmatpush1.bf16.msra.mxu0 0
    %5981 = vmatprep.subr.bf16.mxu0 0
    %5982 = vmatpush1.bf16.msra.mxu0 0
    %5983 = vmatprep.subr.bf16.mxu0 0
    %5984 = vmatpush1.bf16.msra.mxu0 0
    %5985 = vmatprep.subr.bf16.mxu0 0
    %5986 = vmatpush1.bf16.msra.mxu0 0
    %5987 = vmatprep.subr.bf16.mxu0 0
    %5988 = vmatpush1.bf16.msra.mxu0 0
    %5989 = vmatprep.subr.bf16.mxu0 0
    %5990 = vmatpush1.bf16.msra.mxu0 0
    %5991 = vmatprep.subr.bf16.mxu0 0
    %5992 = vmatpush1.bf16.msra.mxu0 0
    %5993 = vmatprep.mubr.bf16.mxu0 0
    %5994 = vmatmul.mubr.bf16.gmra.mrb[0].mxu0 %v5919
    %v5995 = vpop.f32.mrb[0].mxu0
    %v5996 = vadd.f32 0.0, %v5995
    %v5997 = vpop.f32.mrb[0].mxu0
    %v5998 = vadd.f32 0.0, %v5997
    %v5999 = vpop.f32.mrb[0].mxu0
    %v6000 = vpop.f32.mrb[0].mxu0
    %6001 = vdwg.mxu0
    %v6002 = vadd.f32 %v5915, %v5955
    %v6003 = vadd.f32 %v5916, %v5957
    %v6004 = vadd.f32 %v5917, %v5996
    %v6005 = vadd.f32 %v5918, %v5998
    %v6006 = vxor.u32 %v6002, 2147483648
    %v6007 = vxor.u32 %v6003, 2147483648
    %v6008 = vxor.u32 %v6004, 2147483648
    %v6009 = vmul.f32 %v6006, 1.442695
    %v6010 = vpow.pop %v6009
    %v6011 = vmul.f32 %v6007, 1.442695
    %v6012 = vpow.pop %v6011
    %v6013 = vmul.f32 %v6008, 1.442695
    %v6014 = vpow.pop %v6013
    %v6015 = vadd.f32 %v6010, 1.0
    %v6016 = vadd.f32 %v6012, 1.0
    %v6017 = vadd.f32 %v6014, 1.0
    %v6018 = vrcp.pop %v6015
    %v6019 = vmul.f32 1.0, %v6018
    %v6020 = vrcp.pop %v6016
    %v6021 = vmul.f32 1.0, %v6020
    %v6022 = vrcp.pop %v6017
    %v6023 = vmul.f32 1.0, %v6022
    %v6024 = vtanh.pop %v6005
    %v6025 = vmul.f32 %v6021, %v5911
    %v6026 = vmul.f32 %v6019, %v6024
    %v6027 = vadd.f32 %v6025, %v6026
    %v6028 = vtanh.pop %v6027
    %v6029 = vmul.f32 %v6023, %v6028
    %6030 = vst [vmem:[%s1338] sm:$0xff] %v6029
    %v6031 = vld [vmem:[%s1340] sm:$0xff]
    %v6032 = vld [vmem:[%s1340 + $0x8] sm:$0xff]
    %v6033 = vld [vmem:[%s1340 + $0x10] sm:$0xff]
    %v6034 = vld [vmem:[%s1340 + $0x18] sm:$0xff]
    %v6035 = vpack.c.bf16 %v6029, %v6029
    %6036 = vmatprep.subr.bf16.mxu0 %v5393
    %6037 = vmatpush1.bf16.msra.mxu0 %v5392
    %6038 = vmatprep.subr.bf16.mxu0 %v5397
    %6039 = vmatpush1.bf16.msra.mxu0 %v5396
    %6040 = vmatprep.subr.bf16.mxu0 %v5401
    %6041 = vmatpush1.bf16.msra.mxu0 %v5400
    %6042 = vmatprep.subr.bf16.mxu0 %v5405
    %6043 = vmatpush1.bf16.msra.mxu0 %v5404
    %6044 = vmatprep.subr.bf16.mxu0 %v5409
    %6045 = vmatpush1.bf16.msra.mxu0 %v5408
    %6046 = vmatprep.subr.bf16.mxu0 %v5413
    %6047 = vmatpush1.bf16.msra.mxu0 %v5412
    %6048 = vmatprep.subr.bf16.mxu0 %v5417
    %6049 = vmatpush1.bf16.msra.mxu0 %v5416
    %6050 = vmatprep.subr.bf16.mxu0 %v5421
    %6051 = vmatpush1.bf16.msra.mxu0 %v5420
    %6052 = vmatprep.subr.bf16.mxu0 0
    %6053 = vmatpush1.bf16.msra.mxu0 0
    %6054 = vmatprep.subr.bf16.mxu0 0
    %6055 = vmatpush1.bf16.msra.mxu0 0
    %6056 = vmatprep.subr.bf16.mxu0 0
    %6057 = vmatpush1.bf16.msra.mxu0 0
    %6058 = vmatprep.subr.bf16.mxu0 0
    %6059 = vmatpush1.bf16.msra.mxu0 0
    %6060 = vmatprep.subr.bf16.mxu0 0
    %6061 = vmatpush1.bf16.msra.mxu0 0
    %6062 = vmatprep.subr.bf16.mxu0 0
    %6063 = vmatpush1.bf16.msra.mxu0 0
    %6064 = vmatprep.subr.bf16.mxu0 0
    %6065 = vmatpush1.bf16.msra.mxu0 0
    %6066 = vmatprep.subr.bf16.mxu0 0
    %6067 = vmatpush1.bf16.msra.mxu0 0
    %6068 = vmatprep.mubr.bf16.mxu0 0
    %6069 = vmatmul.mubr.bf16.gmra.mrb[0].mxu0 %v6035
    %v6070 = vpop.f32.mrb[0].mxu0
    %v6071 = vadd.f32 0.0, %v6070
    %v6072 = vpop.f32.mrb[0].mxu0
    %v6073 = vadd.f32 0.0, %v6072
    %v6074 = vpop.f32.mrb[0].mxu0
    %v6075 = vpop.f32.mrb[0].mxu0
    %6076 = vdwg.mxu0
    %6077 = vmatprep.subr.bf16.mxu0 %v5395
    %6078 = vmatpush1.bf16.msra.mxu0 %v5394
    %6079 = vmatprep.subr.bf16.mxu0 %v5399
    %6080 = vmatpush1.bf16.msra.mxu0 %v5398
    %6081 = vmatprep.subr.bf16.mxu0 %v5403
    %6082 = vmatpush1.bf16.msra.mxu0 %v5402
    %6083 = vmatprep.subr.bf16.mxu0 %v5407
    %6084 = vmatpush1.bf16.msra.mxu0 %v5406
    %6085 = vmatprep.subr.bf16.mxu0 %v5411
    %6086 = vmatpush1.bf16.msra.mxu0 %v5410
    %6087 = vmatprep.subr.bf16.mxu0 %v5415
    %6088 = vmatpush1.bf16.msra.mxu0 %v5414
    %6089 = vmatprep.subr.bf16.mxu0 %v5419
    %6090 = vmatpush1.bf16.msra.mxu0 %v5418
    %6091 = vmatprep.subr.bf16.mxu0 %v5423
    %6092 = vmatpush1.bf16.msra.mxu0 %v5422
    %6093 = vmatprep.subr.bf16.mxu0 0
    %6094 = vmatpush1.bf16.msra.mxu0 0
    %6095 = vmatprep.subr.bf16.mxu0 0
    %6096 = vmatpush1.bf16.msra.mxu0 0
    %6097 = vmatprep.subr.bf16.mxu0 0
    %6098 = vmatpush1.bf16.msra.mxu0 0
    %6099 = vmatprep.subr.bf16.mxu0 0
    %6100 = vmatpush1.bf16.msra.mxu0 0
    %6101 = vmatprep.subr.bf16.mxu0 0
    %6102 = vmatpush1.bf16.msra.mxu0 0
    %6103 = vmatprep.subr.bf16.mxu0 0
    %6104 = vmatpush1.bf16.msra.mxu0 0
    %6105 = vmatprep.subr.bf16.mxu0 0
    %6106 = vmatpush1.bf16.msra.mxu0 0
    %6107 = vmatprep.subr.bf16.mxu0 0
    %6108 = vmatpush1.bf16.msra.mxu0 0
    %6109 = vmatprep.mubr.bf16.mxu0 0
    %6110 = vmatmul.mubr.bf16.gmra.mrb[0].mxu0 %v6035
    %v6111 = vpop.f32.mrb[0].mxu0
    %v6112 = vadd.f32 0.0, %v6111
    %v6113 = vpop.f32.mrb[0].mxu0
    %v6114 = vadd.f32 0.0, %v6113
    %v6115 = vpop.f32.mrb[0].mxu0
    %v6116 = vpop.f32.mrb[0].mxu0
    %6117 = vdwg.mxu0
    %v6118 = vadd.f32 %v6031, %v6071
    %v6119 = vadd.f32 %v6032, %v6073
    %v6120 = vadd.f32 %v6033, %v6112
    %v6121 = vadd.f32 %v6034, %v6114
    %v6122 = vxor.u32 %v6118, 2147483648
    %v6123 = vxor.u32 %v6119, 2147483648
    %v6124 = vxor.u32 %v6120, 2147483648
    %v6125 = vmul.f32 %v6122, 1.442695
    %v6126 = vpow.pop %v6125
    %v6127 = vmul.f32 %v6123, 1.442695
    %v6128 = vpow.pop %v6127
    %v6129 = vmul.f32 %v6124, 1.442695
    %v6130 = vpow.pop %v6129
    %v6131 = vadd.f32 %v6126, 1.0
    %v6132 = vadd.f32 %v6128, 1.0
    %v6133 = vadd.f32 %v6130, 1.0
    %v6134 = vrcp.pop %v6131
    %v6135 = vmul.f32 1.0, %v6134
    %v6136 = vrcp.pop %v6132
    %v6137 = vmul.f32 1.0, %v6136
    %v6138 = vrcp.pop %v6133
    %v6139 = vmul.f32 1.0, %v6138
    %v6140 = vtanh.pop %v6121
    %v6141 = vmul.f32 %v6137, %v6027
    %v6142 = vmul.f32 %v6135, %v6140
    %v6143 = vadd.f32 %v6141, %v6142
    %v6144 = vtanh.pop %v6143
    %v6145 = vmul.f32 %v6139, %v6144
    %6146 = vst [vmem:[%s1456] sm:$0xff] %v6145
    %v6147 = vld [vmem:[%s1458] sm:$0xff]
    %v6148 = vld [vmem:[%s1458 + $0x8] sm:$0xff]
    %v6149 = vld [vmem:[%s1458 + $0x10] sm:$0xff]
    %v6150 = vld [vmem:[%s1458 + $0x18] sm:$0xff]
    %v6151 = vpack.c.bf16 %v6145, %v6145
    %6152 = vmatprep.subr.bf16.mxu0 %v5393
    %6153 = vmatpush1.bf16.msra.mxu0 %v5392
    %6154 = vmatprep.subr.bf16.mxu0 %v5397
    %6155 = vmatpush1.bf16.msra.mxu0 %v5396
    %6156 = vmatprep.subr.bf16.mxu0 %v5401
    %6157 = vmatpush1.bf16.msra.mxu0 %v5400
    %6158 = vmatprep.subr.bf16.mxu0 %v5405
    %6159 = vmatpush1.bf16.msra.mxu0 %v5404
    %6160 = vmatprep.subr.bf16.mxu0 %v5409
    %6161 = vmatpush1.bf16.msra.mxu0 %v5408
    %6162 = vmatprep.subr.bf16.mxu0 %v5413
    %6163 = vmatpush1.bf16.msra.mxu0 %v5412
    %6164 = vmatprep.subr.bf16.mxu0 %v5417
    %6165 = vmatpush1.bf16.msra.mxu0 %v5416
    %6166 = vmatprep.subr.bf16.mxu0 %v5421
    %6167 = vmatpush1.bf16.msra.mxu0 %v5420
    %6168 = vmatprep.subr.bf16.mxu0 0
    %6169 = vmatpush1.bf16.msra.mxu0 0
    %6170 = vmatprep.subr.bf16.mxu0 0
    %6171 = vmatpush1.bf16.msra.mxu0 0
    %6172 = vmatprep.subr.bf16.mxu0 0
    %6173 = vmatpush1.bf16.msra.mxu0 0
    %6174 = vmatprep.subr.bf16.mxu0 0
    %6175 = vmatpush1.bf16.msra.mxu0 0
    %6176 = vmatprep.subr.bf16.mxu0 0
    %6177 = vmatpush1.bf16.msra.mxu0 0
    %6178 = vmatprep.subr.bf16.mxu0 0
    %6179 = vmatpush1.bf16.msra.mxu0 0
    %6180 = vmatprep.subr.bf16.mxu0 0
    %6181 = vmatpush1.bf16.msra.mxu0 0
    %6182 = vmatprep.subr.bf16.mxu0 0
    %6183 = vmatpush1.bf16.msra.mxu0 0
    %6184 = vmatprep.mubr.bf16.mxu0 0
    %6185 = vmatmul.mubr.bf16.gmra.mrb[0].mxu0 %v6151
    %v6186 = vpop.f32.mrb[0].mxu0
    %v6187 = vadd.f32 0.0, %v6186
    %v6188 = vpop.f32.mrb[0].mxu0
    %v6189 = vadd.f32 0.0, %v6188
    %v6190 = vpop.f32.mrb[0].mxu0
    %v6191 = vpop.f32.mrb[0].mxu0
    %6192 = vdwg.mxu0
    %6193 = vmatprep.subr.bf16.mxu0 %v5395
    %6194 = vmatpush1.bf16.msra.mxu0 %v5394
    %6195 = vmatprep.subr.bf16.mxu0 %v5399
    %6196 = vmatpush1.bf16.msra.mxu0 %v5398
    %6197 = vmatprep.subr.bf16.mxu0 %v5403
    %6198 = vmatpush1.bf16.msra.mxu0 %v5402
    %6199 = vmatprep.subr.bf16.mxu0 %v5407
    %6200 = vmatpush1.bf16.msra.mxu0 %v5406
    %6201 = vmatprep.subr.bf16.mxu0 %v5411
    %6202 = vmatpush1.bf16.msra.mxu0 %v5410
    %6203 = vmatprep.subr.bf16.mxu0 %v5415
    %6204 = vmatpush1.bf16.msra.mxu0 %v5414
    %6205 = vmatprep.subr.bf16.mxu0 %v5419
    %6206 = vmatpush1.bf16.msra.mxu0 %v5418
    %6207 = vmatprep.subr.bf16.mxu0 %v5423
    %6208 = vmatpush1.bf16.msra.mxu0 %v5422
    %6209 = vmatprep.subr.bf16.mxu0 0
    %6210 = vmatpush1.bf16.msra.mxu0 0
    %6211 = vmatprep.subr.bf16.mxu0 0
    %6212 = vmatpush1.bf16.msra.mxu0 0
    %6213 = vmatprep.subr.bf16.mxu0 0
    %6214 = vmatpush1.bf16.msra.mxu0 0
    %6215 = vmatprep.subr.bf16.mxu0 0
    %6216 = vmatpush1.bf16.msra.mxu0 0
    %6217 = vmatprep.subr.bf16.mxu0 0
    %6218 = vmatpush1.bf16.msra.mxu0 0
    %6219 = vmatprep.subr.bf16.mxu0 0
    %6220 = vmatpush1.bf16.msra.mxu0 0
    %6221 = vmatprep.subr.bf16.mxu0 0
    %6222 = vmatpush1.bf16.msra.mxu0 0
    %6223 = vmatprep.subr.bf16.mxu0 0
    %6224 = vmatpush1.bf16.msra.mxu0 0
    %6225 = vmatprep.mubr.bf16.mxu0 0
    %6226 = vmatmul.mubr.bf16.gmra.mrb[0].mxu0 %v6151
    %v6227 = vpop.f32.mrb[0].mxu0
    %v6228 = vadd.f32 0.0, %v6227
    %v6229 = vpop.f32.mrb[0].mxu0
    %v6230 = vadd.f32 0.0, %v6229
    %v6231 = vpop.f32.mrb[0].mxu0
    %v6232 = vpop.f32.mrb[0].mxu0
    %6233 = vdwg.mxu0
    %v6234 = vadd.f32 %v6147, %v6187
    %v6235 = vadd.f32 %v6148, %v6189
    %v6236 = vadd.f32 %v6149, %v6228
    %v6237 = vadd.f32 %v6150, %v6230
    %v6238 = vxor.u32 %v6234, 2147483648
    %v6239 = vxor.u32 %v6235, 2147483648
    %v6240 = vxor.u32 %v6236, 2147483648
    %v6241 = vmul.f32 %v6238, 1.442695
    %v6242 = vpow.pop %v6241
    %v6243 = vmul.f32 %v6239, 1.442695
    %v6244 = vpow.pop %v6243
    %v6245 = vmul.f32 %v6240, 1.442695
    %v6246 = vpow.pop %v6245
    %v6247 = vadd.f32 %v6242, 1.0
    %v6248 = vadd.f32 %v6244, 1.0
    %v6249 = vadd.f32 %v6246, 1.0
    %v6250 = vrcp.pop %v6247
    %v6251 = vmul.f32 1.0, %v6250
    %v6252 = vrcp.pop %v6248
    %v6253 = vmul.f32 1.0, %v6252
    %v6254 = vrcp.pop %v6249
    %v6255 = vmul.f32 1.0, %v6254
    %v6256 = vtanh.pop %v6237
    %v6257 = vmul.f32 %v6253, %v6143
    %v6258 = vmul.f32 %v6251, %v6256
    %v6259 = vadd.f32 %v6257, %v6258
    %v6260 = vtanh.pop %v6259
    %v6261 = vmul.f32 %v6255, %v6260
    %6262 = vst [vmem:[%s1574] sm:$0xff] %v6261
    %v6263 = vld [vmem:[%s1576] sm:$0xff]
    %v6264 = vld [vmem:[%s1576 + $0x8] sm:$0xff]
    %v6265 = vld [vmem:[%s1576 + $0x10] sm:$0xff]
    %v6266 = vld [vmem:[%s1576 + $0x18] sm:$0xff]
    %v6267 = vpack.c.bf16 %v6261, %v6261
    %6268 = vmatprep.subr.bf16.mxu0 %v5393
    %6269 = vmatpush1.bf16.msra.mxu0 %v5392
    %6270 = vmatprep.subr.bf16.mxu0 %v5397
    %6271 = vmatpush1.bf16.msra.mxu0 %v5396
    %6272 = vmatprep.subr.bf16.mxu0 %v5401
    %6273 = vmatpush1.bf16.msra.mxu0 %v5400
    %6274 = vmatprep.subr.bf16.mxu0 %v5405
    %6275 = vmatpush1.bf16.msra.mxu0 %v5404
    %6276 = vmatprep.subr.bf16.mxu0 %v5409
    %6277 = vmatpush1.bf16.msra.mxu0 %v5408
    %6278 = vmatprep.subr.bf16.mxu0 %v5413
    %6279 = vmatpush1.bf16.msra.mxu0 %v5412
    %6280 = vmatprep.subr.bf16.mxu0 %v5417
    %6281 = vmatpush1.bf16.msra.mxu0 %v5416
    %6282 = vmatprep.subr.bf16.mxu0 %v5421
    %6283 = vmatpush1.bf16.msra.mxu0 %v5420
    %6284 = vmatprep.subr.bf16.mxu0 0
    %6285 = vmatpush1.bf16.msra.mxu0 0
    %6286 = vmatprep.subr.bf16.mxu0 0
    %6287 = vmatpush1.bf16.msra.mxu0 0
    %6288 = vmatprep.subr.bf16.mxu0 0
    %6289 = vmatpush1.bf16.msra.mxu0 0
    %6290 = vmatprep.subr.bf16.mxu0 0
    %6291 = vmatpush1.bf16.msra.mxu0 0
    %6292 = vmatprep.subr.bf16.mxu0 0
    %6293 = vmatpush1.bf16.msra.mxu0 0
    %6294 = vmatprep.subr.bf16.mxu0 0
    %6295 = vmatpush1.bf16.msra.mxu0 0
    %6296 = vmatprep.subr.bf16.mxu0 0
    %6297 = vmatpush1.bf16.msra.mxu0 0
    %6298 = vmatprep.subr.bf16.mxu0 0
    %6299 = vmatpush1.bf16.msra.mxu0 0
    %6300 = vmatprep.mubr.bf16.mxu0 0
    %6301 = vmatmul.mubr.bf16.gmra.mrb[0].mxu0 %v6267
    %v6302 = vpop.f32.mrb[0].mxu0
    %v6303 = vadd.f32 0.0, %v6302
    %v6304 = vpop.f32.mrb[0].mxu0
    %v6305 = vadd.f32 0.0, %v6304
    %v6306 = vpop.f32.mrb[0].mxu0
    %v6307 = vpop.f32.mrb[0].mxu0
    %6308 = vdwg.mxu0
    %6309 = vmatprep.subr.bf16.mxu0 %v5395
    %6310 = vmatpush1.bf16.msra.mxu0 %v5394
    %6311 = vmatprep.subr.bf16.mxu0 %v5399
    %6312 = vmatpush1.bf16.msra.mxu0 %v5398
    %6313 = vmatprep.subr.bf16.mxu0 %v5403
    %6314 = vmatpush1.bf16.msra.mxu0 %v5402
    %6315 = vmatprep.subr.bf16.mxu0 %v5407
    %6316 = vmatpush1.bf16.msra.mxu0 %v5406
    %6317 = vmatprep.subr.bf16.mxu0 %v5411
    %6318 = vmatpush1.bf16.msra.mxu0 %v5410
    %6319 = vmatprep.subr.bf16.mxu0 %v5415
    %6320 = vmatpush1.bf16.msra.mxu0 %v5414
    %6321 = vmatprep.subr.bf16.mxu0 %v5419
    %6322 = vmatpush1.bf16.msra.mxu0 %v5418
    %6323 = vmatprep.subr.bf16.mxu0 %v5423
    %6324 = vmatpush1.bf16.msra.mxu0 %v5422
    %6325 = vmatprep.subr.bf16.mxu0 0
    %6326 = vmatpush1.bf16.msra.mxu0 0
    %6327 = vmatprep.subr.bf16.mxu0 0
    %6328 = vmatpush1.bf16.msra.mxu0 0
    %6329 = vmatprep.subr.bf16.mxu0 0
    %6330 = vmatpush1.bf16.msra.mxu0 0
    %6331 = vmatprep.subr.bf16.mxu0 0
    %6332 = vmatpush1.bf16.msra.mxu0 0
    %6333 = vmatprep.subr.bf16.mxu0 0
    %6334 = vmatpush1.bf16.msra.mxu0 0
    %6335 = vmatprep.subr.bf16.mxu0 0
    %6336 = vmatpush1.bf16.msra.mxu0 0
    %6337 = vmatprep.subr.bf16.mxu0 0
    %6338 = vmatpush1.bf16.msra.mxu0 0
    %6339 = vmatprep.subr.bf16.mxu0 0
    %6340 = vmatpush1.bf16.msra.mxu0 0
    %6341 = vmatprep.mubr.bf16.mxu0 0
    %6342 = vmatmul.mubr.bf16.gmra.mrb[0].mxu0 %v6267
    %v6343 = vpop.f32.mrb[0].mxu0
    %v6344 = vadd.f32 0.0, %v6343
    %v6345 = vpop.f32.mrb[0].mxu0
    %v6346 = vadd.f32 0.0, %v6345
    %v6347 = vpop.f32.mrb[0].mxu0
    %v6348 = vpop.f32.mrb[0].mxu0
    %6349 = vdwg.mxu0
    %v6350 = vadd.f32 %v6263, %v6303
    %v6351 = vadd.f32 %v6264, %v6305
    %v6352 = vadd.f32 %v6265, %v6344
    %v6353 = vadd.f32 %v6266, %v6346
    %v6354 = vxor.u32 %v6350, 2147483648
    %v6355 = vxor.u32 %v6351, 2147483648
    %v6356 = vxor.u32 %v6352, 2147483648
    %v6357 = vmul.f32 %v6354, 1.442695
    %v6358 = vpow.pop %v6357
    %v6359 = vmul.f32 %v6355, 1.442695
    %v6360 = vpow.pop %v6359
    %v6361 = vmul.f32 %v6356, 1.442695
    %v6362 = vpow.pop %v6361
    %v6363 = vadd.f32 %v6358, 1.0
    %v6364 = vadd.f32 %v6360, 1.0
    %v6365 = vadd.f32 %v6362, 1.0
    %v6366 = vrcp.pop %v6363
    %v6367 = vmul.f32 1.0, %v6366
    %v6368 = vrcp.pop %v6364
    %v6369 = vmul.f32 1.0, %v6368
    %v6370 = vrcp.pop %v6365
    %v6371 = vmul.f32 1.0, %v6370
    %v6372 = vtanh.pop %v6353
    %v6373 = vmul.f32 %v6369, %v6259
    %v6374 = vmul.f32 %v6367, %v6372
    %v6375 = vadd.f32 %v6373, %v6374
    %v6376 = vtanh.pop %v6375
    %v6377 = vmul.f32 %v6371, %v6376
    %6378 = vst [vmem:[%s1692] sm:$0xff] %v6377
    %s6379 = scalar_lea.vmem %s16, 8
    %6380 = vst [vmem:[%s6379] sm:$0xff] %v6377
    %s6381 = scalar_lea.vmem %s17, 8
    %6382 = vst [vmem:[%s6381] sm:$0xff] %v6375
    %v6383 = vld [vmem:[%s1692] sm:$0xff]
    %v6384 = vld [vmem:[%s9] sm:$0xff]
    %v6385 = vld [vmem:[%s9 + $0x8] sm:$0xff]
    %v6386 = vld [vmem:[%s9 + $0x10] sm:$0xff]
    %v6387 = vld [vmem:[%s9 + $0x18] sm:$0xff]
    %v6388 = vld [vmem:[%s9 + $0x20] sm:$0xff]
    %v6389 = vld [vmem:[%s9 + $0x28] sm:$0xff]
    %v6390 = vld [vmem:[%s9 + $0x30] sm:$0xff]
    %v6391 = vld [vmem:[%s9 + $0x38] sm:$0xff]
    %v6392 = vld [vmem:[%s9 + $0x40] sm:$0xff]
    %v6393 = vld [vmem:[%s9 + $0x48] sm:$0xff]
    %v6394 = vld [vmem:[%s9 + $0x50] sm:$0xff]
    %v6395 = vld [vmem:[%s9 + $0x58] sm:$0xff]
    %v6396 = vld [vmem:[%s9 + $0x60] sm:$0xff]
    %v6397 = vld [vmem:[%s9 + $0x68] sm:$0xff]
    %v6398 = vld [vmem:[%s9 + $0x70] sm:$0xff]
    %v6399 = vld [vmem:[%s9 + $0x78] sm:$0xff]
    %v6400 = vld [vmem:[%s10] sm:$0x1]
    %v6402 = vlaneseq
    %v6403 = vshrl.u32 %v6402, 7
    %v6404 = vsub.s32 0, %v6403
    %v6405 = vrot.slane %v6400, %v6404
    %6407 = vmatprep.subr.mxu0 0.0
    %6408 = vmatpush1.msra.mxu0 %v6384
    %6409 = vmatprep.subr.mxu0 0.0
    %6410 = vmatpush1.msra.mxu0 %v6385
    %6411 = vmatprep.subr.mxu0 0.0
    %6412 = vmatpush1.msra.mxu0 %v6386
    %6413 = vmatprep.subr.mxu0 0.0
    %6414 = vmatpush1.msra.mxu0 %v6387
    %6415 = vmatprep.subr.mxu0 0.0
    %6416 = vmatpush1.msra.mxu0 %v6388
    %6417 = vmatprep.subr.mxu0 0.0
    %6418 = vmatpush1.msra.mxu0 %v6389
    %6419 = vmatprep.subr.mxu0 0.0
    %6420 = vmatpush1.msra.mxu0 %v6390
    %6421 = vmatprep.subr.mxu0 0.0
    %6422 = vmatpush1.msra.mxu0 %v6391
    %6423 = vmatprep.subr.mxu0 0.0
    %6424 = vmatpush1.msra.mxu0 %v6392
    %6425 = vmatprep.subr.mxu0 0.0
    %6426 = vmatpush1.msra.mxu0 %v6393
    %6427 = vmatprep.subr.mxu0 0.0
    %6428 = vmatpush1.msra.mxu0 %v6394
    %6429 = vmatprep.subr.mxu0 0.0
    %6430 = vmatpush1.msra.mxu0 %v6395
    %6431 = vmatprep.subr.mxu0 0.0
    %6432 = vmatpush1.msra.mxu0 %v6396
    %6433 = vmatprep.subr.mxu0 0.0
    %6434 = vmatpush1.msra.mxu0 %v6397
    %6435 = vmatprep.subr.mxu0 0.0
    %6436 = vmatpush1.msra.mxu0 %v6398
    %6437 = vmatprep.subr.mxu0 0.0
    %6438 = vmatpush1.msra.mxu0 %v6399
    %6439 = vmatprep.subr.mxu0 0.0
    %6440 = vmatpush1.msra.mxu0 0.0
    %6441 = vmatprep.subr.mxu0 0.0
    %6442 = vmatpush1.msra.mxu0 0.0
    %6443 = vmatprep.subr.mxu0 0.0
    %6444 = vmatpush1.msra.mxu0 0.0
    %6445 = vmatprep.subr.mxu0 0.0
    %6446 = vmatpush1.msra.mxu0 0.0
    %6447 = vmatprep.subr.mxu0 0.0
    %6448 = vmatpush1.msra.mxu0 0.0
    %6449 = vmatprep.subr.mxu0 0.0
    %6450 = vmatpush1.msra.mxu0 0.0
    %6451 = vmatprep.subr.mxu0 0.0
    %6452 = vmatpush1.msra.mxu0 0.0
    %6453 = vmatprep.subr.mxu0 0.0
    %6454 = vmatpush1.msra.mxu0 0.0
    %6455 = vmatprep.subr.mxu0 0.0
    %6456 = vmatpush1.msra.mxu0 0.0
    %6457 = vmatprep.subr.mxu0 0.0
    %6458 = vmatpush1.msra.mxu0 0.0
    %6459 = vmatprep.subr.mxu0 0.0
    %6460 = vmatpush1.msra.mxu0 0.0
    %6461 = vmatprep.subr.mxu0 0.0
    %6462 = vmatpush1.msra.mxu0 0.0
    %6463 = vmatprep.subr.mxu0 0.0
    %6464 = vmatpush1.msra.mxu0 0.0
    %6465 = vmatprep.subr.mxu0 0.0
    %6466 = vmatpush1.msra.mxu0 0.0
    %6467 = vmatprep.subr.mxu0 0.0
    %6468 = vmatpush1.msra.mxu0 0.0
    %6469 = vmatprep.subr.mxu0 0.0
    %6470 = vmatpush1.msra.mxu0 0.0
    %6471 = vmatprep.mubr.f32.mxu0 0.0
    %6472 = vmatmul.mubr.f32.gmra.mrb[0].mxu0 %v6383
    %v6473 = vpop.f32.mrb[0].mxu0
    %v6474 = vadd.f32 %v6405, %v6473
    %v6475 = vpop.f32.mrb[0].mxu0
    %6476 = vdwg.mxu0
    %v6477 = vmax.f32 %v6474, 0.0
    %v6478 = vld [vmem:[#allocation14] sm:$0xff]
    %v6479 = vld [vmem:[#allocation14 + $0x8] sm:$0xff]
    %v6480 = vld [vmem:[#allocation14 + $0x10] sm:$0xff]
    %v6481 = vld [vmem:[#allocation14 + $0x18] sm:$0xff]
    %v6482 = vld [vmem:[#allocation14 + $0x20] sm:$0xff]
    %v6483 = vld [vmem:[#allocation14 + $0x28] sm:$0xff]
    %v6484 = vld [vmem:[#allocation14 + $0x30] sm:$0xff]
    %v6485 = vld [vmem:[#allocation14 + $0x38] sm:$0xff]
    %v6486 = vld [vmem:[#allocation14 + $0x40] sm:$0xff]
    %v6487 = vld [vmem:[#allocation14 + $0x48] sm:$0xff]
    %v6488 = vld [vmem:[#allocation14 + $0x50] sm:$0xff]
    %v6489 = vld [vmem:[#allocation14 + $0x58] sm:$0xff]
    %v6490 = vld [vmem:[#allocation14 + $0x60] sm:$0xff]
    %v6491 = vld [vmem:[#allocation14 + $0x68] sm:$0xff]
    %v6492 = vld [vmem:[#allocation14 + $0x70] sm:$0xff]
    %v6493 = vld [vmem:[#allocation14 + $0x78] sm:$0xff]
    %v6494 = vld [vmem:[#allocation15] sm:$0x1]
    %v6496 = vlaneseq
    %v6497 = vshrl.u32 %v6496, 7
    %v6498 = vsub.s32 0, %v6497
    %v6499 = vrot.slane %v6494, %v6498
    %6501 = vmatprep.subr.mxu0 0.0
    %6502 = vmatpush1.msra.mxu0 %v6478
    %6503 = vmatprep.subr.mxu0 0.0
    %6504 = vmatpush1.msra.mxu0 %v6479
    %6505 = vmatprep.subr.mxu0 0.0
    %6506 = vmatpush1.msra.mxu0 %v6480
    %6507 = vmatprep.subr.mxu0 0.0
    %6508 = vmatpush1.msra.mxu0 %v6481
    %6509 = vmatprep.subr.mxu0 0.0
    %6510 = vmatpush1.msra.mxu0 %v6482
    %6511 = vmatprep.subr.mxu0 0.0
    %6512 = vmatpush1.msra.mxu0 %v6483
    %6513 = vmatprep.subr.mxu0 0.0
    %6514 = vmatpush1.msra.mxu0 %v6484
    %6515 = vmatprep.subr.mxu0 0.0
    %6516 = vmatpush1.msra.mxu0 %v6485
    %6517 = vmatprep.subr.mxu0 0.0
    %6518 = vmatpush1.msra.mxu0 %v6486
    %6519 = vmatprep.subr.mxu0 0.0
    %6520 = vmatpush1.msra.mxu0 %v6487
    %6521 = vmatprep.subr.mxu0 0.0
    %6522 = vmatpush1.msra.mxu0 %v6488
    %6523 = vmatprep.subr.mxu0 0.0
    %6524 = vmatpush1.msra.mxu0 %v6489
    %6525 = vmatprep.subr.mxu0 0.0
    %6526 = vmatpush1.msra.mxu0 %v6490
    %6527 = vmatprep.subr.mxu0 0.0
    %6528 = vmatpush1.msra.mxu0 %v6491
    %6529 = vmatprep.subr.mxu0 0.0
    %6530 = vmatpush1.msra.mxu0 %v6492
    %6531 = vmatprep.subr.mxu0 0.0
    %6532 = vmatpush1.msra.mxu0 %v6493
    %6533 = vmatprep.subr.mxu0 0.0
    %6534 = vmatpush1.msra.mxu0 0.0
    %6535 = vmatprep.subr.mxu0 0.0
    %6536 = vmatpush1.msra.mxu0 0.0
    %6537 = vmatprep.subr.mxu0 0.0
    %6538 = vmatpush1.msra.mxu0 0.0
    %6539 = vmatprep.subr.mxu0 0.0
    %6540 = vmatpush1.msra.mxu0 0.0
    %6541 = vmatprep.subr.mxu0 0.0
    %6542 = vmatpush1.msra.mxu0 0.0
    %6543 = vmatprep.subr.mxu0 0.0
    %6544 = vmatpush1.msra.mxu0 0.0
    %6545 = vmatprep.subr.mxu0 0.0
    %6546 = vmatpush1.msra.mxu0 0.0
    %6547 = vmatprep.subr.mxu0 0.0
    %6548 = vmatpush1.msra.mxu0 0.0
    %6549 = vmatprep.subr.mxu0 0.0
    %6550 = vmatpush1.msra.mxu0 0.0
    %6551 = vmatprep.subr.mxu0 0.0
    %6552 = vmatpush1.msra.mxu0 0.0
    %6553 = vmatprep.subr.mxu0 0.0
    %6554 = vmatpush1.msra.mxu0 0.0
    %6555 = vmatprep.subr.mxu0 0.0
    %6556 = vmatpush1.msra.mxu0 0.0
    %6557 = vmatprep.subr.mxu0 0.0
    %6558 = vmatpush1.msra.mxu0 0.0
    %6559 = vmatprep.subr.mxu0 0.0
    %6560 = vmatpush1.msra.mxu0 0.0
    %6561 = vmatprep.subr.mxu0 0.0
    %6562 = vmatpush1.msra.mxu0 0.0
    %6563 = vmatprep.subr.mxu0 0.0
    %6564 = vmatpush1.msra.mxu0 0.0
    %6565 = vmatprep.mubr.f32.mxu0 0.0
    %6566 = vmatmul.mubr.f32.gmra.mrb[0].mxu0 %v6477
    %v6567 = vpop.f32.mrb[0].mxu0
    %v6568 = vadd.f32 %v6499, %v6567
    %v6569 = vpop.f32.mrb[0].mxu0
    %6570 = vdwg.mxu0
    %6571 = vst [vmem:[%s13] sm:$0xff] %v6568
    // Predicated region
    $region86: #{lstm_model_forward.1} parent=1 // pred_check
      _
    $region87: #{lstm_model_forward.1} parent=1 // pred_check_branch
      %6573 = sbr.rel (0) target = $region89
    $region88: #{lstm_model_forward.1} parent=1 // pred_region
      _
    $region89: #{lstm_model_forward.1} parent=1 // pred_fallthru
      _
    // Predicated region
    $region90: #{lstm_model_forward.1} parent=1 // pred_check
      _
    $region91: #{lstm_model_forward.1} parent=1 // pred_check_branch
      %6575 = sbr.rel (0) target = $region93
    $region92: #{lstm_model_forward.1} parent=1 // pred_region
      _
    $region93: #{lstm_model_forward.1} parent=1 // pred_fallthru
      _
    // Predicated region
    $region94: #{lstm_model_forward.1} parent=1 // pred_check
      _
    $region95: #{lstm_model_forward.1} parent=1 // pred_check_branch
      %6577 = sbr.rel (0) target = $region97
    $region96: #{lstm_model_forward.1} parent=1 // pred_region
      _
    $region97: #{lstm_model_forward.1} parent=1 // pred_fallthru
      _
    // Predicated region
    $region98: #{lstm_model_forward.1} parent=1 // pred_check
      _
    $region99: #{lstm_model_forward.1} parent=1 // pred_check_branch
      %6579 = sbr.rel (0) target = $region101
    $region100: #{lstm_model_forward.1} parent=1 // pred_region
      _
    $region101: #{lstm_model_forward.1} parent=1 // pred_fallthru
      _
    // Predicated region
    $region102: #{lstm_model_forward.1} parent=1 // pred_check
      _
    $region103: #{lstm_model_forward.1} parent=1 // pred_check_branch
      %6581 = sbr.rel (0) target = $region105
    $region104: #{lstm_model_forward.1} parent=1 // pred_region
      _
    $region105: #{lstm_model_forward.1} parent=1 // pred_fallthru
      _
    // Predicated region
    $region106: #{lstm_model_forward.1} parent=1 // pred_check
      _
    $region107: #{lstm_model_forward.1} parent=1 // pred_check_branch
      %6583 = sbr.rel (0) target = $region109
    $region108: #{lstm_model_forward.1} parent=1 // pred_region
      _
    $region109: #{lstm_model_forward.1} parent=1 // pred_fallthru
      _
    // Predicated region
    $region110: #{lstm_model_forward.1} parent=1 // pred_check
      _
    $region111: #{lstm_model_forward.1} parent=1 // pred_check_branch
      %6585 = sbr.rel (0) target = $region113
    $region112: #{lstm_model_forward.1} parent=1 // pred_region
      _
    $region113: #{lstm_model_forward.1} parent=1 // pred_fallthru
      _
    // Predicated region
    $region114: #{lstm_model_forward.1} parent=1 // pred_check
      _
    $region115: #{lstm_model_forward.1} parent=1 // pred_check_branch
      %6587 = sbr.rel (0) target = $region117
    $region116: #{lstm_model_forward.1} parent=1 // pred_region
      _
    $region117: #{lstm_model_forward.1} parent=1 // pred_fallthru
      _
    // Predicated region
    $region118: #{lstm_model_forward.1} parent=1 // pred_check
      _
    $region119: #{lstm_model_forward.1} parent=1 // pred_check_branch
      %6589 = sbr.rel (0) target = $region121
    $region120: #{lstm_model_forward.1} parent=1 // pred_region
      _
    $region121: #{lstm_model_forward.1} parent=1 // pred_fallthru
      _
    // Predicated region
    $region122: #{lstm_model_forward.1} parent=1 // pred_check
      _
    $region123: #{lstm_model_forward.1} parent=1 // pred_check_branch
      %6591 = sbr.rel (0) target = $region125
    $region124: #{lstm_model_forward.1} parent=1 // pred_region
      _
    $region125: #{lstm_model_forward.1} parent=1 // pred_fallthru
      _
    %6592 = vsyncpa [#allocation5], 1
    %6593 = vsyncpa [#allocation7], 1
    %6594 = vsyncpa [#allocation10], 1
    %6595 = vsyncpa [#allocation13], 1
    %6596 = vsyncpa [#allocation16], 1

</llo_original>
